<compile_context>
chip_gen: v5e
topology: v5e:2x2
jax: 0.10.0
libtpu: 0.0.40
codegen_flags: <defaults>
</compile_context>

<pallas_src>
import functools
import math

import jax
import jax.numpy as jnp
from jax.experimental import pallas as pl
from jax.experimental.pallas import tpu as pltpu

BN_EPS = 1e-5
LANE = 128            # channel (lane) padding -> unmasked vst + full MXU columns
MAX_TILE_M = 1024     # ~86% of HBM roofline on v6e for mem-bound tiles
FALLBACK_VMEM_LIMIT = 32 * 1024 * 1024


def _round_up(v, m):
    return (v + m - 1) // m * m


def _vmem_limit_bytes():
    """Per-chip scoped-VMEM request (v5e/v6e: 128 MiB physical, v7x: 64 MiB)."""
    try:
        cap = int(pltpu.get_tpu_info().vmem_capacity_bytes)
        return max(16 * 1024 * 1024, min(cap // 2, 100 * 1024 * 1024))
    except Exception:
        return FALLBACK_VMEM_LIMIT


def _erf(x):
    # Abramowitz & Stegun 7.1.26, |err| < 1.5e-7; exp/mul/add/select only.
    a1, a2, a3, a4, a5 = (0.254829592, -0.284496736, 1.421413741,
                          -1.453152027, 1.061405429)
    p = 0.3275911
    ax = jnp.abs(x)
    t = 1.0 / (1.0 + p * ax)
    poly = ((((a5 * t + a4) * t + a3) * t + a2) * t + a1) * t
    y = 1.0 - poly * jnp.exp(-ax * ax)
    return jnp.where(x < 0, -y, y)


def _gelu_exact(x):
    # nn.GELU() default: exact erf formulation.
    return 0.5 * x * (1.0 + _erf(x * (1.0 / math.sqrt(2.0))))


# ---------------------------------------------------------------------------
# Pallas kernels
# ---------------------------------------------------------------------------

def _stats_kernel(*refs, has_shortcut, store_y):
    """Pass 1: per-channel sum / sum-of-squares of the conv output (training BN).

    Optionally also (a) computes the fused 1x1-shortcut conv stats and
    (b) stores the main conv output in bf16 so pass 2 need not redo the matmul.
    Grid = (cores, tiles_per_core); stats rows are per-core partials.
    """
    it = iter(refs)
    p_ref = next(it)
    w_ref = next(it)
    ps_ref = next(it) if has_shortcut else None
    ws_ref = next(it) if has_shortcut else None
    sum_ref = next(it)
    sq_ref = next(it)
    ssum_ref = next(it) if has_shortcut else None
    ssq_ref = next(it) if has_shortcut else None
    y_ref = next(it) if store_y else None

    @pl.when(pl.program_id(1) == 0)
    def _init():
        sum_ref[...] = jnp.zeros_like(sum_ref)
        sq_ref[...] = jnp.zeros_like(sq_ref)
        if has_shortcut:
            ssum_ref[...] = jnp.zeros_like(ssum_ref)
            ssq_ref[...] = jnp.zeros_like(ssq_ref)

    # bf16 operands on the MXU, f32 accumulation.
    y = jnp.dot(p_ref[...], w_ref[...], preferred_element_type=jnp.float32)
    sum_ref[0:1, :] += jnp.sum(y, axis=0, keepdims=True)
    sq_ref[0:1, :] += jnp.sum(y * y, axis=0, keepdims=True)
    if store_y:
        y_ref[...] = y.astype(y_ref.dtype)
    if has_shortcut:
        ys = jnp.dot(ps_ref[...], ws_ref[...], preferred_element_type=jnp.float32)
        ssum_ref[0:1, :] += jnp.sum(ys, axis=0, keepdims=True)
        ssq_ref[0:1, :] += jnp.sum(ys * ys, axis=0, keepdims=True)


def _apply_kernel(*refs, src_stored, residual_mode, apply_act):
    """Pass 2: folded BN affine (+ residual add) (+ GELU) per M tile.

    src_stored      : read bf16 conv output from pass 1 (no matmul, no patch read)
    residual_mode   : "none" | "direct" (identity x) | "conv" (fused 1x1 shortcut)
    """
    it = iter(refs)
    if src_stored:
        y_ref = next(it)
    else:
        p_ref = next(it)
        w_ref = next(it)
    scale_ref = next(it)
    shift_ref = next(it)
    if residual_mode == "direct":
        res_ref = next(it)
    elif residual_mode == "conv":
        ps_ref = next(it)
        ws_ref = next(it)
        sscale_ref = next(it)
        sshift_ref = next(it)
    out_ref = next(it)

    if src_stored:
        y = y_ref[...].astype(jnp.float32)
    else:
        y = jnp.dot(p_ref[...], w_ref[...], preferred_element_type=jnp.float32)
    y = y * scale_ref[...] + shift_ref[...]                 # folded BN (f32)
    if residual_mode == "direct":
        y = y + res_ref[...].astype(jnp.float32)
    elif residual_mode == "conv":
        ys = jnp.dot(ps_ref[...], ws_ref[...], preferred_element_type=jnp.float32)
        y = y + (ys * sscale_ref[...] + sshift_ref[...])    # fused shortcut BN
    if apply_act:
        y = _gelu_exact(y)
    out_ref[...] = y.astype(out_ref.dtype)


# ---------------------------------------------------------------------------
# Tiling / pallas_call drivers
# ---------------------------------------------------------------------------

def _choose_tile_m(m_real, row_bytes, fixed_bytes, vmem_limit):
    budget = max(vmem_limit // 2 - fixed_bytes, 0)
    t = max(8, min(MAX_TILE_M, _round_up(m_real, 8)))
    while t > 8 and t * row_bytes > budget:
        t = _round_up(t // 2, 8)
    return t


def _plan_tiles(m_real, k, cpad, k_extra, out_bytes, vmem_limit):
    # Double-buffered bytes per M row across all M-tiled operands (conservative):
    # patches (bf16) + stored y (bf16) + residual (bf16) + shortcut patches (bf16)
    # + output.
    row_bytes = 2 * (2 * k + 2 * cpad + 2 * cpad + 2 * k_extra + out_bytes * cpad)
    fixed_bytes = 2 * 2 * cpad * (k + k_extra) + (1 << 16)   # weights + headroom
    tile_m = _choose_tile_m(m_real, row_bytes, fixed_bytes, vmem_limit)
    num_tiles = pl.cdiv(m_real, tile_m)
    cores = 2 if num_tiles >= 2 else 1       # split the stats sweep on v7x megacore
    num_tiles = _round_up(num_tiles, cores)
    return tile_m, num_tiles, cores, num_tiles * tile_m


def _bn_stats_pass(p, w, cpad, *, shortcut, store_y, tile_m, num_tiles, cores,
                   vmem_limit):
    m_pad, k = p.shape
    tpc = num_tiles // cores
    has_shortcut = shortcut is not None

    def pmap(c, i, tpc=tpc):
        return (c * tpc + i, 0)

    args = [p, w]
    in_specs = [pl.BlockSpec((tile_m, k), pmap),
                pl.BlockSpec((k, cpad), lambda c, i: (0, 0))]
    if has_shortcut:
        ps, ws = shortcut
        ks = ps.shape[1]
        args += [ps, ws]
        in_specs += [pl.BlockSpec((tile_m, ks), pmap),
                     pl.BlockSpec((ks, cpad), lambda c, i: (0, 0))]

    stat_shape = jax.ShapeDtypeStruct((cores * 8, cpad), jnp.float32)
    stat_spec = pl.BlockSpec((8, cpad), lambda c, i: (c, 0))
    out_shape = [stat_shape, stat_shape]
    out_specs = [stat_spec, stat_spec]
    if has_shortcut:
        out_shape += [stat_shape, stat_shape]
        out_specs += [stat_spec, stat_spec]
    if store_y:
        out_shape.append(jax.ShapeDtypeStruct((m_pad, cpad), jnp.bfloat16))
        out_specs.append(pl.BlockSpec((tile_m, cpad), pmap))

    kernel = functools.partial(_stats_kernel, has_shortcut=has_shortcut,
                               store_y=store_y)
    return pl.pallas_call(
        kernel,
        out_shape=tuple(out_shape),
        grid=(cores, tpc),
        in_specs=in_specs,
        out_specs=tuple(out_specs),
        compiler_params=pltpu.CompilerParams(
            dimension_semantics=("parallel", "arbitrary"),
            vmem_limit_bytes=vmem_limit),
    )(*args)


def _fold_bn(col_sum, col_sq, gamma_pad, beta_pad, m_real):
    """Fold training-mode BN into per-channel scale/shift (tiny XLA epilogue)."""
    total = jnp.sum(col_sum, axis=0, keepdims=True)
    total_sq = jnp.sum(col_sq, axis=0, keepdims=True)
    mean = total / float(m_real)
    var = jnp.maximum(total_sq / float(m_real) - mean * mean, 0.0)
    scale = gamma_pad * jax.lax.rsqrt(var + BN_EPS)
    shift = beta_pad - mean * scale
    return scale, shift


def _bn_apply_pass(scale, shift, *, y_store, p, w, residual, shortcut,
                   apply_act, out_dtype, tile_m, num_tiles, cpad, vmem_limit):
    src_stored = y_store is not None
    args, in_specs = [], []
    if src_stored:
        m_pad = y_store.shape[0]
        args.append(y_store)
        in_specs.append(pl.BlockSpec((tile_m, cpad), lambda i: (i, 0)))
    else:
        m_pad, k = p.shape
        args += [p, w]
        in_specs += [pl.BlockSpec((tile_m, k), lambda i: (i, 0)),
                     pl.BlockSpec((k, cpad), lambda i: (0, 0))]
    args += [scale, shift]
    in_specs += [pl.BlockSpec((1, cpad), lambda i: (0, 0)),
                 pl.BlockSpec((1, cpad), lambda i: (0, 0))]

    residual_mode = "none"
    if residual is not None:
        residual_mode = "direct"
        args.append(residual)
        in_specs.append(pl.BlockSpec((tile_m, cpad), lambda i: (i, 0)))
    elif shortcut is not None:
        residual_mode = "conv"
        ps, ws, sscale, sshift = shortcut
        ks = ps.shape[1]
        args += [ps, ws, sscale, sshift]
        in_specs += [pl.BlockSpec((tile_m, ks), lambda i: (i, 0)),
                     pl.BlockSpec((ks, cpad), lambda i: (0, 0)),
                     pl.BlockSpec((1, cpad), lambda i: (0, 0)),
                     pl.BlockSpec((1, cpad), lambda i: (0, 0))]

    kernel = functools.partial(_apply_kernel, src_stored=src_stored,
                               residual_mode=residual_mode, apply_act=apply_act)
    return pl.pallas_call(
        kernel,
        out_shape=jax.ShapeDtypeStruct((m_pad, cpad), out_dtype),
        grid=(num_tiles,),
        in_specs=in_specs,
        out_specs=pl.BlockSpec((tile_m, cpad), lambda i: (i, 0)),
        compiler_params=pltpu.CompilerParams(
            dimension_semantics=("parallel",),     # megacore-shardable
            vmem_limit_bytes=vmem_limit),
    )(*args)


# ---------------------------------------------------------------------------
# im2col (NHWC) and weight flattening (host side)
# ---------------------------------------------------------------------------

def im2col_nhwc(x, kernel_size, stride, padding):
    """x: (N, H, W, C) -> patches (N*Ho*Wo, kh*kw*C); K order = (tap, channel)."""
    kh, kw = kernel_size
    sh, sw = stride
    ph, pw = padding
    n, h, w, c = x.shape
    xp = jnp.pad(x, ((0, 0), (ph, ph), (pw, pw), (0, 0)))
    ho = (h + 2 * ph - kh) // sh + 1
    wo = (w + 2 * pw - kw) // sw + 1
    cols = []
    for i in range(kh):
        for j in range(kw):
            cols.append(xp[:, i:i + sh * ho:sh, j:j + sw * wo:sw, :])
    p = jnp.stack(cols, axis=3)                  # (N, Ho, Wo, kh*kw, C)
    return p.reshape(n * ho * wo, kh * kw * c), ho, wo


def _flat_w_nhwc(w):
    # (C_out, C_in, kh, kw) -> (kh*kw*C_in, C_out) matching the (tap, c) K order.
    return jnp.transpose(w, (2, 3, 1, 0)).reshape(-1, w.shape[0])


def _pad_row(v, cpad):
    v = v.reshape(1, -1).astype(jnp.float32)
    return jnp.pad(v, ((0, 0), (0, cpad - v.shape[1])))


def _pad_rows(a, m_pad):
    return jnp.pad(a, ((0, m_pad - a.shape[0]), (0, 0)))


# ---------------------------------------------------------------------------
# ResBlock forward
# ---------------------------------------------------------------------------

def res_block_forward(x, params, kernel_size, stride, padding):
    """Forward of ResBlock. x is NCHW f32, returns NCHW f32 (training-mode BN)."""
    n, c_in, h, w = x.shape
    c_out = params["w0"].shape[0]
    cpad = _round_up(c_out, LANE)
    is_bottleneck = (c_in != c_out)
    vmem_limit = _vmem_limit_bytes()

    x_nhwc = jnp.transpose(x, (0, 2, 3, 1))          # single boundary transpose

    # ---------------- conv_0 (+ fused shortcut stats) ----------------
    p0, ho, wo = im2col_nhwc(x_nhwc, kernel_size, stride, padding)
    m = n * ho * wo
    k0 = p0.shape[1]
    w0 = _flat_w_nhwc(params["w0"])

    if is_bottleneck:
        ps, hos, wos = im2col_nhwc(x_nhwc, (1, 1), stride, (0, 0))
        assert (hos, wos) == (ho, wo), "shortcut/main spatial mismatch"
        ks = ps.shape[1]
        ws = _flat_w_nhwc(params["ws"])
        wsb = jnp.pad(ws, ((0, 0), (0, cpad - c_out))).astype(jnp.bfloat16)
    else:
        assert (ho, wo) == (h, w) and tuple(stride) == (1, 1), \
            "identity shortcut needs preserved spatial dims"
        ps, ks, wsb = None, 0, None

    store0 = k0 > cpad
    tile0, nt0, cores0, m_pad0 = _plan_tiles(m, k0, cpad, ks, 2, vmem_limit)

    p0b = _pad_rows(p0, m_pad0).astype(jnp.bfloat16)
    w0b = jnp.pad(w0, ((0, 0), (0, cpad - c_out))).astype(jnp.bfloat16)
    shortcut_in = None
    if is_bottleneck:
        shortcut_in = (_pad_rows(ps, m_pad0).astype(jnp.bfloat16), wsb)

    stats0 = _bn_stats_pass(p0b, w0b, cpad, shortcut=shortcut_in, store_y=store0,
                            tile_m=tile0, num_tiles=nt0, cores=cores0,
                            vmem_limit=vmem_limit)
    idx = 0
    sum0, sq0 = stats0[idx], stats0[idx + 1]
    idx += 2
    if is_bottleneck:
        sums, sqs = stats0[idx], stats0[idx + 1]
        idx += 2
        scale_s, shift_s = _fold_bn(sums, sqs, _pad_row(params["gs"], cpad),
                                    _pad_row(params["betas"], cpad), m)
    y0_store = stats0[idx] if store0 else None

    scale0, shift0 = _fold_bn(sum0, sq0, _pad_row(params["g0"], cpad),
                              _pad_row(params["beta0"], cpad), m)

    hid = _bn_apply_pass(scale0, shift0, y_store=y0_store,
                         p=None if store0 else p0b, w=None if store0 else w0b,
                         residual=None, shortcut=None,
                         apply_act=True, out_dtype=jnp.bfloat16,
                         tile_m=tile0, num_tiles=nt0, cpad=cpad,
                         vmem_limit=vmem_limit)
    hid_nhwc = hid[:m, :c_out].reshape(n, ho, wo, c_out)   # stays NHWC, bf16

    # ---------------- conv_1 + bn_1 + residual add + GELU ----------------
    p1, ho1, wo1 = im2col_nhwc(hid_nhwc, kernel_size, (1, 1), padding)
    assert (ho1, wo1) == (ho, wo), "conv_1 must preserve spatial dims"
    k1 = p1.shape[1]
    w1 = _flat_w_nhwc(params["w1"])

    store1 = k1 > cpad
    tile1, nt1, cores1, m_pad1 = _plan_tiles(m, k1, cpad, ks, 4, vmem_limit)

    p1b = _pad_rows(p1, m_pad1).astype(jnp.bfloat16)
    w1b = jnp.pad(w1, ((0, 0), (0, cpad - c_out))).astype(jnp.bfloat16)

    stats1 = _bn_stats_pass(p1b, w1b, cpad, shortcut=None, store_y=store1,
                            tile_m=tile1, num_tiles=nt1, cores=cores1,
                            vmem_limit=vmem_limit)
    sum1, sq1 = stats1[0], stats1[1]
    y1_store = stats1[2] if store1 else None
    scale1, shift1 = _fold_bn(sum1, sq1, _pad_row(params["g1"], cpad),
                              _pad_row(params["beta1"], cpad), m)

    if is_bottleneck:
        shortcut_ap = (_pad_rows(ps, m_pad1).astype(jnp.bfloat16), wsb,
                       scale_s, shift_s)
        residual = None
    else:
        shortcut_ap = None
        res = x_nhwc.reshape(m, c_in).astype(jnp.bfloat16)
        residual = jnp.pad(res, ((0, m_pad1 - m), (0, cpad - c_in)))

    out = _bn_apply_pass(scale1, shift1, y_store=y1_store,
                         p=None if store1 else p1b, w=None if store1 else w1b,
                         residual=residual, shortcut=shortcut_ap,
                         apply_act=True, out_dtype=jnp.float32,
                         tile_m=tile1, num_tiles=nt1, cpad=cpad,
                         vmem_limit=vmem_limit)

    out_nhwc = out[:m, :c_out].reshape(n, ho, wo, c_out)
    return jnp.transpose(out_nhwc, (0, 3, 1, 2))     # single boundary transpose


# ---------------------------------------------------------------------------
# Pure-JAX reference (mirrors the PyTorch module, training-mode BN, all f32)
# ---------------------------------------------------------------------------

def reference_forward(x, params, kernel_size, stride, padding):
    def conv(v, w, b, s, p):
        y = jax.lax.conv_general_dilated(
            v, w, window_strides=s,
            padding=[(p[0], p[0]), (p[1], p[1])],
            dimension_numbers=("NCHW", "OIHW", "NCHW"))
        return y + b.reshape(1, -1, 1, 1)

    def bn(v, g, b):
        mean = v.mean(axis=(0, 2, 3), keepdims=True)
        var = jnp.square(v - mean).mean(axis=(0, 2, 3), keepdims=True)
        return (v - mean) / jnp.sqrt(var + BN_EPS) * g.reshape(1, -1, 1, 1) \
            + b.reshape(1, -1, 1, 1)

    c_in = x.shape[1]
    c_out = params["w0"].shape[0]
    if c_in != c_out:
        residual = bn(conv(x, params["ws"], params["bs"], stride, (0, 0)),
                      params["gs"], params["betas"])
    else:
        residual = x
    y = _gelu_exact(bn(conv(x, params["w0"], params["b0"], stride, padding),
                       params["g0"], params["beta0"]))
    y = bn(conv(y, params["w1"], params["b1"], (1, 1), padding),
           params["g1"], params["beta1"])
    return _gelu_exact(y + residual)


def init_params(key, c_in, c_out, kernel_size):
    kh, kw = kernel_size
    keys = jax.random.split(key, 12)
    nrm = lambda k, s, scale=0.1: scale * jax.random.normal(k, s, jnp.float32)
    return {
        "w0": nrm(keys[0], (c_out, c_in, kh, kw)),
        "b0": nrm(keys[1], (c_out,)),
        "g0": 1.0 + nrm(keys[2], (c_out,)),
        "beta0": nrm(keys[3], (c_out,)),
        "w1": nrm(keys[4], (c_out, c_out, kh, kw)),
        "b1": nrm(keys[5], (c_out,)),
        "g1": 1.0 + nrm(keys[6], (c_out,)),
        "beta1": nrm(keys[7], (c_out,)),
        "ws": nrm(keys[8], (c_out, c_in, 1, 1)),
        "bs": nrm(keys[9], (c_out,)),
        "gs": 1.0 + nrm(keys[10], (c_out,)),
        "betas": nrm(keys[11], (c_out,)),
    }


if __name__ == "__main__":
    def run_case(name, n, c_in, c_out, h, w, kernel_size, stride, padding, key):
        kx, kp = jax.random.split(key)
        x = jax.random.normal(kx, (n, c_in, h, w), jnp.float32)
        params = init_params(kp, c_in, c_out, kernel_size)
        fwd = jax.jit(functools.partial(res_block_forward,
                                        kernel_size=kernel_size,
                                        stride=stride, padding=padding))
        out = jax.block_until_ready(fwd(x, params))
        ref = reference_forward(x, params, kernel_size, stride, padding)
        assert out.shape == ref.shape, (name, out.shape, ref.shape)
        err = float(jnp.max(jnp.abs(out - ref)))
        # bf16 MXU operands / bf16 intermediates vs the all-f32 reference.
        assert jnp.allclose(out, ref, atol=5e-2, rtol=5e-2), (name, err)

    key = jax.random.PRNGKey(0)
    k1, k2 = jax.random.split(key)
    # Bottleneck shortcut (1x1 conv+BN fused into the main passes); K <= 128
    # so the apply pass takes the matmul-recompute path.
    run_case("bottleneck", 2, 4, 8, 16, 16, (3, 3), (1, 1), (1, 1), k1)
    # Identity shortcut; K = 144 > 128 so the stats pass stores the bf16 conv
    # output and the apply pass never re-reads the patches.
    run_case("identity", 1, 16, 16, 8, 8, (3, 3), (1, 1), (1, 1), k2)

    print("KERNEL_OK")
</pallas_src>

<mosaic_0001>
module attributes {stable_mosaic.version = 11 : i64} {
  func.func @_stats_kernel(%arg0: i32, %arg1: i32, %arg2: memref<512x36xbf16, #tpu.memory_space<vmem>>, %arg3: memref<36x128xbf16, #tpu.memory_space<vmem>>, %arg4: memref<512x4xbf16, #tpu.memory_space<vmem>>, %arg5: memref<4x128xbf16, #tpu.memory_space<vmem>>, %arg6: memref<8x128xf32, #tpu.memory_space<vmem>>, %arg7: memref<8x128xf32, #tpu.memory_space<vmem>>, %arg8: memref<8x128xf32, #tpu.memory_space<vmem>>, %arg9: memref<8x128xf32, #tpu.memory_space<vmem>>) attributes {dimension_semantics = [#tpu.dimension_semantics<parallel>, #tpu.dimension_semantics<arbitrary>], iteration_bounds = array<i64: 1, 1>, scalar_prefetch = 0 : i64, scratch_operands = 0 : i64, tpu.core_type = #tpu.core_type<tc>, window_params = [{transform_indices = @transform_0, window_bounds = array<i64: 512, 36>}, {pipeline_mode = #tpu.pipeline_mode<synchronous>, transform_indices = @transform_1, window_bounds = array<i64: 36, 128>}, {transform_indices = @transform_2, window_bounds = array<i64: 512, 4>}, {pipeline_mode = #tpu.pipeline_mode<synchronous>, transform_indices = @transform_3, window_bounds = array<i64: 4, 128>}, {transform_indices = @transform_4, window_bounds = array<i64: 8, 128>}, {transform_indices = @transform_5, window_bounds = array<i64: 8, 128>}, {transform_indices = @transform_6, window_bounds = array<i64: 8, 128>}, {transform_indices = @transform_7, window_bounds = array<i64: 8, 128>}]} {
    %c0_i32 = arith.constant 0 : i32
    %0 = arith.cmpi eq, %arg1, %c0_i32 : i32
    %1 = arith.extui %0 : i1 to i32
    %c0_i32_0 = arith.constant 0 : i32
    %2 = arith.cmpi ne, %1, %c0_i32_0 : i32
    scf.if %2 {
      %cst_29 = arith.constant 0.000000e+00 : f32
      %31 = vector.broadcast %cst_29 : f32 to vector<8x128xf32>
      %c0_30 = arith.constant 0 : index
      %c0_31 = arith.constant 0 : index
      %32 = vector.load %arg6[%c0_30, %c0_31] : memref<8x128xf32, #tpu.memory_space<vmem>>, vector<8x128xf32>
      tpu.vector_store %arg6[%c0_30, %c0_31], %31 {strides = array<i32>} : memref<8x128xf32, #tpu.memory_space<vmem>>, vector<8x128xf32>,
      %cst_32 = arith.constant 0.000000e+00 : f32
      %33 = vector.broadcast %cst_32 : f32 to vector<8x128xf32>
      %c0_33 = arith.constant 0 : index
      %c0_34 = arith.constant 0 : index
      %34 = vector.load %arg7[%c0_33, %c0_34] : memref<8x128xf32, #tpu.memory_space<vmem>>, vector<8x128xf32>
      tpu.vector_store %arg7[%c0_33, %c0_34], %33 {strides = array<i32>} : memref<8x128xf32, #tpu.memory_space<vmem>>, vector<8x128xf32>,
      %cst_35 = arith.constant 0.000000e+00 : f32
      %35 = vector.broadcast %cst_35 : f32 to vector<8x128xf32>
      %c0_36 = arith.constant 0 : index
      %c0_37 = arith.constant 0 : index
      %36 = vector.load %arg8[%c0_36, %c0_37] : memref<8x128xf32, #tpu.memory_space<vmem>>, vector<8x128xf32>
      tpu.vector_store %arg8[%c0_36, %c0_37], %35 {strides = array<i32>} : memref<8x128xf32, #tpu.memory_space<vmem>>, vector<8x128xf32>,
      %cst_38 = arith.constant 0.000000e+00 : f32
      %37 = vector.broadcast %cst_38 : f32 to vector<8x128xf32>
      %c0_39 = arith.constant 0 : index
      %c0_40 = arith.constant 0 : index
      %38 = vector.load %arg9[%c0_39, %c0_40] : memref<8x128xf32, #tpu.memory_space<vmem>>, vector<8x128xf32>
      tpu.vector_store %arg9[%c0_39, %c0_40], %37 {strides = array<i32>} : memref<8x128xf32, #tpu.memory_space<vmem>>, vector<8x128xf32>,
    } else {
    }
    %c0 = arith.constant 0 : index
    %c0_1 = arith.constant 0 : index
    %3 = vector.load %arg2[%c0, %c0_1] : memref<512x36xbf16, #tpu.memory_space<vmem>>, vector<512x36xbf16>
    %c0_2 = arith.constant 0 : index
    %c0_3 = arith.constant 0 : index
    %4 = vector.load %arg3[%c0_2, %c0_3] : memref<36x128xbf16, #tpu.memory_space<vmem>>, vector<36x128xbf16>
    %cst = arith.constant dense<0.000000e+00> : vector<512x128xf32>
    %5 = tpu.matmul %3, %4, %cst {dimension_numbers = #tpu.dot_dimension_numbers<[1], [0], [0], [1], [0, 0, 1, 1], [], []>} : vector<512x36xbf16>, vector<36x128xbf16>, vector<512x128xf32> -> vector<512x128xf32>
    %c0_4 = arith.constant 0 : index
    %c0_5 = arith.constant 0 : index
    %6 = vector.load %arg6[%c0_4, %c0_5] : memref<8x128xf32, #tpu.memory_space<vmem>>, vector<1x128xf32>
    %cst_6 = arith.constant dense<0.000000e+00> : vector<128xf32>
    %7 = vector.multi_reduction <add>, %5, %cst_6 [0] : vector<512x128xf32> to vector<128xf32>
    %8 = vector.shape_cast %7 : vector<128xf32> to vector<1x128xf32>
    %9 = arith.addf %6, %8 : vector<1x128xf32>
    %c0_7 = arith.constant 0 : index
    %c0_8 = arith.constant 0 : index
    %10 = vector.load %arg6[%c0_7, %c0_8] : memref<8x128xf32, #tpu.memory_space<vmem>>, vector<1x128xf32>
    tpu.vector_store %arg6[%c0_7, %c0_8], %9 {strides = array<i32>} : memref<8x128xf32, #tpu.memory_space<vmem>>, vector<1x128xf32>,
    %c0_9 = arith.constant 0 : index
    %c0_10 = arith.constant 0 : index
    %11 = vector.load %arg7[%c0_9, %c0_10] : memref<8x128xf32, #tpu.memory_space<vmem>>, vector<1x128xf32>
    %12 = arith.mulf %5, %5 : vector<512x128xf32>
    %cst_11 = arith.constant dense<0.000000e+00> : vector<128xf32>
    %13 = vector.multi_reduction <add>, %12, %cst_11 [0] : vector<512x128xf32> to vector<128xf32>
    %14 = vector.shape_cast %13 : vector<128xf32> to vector<1x128xf32>
    %15 = arith.addf %11, %14 : vector<1x128xf32>
    %c0_12 = arith.constant 0 : index
    %c0_13 = arith.constant 0 : index
    %16 = vector.load %arg7[%c0_12, %c0_13] : memref<8x128xf32, #tpu.memory_space<vmem>>, vector<1x128xf32>
    tpu.vector_store %arg7[%c0_12, %c0_13], %15 {strides = array<i32>} : memref<8x128xf32, #tpu.memory_space<vmem>>, vector<1x128xf32>,
    %c0_14 = arith.constant 0 : index
    %c0_15 = arith.constant 0 : index
    %17 = vector.load %arg4[%c0_14, %c0_15] : memref<512x4xbf16, #tpu.memory_space<vmem>>, vector<512x4xbf16>
    %c0_16 = arith.constant 0 : index
    %c0_17 = arith.constant 0 : index
    %18 = vector.load %arg5[%c0_16, %c0_17] : memref<4x128xbf16, #tpu.memory_space<vmem>>, vector<4x128xbf16>
    %cst_18 = arith.constant dense<0.000000e+00> : vector<512x128xf32>
    %19 = tpu.matmul %17, %18, %cst_18 {dimension_numbers = #tpu.dot_dimension_numbers<[1], [0], [0], [1], [0, 0, 1, 1], [], []>} : vector<512x4xbf16>, vector<4x128xbf16>, vector<512x128xf32> -> vector<512x128xf32>
    %c0_19 = arith.constant 0 : index
    %c0_20 = arith.constant 0 : index
    %20 = vector.load %arg8[%c0_19, %c0_20] : memref<8x128xf32, #tpu.memory_space<vmem>>, vector<1x128xf32>
    %cst_21 = arith.constant dense<0.000000e+00> : vector<128xf32>
    %21 = vector.multi_reduction <add>, %19, %cst_21 [0] : vector<512x128xf32> to vector<128xf32>
    %22 = vector.shape_cast %21 : vector<128xf32> to vector<1x128xf32>
    %23 = arith.addf %20, %22 : vector<1x128xf32>
    %c0_22 = arith.constant 0 : index
    %c0_23 = arith.constant 0 : index
    %24 = vector.load %arg8[%c0_22, %c0_23] : memref<8x128xf32, #tpu.memory_space<vmem>>, vector<1x128xf32>
    tpu.vector_store %arg8[%c0_22, %c0_23], %23 {strides = array<i32>} : memref<8x128xf32, #tpu.memory_space<vmem>>, vector<1x128xf32>,
    %c0_24 = arith.constant 0 : index
    %c0_25 = arith.constant 0 : index
    %25 = vector.load %arg9[%c0_24, %c0_25] : memref<8x128xf32, #tpu.memory_space<vmem>>, vector<1x128xf32>
    %26 = arith.mulf %19, %19 : vector<512x128xf32>
    %cst_26 = arith.constant dense<0.000000e+00> : vector<128xf32>
    %27 = vector.multi_reduction <add>, %26, %cst_26 [0] : vector<512x128xf32> to vector<128xf32>
    %28 = vector.shape_cast %27 : vector<128xf32> to vector<1x128xf32>
    %29 = arith.addf %25, %28 : vector<1x128xf32>
    %c0_27 = arith.constant 0 : index
    %c0_28 = arith.constant 0 : index
    %30 = vector.load %arg9[%c0_27, %c0_28] : memref<8x128xf32, #tpu.memory_space<vmem>>, vector<1x128xf32>
    tpu.vector_store %arg9[%c0_27, %c0_28], %29 {strides = array<i32>} : memref<8x128xf32, #tpu.memory_space<vmem>>, vector<1x128xf32>,
    return
  }
  func.func @transform_0(%arg0: i32, %arg1: i32) -> (i32, i32) {
    %c1_i32 = arith.constant 1 : i32
    %0 = arith.muli %arg0, %c1_i32 : i32
    %1 = arith.addi %0, %arg1 : i32
    %c0_i32 = arith.constant 0 : i32
    %c0_i32_0 = arith.constant 0 : i32
    return %1, %c0_i32 : i32, i32
  }
  func.func @transform_1(%arg0: i32, %arg1: i32) -> (i32, i32) {
    %c0_i32 = arith.constant 0 : i32
    %c0_i32_0 = arith.constant 0 : i32
    %c0_i32_1 = arith.constant 0 : i32
    return %c0_i32, %c0_i32_0 : i32, i32
  }
  func.func @transform_2(%arg0: i32, %arg1: i32) -> (i32, i32) {
    %c1_i32 = arith.constant 1 : i32
    %0 = arith.muli %arg0, %c1_i32 : i32
    %1 = arith.addi %0, %arg1 : i32
    %c0_i32 = arith.constant 0 : i32
    %c0_i32_0 = arith.constant 0 : i32
    return %1, %c0_i32 : i32, i32
  }
  func.func @transform_3(%arg0: i32, %arg1: i32) -> (i32, i32) {
    %c0_i32 = arith.constant 0 : i32
    %c0_i32_0 = arith.constant 0 : i32
    %c0_i32_1 = arith.constant 0 : i32
    return %c0_i32, %c0_i32_0 : i32, i32
  }
  func.func @transform_4(%arg0: i32, %arg1: i32) -> (i32, i32) {
    %c0_i32 = arith.constant 0 : i32
    %c0_i32_0 = arith.constant 0 : i32
    return %arg0, %c0_i32 : i32, i32
  }
  func.func @transform_5(%arg0: i32, %arg1: i32) -> (i32, i32) {
    %c0_i32 = arith.constant 0 : i32
    %c0_i32_0 = arith.constant 0 : i32
    return %arg0, %c0_i32 : i32, i32
  }
  func.func @transform_6(%arg0: i32, %arg1: i32) -> (i32, i32) {
    %c0_i32 = arith.constant 0 : i32
    %c0_i32_0 = arith.constant 0 : i32
    return %arg0, %c0_i32 : i32, i32
  }
  func.func @transform_7(%arg0: i32, %arg1: i32) -> (i32, i32) {
    %c0_i32 = arith.constant 0 : i32
    %c0_i32_0 = arith.constant 0 : i32
    return %arg0, %c0_i32 : i32, i32
  }
}

module attributes {stable_mosaic.version = 11 : i64} {
  func.func @_apply_kernel(%arg0: i32, %arg1: memref<512x36xbf16, #tpu.memory_space<vmem>>, %arg2: memref<36x128xbf16, #tpu.memory_space<vmem>>, %arg3: memref<1x128xf32, #tpu.memory_space<vmem>>, %arg4: memref<1x128xf32, #tpu.memory_space<vmem>>, %arg5: memref<512x128xbf16, #tpu.memory_space<vmem>>) attributes {dimension_semantics = [#tpu.dimension_semantics<parallel>], iteration_bounds = array<i64: 1>, scalar_prefetch = 0 : i64, scratch_operands = 0 : i64, tpu.core_type = #tpu.core_type<tc>, window_params = [{transform_indices = @transform_0, window_bounds = array<i64: 512, 36>}, {pipeline_mode = #tpu.pipeline_mode<synchronous>, transform_indices = @transform_1, window_bounds = array<i64: 36, 128>}, {pipeline_mode = #tpu.pipeline_mode<synchronous>, transform_indices = @transform_2, window_bounds = array<i64: 1, 128>}, {pipeline_mode = #tpu.pipeline_mode<synchronous>, transform_indices = @transform_3, window_bounds = array<i64: 1, 128>}, {transform_indices = @transform_4, window_bounds = array<i64: 512, 128>}]} {
    %c0 = arith.constant 0 : index
    %c0_0 = arith.constant 0 : index
    %0 = vector.load %arg1[%c0, %c0_0] : memref<512x36xbf16, #tpu.memory_space<vmem>>, vector<512x36xbf16>
    %c0_1 = arith.constant 0 : index
    %c0_2 = arith.constant 0 : index
    %1 = vector.load %arg2[%c0_1, %c0_2] : memref<36x128xbf16, #tpu.memory_space<vmem>>, vector<36x128xbf16>
    %cst = arith.constant dense<0.000000e+00> : vector<512x128xf32>
    %2 = tpu.matmul %0, %1, %cst {dimension_numbers = #tpu.dot_dimension_numbers<[1], [0], [0], [1], [0, 0, 1, 1], [], []>} : vector<512x36xbf16>, vector<36x128xbf16>, vector<512x128xf32> -> vector<512x128xf32>
    %c0_3 = arith.constant 0 : index
    %c0_4 = arith.constant 0 : index
    %3 = vector.load %arg3[%c0_3, %c0_4] : memref<1x128xf32, #tpu.memory_space<vmem>>, vector<1x128xf32>
    %4 = vector.broadcast %3 : vector<1x128xf32> to vector<512x128xf32>
    %5 = arith.mulf %2, %4 : vector<512x128xf32>
    %c0_5 = arith.constant 0 : index
    %c0_6 = arith.constant 0 : index
    %6 = vector.load %arg4[%c0_5, %c0_6] : memref<1x128xf32, #tpu.memory_space<vmem>>, vector<1x128xf32>
    %7 = vector.broadcast %6 : vector<1x128xf32> to vector<512x128xf32>
    %8 = arith.addf %5, %7 : vector<512x128xf32>
    %cst_7 = arith.constant 5.000000e-01 : f32
    %9 = vector.broadcast %cst_7 : f32 to vector<512x128xf32>
    %10 = arith.mulf %9, %8 : vector<512x128xf32>
    %cst_8 = arith.constant 0.707106769 : f32
    %11 = vector.broadcast %cst_8 : f32 to vector<512x128xf32>
    %12 = arith.mulf %8, %11 : vector<512x128xf32>
    %13 = math.absf %12 : vector<512x128xf32>
    %cst_9 = arith.constant 0.327591091 : f32
    %14 = vector.broadcast %cst_9 : f32 to vector<512x128xf32>
    %15 = arith.mulf %14, %13 : vector<512x128xf32>
    %cst_10 = arith.constant 1.000000e+00 : f32
    %16 = vector.broadcast %cst_10 : f32 to vector<512x128xf32>
    %17 = arith.addf %16, %15 : vector<512x128xf32>
    %cst_11 = arith.constant 1.000000e+00 : f32
    %18 = vector.broadcast %cst_11 : f32 to vector<512x128xf32>
    %19 = arith.divf %18, %17 : vector<512x128xf32>
    %cst_12 = arith.constant 1.06140542 : f32
    %20 = vector.broadcast %cst_12 : f32 to vector<512x128xf32>
    %21 = arith.mulf %20, %19 : vector<512x128xf32>
    %cst_13 = arith.constant -1.45315206 : f32
    %22 = vector.broadcast %cst_13 : f32 to vector<512x128xf32>
    %23 = arith.addf %21, %22 : vector<512x128xf32>
    %24 = arith.mulf %23, %19 : vector<512x128xf32>
    %cst_14 = arith.constant 1.42141378 : f32
    %25 = vector.broadcast %cst_14 : f32 to vector<512x128xf32>
    %26 = arith.addf %24, %25 : vector<512x128xf32>
    %27 = arith.mulf %26, %19 : vector<512x128xf32>
    %cst_15 = arith.constant -0.284496725 : f32
    %28 = vector.broadcast %cst_15 : f32 to vector<512x128xf32>
    %29 = arith.addf %27, %28 : vector<512x128xf32>
    %30 = arith.mulf %29, %19 : vector<512x128xf32>
    %cst_16 = arith.constant 0.254829586 : f32
    %31 = vector.broadcast %cst_16 : f32 to vector<512x128xf32>
    %32 = arith.addf %30, %31 : vector<512x128xf32>
    %33 = arith.mulf %32, %19 : vector<512x128xf32>
    %cst_17 = arith.constant 0.000000e+00 : f32
    %34 = vector.broadcast %cst_17 : f32 to vector<512x128xf32>
    %35 = arith.subf %34, %13 : vector<512x128xf32>
    %36 = arith.mulf %35, %13 : vector<512x128xf32>
    %37 = math.exp %36 : vector<512x128xf32>
    %38 = arith.mulf %33, %37 : vector<512x128xf32>
    %cst_18 = arith.constant 1.000000e+00 : f32
    %39 = vector.broadcast %cst_18 : f32 to vector<512x128xf32>
    %40 = arith.subf %39, %38 : vector<512x128xf32>
    %cst_19 = arith.constant 0.000000e+00 : f32
    %41 = vector.broadcast %cst_19 : f32 to vector<512x128xf32>
    %42 = arith.cmpf olt, %12, %41 : vector<512x128xf32>
    %cst_20 = arith.constant 0.000000e+00 : f32
    %43 = vector.broadcast %cst_20 : f32 to vector<512x128xf32>
    %44 = arith.subf %43, %40 : vector<512x128xf32>
    %45 = arith.select %42, %44, %40 : vector<512x128xi1>, vector<512x128xf32>
    %cst_21 = arith.constant 1.000000e+00 : f32
    %46 = vector.broadcast %cst_21 : f32 to vector<512x128xf32>
    %47 = arith.addf %46, %45 : vector<512x128xf32>
    %48 = arith.mulf %10, %47 : vector<512x128xf32>
    %49 = arith.truncf %48 : vector<512x128xf32> to vector<512x128xbf16>
    %c0_22 = arith.constant 0 : index
    %c0_23 = arith.constant 0 : index
    %50 = vector.load %arg5[%c0_22, %c0_23] : memref<512x128xbf16, #tpu.memory_space<vmem>>, vector<512x128xbf16>
    tpu.vector_store %arg5[%c0_22, %c0_23], %49 {strides = array<i32>} : memref<512x128xbf16, #tpu.memory_space<vmem>>, vector<512x128xbf16>,
    return
  }
  func.func @transform_0(%arg0: i32) -> (i32, i32) {
    %c0_i32 = arith.constant 0 : i32
    %c0_i32_0 = arith.constant 0 : i32
    return %arg0, %c0_i32 : i32, i32
  }
  func.func @transform_1(%arg0: i32) -> (i32, i32) {
    %c0_i32 = arith.constant 0 : i32
    %c0_i32_0 = arith.constant 0 : i32
    %c0_i32_1 = arith.constant 0 : i32
    return %c0_i32, %c0_i32_0 : i32, i32
  }
  func.func @transform_2(%arg0: i32) -> (i32, i32) {
    %c0_i32 = arith.constant 0 : i32
    %c0_i32_0 = arith.constant 0 : i32
    %c0_i32_1 = arith.constant 0 : i32
    return %c0_i32, %c0_i32_0 : i32, i32
  }
  func.func @transform_3(%arg0: i32) -> (i32, i32) {
    %c0_i32 = arith.constant 0 : i32
    %c0_i32_0 = arith.constant 0 : i32
    %c0_i32_1 = arith.constant 0 : i32
    return %c0_i32, %c0_i32_0 : i32, i32
  }
  func.func @transform_4(%arg0: i32) -> (i32, i32) {
    %c0_i32 = arith.constant 0 : i32
    %c0_i32_0 = arith.constant 0 : i32
    return %arg0, %c0_i32 : i32, i32
  }
}

module attributes {stable_mosaic.version = 11 : i64} {
  func.func @_apply_kernel(%arg0: i32, %arg1: memref<512x72xbf16, #tpu.memory_space<vmem>>, %arg2: memref<72x128xbf16, #tpu.memory_space<vmem>>, %arg3: memref<1x128xf32, #tpu.memory_space<vmem>>, %arg4: memref<1x128xf32, #tpu.memory_space<vmem>>, %arg5: memref<512x4xbf16, #tpu.memory_space<vmem>>, %arg6: memref<4x128xbf16, #tpu.memory_space<vmem>>, %arg7: memref<1x128xf32, #tpu.memory_space<vmem>>, %arg8: memref<1x128xf32, #tpu.memory_space<vmem>>, %arg9: memref<512x128xf32, #tpu.memory_space<vmem>>) attributes {dimension_semantics = [#tpu.dimension_semantics<parallel>], iteration_bounds = array<i64: 1>, scalar_prefetch = 0 : i64, scratch_operands = 0 : i64, tpu.core_type = #tpu.core_type<tc>, window_params = [{transform_indices = @transform_0, window_bounds = array<i64: 512, 72>}, {pipeline_mode = #tpu.pipeline_mode<synchronous>, transform_indices = @transform_1, window_bounds = array<i64: 72, 128>}, {pipeline_mode = #tpu.pipeline_mode<synchronous>, transform_indices = @transform_2, window_bounds = array<i64: 1, 128>}, {pipeline_mode = #tpu.pipeline_mode<synchronous>, transform_indices = @transform_3, window_bounds = array<i64: 1, 128>}, {transform_indices = @transform_4, window_bounds = array<i64: 512, 4>}, {pipeline_mode = #tpu.pipeline_mode<synchronous>, transform_indices = @transform_5, window_bounds = array<i64: 4, 128>}, {pipeline_mode = #tpu.pipeline_mode<synchronous>, transform_indices = @transform_6, window_bounds = array<i64: 1, 128>}, {pipeline_mode = #tpu.pipeline_mode<synchronous>, transform_indices = @transform_7, window_bounds = array<i64: 1, 128>}, {transform_indices = @transform_8, window_bounds = array<i64: 512, 128>}]} {
    %c0 = arith.constant 0 : index
    %c0_0 = arith.constant 0 : index
    %0 = vector.load %arg1[%c0, %c0_0] : memref<512x72xbf16, #tpu.memory_space<vmem>>, vector<512x72xbf16>
    %c0_1 = arith.constant 0 : index
    %c0_2 = arith.constant 0 : index
    %1 = vector.load %arg2[%c0_1, %c0_2] : memref<72x128xbf16, #tpu.memory_space<vmem>>, vector<72x128xbf16>
    %cst = arith.constant dense<0.000000e+00> : vector<512x128xf32>
    %2 = tpu.matmul %0, %1, %cst {dimension_numbers = #tpu.dot_dimension_numbers<[1], [0], [0], [1], [0, 0, 1, 1], [], []>} : vector<512x72xbf16>, vector<72x128xbf16>, vector<512x128xf32> -> vector<512x128xf32>
    %c0_3 = arith.constant 0 : index
    %c0_4 = arith.constant 0 : index
    %3 = vector.load %arg3[%c0_3, %c0_4] : memref<1x128xf32, #tpu.memory_space<vmem>>, vector<1x128xf32>
    %4 = vector.broadcast %3 : vector<1x128xf32> to vector<512x128xf32>
    %5 = arith.mulf %2, %4 : vector<512x128xf32>
    %c0_5 = arith.constant 0 : index
    %c0_6 = arith.constant 0 : index
    %6 = vector.load %arg4[%c0_5, %c0_6] : memref<1x128xf32, #tpu.memory_space<vmem>>, vector<1x128xf32>
    %7 = vector.broadcast %6 : vector<1x128xf32> to vector<512x128xf32>
    %8 = arith.addf %5, %7 : vector<512x128xf32>
    %c0_7 = arith.constant 0 : index
    %c0_8 = arith.constant 0 : index
    %9 = vector.load %arg5[%c0_7, %c0_8] : memref<512x4xbf16, #tpu.memory_space<vmem>>, vector<512x4xbf16>
    %c0_9 = arith.constant 0 : index
    %c0_10 = arith.constant 0 : index
    %10 = vector.load %arg6[%c0_9, %c0_10] : memref<4x128xbf16, #tpu.memory_space<vmem>>, vector<4x128xbf16>
    %cst_11 = arith.constant dense<0.000000e+00> : vector<512x128xf32>
    %11 = tpu.matmul %9, %10, %cst_11 {dimension_numbers = #tpu.dot_dimension_numbers<[1], [0], [0], [1], [0, 0, 1, 1], [], []>} : vector<512x4xbf16>, vector<4x128xbf16>, vector<512x128xf32> -> vector<512x128xf32>
    %c0_12 = arith.constant 0 : index
    %c0_13 = arith.constant 0 : index
    %12 = vector.load %arg7[%c0_12, %c0_13] : memref<1x128xf32, #tpu.memory_space<vmem>>, vector<1x128xf32>
    %13 = vector.broadcast %12 : vector<1x128xf32> to vector<512x128xf32>
    %14 = arith.mulf %11, %13 : vector<512x128xf32>
    %c0_14 = arith.constant 0 : index
    %c0_15 = arith.constant 0 : index
    %15 = vector.load %arg8[%c0_14, %c0_15] : memref<1x128xf32, #tpu.memory_space<vmem>>, vector<1x128xf32>
    %16 = vector.broadcast %15 : vector<1x128xf32> to vector<512x128xf32>
    %17 = arith.addf %14, %16 : vector<512x128xf32>
    %18 = arith.addf %8, %17 : vector<512x128xf32>
    %cst_16 = arith.constant 5.000000e-01 : f32
    %19 = vector.broadcast %cst_16 : f32 to vector<512x128xf32>
    %20 = arith.mulf %19, %18 : vector<512x128xf32>
    %cst_17 = arith.constant 0.707106769 : f32
    %21 = vector.broadcast %cst_17 : f32 to vector<512x128xf32>
    %22 = arith.mulf %18, %21 : vector<512x128xf32>
    %23 = math.absf %22 : vector<512x128xf32>
    %cst_18 = arith.constant 0.327591091 : f32
    %24 = vector.broadcast %cst_18 : f32 to vector<512x128xf32>
    %25 = arith.mulf %24, %23 : vector<512x128xf32>
    %cst_19 = arith.constant 1.000000e+00 : f32
    %26 = vector.broadcast %cst_19 : f32 to vector<512x128xf32>
    %27 = arith.addf %26, %25 : vector<512x128xf32>
    %cst_20 = arith.constant 1.000000e+00 : f32
    %28 = vector.broadcast %cst_20 : f32 to vector<512x128xf32>
    %29 = arith.divf %28, %27 : vector<512x128xf32>
    %cst_21 = arith.constant 1.06140542 : f32
    %30 = vector.broadcast %cst_21 : f32 to vector<512x128xf32>
    %31 = arith.mulf %30, %29 : vector<512x128xf32>
    %cst_22 = arith.constant -1.45315206 : f32
    %32 = vector.broadcast %cst_22 : f32 to vector<512x128xf32>
    %33 = arith.addf %31, %32 : vector<512x128xf32>
    %34 = arith.mulf %33, %29 : vector<512x128xf32>
    %cst_23 = arith.constant 1.42141378 : f32
    %35 = vector.broadcast %cst_23 : f32 to vector<512x128xf32>
    %36 = arith.addf %34, %35 : vector<512x128xf32>
    %37 = arith.mulf %36, %29 : vector<512x128xf32>
    %cst_24 = arith.constant -0.284496725 : f32
    %38 = vector.broadcast %cst_24 : f32 to vector<512x128xf32>
    %39 = arith.addf %37, %38 : vector<512x128xf32>
    %40 = arith.mulf %39, %29 : vector<512x128xf32>
    %cst_25 = arith.constant 0.254829586 : f32
    %41 = vector.broadcast %cst_25 : f32 to vector<512x128xf32>
    %42 = arith.addf %40, %41 : vector<512x128xf32>
    %43 = arith.mulf %42, %29 : vector<512x128xf32>
    %cst_26 = arith.constant 0.000000e+00 : f32
    %44 = vector.broadcast %cst_26 : f32 to vector<512x128xf32>
    %45 = arith.subf %44, %23 : vector<512x128xf32>
    %46 = arith.mulf %45, %23 : vector<512x128xf32>
    %47 = math.exp %46 : vector<512x128xf32>
    %48 = arith.mulf %43, %47 : vector<512x128xf32>
    %cst_27 = arith.constant 1.000000e+00 : f32
    %49 = vector.broadcast %cst_27 : f32 to vector<512x128xf32>
    %50 = arith.subf %49, %48 : vector<512x128xf32>
    %cst_28 = arith.constant 0.000000e+00 : f32
    %51 = vector.broadcast %cst_28 : f32 to vector<512x128xf32>
    %52 = arith.cmpf olt, %22, %51 : vector<512x128xf32>
    %cst_29 = arith.constant 0.000000e+00 : f32
    %53 = vector.broadcast %cst_29 : f32 to vector<512x128xf32>
    %54 = arith.subf %53, %50 : vector<512x128xf32>
    %55 = arith.select %52, %54, %50 : vector<512x128xi1>, vector<512x128xf32>
    %cst_30 = arith.constant 1.000000e+00 : f32
    %56 = vector.broadcast %cst_30 : f32 to vector<512x128xf32>
    %57 = arith.addf %56, %55 : vector<512x128xf32>
    %58 = arith.mulf %20, %57 : vector<512x128xf32>
    %c0_31 = arith.constant 0 : index
    %c0_32 = arith.constant 0 : index
    %59 = vector.load %arg9[%c0_31, %c0_32] : memref<512x128xf32, #tpu.memory_space<vmem>>, vector<512x128xf32>
    tpu.vector_store %arg9[%c0_31, %c0_32], %58 {strides = array<i32>} : memref<512x128xf32, #tpu.memory_space<vmem>>, vector<512x128xf32>,
    return
  }
  func.func @transform_0(%arg0: i32) -> (i32, i32) {
    %c0_i32 = arith.constant 0 : i32
    %c0_i32_0 = arith.constant 0 : i32
    return %arg0, %c0_i32 : i32, i32
  }
  func.func @transform_1(%arg0: i32) -> (i32, i32) {
    %c0_i32 = arith.constant 0 : i32
    %c0_i32_0 = arith.constant 0 : i32
    %c0_i32_1 = arith.constant 0 : i32
    return %c0_i32, %c0_i32_0 : i32, i32
  }
  func.func @transform_2(%arg0: i32) -> (i32, i32) {
    %c0_i32 = arith.constant 0 : i32
    %c0_i32_0 = arith.constant 0 : i32
    %c0_i32_1 = arith.constant 0 : i32
    return %c0_i32, %c0_i32_0 : i32, i32
  }
  func.func @transform_3(%arg0: i32) -> (i32, i32) {
    %c0_i32 = arith.constant 0 : i32
    %c0_i32_0 = arith.constant 0 : i32
    %c0_i32_1 = arith.constant 0 : i32
    return %c0_i32, %c0_i32_0 : i32, i32
  }
  func.func @transform_4(%arg0: i32) -> (i32, i32) {
    %c0_i32 = arith.constant 0 : i32
    %c0_i32_0 = arith.constant 0 : i32
    return %arg0, %c0_i32 : i32, i32
  }
  func.func @transform_5(%arg0: i32) -> (i32, i32) {
    %c0_i32 = arith.constant 0 : i32
    %c0_i32_0 = arith.constant 0 : i32
    %c0_i32_1 = arith.constant 0 : i32
    return %c0_i32, %c0_i32_0 : i32, i32
  }
  func.func @transform_6(%arg0: i32) -> (i32, i32) {
    %c0_i32 = arith.constant 0 : i32
    %c0_i32_0 = arith.constant 0 : i32
    %c0_i32_1 = arith.constant 0 : i32
    return %c0_i32, %c0_i32_0 : i32, i32
  }
  func.func @transform_7(%arg0: i32) -> (i32, i32) {
    %c0_i32 = arith.constant 0 : i32
    %c0_i32_0 = arith.constant 0 : i32
    %c0_i32_1 = arith.constant 0 : i32
    return %c0_i32, %c0_i32_0 : i32, i32
  }
  func.func @transform_8(%arg0: i32) -> (i32, i32) {
    %c0_i32 = arith.constant 0 : i32
    %c0_i32_0 = arith.constant 0 : i32
    return %arg0, %c0_i32 : i32, i32
  }
}

module attributes {stable_mosaic.version = 11 : i64} {
  func.func @_stats_kernel(%arg0: i32, %arg1: i32, %arg2: memref<512x72xbf16, #tpu.memory_space<vmem>>, %arg3: memref<72x128xbf16, #tpu.memory_space<vmem>>, %arg4: memref<8x128xf32, #tpu.memory_space<vmem>>, %arg5: memref<8x128xf32, #tpu.memory_space<vmem>>) attributes {dimension_semantics = [#tpu.dimension_semantics<parallel>, #tpu.dimension_semantics<arbitrary>], iteration_bounds = array<i64: 1, 1>, scalar_prefetch = 0 : i64, scratch_operands = 0 : i64, tpu.core_type = #tpu.core_type<tc>, window_params = [{transform_indices = @transform_0, window_bounds = array<i64: 512, 72>}, {pipeline_mode = #tpu.pipeline_mode<synchronous>, transform_indices = @transform_1, window_bounds = array<i64: 72, 128>}, {transform_indices = @transform_2, window_bounds = array<i64: 8, 128>}, {transform_indices = @transform_3, window_bounds = array<i64: 8, 128>}]} {
    %c0_i32 = arith.constant 0 : i32
    %0 = arith.cmpi eq, %arg1, %c0_i32 : i32
    %1 = arith.extui %0 : i1 to i32
    %c0_i32_0 = arith.constant 0 : i32
    %2 = arith.cmpi ne, %1, %c0_i32_0 : i32
    scf.if %2 {
      %cst_14 = arith.constant 0.000000e+00 : f32
      %17 = vector.broadcast %cst_14 : f32 to vector<8x128xf32>
      %c0_15 = arith.constant 0 : index
      %c0_16 = arith.constant 0 : index
      %18 = vector.load %arg4[%c0_15, %c0_16] : memref<8x128xf32, #tpu.memory_space<vmem>>, vector<8x128xf32>
      tpu.vector_store %arg4[%c0_15, %c0_16], %17 {strides = array<i32>} : memref<8x128xf32, #tpu.memory_space<vmem>>, vector<8x128xf32>,
      %cst_17 = arith.constant 0.000000e+00 : f32
      %19 = vector.broadcast %cst_17 : f32 to vector<8x128xf32>
      %c0_18 = arith.constant 0 : index
      %c0_19 = arith.constant 0 : index
      %20 = vector.load %arg5[%c0_18, %c0_19] : memref<8x128xf32, #tpu.memory_space<vmem>>, vector<8x128xf32>
      tpu.vector_store %arg5[%c0_18, %c0_19], %19 {strides = array<i32>} : memref<8x128xf32, #tpu.memory_space<vmem>>, vector<8x128xf32>,
    } else {
    }
    %c0 = arith.constant 0 : index
    %c0_1 = arith.constant 0 : index
    %3 = vector.load %arg2[%c0, %c0_1] : memref<512x72xbf16, #tpu.memory_space<vmem>>, vector<512x72xbf16>
    %c0_2 = arith.constant 0 : index
    %c0_3 = arith.constant 0 : index
    %4 = vector.load %arg3[%c0_2, %c0_3] : memref<72x128xbf16, #tpu.memory_space<vmem>>, vector<72x128xbf16>
    %cst = arith.constant dense<0.000000e+00> : vector<512x128xf32>
    %5 = tpu.matmul %3, %4, %cst {dimension_numbers = #tpu.dot_dimension_numbers<[1], [0], [0], [1], [0, 0, 1, 1], [], []>} : vector<512x72xbf16>, vector<72x128xbf16>, vector<512x128xf32> -> vector<512x128xf32>
    %c0_4 = arith.constant 0 : index
    %c0_5 = arith.constant 0 : index
    %6 = vector.load %arg4[%c0_4, %c0_5] : memref<8x128xf32, #tpu.memory_space<vmem>>, vector<1x128xf32>
    %cst_6 = arith.constant dense<0.000000e+00> : vector<128xf32>
    %7 = vector.multi_reduction <add>, %5, %cst_6 [0] : vector<512x128xf32> to vector<128xf32>
    %8 = vector.shape_cast %7 : vector<128xf32> to vector<1x128xf32>
    %9 = arith.addf %6, %8 : vector<1x128xf32>
    %c0_7 = arith.constant 0 : index
    %c0_8 = arith.constant 0 : index
    %10 = vector.load %arg4[%c0_7, %c0_8] : memref<8x128xf32, #tpu.memory_space<vmem>>, vector<1x128xf32>
    tpu.vector_store %arg4[%c0_7, %c0_8], %9 {strides = array<i32>} : memref<8x128xf32, #tpu.memory_space<vmem>>, vector<1x128xf32>,
    %c0_9 = arith.constant 0 : index
    %c0_10 = arith.constant 0 : index
    %11 = vector.load %arg5[%c0_9, %c0_10] : memref<8x128xf32, #tpu.memory_space<vmem>>, vector<1x128xf32>
    %12 = arith.mulf %5, %5 : vector<512x128xf32>
    %cst_11 = arith.constant dense<0.000000e+00> : vector<128xf32>
    %13 = vector.multi_reduction <add>, %12, %cst_11 [0] : vector<512x128xf32> to vector<128xf32>
    %14 = vector.shape_cast %13 : vector<128xf32> to vector<1x128xf32>
    %15 = arith.addf %11, %14 : vector<1x128xf32>
    %c0_12 = arith.constant 0 : index
    %c0_13 = arith.constant 0 : index
    %16 = vector.load %arg5[%c0_12, %c0_13] : memref<8x128xf32, #tpu.memory_space<vmem>>, vector<1x128xf32>
    tpu.vector_store %arg5[%c0_12, %c0_13], %15 {strides = array<i32>} : memref<8x128xf32, #tpu.memory_space<vmem>>, vector<1x128xf32>,
    return
  }
  func.func @transform_0(%arg0: i32, %arg1: i32) -> (i32, i32) {
    %c1_i32 = arith.constant 1 : i32
    %0 = arith.muli %arg0, %c1_i32 : i32
    %1 = arith.addi %0, %arg1 : i32
    %c0_i32 = arith.constant 0 : i32
    %c0_i32_0 = arith.constant 0 : i32
    return %1, %c0_i32 : i32, i32
  }
  func.func @transform_1(%arg0: i32, %arg1: i32) -> (i32, i32) {
    %c0_i32 = arith.constant 0 : i32
    %c0_i32_0 = arith.constant 0 : i32
    %c0_i32_1 = arith.constant 0 : i32
    return %c0_i32, %c0_i32_0 : i32, i32
  }
  func.func @transform_2(%arg0: i32, %arg1: i32) -> (i32, i32) {
    %c0_i32 = arith.constant 0 : i32
    %c0_i32_0 = arith.constant 0 : i32
    return %arg0, %c0_i32 : i32, i32
  }
  func.func @transform_3(%arg0: i32, %arg1: i32) -> (i32, i32) {
    %c0_i32 = arith.constant 0 : i32
    %c0_i32_0 = arith.constant 0 : i32
    return %arg0, %c0_i32 : i32, i32
  }
}

</mosaic_0001>

<llo_original>
// kernel: res_block_forward.4
$region0: #{res_block_forward.4}
  #allocation0 [shape = 'u32[]', space=smem, size = 0x4, offset = 0x4, fixed_abs, tag = 'smem constant byte address 0x4 - core index']
  #allocation1 [shape = 'u32[72,128]{1,0:T(1,128)}', space=vmem, size = 0x9000, scoped, tag = 'internal scratch']
  %s0 = inlined_call_operand.vmem [shape: bf16[512,36], index: 0, kind: input, shape index: {}]
  %s1 = inlined_call_operand.vmem [shape: bf16[36,128], index: 1, kind: input, shape index: {}]
  %s2 = inlined_call_operand.vmem [shape: bf16[512,4], index: 2, kind: input, shape index: {}]
  %s3 = inlined_call_operand.vmem [shape: bf16[4,128], index: 3, kind: input, shape index: {}]
  %s4 = inlined_call_operand.vmem [shape: f32[8,128], index: 4, kind: output, shape index: {0}]
  %s5 = inlined_call_operand.vmem [shape: f32[8,128], index: 5, kind: output, shape index: {1}]
  %s6 = inlined_call_operand.vmem [shape: f32[8,128], index: 6, kind: output, shape index: {2}]
  %s7 = inlined_call_operand.vmem [shape: f32[8,128], index: 7, kind: output, shape index: {3}]
  %8 = xla_tuple %s4, %s5, %s6, %s7
  %s9 = sld [smem:[#allocation0]]
  $region54: #{res_block_forward.4} parent=0
    _
  %s11 = ssub.s32 1, %s9
  %s12 = scalar_select 0, %s11, %s9
  // Predicated region
  $region2: #{res_block_forward.4} parent=0 // pred_check
    _
  $region3: #{res_block_forward.4} parent=0 // pred_check_branch
    %14 = sbr.rel (0) target = $region5
  $region4: #{res_block_forward.4} parent=0 // pred_region
    %s15 = sadd.s32 0, 0
    %s16 = smul.u32 64, %s15
    %p17 = scmp.lt.s32.totalorder %s16, 63
    %s18 = scalar_select %p17, %s16, 63
    %s19 = smul.addr %s18, 4
    %s20 = scalar_lea.vmem %s0, %s19
    %s21 = sadd.s32 0, 0
    %s22 = smul.u32 64, %s21
  $region5: #{res_block_forward.4} parent=0 // pred_fallthru
    _
  // Predicated region
  $region6: #{res_block_forward.4} parent=0 // pred_check
    _
  $region7: #{res_block_forward.4} parent=0 // pred_check_branch
    %24 = sbr.rel (0) target = $region9
  $region8: #{res_block_forward.4} parent=0 // pred_region
    _
  $region9: #{res_block_forward.4} parent=0 // pred_fallthru
    _
  // Predicated region
  $region10: #{res_block_forward.4} parent=0 // pred_check
    _
  $region11: #{res_block_forward.4} parent=0 // pred_check_branch
    %26 = sbr.rel (0) target = $region13
  $region12: #{res_block_forward.4} parent=0 // pred_region
    %s27 = sadd.s32 0, 0
    %s28 = smul.u32 64, %s27
    %p29 = scmp.lt.s32.totalorder %s28, 63
    %s30 = scalar_select %p29, %s28, 63
    %s31 = smul.addr %s30, 4
    %s32 = scalar_lea.vmem %s2, %s31
    %s33 = sadd.s32 0, 0
    %s34 = smul.u32 64, %s33
  $region13: #{res_block_forward.4} parent=0 // pred_fallthru
    _
  // Predicated region
  $region14: #{res_block_forward.4} parent=0 // pred_check
    _
  $region15: #{res_block_forward.4} parent=0 // pred_check_branch
    %36 = sbr.rel (0) target = $region17
  $region16: #{res_block_forward.4} parent=0 // pred_region
    _
  $region17: #{res_block_forward.4} parent=0 // pred_fallthru
    _
  %s37 = sadd.s32 0, 0
  %s38 = smul.u32 64, %s37
  %p39 = scmp.lt.s32.totalorder %s38, 63
  %s40 = scalar_select %p39, %s38, 63
  %s41 = smul.addr %s40, 4
  %s42 = scalar_lea.vmem %s0, %s41
  %s43 = sadd.s32 0, 0
  %s44 = smul.u32 64, %s43
  %p45 = scmp.lt.s32.totalorder %s44, 63
  %s46 = scalar_select %p45, %s44, 63
  %s47 = smul.addr %s46, 4
  %s48 = scalar_lea.vmem %s2, %s47
  %s49 = sadd.s32 0, 0
  %s50 = smul.u32 64, %s49
  %p51 = scmp.lt.s32.totalorder %s50, 63
  %s52 = scalar_select %p51, %s50, 63
  %s53 = smul.addr %s52, 4
  %s54 = scalar_lea.vmem %s0, %s53
  %s55 = sadd.s32 0, 0
  %s56 = smul.u32 64, %s55
  %s57 = sadd.s32 0, 0
  %s58 = smul.u32 64, %s57
  %p59 = scmp.lt.s32.totalorder %s58, 63
  %s60 = scalar_select %p59, %s58, 63
  %s61 = smul.addr %s60, 4
  %s62 = scalar_lea.vmem %s2, %s61
  %s63 = sadd.s32 0, 0
  %s64 = smul.u32 64, %s63
  %p66 = scmp.eq.s32.totalorder 0, 0
  // Predicated region
  $region18: #{res_block_forward.4} parent=0 // pred_check
    %p67 = pneg %p66
  $region19: #{res_block_forward.4} parent=0 // pred_check_branch
    %69 = sbr.rel (%p67) target = $region21
  $region20: #{res_block_forward.4} parent=0 // pred_region
    %70 = vst [vmem:[%s4] sm:$0xff] 0.0
    %71 = vst [vmem:[%s5] sm:$0xff] 0.0
    %72 = vst [vmem:[%s6] sm:$0xff] 0.0
    %73 = vst [vmem:[%s7] sm:$0xff] 0.0
  $region21: #{res_block_forward.4} parent=0 // pred_fallthru
    _
  %v74 = vld [vmem:[%s54] sm:$0xf]
  %v75 = vld [vmem:[%s54 + $0x4] sm:$0xf]
  %v76 = vld [vmem:[%s54 + $0x8] sm:$0xf]
  %v77 = vld [vmem:[%s54 + $0xc] sm:$0xf]
  %v78 = vld [vmem:[%s54 + $0x10] sm:$0xf]
  %v79 = vld [vmem:[%s54 + $0x14] sm:$0xf]
  %v80 = vld [vmem:[%s54 + $0x18] sm:$0xf]
  %v81 = vld [vmem:[%s54 + $0x1c] sm:$0xf]
  %v82 = vld [vmem:[%s54 + $0x20] sm:$0xf]
  %v83 = vld [vmem:[%s54 + $0x24] sm:$0xf]
  %v84 = vld [vmem:[%s54 + $0x28] sm:$0xf]
  %v85 = vld [vmem:[%s54 + $0x2c] sm:$0xf]
  %v86 = vld [vmem:[%s54 + $0x30] sm:$0xf]
  %v87 = vld [vmem:[%s54 + $0x34] sm:$0xf]
  %v88 = vld [vmem:[%s54 + $0x38] sm:$0xf]
  %v89 = vld [vmem:[%s54 + $0x3c] sm:$0xf]
  %v90 = vld [vmem:[%s54 + $0x40] sm:$0xf]
  %v91 = vld [vmem:[%s54 + $0x44] sm:$0xf]
  %v92 = vld [vmem:[%s54 + $0x48] sm:$0xf]
  %v93 = vld [vmem:[%s54 + $0x4c] sm:$0xf]
  %v94 = vld [vmem:[%s54 + $0x50] sm:$0xf]
  %v95 = vld [vmem:[%s54 + $0x54] sm:$0xf]
  %v96 = vld [vmem:[%s54 + $0x58] sm:$0xf]
  %v97 = vld [vmem:[%s54 + $0x5c] sm:$0xf]
  %v98 = vld [vmem:[%s54 + $0x60] sm:$0xf]
  %v99 = vld [vmem:[%s54 + $0x64] sm:$0xf]
  %v100 = vld [vmem:[%s54 + $0x68] sm:$0xf]
  %v101 = vld [vmem:[%s54 + $0x6c] sm:$0xf]
  %v102 = vld [vmem:[%s54 + $0x70] sm:$0xf]
  %v103 = vld [vmem:[%s54 + $0x74] sm:$0xf]
  %v104 = vld [vmem:[%s54 + $0x78] sm:$0xf]
  %v105 = vld [vmem:[%s54 + $0x7c] sm:$0xf]
  %v106 = vld [vmem:[%s54 + $0x80] sm:$0xf]
  %v107 = vld [vmem:[%s54 + $0x84] sm:$0xf]
  %v108 = vld [vmem:[%s54 + $0x88] sm:$0xf]
  %v109 = vld [vmem:[%s54 + $0x8c] sm:$0xf]
  %v110 = vld [vmem:[%s54 + $0x90] sm:$0xf]
  %v111 = vld [vmem:[%s54 + $0x94] sm:$0xf]
  %v112 = vld [vmem:[%s54 + $0x98] sm:$0xf]
  %v113 = vld [vmem:[%s54 + $0x9c] sm:$0xf]
  %v114 = vld [vmem:[%s54 + $0xa0] sm:$0xf]
  %v115 = vld [vmem:[%s54 + $0xa4] sm:$0xf]
  %v116 = vld [vmem:[%s54 + $0xa8] sm:$0xf]
  %v117 = vld [vmem:[%s54 + $0xac] sm:$0xf]
  %v118 = vld [vmem:[%s54 + $0xb0] sm:$0xf]
  %v119 = vld [vmem:[%s54 + $0xb4] sm:$0xf]
  %v120 = vld [vmem:[%s54 + $0xb8] sm:$0xf]
  %v121 = vld [vmem:[%s54 + $0xbc] sm:$0xf]
  %v122 = vld [vmem:[%s54 + $0xc0] sm:$0xf]
  %v123 = vld [vmem:[%s54 + $0xc4] sm:$0xf]
  %v124 = vld [vmem:[%s54 + $0xc8] sm:$0xf]
  %v125 = vld [vmem:[%s54 + $0xcc] sm:$0xf]
  %v126 = vld [vmem:[%s54 + $0xd0] sm:$0xf]
  %v127 = vld [vmem:[%s54 + $0xd4] sm:$0xf]
  %v128 = vld [vmem:[%s54 + $0xd8] sm:$0xf]
  %v129 = vld [vmem:[%s54 + $0xdc] sm:$0xf]
  %v130 = vld [vmem:[%s54 + $0xe0] sm:$0xf]
  %v131 = vld [vmem:[%s54 + $0xe4] sm:$0xf]
  %v132 = vld [vmem:[%s54 + $0xe8] sm:$0xf]
  %v133 = vld [vmem:[%s54 + $0xec] sm:$0xf]
  %v134 = vld [vmem:[%s54 + $0xf0] sm:$0xf]
  %v135 = vld [vmem:[%s54 + $0xf4] sm:$0xf]
  %v136 = vld [vmem:[%s54 + $0xf8] sm:$0xf]
  %v137 = vld [vmem:[%s54 + $0xfc] sm:$0xf]
  %v138 = vld [vmem:[%s1] sm:$0xf]
  %v139 = vld [vmem:[%s1 + $0x4] sm:$0xf]
  %v140 = vld [vmem:[%s1 + $0x8] sm:$0xf]
  %v141 = vld [vmem:[%s1 + $0xc] sm:$0xf]
  %v142 = vld [vmem:[%s1 + $0x10] sm:$0x3]
  %v207 = vunpack.c.l.b16 %v74
  %v208 = vunpack.c.l.b16 %v75
  %v209 = vunpack.c.l.b16 %v76
  %v210 = vunpack.c.l.b16 %v77
  %v211 = vunpack.c.l.b16 %v78
  %v212 = vunpack.c.l.b16 %v79
  %v213 = vunpack.c.l.b16 %v80
  %v214 = vunpack.c.l.b16 %v81
  %v215 = vunpack.c.l.b16 %v82
  %v216 = vunpack.c.l.b16 %v83
  %v217 = vunpack.c.l.b16 %v84
  %v218 = vunpack.c.l.b16 %v85
  %v219 = vunpack.c.l.b16 %v86
  %v220 = vunpack.c.l.b16 %v87
  %v221 = vunpack.c.l.b16 %v88
  %v222 = vunpack.c.l.b16 %v89
  %v223 = vunpack.c.l.b16 %v90
  %v224 = vunpack.c.l.b16 %v91
  %v225 = vunpack.c.l.b16 %v92
  %v226 = vunpack.c.l.b16 %v93
  %v227 = vunpack.c.l.b16 %v94
  %v228 = vunpack.c.l.b16 %v95
  %v229 = vunpack.c.l.b16 %v96
  %v230 = vunpack.c.l.b16 %v97
  %v231 = vunpack.c.l.b16 %v98
  %v232 = vunpack.c.l.b16 %v99
  %v233 = vunpack.c.l.b16 %v100
  %v234 = vunpack.c.l.b16 %v101
  %v235 = vunpack.c.l.b16 %v102
  %v236 = vunpack.c.l.b16 %v103
  %v237 = vunpack.c.l.b16 %v104
  %v238 = vunpack.c.l.b16 %v105
  %v239 = vunpack.c.l.b16 %v106
  %v240 = vunpack.c.l.b16 %v107
  %v241 = vunpack.c.l.b16 %v108
  %v242 = vunpack.c.l.b16 %v109
  %v243 = vunpack.c.l.b16 %v110
  %v244 = vunpack.c.l.b16 %v111
  %v245 = vunpack.c.l.b16 %v112
  %v246 = vunpack.c.l.b16 %v113
  %v247 = vunpack.c.l.b16 %v114
  %v248 = vunpack.c.l.b16 %v115
  %v249 = vunpack.c.l.b16 %v116
  %v250 = vunpack.c.l.b16 %v117
  %v251 = vunpack.c.l.b16 %v118
  %v252 = vunpack.c.l.b16 %v119
  %v253 = vunpack.c.l.b16 %v120
  %v254 = vunpack.c.l.b16 %v121
  %v255 = vunpack.c.l.b16 %v122
  %v256 = vunpack.c.l.b16 %v123
  %v257 = vunpack.c.l.b16 %v124
  %v258 = vunpack.c.l.b16 %v125
  %v259 = vunpack.c.l.b16 %v126
  %v260 = vunpack.c.l.b16 %v127
  %v261 = vunpack.c.l.b16 %v128
  %v262 = vunpack.c.l.b16 %v129
  %v263 = vunpack.c.l.b16 %v130
  %v264 = vunpack.c.l.b16 %v131
  %v265 = vunpack.c.l.b16 %v132
  %v266 = vunpack.c.l.b16 %v133
  %v267 = vunpack.c.l.b16 %v134
  %v268 = vunpack.c.l.b16 %v135
  %v269 = vunpack.c.l.b16 %v136
  %v270 = vunpack.c.l.b16 %v137
  %v271 = vpack.c.b16 %v208, %v207
  %v272 = vpack.c.b16 %v210, %v209
  %v273 = vpack.c.b16 %v212, %v211
  %v274 = vpack.c.b16 %v214, %v213
  %v275 = vpack.c.b16 %v216, %v215
  %v276 = vpack.c.b16 %v218, %v217
  %v277 = vpack.c.b16 %v220, %v219
  %v278 = vpack.c.b16 %v222, %v221
  %v279 = vpack.c.b16 %v224, %v223
  %v280 = vpack.c.b16 %v226, %v225
  %v281 = vpack.c.b16 %v228, %v227
  %v282 = vpack.c.b16 %v230, %v229
  %v283 = vpack.c.b16 %v232, %v231
  %v284 = vpack.c.b16 %v234, %v233
  %v285 = vpack.c.b16 %v236, %v235
  %v286 = vpack.c.b16 %v238, %v237
  %v287 = vpack.c.b16 %v240, %v239
  %v288 = vpack.c.b16 %v242, %v241
  %v289 = vpack.c.b16 %v244, %v243
  %v290 = vpack.c.b16 %v246, %v245
  %v291 = vpack.c.b16 %v248, %v247
  %v292 = vpack.c.b16 %v250, %v249
  %v293 = vpack.c.b16 %v252, %v251
  %v294 = vpack.c.b16 %v254, %v253
  %v295 = vpack.c.b16 %v256, %v255
  %v296 = vpack.c.b16 %v258, %v257
  %v297 = vpack.c.b16 %v260, %v259
  %v298 = vpack.c.b16 %v262, %v261
  %v299 = vpack.c.b16 %v264, %v263
  %v300 = vpack.c.b16 %v266, %v265
  %v301 = vpack.c.b16 %v268, %v267
  %v302 = vpack.c.b16 %v270, %v269
  %v308 = vunpack.c.l.b16 %v138
  %v309 = vunpack.c.l.b16 %v139
  %v310 = vunpack.c.l.b16 %v140
  %v311 = vunpack.c.l.b16 %v141
  %v312 = vunpack.c.l.b16 %v142
  %v313 = vpack.c.b16 %v309, %v308
  %v314 = vpack.c.b16 %v311, %v310
  %v315 = vpack.c.b16 %v312, %v312
  %vm318 = vcmask 293888
  %v320 = vsel %vm318, %v271, 0
  %v323 = vsel %vm318, %v272, 0
  %v326 = vsel %vm318, %v273, 0
  %v329 = vsel %vm318, %v274, 0
  %v332 = vsel %vm318, %v275, 0
  %v335 = vsel %vm318, %v276, 0
  %v338 = vsel %vm318, %v277, 0
  %v341 = vsel %vm318, %v278, 0
  %v344 = vsel %vm318, %v279, 0
  %v347 = vsel %vm318, %v280, 0
  %v350 = vsel %vm318, %v281, 0
  %v353 = vsel %vm318, %v282, 0
  %v356 = vsel %vm318, %v283, 0
  %v359 = vsel %vm318, %v284, 0
  %v362 = vsel %vm318, %v285, 0
  %v365 = vsel %vm318, %v286, 0
  %v368 = vsel %vm318, %v287, 0
  %v371 = vsel %vm318, %v288, 0
  %v374 = vsel %vm318, %v289, 0
  %v377 = vsel %vm318, %v290, 0
  %v380 = vsel %vm318, %v291, 0
  %v383 = vsel %vm318, %v292, 0
  %v386 = vsel %vm318, %v293, 0
  %v389 = vsel %vm318, %v294, 0
  %v392 = vsel %vm318, %v295, 0
  %v395 = vsel %vm318, %v296, 0
  %v398 = vsel %vm318, %v297, 0
  %v401 = vsel %vm318, %v298, 0
  %v404 = vsel %vm318, %v299, 0
  %v407 = vsel %vm318, %v300, 0
  %v410 = vsel %vm318, %v301, 0
  %v413 = vsel %vm318, %v302, 0
  %vm415 = vcmask 1041408
  %v417 = vsel %vm415, %v315, 0
  %419 = vmatpush.bf16.msra.mxu0 0
  %420 = vmatpush.bf16.msra.mxu0 0
  %421 = vmatpush.bf16.msra.mxu0 0
  %422 = vmatpush.bf16.msra.mxu0 0
  %423 = vmatpush.bf16.msra.mxu0 0
  %424 = vmatpush.bf16.msra.mxu0 %v417
  %425 = vmatpush.bf16.msra.mxu0 %v314
  %426 = vmatpush.bf16.msra.mxu0 %v313
  %427 = vmatmul.bf16.gmra.mxu0 %v320
  %v428 = vpop.f32.mrf.mxu0
  %v429 = vadd.f32 0.0, %v428
  %v430 = vpop.f32.mrf.mxu0
  %v431 = vadd.f32 0.0, %v430
  %432 = vmatmul.bf16.gmra.mxu0 %v323
  %v433 = vpop.f32.mrf.mxu0
  %v434 = vadd.f32 0.0, %v433
  %v435 = vpop.f32.mrf.mxu0
  %v436 = vadd.f32 0.0, %v435
  %437 = vmatmul.bf16.gmra.mxu0 %v326
  %v438 = vpop.f32.mrf.mxu0
  %v439 = vadd.f32 0.0, %v438
  %v440 = vpop.f32.mrf.mxu0
  %v441 = vadd.f32 0.0, %v440
  %442 = vmatmul.bf16.gmra.mxu0 %v329
  %v443 = vpop.f32.mrf.mxu0
  %v444 = vadd.f32 0.0, %v443
  %v445 = vpop.f32.mrf.mxu0
  %v446 = vadd.f32 0.0, %v445
  %447 = vmatmul.bf16.gmra.mxu0 %v332
  %v448 = vpop.f32.mrf.mxu0
  %v449 = vadd.f32 0.0, %v448
  %v450 = vpop.f32.mrf.mxu0
  %v451 = vadd.f32 0.0, %v450
  %452 = vmatmul.bf16.gmra.mxu0 %v335
  %v453 = vpop.f32.mrf.mxu0
  %v454 = vadd.f32 0.0, %v453
  %v455 = vpop.f32.mrf.mxu0
  %v456 = vadd.f32 0.0, %v455
  %457 = vmatmul.bf16.gmra.mxu0 %v338
  %v458 = vpop.f32.mrf.mxu0
  %v459 = vadd.f32 0.0, %v458
  %v460 = vpop.f32.mrf.mxu0
  %v461 = vadd.f32 0.0, %v460
  %462 = vmatmul.bf16.gmra.mxu0 %v341
  %v463 = vpop.f32.mrf.mxu0
  %v464 = vadd.f32 0.0, %v463
  %v465 = vpop.f32.mrf.mxu0
  %v466 = vadd.f32 0.0, %v465
  %467 = vmatmul.bf16.gmra.mxu0 %v344
  %v468 = vpop.f32.mrf.mxu0
  %v469 = vadd.f32 0.0, %v468
  %v470 = vpop.f32.mrf.mxu0
  %v471 = vadd.f32 0.0, %v470
  %472 = vmatmul.bf16.gmra.mxu0 %v347
  %v473 = vpop.f32.mrf.mxu0
  %v474 = vadd.f32 0.0, %v473
  %v475 = vpop.f32.mrf.mxu0
  %v476 = vadd.f32 0.0, %v475
  %477 = vmatmul.bf16.gmra.mxu0 %v350
  %v478 = vpop.f32.mrf.mxu0
  %v479 = vadd.f32 0.0, %v478
  %v480 = vpop.f32.mrf.mxu0
  %v481 = vadd.f32 0.0, %v480
  %482 = vmatmul.bf16.gmra.mxu0 %v353
  %v483 = vpop.f32.mrf.mxu0
  %v484 = vadd.f32 0.0, %v483
  %v485 = vpop.f32.mrf.mxu0
  %v486 = vadd.f32 0.0, %v485
  %487 = vmatmul.bf16.gmra.mxu0 %v356
  %v488 = vpop.f32.mrf.mxu0
  %v489 = vadd.f32 0.0, %v488
  %v490 = vpop.f32.mrf.mxu0
  %v491 = vadd.f32 0.0, %v490
  %492 = vmatmul.bf16.gmra.mxu0 %v359
  %v493 = vpop.f32.mrf.mxu0
  %v494 = vadd.f32 0.0, %v493
  %v495 = vpop.f32.mrf.mxu0
  %v496 = vadd.f32 0.0, %v495
  %497 = vmatmul.bf16.gmra.mxu0 %v362
  %v498 = vpop.f32.mrf.mxu0
  %v499 = vadd.f32 0.0, %v498
  %v500 = vpop.f32.mrf.mxu0
  %v501 = vadd.f32 0.0, %v500
  %502 = vmatmul.bf16.gmra.mxu0 %v365
  %v503 = vpop.f32.mrf.mxu0
  %v504 = vadd.f32 0.0, %v503
  %v505 = vpop.f32.mrf.mxu0
  %v506 = vadd.f32 0.0, %v505
  %507 = vmatmul.bf16.gmra.mxu0 %v368
  %v508 = vpop.f32.mrf.mxu0
  %v509 = vadd.f32 0.0, %v508
  %v510 = vpop.f32.mrf.mxu0
  %v511 = vadd.f32 0.0, %v510
  %512 = vmatmul.bf16.gmra.mxu0 %v371
  %v513 = vpop.f32.mrf.mxu0
  %v514 = vadd.f32 0.0, %v513
  %v515 = vpop.f32.mrf.mxu0
  %v516 = vadd.f32 0.0, %v515
  %517 = vmatmul.bf16.gmra.mxu0 %v374
  %v518 = vpop.f32.mrf.mxu0
  %v519 = vadd.f32 0.0, %v518
  %v520 = vpop.f32.mrf.mxu0
  %v521 = vadd.f32 0.0, %v520
  %522 = vmatmul.bf16.gmra.mxu0 %v377
  %v523 = vpop.f32.mrf.mxu0
  %v524 = vadd.f32 0.0, %v523
  %v525 = vpop.f32.mrf.mxu0
  %v526 = vadd.f32 0.0, %v525
  %527 = vmatmul.bf16.gmra.mxu0 %v380
  %v528 = vpop.f32.mrf.mxu0
  %v529 = vadd.f32 0.0, %v528
  %v530 = vpop.f32.mrf.mxu0
  %v531 = vadd.f32 0.0, %v530
  %532 = vmatmul.bf16.gmra.mxu0 %v383
  %v533 = vpop.f32.mrf.mxu0
  %v534 = vadd.f32 0.0, %v533
  %v535 = vpop.f32.mrf.mxu0
  %v536 = vadd.f32 0.0, %v535
  %537 = vmatmul.bf16.gmra.mxu0 %v386
  %v538 = vpop.f32.mrf.mxu0
  %v539 = vadd.f32 0.0, %v538
  %v540 = vpop.f32.mrf.mxu0
  %v541 = vadd.f32 0.0, %v540
  %542 = vmatmul.bf16.gmra.mxu0 %v389
  %v543 = vpop.f32.mrf.mxu0
  %v544 = vadd.f32 0.0, %v543
  %v545 = vpop.f32.mrf.mxu0
  %v546 = vadd.f32 0.0, %v545
  %547 = vmatmul.bf16.gmra.mxu0 %v392
  %v548 = vpop.f32.mrf.mxu0
  %v549 = vadd.f32 0.0, %v548
  %v550 = vpop.f32.mrf.mxu0
  %v551 = vadd.f32 0.0, %v550
  %552 = vmatmul.bf16.gmra.mxu0 %v395
  %v553 = vpop.f32.mrf.mxu0
  %v554 = vadd.f32 0.0, %v553
  %v555 = vpop.f32.mrf.mxu0
  %v556 = vadd.f32 0.0, %v555
  %557 = vmatmul.bf16.gmra.mxu0 %v398
  %v558 = vpop.f32.mrf.mxu0
  %v559 = vadd.f32 0.0, %v558
  %v560 = vpop.f32.mrf.mxu0
  %v561 = vadd.f32 0.0, %v560
  %562 = vmatmul.bf16.gmra.mxu0 %v401
  %v563 = vpop.f32.mrf.mxu0
  %v564 = vadd.f32 0.0, %v563
  %v565 = vpop.f32.mrf.mxu0
  %v566 = vadd.f32 0.0, %v565
  %567 = vmatmul.bf16.gmra.mxu0 %v404
  %v568 = vpop.f32.mrf.mxu0
  %v569 = vadd.f32 0.0, %v568
  %v570 = vpop.f32.mrf.mxu0
  %v571 = vadd.f32 0.0, %v570
  %572 = vmatmul.bf16.gmra.mxu0 %v407
  %v573 = vpop.f32.mrf.mxu0
  %v574 = vadd.f32 0.0, %v573
  %v575 = vpop.f32.mrf.mxu0
  %v576 = vadd.f32 0.0, %v575
  %577 = vmatmul.bf16.gmra.mxu0 %v410
  %v578 = vpop.f32.mrf.mxu0
  %v579 = vadd.f32 0.0, %v578
  %v580 = vpop.f32.mrf.mxu0
  %v581 = vadd.f32 0.0, %v580
  %582 = vmatmul.bf16.gmra.mxu0 %v413
  %v583 = vpop.f32.mrf.mxu0
  %v584 = vadd.f32 0.0, %v583
  %v585 = vpop.f32.mrf.mxu0
  %v586 = vadd.f32 0.0, %v585
  %587 = vdwg.mxu0
  %v588 = vld [vmem:[%s4] sm:$0x1]
  %v589 = vadd.f32 %v429, %v431
  %v590 = vadd.f32 %v589, %v434
  %v591 = vadd.f32 %v590, %v436
  %v592 = vadd.f32 %v591, %v439
  %v593 = vadd.f32 %v592, %v441
  %v594 = vadd.f32 %v593, %v444
  %v595 = vadd.f32 %v594, %v446
  %v596 = vadd.f32 %v595, %v449
  %v597 = vadd.f32 %v596, %v451
  %v598 = vadd.f32 %v597, %v454
  %v599 = vadd.f32 %v598, %v456
  %v600 = vadd.f32 %v599, %v459
  %v601 = vadd.f32 %v600, %v461
  %v602 = vadd.f32 %v601, %v464
  %v603 = vadd.f32 %v602, %v466
  %v604 = vadd.f32 %v603, %v469
  %v605 = vadd.f32 %v604, %v471
  %v606 = vadd.f32 %v605, %v474
  %v607 = vadd.f32 %v606, %v476
  %v608 = vadd.f32 %v607, %v479
  %v609 = vadd.f32 %v608, %v481
  %v610 = vadd.f32 %v609, %v484
  %v611 = vadd.f32 %v610, %v486
  %v612 = vadd.f32 %v611, %v489
  %v613 = vadd.f32 %v612, %v491
  %v614 = vadd.f32 %v613, %v494
  %v615 = vadd.f32 %v614, %v496
  %v616 = vadd.f32 %v615, %v499
  %v617 = vadd.f32 %v616, %v501
  %v618 = vadd.f32 %v617, %v504
  %v619 = vadd.f32 %v618, %v506
  %v620 = vadd.f32 %v619, %v509
  %v621 = vadd.f32 %v620, %v511
  %v622 = vadd.f32 %v621, %v514
  %v623 = vadd.f32 %v622, %v516
  %v624 = vadd.f32 %v623, %v519
  %v625 = vadd.f32 %v624, %v521
  %v626 = vadd.f32 %v625, %v524
  %v627 = vadd.f32 %v626, %v526
  %v628 = vadd.f32 %v627, %v529
  %v629 = vadd.f32 %v628, %v531
  %v630 = vadd.f32 %v629, %v534
  %v631 = vadd.f32 %v630, %v536
  %v632 = vadd.f32 %v631, %v539
  %v633 = vadd.f32 %v632, %v541
  %v634 = vadd.f32 %v633, %v544
  %v635 = vadd.f32 %v634, %v546
  %v636 = vadd.f32 %v635, %v549
  %v637 = vadd.f32 %v636, %v551
  %v638 = vadd.f32 %v637, %v554
  %v639 = vadd.f32 %v638, %v556
  %v640 = vadd.f32 %v639, %v559
  %v641 = vadd.f32 %v640, %v561
  %v642 = vadd.f32 %v641, %v564
  %v643 = vadd.f32 %v642, %v566
  %v644 = vadd.f32 %v643, %v569
  %v645 = vadd.f32 %v644, %v571
  %v646 = vadd.f32 %v645, %v574
  %v647 = vadd.f32 %v646, %v576
  %v648 = vadd.f32 %v647, %v579
  %v649 = vadd.f32 %v648, %v581
  %v650 = vadd.f32 %v649, %v584
  %v651 = vadd.f32 %v650, %v586
  %v652 = vrot.slane %v651, 4
  %v653 = vadd.f32 %v651, %v652
  %v654 = vrot.slane %v653, 2
  %v655 = vadd.f32 %v653, %v654
  %v656 = vrot.slane %v655, 1
  %v657 = vadd.f32 %v655, %v656
  %v658 = vadd.f32 %v588, %v657
  %659 = vst [vmem:[%s4] sm:$0x1] %v658
  %v660 = vld [vmem:[%s5] sm:$0x1]
  %v661 = vmul.f32 %v429, %v429
  %v662 = vmul.f32 %v431, %v431
  %v663 = vmul.f32 %v434, %v434
  %v664 = vmul.f32 %v436, %v436
  %v665 = vmul.f32 %v439, %v439
  %v666 = vmul.f32 %v441, %v441
  %v667 = vmul.f32 %v444, %v444
  %v668 = vmul.f32 %v446, %v446
  %v669 = vmul.f32 %v449, %v449
  %v670 = vmul.f32 %v451, %v451
  %v671 = vmul.f32 %v454, %v454
  %v672 = vmul.f32 %v456, %v456
  %v673 = vmul.f32 %v459, %v459
  %v674 = vmul.f32 %v461, %v461
  %v675 = vmul.f32 %v464, %v464
  %v676 = vmul.f32 %v466, %v466
  %v677 = vmul.f32 %v469, %v469
  %v678 = vmul.f32 %v471, %v471
  %v679 = vmul.f32 %v474, %v474
  %v680 = vmul.f32 %v476, %v476
  %v681 = vmul.f32 %v479, %v479
  %v682 = vmul.f32 %v481, %v481
  %v683 = vmul.f32 %v484, %v484
  %v684 = vmul.f32 %v486, %v486
  %v685 = vmul.f32 %v489, %v489
  %v686 = vmul.f32 %v491, %v491
  %v687 = vmul.f32 %v494, %v494
  %v688 = vmul.f32 %v496, %v496
  %v689 = vmul.f32 %v499, %v499
  %v690 = vmul.f32 %v501, %v501
  %v691 = vmul.f32 %v504, %v504
  %v692 = vmul.f32 %v506, %v506
  %v693 = vmul.f32 %v509, %v509
  %v694 = vmul.f32 %v511, %v511
  %v695 = vmul.f32 %v514, %v514
  %v696 = vmul.f32 %v516, %v516
  %v697 = vmul.f32 %v519, %v519
  %v698 = vmul.f32 %v521, %v521
  %v699 = vmul.f32 %v524, %v524
  %v700 = vmul.f32 %v526, %v526
  %v701 = vmul.f32 %v529, %v529
  %v702 = vmul.f32 %v531, %v531
  %v703 = vmul.f32 %v534, %v534
  %v704 = vmul.f32 %v536, %v536
  %v705 = vmul.f32 %v539, %v539
  %v706 = vmul.f32 %v541, %v541
  %v707 = vmul.f32 %v544, %v544
  %v708 = vmul.f32 %v546, %v546
  %v709 = vmul.f32 %v549, %v549
  %v710 = vmul.f32 %v551, %v551
  %v711 = vmul.f32 %v554, %v554
  %v712 = vmul.f32 %v556, %v556
  %v713 = vmul.f32 %v559, %v559
  %v714 = vmul.f32 %v561, %v561
  %v715 = vmul.f32 %v564, %v564
  %v716 = vmul.f32 %v566, %v566
  %v717 = vmul.f32 %v569, %v569
  %v718 = vmul.f32 %v571, %v571
  %v719 = vmul.f32 %v574, %v574
  %v720 = vmul.f32 %v576, %v576
  %v721 = vmul.f32 %v579, %v579
  %v722 = vmul.f32 %v581, %v581
  %v723 = vmul.f32 %v584, %v584
  %v724 = vmul.f32 %v586, %v586
  %v725 = vadd.f32 %v661, %v662
  %v726 = vadd.f32 %v725, %v663
  %v727 = vadd.f32 %v726, %v664
  %v728 = vadd.f32 %v727, %v665
  %v729 = vadd.f32 %v728, %v666
  %v730 = vadd.f32 %v729, %v667
  %v731 = vadd.f32 %v730, %v668
  %v732 = vadd.f32 %v731, %v669
  %v733 = vadd.f32 %v732, %v670
  %v734 = vadd.f32 %v733, %v671
  %v735 = vadd.f32 %v734, %v672
  %v736 = vadd.f32 %v735, %v673
  %v737 = vadd.f32 %v736, %v674
  %v738 = vadd.f32 %v737, %v675
  %v739 = vadd.f32 %v738, %v676
  %v740 = vadd.f32 %v739, %v677
  %v741 = vadd.f32 %v740, %v678
  %v742 = vadd.f32 %v741, %v679
  %v743 = vadd.f32 %v742, %v680
  %v744 = vadd.f32 %v743, %v681
  %v745 = vadd.f32 %v744, %v682
  %v746 = vadd.f32 %v745, %v683
  %v747 = vadd.f32 %v746, %v684
  %v748 = vadd.f32 %v747, %v685
  %v749 = vadd.f32 %v748, %v686
  %v750 = vadd.f32 %v749, %v687
  %v751 = vadd.f32 %v750, %v688
  %v752 = vadd.f32 %v751, %v689
  %v753 = vadd.f32 %v752, %v690
  %v754 = vadd.f32 %v753, %v691
  %v755 = vadd.f32 %v754, %v692
  %v756 = vadd.f32 %v755, %v693
  %v757 = vadd.f32 %v756, %v694
  %v758 = vadd.f32 %v757, %v695
  %v759 = vadd.f32 %v758, %v696
  %v760 = vadd.f32 %v759, %v697
  %v761 = vadd.f32 %v760, %v698
  %v762 = vadd.f32 %v761, %v699
  %v763 = vadd.f32 %v762, %v700
  %v764 = vadd.f32 %v763, %v701
  %v765 = vadd.f32 %v764, %v702
  %v766 = vadd.f32 %v765, %v703
  %v767 = vadd.f32 %v766, %v704
  %v768 = vadd.f32 %v767, %v705
  %v769 = vadd.f32 %v768, %v706
  %v770 = vadd.f32 %v769, %v707
  %v771 = vadd.f32 %v770, %v708
  %v772 = vadd.f32 %v771, %v709
  %v773 = vadd.f32 %v772, %v710
  %v774 = vadd.f32 %v773, %v711
  %v775 = vadd.f32 %v774, %v712
  %v776 = vadd.f32 %v775, %v713
  %v777 = vadd.f32 %v776, %v714
  %v778 = vadd.f32 %v777, %v715
  %v779 = vadd.f32 %v778, %v716
  %v780 = vadd.f32 %v779, %v717
  %v781 = vadd.f32 %v780, %v718
  %v782 = vadd.f32 %v781, %v719
  %v783 = vadd.f32 %v782, %v720
  %v784 = vadd.f32 %v783, %v721
  %v785 = vadd.f32 %v784, %v722
  %v786 = vadd.f32 %v785, %v723
  %v787 = vadd.f32 %v786, %v724
  %v788 = vrot.slane %v787, 4
  %v789 = vadd.f32 %v787, %v788
  %v790 = vrot.slane %v789, 2
  %v791 = vadd.f32 %v789, %v790
  %v792 = vrot.slane %v791, 1
  %v793 = vadd.f32 %v791, %v792
  %v794 = vadd.f32 %v660, %v793
  %795 = vst [vmem:[%s5] sm:$0x1] %v794
  %v796 = vld [vmem:[%s62] sm:$0xf]
  %v797 = vld [vmem:[%s62 + $0x4] sm:$0xf]
  %v798 = vld [vmem:[%s62 + $0x8] sm:$0xf]
  %v799 = vld [vmem:[%s62 + $0xc] sm:$0xf]
  %v800 = vld [vmem:[%s62 + $0x10] sm:$0xf]
  %v801 = vld [vmem:[%s62 + $0x14] sm:$0xf]
  %v802 = vld [vmem:[%s62 + $0x18] sm:$0xf]
  %v803 = vld [vmem:[%s62 + $0x1c] sm:$0xf]
  %v804 = vld [vmem:[%s62 + $0x20] sm:$0xf]
  %v805 = vld [vmem:[%s62 + $0x24] sm:$0xf]
  %v806 = vld [vmem:[%s62 + $0x28] sm:$0xf]
  %v807 = vld [vmem:[%s62 + $0x2c] sm:$0xf]
  %v808 = vld [vmem:[%s62 + $0x30] sm:$0xf]
  %v809 = vld [vmem:[%s62 + $0x34] sm:$0xf]
  %v810 = vld [vmem:[%s62 + $0x38] sm:$0xf]
  %v811 = vld [vmem:[%s62 + $0x3c] sm:$0xf]
  %v812 = vld [vmem:[%s62 + $0x40] sm:$0xf]
  %v813 = vld [vmem:[%s62 + $0x44] sm:$0xf]
  %v814 = vld [vmem:[%s62 + $0x48] sm:$0xf]
  %v815 = vld [vmem:[%s62 + $0x4c] sm:$0xf]
  %v816 = vld [vmem:[%s62 + $0x50] sm:$0xf]
  %v817 = vld [vmem:[%s62 + $0x54] sm:$0xf]
  %v818 = vld [vmem:[%s62 + $0x58] sm:$0xf]
  %v819 = vld [vmem:[%s62 + $0x5c] sm:$0xf]
  %v820 = vld [vmem:[%s62 + $0x60] sm:$0xf]
  %v821 = vld [vmem:[%s62 + $0x64] sm:$0xf]
  %v822 = vld [vmem:[%s62 + $0x68] sm:$0xf]
  %v823 = vld [vmem:[%s62 + $0x6c] sm:$0xf]
  %v824 = vld [vmem:[%s62 + $0x70] sm:$0xf]
  %v825 = vld [vmem:[%s62 + $0x74] sm:$0xf]
  %v826 = vld [vmem:[%s62 + $0x78] sm:$0xf]
  %v827 = vld [vmem:[%s62 + $0x7c] sm:$0xf]
  %v828 = vld [vmem:[%s62 + $0x80] sm:$0xf]
  %v829 = vld [vmem:[%s62 + $0x84] sm:$0xf]
  %v830 = vld [vmem:[%s62 + $0x88] sm:$0xf]
  %v831 = vld [vmem:[%s62 + $0x8c] sm:$0xf]
  %v832 = vld [vmem:[%s62 + $0x90] sm:$0xf]
  %v833 = vld [vmem:[%s62 + $0x94] sm:$0xf]
  %v834 = vld [vmem:[%s62 + $0x98] sm:$0xf]
  %v835 = vld [vmem:[%s62 + $0x9c] sm:$0xf]
  %v836 = vld [vmem:[%s62 + $0xa0] sm:$0xf]
  %v837 = vld [vmem:[%s62 + $0xa4] sm:$0xf]
  %v838 = vld [vmem:[%s62 + $0xa8] sm:$0xf]
  %v839 = vld [vmem:[%s62 + $0xac] sm:$0xf]
  %v840 = vld [vmem:[%s62 + $0xb0] sm:$0xf]
  %v841 = vld [vmem:[%s62 + $0xb4] sm:$0xf]
  %v842 = vld [vmem:[%s62 + $0xb8] sm:$0xf]
  %v843 = vld [vmem:[%s62 + $0xbc] sm:$0xf]
  %v844 = vld [vmem:[%s62 + $0xc0] sm:$0xf]
  %v845 = vld [vmem:[%s62 + $0xc4] sm:$0xf]
  %v846 = vld [vmem:[%s62 + $0xc8] sm:$0xf]
  %v847 = vld [vmem:[%s62 + $0xcc] sm:$0xf]
  %v848 = vld [vmem:[%s62 + $0xd0] sm:$0xf]
  %v849 = vld [vmem:[%s62 + $0xd4] sm:$0xf]
  %v850 = vld [vmem:[%s62 + $0xd8] sm:$0xf]
  %v851 = vld [vmem:[%s62 + $0xdc] sm:$0xf]
  %v852 = vld [vmem:[%s62 + $0xe0] sm:$0xf]
  %v853 = vld [vmem:[%s62 + $0xe4] sm:$0xf]
  %v854 = vld [vmem:[%s62 + $0xe8] sm:$0xf]
  %v855 = vld [vmem:[%s62 + $0xec] sm:$0xf]
  %v856 = vld [vmem:[%s62 + $0xf0] sm:$0xf]
  %v857 = vld [vmem:[%s62 + $0xf4] sm:$0xf]
  %v858 = vld [vmem:[%s62 + $0xf8] sm:$0xf]
  %v859 = vld [vmem:[%s62 + $0xfc] sm:$0xf]
  %v860 = vld [vmem:[%s3] sm:$0x3]
  %v925 = vunpack.c.l.b16 %v796
  %v926 = vunpack.c.l.b16 %v797
  %v927 = vunpack.c.l.b16 %v798
  %v928 = vunpack.c.l.b16 %v799
  %v929 = vunpack.c.l.b16 %v800
  %v930 = vunpack.c.l.b16 %v801
  %v931 = vunpack.c.l.b16 %v802
  %v932 = vunpack.c.l.b16 %v803
  %v933 = vunpack.c.l.b16 %v804
  %v934 = vunpack.c.l.b16 %v805
  %v935 = vunpack.c.l.b16 %v806
  %v936 = vunpack.c.l.b16 %v807
  %v937 = vunpack.c.l.b16 %v808
  %v938 = vunpack.c.l.b16 %v809
  %v939 = vunpack.c.l.b16 %v810
  %v940 = vunpack.c.l.b16 %v811
  %v941 = vunpack.c.l.b16 %v812
  %v942 = vunpack.c.l.b16 %v813
  %v943 = vunpack.c.l.b16 %v814
  %v944 = vunpack.c.l.b16 %v815
  %v945 = vunpack.c.l.b16 %v816
  %v946 = vunpack.c.l.b16 %v817
  %v947 = vunpack.c.l.b16 %v818
  %v948 = vunpack.c.l.b16 %v819
  %v949 = vunpack.c.l.b16 %v820
  %v950 = vunpack.c.l.b16 %v821
  %v951 = vunpack.c.l.b16 %v822
  %v952 = vunpack.c.l.b16 %v823
  %v953 = vunpack.c.l.b16 %v824
  %v954 = vunpack.c.l.b16 %v825
  %v955 = vunpack.c.l.b16 %v826
  %v956 = vunpack.c.l.b16 %v827
  %v957 = vunpack.c.l.b16 %v828
  %v958 = vunpack.c.l.b16 %v829
  %v959 = vunpack.c.l.b16 %v830
  %v960 = vunpack.c.l.b16 %v831
  %v961 = vunpack.c.l.b16 %v832
  %v962 = vunpack.c.l.b16 %v833
  %v963 = vunpack.c.l.b16 %v834
  %v964 = vunpack.c.l.b16 %v835
  %v965 = vunpack.c.l.b16 %v836
  %v966 = vunpack.c.l.b16 %v837
  %v967 = vunpack.c.l.b16 %v838
  %v968 = vunpack.c.l.b16 %v839
  %v969 = vunpack.c.l.b16 %v840
  %v970 = vunpack.c.l.b16 %v841
  %v971 = vunpack.c.l.b16 %v842
  %v972 = vunpack.c.l.b16 %v843
  %v973 = vunpack.c.l.b16 %v844
  %v974 = vunpack.c.l.b16 %v845
  %v975 = vunpack.c.l.b16 %v846
  %v976 = vunpack.c.l.b16 %v847
  %v977 = vunpack.c.l.b16 %v848
  %v978 = vunpack.c.l.b16 %v849
  %v979 = vunpack.c.l.b16 %v850
  %v980 = vunpack.c.l.b16 %v851
  %v981 = vunpack.c.l.b16 %v852
  %v982 = vunpack.c.l.b16 %v853
  %v983 = vunpack.c.l.b16 %v854
  %v984 = vunpack.c.l.b16 %v855
  %v985 = vunpack.c.l.b16 %v856
  %v986 = vunpack.c.l.b16 %v857
  %v987 = vunpack.c.l.b16 %v858
  %v988 = vunpack.c.l.b16 %v859
  %v989 = vpack.c.b16 %v926, %v925
  %v990 = vpack.c.b16 %v928, %v927
  %v991 = vpack.c.b16 %v930, %v929
  %v992 = vpack.c.b16 %v932, %v931
  %v993 = vpack.c.b16 %v934, %v933
  %v994 = vpack.c.b16 %v936, %v935
  %v995 = vpack.c.b16 %v938, %v937
  %v996 = vpack.c.b16 %v940, %v939
  %v997 = vpack.c.b16 %v942, %v941
  %v998 = vpack.c.b16 %v944, %v943
  %v999 = vpack.c.b16 %v946, %v945
  %v1000 = vpack.c.b16 %v948, %v947
  %v1001 = vpack.c.b16 %v950, %v949
  %v1002 = vpack.c.b16 %v952, %v951
  %v1003 = vpack.c.b16 %v954, %v953
  %v1004 = vpack.c.b16 %v956, %v955
  %v1005 = vpack.c.b16 %v958, %v957
  %v1006 = vpack.c.b16 %v960, %v959
  %v1007 = vpack.c.b16 %v962, %v961
  %v1008 = vpack.c.b16 %v964, %v963
  %v1009 = vpack.c.b16 %v966, %v965
  %v1010 = vpack.c.b16 %v968, %v967
  %v1011 = vpack.c.b16 %v970, %v969
  %v1012 = vpack.c.b16 %v972, %v971
  %v1013 = vpack.c.b16 %v974, %v973
  %v1014 = vpack.c.b16 %v976, %v975
  %v1015 = vpack.c.b16 %v978, %v977
  %v1016 = vpack.c.b16 %v980, %v979
  %v1017 = vpack.c.b16 %v982, %v981
  %v1018 = vpack.c.b16 %v984, %v983
  %v1019 = vpack.c.b16 %v986, %v985
  %v1020 = vpack.c.b16 %v988, %v987
  %vm1021 = vcmask 31744
  %v1023 = vsel %vm1021, %v989, 0
  %v1026 = vsel %vm1021, %v990, 0
  %v1029 = vsel %vm1021, %v991, 0
  %v1032 = vsel %vm1021, %v992, 0
  %v1035 = vsel %vm1021, %v993, 0
  %v1038 = vsel %vm1021, %v994, 0
  %v1041 = vsel %vm1021, %v995, 0
  %v1044 = vsel %vm1021, %v996, 0
  %v1047 = vsel %vm1021, %v997, 0
  %v1050 = vsel %vm1021, %v998, 0
  %v1053 = vsel %vm1021, %v999, 0
  %v1056 = vsel %vm1021, %v1000, 0
  %v1059 = vsel %vm1021, %v1001, 0
  %v1062 = vsel %vm1021, %v1002, 0
  %v1065 = vsel %vm1021, %v1003, 0
  %v1068 = vsel %vm1021, %v1004, 0
  %v1071 = vsel %vm1021, %v1005, 0
  %v1074 = vsel %vm1021, %v1006, 0
  %v1077 = vsel %vm1021, %v1007, 0
  %v1080 = vsel %vm1021, %v1008, 0
  %v1083 = vsel %vm1021, %v1009, 0
  %v1086 = vsel %vm1021, %v1010, 0
  %v1089 = vsel %vm1021, %v1011, 0
  %v1092 = vsel %vm1021, %v1012, 0
  %v1095 = vsel %vm1021, %v1013, 0
  %v1098 = vsel %vm1021, %v1014, 0
  %v1101 = vsel %vm1021, %v1015, 0
  %v1104 = vsel %vm1021, %v1016, 0
  %v1107 = vsel %vm1021, %v1017, 0
  %v1110 = vsel %vm1021, %v1018, 0
  %v1113 = vsel %vm1021, %v1019, 0
  %v1116 = vsel %vm1021, %v1020, 0
  %v1119 = vsel %vm415, %v860, 0
  %1121 = vmatpush.bf16.msra.mxu0 0
  %1122 = vmatpush.bf16.msra.mxu0 0
  %1123 = vmatpush.bf16.msra.mxu0 0
  %1124 = vmatpush.bf16.msra.mxu0 0
  %1125 = vmatpush.bf16.msra.mxu0 0
  %1126 = vmatpush.bf16.msra.mxu0 0
  %1127 = vmatpush.bf16.msra.mxu0 0
  %1128 = vmatpush.bf16.msra.mxu0 %v1119
  %1129 = vmatmul.bf16.gmra.mxu0 %v1023
  %v1130 = vpop.f32.mrf.mxu0
  %v1131 = vadd.f32 0.0, %v1130
  %v1132 = vpop.f32.mrf.mxu0
  %v1133 = vadd.f32 0.0, %v1132
  %1134 = vmatmul.bf16.gmra.mxu0 %v1026
  %v1135 = vpop.f32.mrf.mxu0
  %v1136 = vadd.f32 0.0, %v1135
  %v1137 = vpop.f32.mrf.mxu0
  %v1138 = vadd.f32 0.0, %v1137
  %1139 = vmatmul.bf16.gmra.mxu0 %v1029
  %v1140 = vpop.f32.mrf.mxu0
  %v1141 = vadd.f32 0.0, %v1140
  %v1142 = vpop.f32.mrf.mxu0
  %v1143 = vadd.f32 0.0, %v1142
  %1144 = vmatmul.bf16.gmra.mxu0 %v1032
  %v1145 = vpop.f32.mrf.mxu0
  %v1146 = vadd.f32 0.0, %v1145
  %v1147 = vpop.f32.mrf.mxu0
  %v1148 = vadd.f32 0.0, %v1147
  %1149 = vmatmul.bf16.gmra.mxu0 %v1035
  %v1150 = vpop.f32.mrf.mxu0
  %v1151 = vadd.f32 0.0, %v1150
  %v1152 = vpop.f32.mrf.mxu0
  %v1153 = vadd.f32 0.0, %v1152
  %1154 = vmatmul.bf16.gmra.mxu0 %v1038
  %v1155 = vpop.f32.mrf.mxu0
  %v1156 = vadd.f32 0.0, %v1155
  %v1157 = vpop.f32.mrf.mxu0
  %v1158 = vadd.f32 0.0, %v1157
  %1159 = vmatmul.bf16.gmra.mxu0 %v1041
  %v1160 = vpop.f32.mrf.mxu0
  %v1161 = vadd.f32 0.0, %v1160
  %v1162 = vpop.f32.mrf.mxu0
  %v1163 = vadd.f32 0.0, %v1162
  %1164 = vmatmul.bf16.gmra.mxu0 %v1044
  %v1165 = vpop.f32.mrf.mxu0
  %v1166 = vadd.f32 0.0, %v1165
  %v1167 = vpop.f32.mrf.mxu0
  %v1168 = vadd.f32 0.0, %v1167
  %1169 = vmatmul.bf16.gmra.mxu0 %v1047
  %v1170 = vpop.f32.mrf.mxu0
  %v1171 = vadd.f32 0.0, %v1170
  %v1172 = vpop.f32.mrf.mxu0
  %v1173 = vadd.f32 0.0, %v1172
  %1174 = vmatmul.bf16.gmra.mxu0 %v1050
  %v1175 = vpop.f32.mrf.mxu0
  %v1176 = vadd.f32 0.0, %v1175
  %v1177 = vpop.f32.mrf.mxu0
  %v1178 = vadd.f32 0.0, %v1177
  %1179 = vmatmul.bf16.gmra.mxu0 %v1053
  %v1180 = vpop.f32.mrf.mxu0
  %v1181 = vadd.f32 0.0, %v1180
  %v1182 = vpop.f32.mrf.mxu0
  %v1183 = vadd.f32 0.0, %v1182
  %1184 = vmatmul.bf16.gmra.mxu0 %v1056
  %v1185 = vpop.f32.mrf.mxu0
  %v1186 = vadd.f32 0.0, %v1185
  %v1187 = vpop.f32.mrf.mxu0
  %v1188 = vadd.f32 0.0, %v1187
  %1189 = vmatmul.bf16.gmra.mxu0 %v1059
  %v1190 = vpop.f32.mrf.mxu0
  %v1191 = vadd.f32 0.0, %v1190
  %v1192 = vpop.f32.mrf.mxu0
  %v1193 = vadd.f32 0.0, %v1192
  %1194 = vmatmul.bf16.gmra.mxu0 %v1062
  %v1195 = vpop.f32.mrf.mxu0
  %v1196 = vadd.f32 0.0, %v1195
  %v1197 = vpop.f32.mrf.mxu0
  %v1198 = vadd.f32 0.0, %v1197
  %1199 = vmatmul.bf16.gmra.mxu0 %v1065
  %v1200 = vpop.f32.mrf.mxu0
  %v1201 = vadd.f32 0.0, %v1200
  %v1202 = vpop.f32.mrf.mxu0
  %v1203 = vadd.f32 0.0, %v1202
  %1204 = vmatmul.bf16.gmra.mxu0 %v1068
  %v1205 = vpop.f32.mrf.mxu0
  %v1206 = vadd.f32 0.0, %v1205
  %v1207 = vpop.f32.mrf.mxu0
  %v1208 = vadd.f32 0.0, %v1207
  %1209 = vmatmul.bf16.gmra.mxu0 %v1071
  %v1210 = vpop.f32.mrf.mxu0
  %v1211 = vadd.f32 0.0, %v1210
  %v1212 = vpop.f32.mrf.mxu0
  %v1213 = vadd.f32 0.0, %v1212
  %1214 = vmatmul.bf16.gmra.mxu0 %v1074
  %v1215 = vpop.f32.mrf.mxu0
  %v1216 = vadd.f32 0.0, %v1215
  %v1217 = vpop.f32.mrf.mxu0
  %v1218 = vadd.f32 0.0, %v1217
  %1219 = vmatmul.bf16.gmra.mxu0 %v1077
  %v1220 = vpop.f32.mrf.mxu0
  %v1221 = vadd.f32 0.0, %v1220
  %v1222 = vpop.f32.mrf.mxu0
  %v1223 = vadd.f32 0.0, %v1222
  %1224 = vmatmul.bf16.gmra.mxu0 %v1080
  %v1225 = vpop.f32.mrf.mxu0
  %v1226 = vadd.f32 0.0, %v1225
  %v1227 = vpop.f32.mrf.mxu0
  %v1228 = vadd.f32 0.0, %v1227
  %1229 = vmatmul.bf16.gmra.mxu0 %v1083
  %v1230 = vpop.f32.mrf.mxu0
  %v1231 = vadd.f32 0.0, %v1230
  %v1232 = vpop.f32.mrf.mxu0
  %v1233 = vadd.f32 0.0, %v1232
  %1234 = vmatmul.bf16.gmra.mxu0 %v1086
  %v1235 = vpop.f32.mrf.mxu0
  %v1236 = vadd.f32 0.0, %v1235
  %v1237 = vpop.f32.mrf.mxu0
  %v1238 = vadd.f32 0.0, %v1237
  %1239 = vmatmul.bf16.gmra.mxu0 %v1089
  %v1240 = vpop.f32.mrf.mxu0
  %v1241 = vadd.f32 0.0, %v1240
  %v1242 = vpop.f32.mrf.mxu0
  %v1243 = vadd.f32 0.0, %v1242
  %1244 = vmatmul.bf16.gmra.mxu0 %v1092
  %v1245 = vpop.f32.mrf.mxu0
  %v1246 = vadd.f32 0.0, %v1245
  %v1247 = vpop.f32.mrf.mxu0
  %v1248 = vadd.f32 0.0, %v1247
  %1249 = vmatmul.bf16.gmra.mxu0 %v1095
  %v1250 = vpop.f32.mrf.mxu0
  %v1251 = vadd.f32 0.0, %v1250
  %v1252 = vpop.f32.mrf.mxu0
  %v1253 = vadd.f32 0.0, %v1252
  %1254 = vmatmul.bf16.gmra.mxu0 %v1098
  %v1255 = vpop.f32.mrf.mxu0
  %v1256 = vadd.f32 0.0, %v1255
  %v1257 = vpop.f32.mrf.mxu0
  %v1258 = vadd.f32 0.0, %v1257
  %1259 = vmatmul.bf16.gmra.mxu0 %v1101
  %v1260 = vpop.f32.mrf.mxu0
  %v1261 = vadd.f32 0.0, %v1260
  %v1262 = vpop.f32.mrf.mxu0
  %v1263 = vadd.f32 0.0, %v1262
  %1264 = vmatmul.bf16.gmra.mxu0 %v1104
  %v1265 = vpop.f32.mrf.mxu0
  %v1266 = vadd.f32 0.0, %v1265
  %v1267 = vpop.f32.mrf.mxu0
  %v1268 = vadd.f32 0.0, %v1267
  %1269 = vmatmul.bf16.gmra.mxu0 %v1107
  %v1270 = vpop.f32.mrf.mxu0
  %v1271 = vadd.f32 0.0, %v1270
  %v1272 = vpop.f32.mrf.mxu0
  %v1273 = vadd.f32 0.0, %v1272
  %1274 = vmatmul.bf16.gmra.mxu0 %v1110
  %v1275 = vpop.f32.mrf.mxu0
  %v1276 = vadd.f32 0.0, %v1275
  %v1277 = vpop.f32.mrf.mxu0
  %v1278 = vadd.f32 0.0, %v1277
  %1279 = vmatmul.bf16.gmra.mxu0 %v1113
  %v1280 = vpop.f32.mrf.mxu0
  %v1281 = vadd.f32 0.0, %v1280
  %v1282 = vpop.f32.mrf.mxu0
  %v1283 = vadd.f32 0.0, %v1282
  %1284 = vmatmul.bf16.gmra.mxu0 %v1116
  %v1285 = vpop.f32.mrf.mxu0
  %v1286 = vadd.f32 0.0, %v1285
  %v1287 = vpop.f32.mrf.mxu0
  %v1288 = vadd.f32 0.0, %v1287
  %1289 = vdwg.mxu0
  %v1290 = vld [vmem:[%s6] sm:$0x1]
  %v1291 = vadd.f32 %v1131, %v1133
  %v1292 = vadd.f32 %v1291, %v1136
  %v1293 = vadd.f32 %v1292, %v1138
  %v1294 = vadd.f32 %v1293, %v1141
  %v1295 = vadd.f32 %v1294, %v1143
  %v1296 = vadd.f32 %v1295, %v1146
  %v1297 = vadd.f32 %v1296, %v1148
  %v1298 = vadd.f32 %v1297, %v1151
  %v1299 = vadd.f32 %v1298, %v1153
  %v1300 = vadd.f32 %v1299, %v1156
  %v1301 = vadd.f32 %v1300, %v1158
  %v1302 = vadd.f32 %v1301, %v1161
  %v1303 = vadd.f32 %v1302, %v1163
  %v1304 = vadd.f32 %v1303, %v1166
  %v1305 = vadd.f32 %v1304, %v1168
  %v1306 = vadd.f32 %v1305, %v1171
  %v1307 = vadd.f32 %v1306, %v1173
  %v1308 = vadd.f32 %v1307, %v1176
  %v1309 = vadd.f32 %v1308, %v1178
  %v1310 = vadd.f32 %v1309, %v1181
  %v1311 = vadd.f32 %v1310, %v1183
  %v1312 = vadd.f32 %v1311, %v1186
  %v1313 = vadd.f32 %v1312, %v1188
  %v1314 = vadd.f32 %v1313, %v1191
  %v1315 = vadd.f32 %v1314, %v1193
  %v1316 = vadd.f32 %v1315, %v1196
  %v1317 = vadd.f32 %v1316, %v1198
  %v1318 = vadd.f32 %v1317, %v1201
  %v1319 = vadd.f32 %v1318, %v1203
  %v1320 = vadd.f32 %v1319, %v1206
  %v1321 = vadd.f32 %v1320, %v1208
  %v1322 = vadd.f32 %v1321, %v1211
  %v1323 = vadd.f32 %v1322, %v1213
  %v1324 = vadd.f32 %v1323, %v1216
  %v1325 = vadd.f32 %v1324, %v1218
  %v1326 = vadd.f32 %v1325, %v1221
  %v1327 = vadd.f32 %v1326, %v1223
  %v1328 = vadd.f32 %v1327, %v1226
  %v1329 = vadd.f32 %v1328, %v1228
  %v1330 = vadd.f32 %v1329, %v1231
  %v1331 = vadd.f32 %v1330, %v1233
  %v1332 = vadd.f32 %v1331, %v1236
  %v1333 = vadd.f32 %v1332, %v1238
  %v1334 = vadd.f32 %v1333, %v1241
  %v1335 = vadd.f32 %v1334, %v1243
  %v1336 = vadd.f32 %v1335, %v1246
  %v1337 = vadd.f32 %v1336, %v1248
  %v1338 = vadd.f32 %v1337, %v1251
  %v1339 = vadd.f32 %v1338, %v1253
  %v1340 = vadd.f32 %v1339, %v1256
  %v1341 = vadd.f32 %v1340, %v1258
  %v1342 = vadd.f32 %v1341, %v1261
  %v1343 = vadd.f32 %v1342, %v1263
  %v1344 = vadd.f32 %v1343, %v1266
  %v1345 = vadd.f32 %v1344, %v1268
  %v1346 = vadd.f32 %v1345, %v1271
  %v1347 = vadd.f32 %v1346, %v1273
  %v1348 = vadd.f32 %v1347, %v1276
  %v1349 = vadd.f32 %v1348, %v1278
  %v1350 = vadd.f32 %v1349, %v1281
  %v1351 = vadd.f32 %v1350, %v1283
  %v1352 = vadd.f32 %v1351, %v1286
  %v1353 = vadd.f32 %v1352, %v1288
  %v1354 = vrot.slane %v1353, 4
  %v1355 = vadd.f32 %v1353, %v1354
  %v1356 = vrot.slane %v1355, 2
  %v1357 = vadd.f32 %v1355, %v1356
  %v1358 = vrot.slane %v1357, 1
  %v1359 = vadd.f32 %v1357, %v1358
  %v1360 = vadd.f32 %v1290, %v1359
  %1361 = vst [vmem:[%s6] sm:$0x1] %v1360
  %v1362 = vld [vmem:[%s7] sm:$0x1]
  %v1363 = vmul.f32 %v1131, %v1131
  %v1364 = vmul.f32 %v1133, %v1133
  %v1365 = vmul.f32 %v1136, %v1136
  %v1366 = vmul.f32 %v1138, %v1138
  %v1367 = vmul.f32 %v1141, %v1141
  %v1368 = vmul.f32 %v1143, %v1143
  %v1369 = vmul.f32 %v1146, %v1146
  %v1370 = vmul.f32 %v1148, %v1148
  %v1371 = vmul.f32 %v1151, %v1151
  %v1372 = vmul.f32 %v1153, %v1153
  %v1373 = vmul.f32 %v1156, %v1156
  %v1374 = vmul.f32 %v1158, %v1158
  %v1375 = vmul.f32 %v1161, %v1161
  %v1376 = vmul.f32 %v1163, %v1163
  %v1377 = vmul.f32 %v1166, %v1166
  %v1378 = vmul.f32 %v1168, %v1168
  %v1379 = vmul.f32 %v1171, %v1171
  %v1380 = vmul.f32 %v1173, %v1173
  %v1381 = vmul.f32 %v1176, %v1176
  %v1382 = vmul.f32 %v1178, %v1178
  %v1383 = vmul.f32 %v1181, %v1181
  %v1384 = vmul.f32 %v1183, %v1183
  %v1385 = vmul.f32 %v1186, %v1186
  %v1386 = vmul.f32 %v1188, %v1188
  %v1387 = vmul.f32 %v1191, %v1191
  %v1388 = vmul.f32 %v1193, %v1193
  %v1389 = vmul.f32 %v1196, %v1196
  %v1390 = vmul.f32 %v1198, %v1198
  %v1391 = vmul.f32 %v1201, %v1201
  %v1392 = vmul.f32 %v1203, %v1203
  %v1393 = vmul.f32 %v1206, %v1206
  %v1394 = vmul.f32 %v1208, %v1208
  %v1395 = vmul.f32 %v1211, %v1211
  %v1396 = vmul.f32 %v1213, %v1213
  %v1397 = vmul.f32 %v1216, %v1216
  %v1398 = vmul.f32 %v1218, %v1218
  %v1399 = vmul.f32 %v1221, %v1221
  %v1400 = vmul.f32 %v1223, %v1223
  %v1401 = vmul.f32 %v1226, %v1226
  %v1402 = vmul.f32 %v1228, %v1228
  %v1403 = vmul.f32 %v1231, %v1231
  %v1404 = vmul.f32 %v1233, %v1233
  %v1405 = vmul.f32 %v1236, %v1236
  %v1406 = vmul.f32 %v1238, %v1238
  %v1407 = vmul.f32 %v1241, %v1241
  %v1408 = vmul.f32 %v1243, %v1243
  %v1409 = vmul.f32 %v1246, %v1246
  %v1410 = vmul.f32 %v1248, %v1248
  %v1411 = vmul.f32 %v1251, %v1251
  %v1412 = vmul.f32 %v1253, %v1253
  %v1413 = vmul.f32 %v1256, %v1256
  %v1414 = vmul.f32 %v1258, %v1258
  %v1415 = vmul.f32 %v1261, %v1261
  %v1416 = vmul.f32 %v1263, %v1263
  %v1417 = vmul.f32 %v1266, %v1266
  %v1418 = vmul.f32 %v1268, %v1268
  %v1419 = vmul.f32 %v1271, %v1271
  %v1420 = vmul.f32 %v1273, %v1273
  %v1421 = vmul.f32 %v1276, %v1276
  %v1422 = vmul.f32 %v1278, %v1278
  %v1423 = vmul.f32 %v1281, %v1281
  %v1424 = vmul.f32 %v1283, %v1283
  %v1425 = vmul.f32 %v1286, %v1286
  %v1426 = vmul.f32 %v1288, %v1288
  %v1427 = vadd.f32 %v1363, %v1364
  %v1428 = vadd.f32 %v1427, %v1365
  %v1429 = vadd.f32 %v1428, %v1366
  %v1430 = vadd.f32 %v1429, %v1367
  %v1431 = vadd.f32 %v1430, %v1368
  %v1432 = vadd.f32 %v1431, %v1369
  %v1433 = vadd.f32 %v1432, %v1370
  %v1434 = vadd.f32 %v1433, %v1371
  %v1435 = vadd.f32 %v1434, %v1372
  %v1436 = vadd.f32 %v1435, %v1373
  %v1437 = vadd.f32 %v1436, %v1374
  %v1438 = vadd.f32 %v1437, %v1375
  %v1439 = vadd.f32 %v1438, %v1376
  %v1440 = vadd.f32 %v1439, %v1377
  %v1441 = vadd.f32 %v1440, %v1378
  %v1442 = vadd.f32 %v1441, %v1379
  %v1443 = vadd.f32 %v1442, %v1380
  %v1444 = vadd.f32 %v1443, %v1381
  %v1445 = vadd.f32 %v1444, %v1382
  %v1446 = vadd.f32 %v1445, %v1383
  %v1447 = vadd.f32 %v1446, %v1384
  %v1448 = vadd.f32 %v1447, %v1385
  %v1449 = vadd.f32 %v1448, %v1386
  %v1450 = vadd.f32 %v1449, %v1387
  %v1451 = vadd.f32 %v1450, %v1388
  %v1452 = vadd.f32 %v1451, %v1389
  %v1453 = vadd.f32 %v1452, %v1390
  %v1454 = vadd.f32 %v1453, %v1391
  %v1455 = vadd.f32 %v1454, %v1392
  %v1456 = vadd.f32 %v1455, %v1393
  %v1457 = vadd.f32 %v1456, %v1394
  %v1458 = vadd.f32 %v1457, %v1395
  %v1459 = vadd.f32 %v1458, %v1396
  %v1460 = vadd.f32 %v1459, %v1397
  %v1461 = vadd.f32 %v1460, %v1398
  %v1462 = vadd.f32 %v1461, %v1399
  %v1463 = vadd.f32 %v1462, %v1400
  %v1464 = vadd.f32 %v1463, %v1401
  %v1465 = vadd.f32 %v1464, %v1402
  %v1466 = vadd.f32 %v1465, %v1403
  %v1467 = vadd.f32 %v1466, %v1404
  %v1468 = vadd.f32 %v1467, %v1405
  %v1469 = vadd.f32 %v1468, %v1406
  %v1470 = vadd.f32 %v1469, %v1407
  %v1471 = vadd.f32 %v1470, %v1408
  %v1472 = vadd.f32 %v1471, %v1409
  %v1473 = vadd.f32 %v1472, %v1410
  %v1474 = vadd.f32 %v1473, %v1411
  %v1475 = vadd.f32 %v1474, %v1412
  %v1476 = vadd.f32 %v1475, %v1413
  %v1477 = vadd.f32 %v1476, %v1414
  %v1478 = vadd.f32 %v1477, %v1415
  %v1479 = vadd.f32 %v1478, %v1416
  %v1480 = vadd.f32 %v1479, %v1417
  %v1481 = vadd.f32 %v1480, %v1418
  %v1482 = vadd.f32 %v1481, %v1419
  %v1483 = vadd.f32 %v1482, %v1420
  %v1484 = vadd.f32 %v1483, %v1421
  %v1485 = vadd.f32 %v1484, %v1422
  %v1486 = vadd.f32 %v1485, %v1423
  %v1487 = vadd.f32 %v1486, %v1424
  %v1488 = vadd.f32 %v1487, %v1425
  %v1489 = vadd.f32 %v1488, %v1426
  %v1490 = vrot.slane %v1489, 4
  %v1491 = vadd.f32 %v1489, %v1490
  %v1492 = vrot.slane %v1491, 2
  %v1493 = vadd.f32 %v1491, %v1492
  %v1494 = vrot.slane %v1493, 1
  %v1495 = vadd.f32 %v1493, %v1494
  %v1496 = vadd.f32 %v1362, %v1495
  %1497 = vst [vmem:[%s7] sm:$0x1] %v1496
  // Predicated region
  $region22: #{res_block_forward.4} parent=0 // pred_check
    _
  $region23: #{res_block_forward.4} parent=0 // pred_check_branch
    %1499 = sbr.rel (0) target = $region25
  $region24: #{res_block_forward.4} parent=0 // pred_region
    _
  $region25: #{res_block_forward.4} parent=0 // pred_fallthru
    _
  // Predicated region
  $region26: #{res_block_forward.4} parent=0 // pred_check
    _
  $region27: #{res_block_forward.4} parent=0 // pred_check_branch
    %1501 = sbr.rel (0) target = $region29
  $region28: #{res_block_forward.4} parent=0 // pred_region
    _
  $region29: #{res_block_forward.4} parent=0 // pred_fallthru
    _
  // Predicated region
  $region30: #{res_block_forward.4} parent=0 // pred_check
    _
  $region31: #{res_block_forward.4} parent=0 // pred_check_branch
    %1503 = sbr.rel (0) target = $region33
  $region32: #{res_block_forward.4} parent=0 // pred_region
    _
  $region33: #{res_block_forward.4} parent=0 // pred_fallthru
    _
  // Predicated region
  $region34: #{res_block_forward.4} parent=0 // pred_check
    _
  $region35: #{res_block_forward.4} parent=0 // pred_check_branch
    %1505 = sbr.rel (0) target = $region37
  $region36: #{res_block_forward.4} parent=0 // pred_region
    _
  $region37: #{res_block_forward.4} parent=0 // pred_fallthru
    _
  // Predicated region
  $region38: #{res_block_forward.4} parent=0 // pred_check
    _
  $region39: #{res_block_forward.4} parent=0 // pred_check_branch
    %1507 = sbr.rel (0) target = $region41
  $region40: #{res_block_forward.4} parent=0 // pred_region
    _
  $region41: #{res_block_forward.4} parent=0 // pred_fallthru
    _
  // Predicated region
  $region42: #{res_block_forward.4} parent=0 // pred_check
    _
  $region43: #{res_block_forward.4} parent=0 // pred_check_branch
    %1509 = sbr.rel (0) target = $region45
  $region44: #{res_block_forward.4} parent=0 // pred_region
    _
  $region45: #{res_block_forward.4} parent=0 // pred_fallthru
    _
  // Predicated region
  $region46: #{res_block_forward.4} parent=0 // pred_check
    _
  $region47: #{res_block_forward.4} parent=0 // pred_check_branch
    %1511 = sbr.rel (0) target = $region49
  $region48: #{res_block_forward.4} parent=0 // pred_region
    _
  $region49: #{res_block_forward.4} parent=0 // pred_fallthru
    _
  // Predicated region
  $region50: #{res_block_forward.4} parent=0 // pred_check
    _
  $region51: #{res_block_forward.4} parent=0 // pred_check_branch
    %1513 = sbr.rel (0) target = $region53
  $region52: #{res_block_forward.4} parent=0 // pred_region
    _
  $region53: #{res_block_forward.4} parent=0 // pred_fallthru
    _

// kernel: res_block_forward.5
$region0: #{res_block_forward.5}
  #allocation0 [shape = 'u32[]', space=smem, size = 0x4, offset = 0x4, fixed_abs, tag = 'smem constant byte address 0x4 - core index']
  #allocation1 [shape = 'u32[72,128]{1,0:T(1,128)}', space=vmem, size = 0x9000, scoped, tag = 'internal scratch']
  %s0 = inlined_call_operand.vmem [shape: bf16[512,36], index: 0, kind: input, shape index: {}]
  %s1 = inlined_call_operand.vmem [shape: bf16[36,128], index: 1, kind: input, shape index: {}]
  %s2 = inlined_call_operand.vmem [shape: f32[1,128], index: 2, kind: input, shape index: {}]
  %s3 = inlined_call_operand.vmem [shape: f32[1,128], index: 3, kind: input, shape index: {}]
  %s4 = inlined_call_operand.vmem [shape: bf16[512,128], index: 4, kind: output, shape index: {}]
  %s5 = sld [smem:[#allocation0]]
  $region26: #{res_block_forward.5} parent=0
    _
  %s7 = ssub.s32 1, %s5
  %s8 = scalar_select 0, %s7, %s5
  // Predicated region
  $region2: #{res_block_forward.5} parent=0 // pred_check
    _
  $region3: #{res_block_forward.5} parent=0 // pred_check_branch
    %10 = sbr.rel (0) target = $region5
  $region4: #{res_block_forward.5} parent=0 // pred_region
    _
  $region5: #{res_block_forward.5} parent=0 // pred_fallthru
    _
  // Predicated region
  $region6: #{res_block_forward.5} parent=0 // pred_check
    _
  $region7: #{res_block_forward.5} parent=0 // pred_check_branch
    %12 = sbr.rel (0) target = $region9
  $region8: #{res_block_forward.5} parent=0 // pred_region
    _
  $region9: #{res_block_forward.5} parent=0 // pred_fallthru
    _
  // Predicated region
  $region10: #{res_block_forward.5} parent=0 // pred_check
    _
  $region11: #{res_block_forward.5} parent=0 // pred_check_branch
    %14 = sbr.rel (0) target = $region13
  $region12: #{res_block_forward.5} parent=0 // pred_region
    _
  $region13: #{res_block_forward.5} parent=0 // pred_fallthru
    _
  // Predicated region
  $region14: #{res_block_forward.5} parent=0 // pred_check
    _
  $region15: #{res_block_forward.5} parent=0 // pred_check_branch
    %16 = sbr.rel (0) target = $region17
  $region16: #{res_block_forward.5} parent=0 // pred_region
    _
  $region17: #{res_block_forward.5} parent=0 // pred_fallthru
    _
  %v18 = vld [vmem:[%s0] sm:$0xf]
  %v19 = vld [vmem:[%s0 + $0x4] sm:$0xf]
  %v20 = vld [vmem:[%s0 + $0x8] sm:$0xf]
  %v21 = vld [vmem:[%s0 + $0xc] sm:$0xf]
  %v22 = vld [vmem:[%s0 + $0x10] sm:$0xf]
  %v23 = vld [vmem:[%s0 + $0x14] sm:$0xf]
  %v24 = vld [vmem:[%s0 + $0x18] sm:$0xf]
  %v25 = vld [vmem:[%s0 + $0x1c] sm:$0xf]
  %v26 = vld [vmem:[%s0 + $0x20] sm:$0xf]
  %v27 = vld [vmem:[%s0 + $0x24] sm:$0xf]
  %v28 = vld [vmem:[%s0 + $0x28] sm:$0xf]
  %v29 = vld [vmem:[%s0 + $0x2c] sm:$0xf]
  %v30 = vld [vmem:[%s0 + $0x30] sm:$0xf]
  %v31 = vld [vmem:[%s0 + $0x34] sm:$0xf]
  %v32 = vld [vmem:[%s0 + $0x38] sm:$0xf]
  %v33 = vld [vmem:[%s0 + $0x3c] sm:$0xf]
  %v34 = vld [vmem:[%s0 + $0x40] sm:$0xf]
  %v35 = vld [vmem:[%s0 + $0x44] sm:$0xf]
  %v36 = vld [vmem:[%s0 + $0x48] sm:$0xf]
  %v37 = vld [vmem:[%s0 + $0x4c] sm:$0xf]
  %v38 = vld [vmem:[%s0 + $0x50] sm:$0xf]
  %v39 = vld [vmem:[%s0 + $0x54] sm:$0xf]
  %v40 = vld [vmem:[%s0 + $0x58] sm:$0xf]
  %v41 = vld [vmem:[%s0 + $0x5c] sm:$0xf]
  %v42 = vld [vmem:[%s0 + $0x60] sm:$0xf]
  %v43 = vld [vmem:[%s0 + $0x64] sm:$0xf]
  %v44 = vld [vmem:[%s0 + $0x68] sm:$0xf]
  %v45 = vld [vmem:[%s0 + $0x6c] sm:$0xf]
  %v46 = vld [vmem:[%s0 + $0x70] sm:$0xf]
  %v47 = vld [vmem:[%s0 + $0x74] sm:$0xf]
  %v48 = vld [vmem:[%s0 + $0x78] sm:$0xf]
  %v49 = vld [vmem:[%s0 + $0x7c] sm:$0xf]
  %v50 = vld [vmem:[%s0 + $0x80] sm:$0xf]
  %v51 = vld [vmem:[%s0 + $0x84] sm:$0xf]
  %v52 = vld [vmem:[%s0 + $0x88] sm:$0xf]
  %v53 = vld [vmem:[%s0 + $0x8c] sm:$0xf]
  %v54 = vld [vmem:[%s0 + $0x90] sm:$0xf]
  %v55 = vld [vmem:[%s0 + $0x94] sm:$0xf]
  %v56 = vld [vmem:[%s0 + $0x98] sm:$0xf]
  %v57 = vld [vmem:[%s0 + $0x9c] sm:$0xf]
  %v58 = vld [vmem:[%s0 + $0xa0] sm:$0xf]
  %v59 = vld [vmem:[%s0 + $0xa4] sm:$0xf]
  %v60 = vld [vmem:[%s0 + $0xa8] sm:$0xf]
  %v61 = vld [vmem:[%s0 + $0xac] sm:$0xf]
  %v62 = vld [vmem:[%s0 + $0xb0] sm:$0xf]
  %v63 = vld [vmem:[%s0 + $0xb4] sm:$0xf]
  %v64 = vld [vmem:[%s0 + $0xb8] sm:$0xf]
  %v65 = vld [vmem:[%s0 + $0xbc] sm:$0xf]
  %v66 = vld [vmem:[%s0 + $0xc0] sm:$0xf]
  %v67 = vld [vmem:[%s0 + $0xc4] sm:$0xf]
  %v68 = vld [vmem:[%s0 + $0xc8] sm:$0xf]
  %v69 = vld [vmem:[%s0 + $0xcc] sm:$0xf]
  %v70 = vld [vmem:[%s0 + $0xd0] sm:$0xf]
  %v71 = vld [vmem:[%s0 + $0xd4] sm:$0xf]
  %v72 = vld [vmem:[%s0 + $0xd8] sm:$0xf]
  %v73 = vld [vmem:[%s0 + $0xdc] sm:$0xf]
  %v74 = vld [vmem:[%s0 + $0xe0] sm:$0xf]
  %v75 = vld [vmem:[%s0 + $0xe4] sm:$0xf]
  %v76 = vld [vmem:[%s0 + $0xe8] sm:$0xf]
  %v77 = vld [vmem:[%s0 + $0xec] sm:$0xf]
  %v78 = vld [vmem:[%s0 + $0xf0] sm:$0xf]
  %v79 = vld [vmem:[%s0 + $0xf4] sm:$0xf]
  %v80 = vld [vmem:[%s0 + $0xf8] sm:$0xf]
  %v81 = vld [vmem:[%s0 + $0xfc] sm:$0xf]
  %v82 = vld [vmem:[%s1] sm:$0xf]
  %v83 = vld [vmem:[%s1 + $0x4] sm:$0xf]
  %v84 = vld [vmem:[%s1 + $0x8] sm:$0xf]
  %v85 = vld [vmem:[%s1 + $0xc] sm:$0xf]
  %v86 = vld [vmem:[%s1 + $0x10] sm:$0x3]
  %v151 = vunpack.c.l.b16 %v18
  %v152 = vunpack.c.l.b16 %v19
  %v153 = vunpack.c.l.b16 %v20
  %v154 = vunpack.c.l.b16 %v21
  %v155 = vunpack.c.l.b16 %v22
  %v156 = vunpack.c.l.b16 %v23
  %v157 = vunpack.c.l.b16 %v24
  %v158 = vunpack.c.l.b16 %v25
  %v159 = vunpack.c.l.b16 %v26
  %v160 = vunpack.c.l.b16 %v27
  %v161 = vunpack.c.l.b16 %v28
  %v162 = vunpack.c.l.b16 %v29
  %v163 = vunpack.c.l.b16 %v30
  %v164 = vunpack.c.l.b16 %v31
  %v165 = vunpack.c.l.b16 %v32
  %v166 = vunpack.c.l.b16 %v33
  %v167 = vunpack.c.l.b16 %v34
  %v168 = vunpack.c.l.b16 %v35
  %v169 = vunpack.c.l.b16 %v36
  %v170 = vunpack.c.l.b16 %v37
  %v171 = vunpack.c.l.b16 %v38
  %v172 = vunpack.c.l.b16 %v39
  %v173 = vunpack.c.l.b16 %v40
  %v174 = vunpack.c.l.b16 %v41
  %v175 = vunpack.c.l.b16 %v42
  %v176 = vunpack.c.l.b16 %v43
  %v177 = vunpack.c.l.b16 %v44
  %v178 = vunpack.c.l.b16 %v45
  %v179 = vunpack.c.l.b16 %v46
  %v180 = vunpack.c.l.b16 %v47
  %v181 = vunpack.c.l.b16 %v48
  %v182 = vunpack.c.l.b16 %v49
  %v183 = vunpack.c.l.b16 %v50
  %v184 = vunpack.c.l.b16 %v51
  %v185 = vunpack.c.l.b16 %v52
  %v186 = vunpack.c.l.b16 %v53
  %v187 = vunpack.c.l.b16 %v54
  %v188 = vunpack.c.l.b16 %v55
  %v189 = vunpack.c.l.b16 %v56
  %v190 = vunpack.c.l.b16 %v57
  %v191 = vunpack.c.l.b16 %v58
  %v192 = vunpack.c.l.b16 %v59
  %v193 = vunpack.c.l.b16 %v60
  %v194 = vunpack.c.l.b16 %v61
  %v195 = vunpack.c.l.b16 %v62
  %v196 = vunpack.c.l.b16 %v63
  %v197 = vunpack.c.l.b16 %v64
  %v198 = vunpack.c.l.b16 %v65
  %v199 = vunpack.c.l.b16 %v66
  %v200 = vunpack.c.l.b16 %v67
  %v201 = vunpack.c.l.b16 %v68
  %v202 = vunpack.c.l.b16 %v69
  %v203 = vunpack.c.l.b16 %v70
  %v204 = vunpack.c.l.b16 %v71
  %v205 = vunpack.c.l.b16 %v72
  %v206 = vunpack.c.l.b16 %v73
  %v207 = vunpack.c.l.b16 %v74
  %v208 = vunpack.c.l.b16 %v75
  %v209 = vunpack.c.l.b16 %v76
  %v210 = vunpack.c.l.b16 %v77
  %v211 = vunpack.c.l.b16 %v78
  %v212 = vunpack.c.l.b16 %v79
  %v213 = vunpack.c.l.b16 %v80
  %v214 = vunpack.c.l.b16 %v81
  %v215 = vpack.c.b16 %v152, %v151
  %v216 = vpack.c.b16 %v154, %v153
  %v217 = vpack.c.b16 %v156, %v155
  %v218 = vpack.c.b16 %v158, %v157
  %v219 = vpack.c.b16 %v160, %v159
  %v220 = vpack.c.b16 %v162, %v161
  %v221 = vpack.c.b16 %v164, %v163
  %v222 = vpack.c.b16 %v166, %v165
  %v223 = vpack.c.b16 %v168, %v167
  %v224 = vpack.c.b16 %v170, %v169
  %v225 = vpack.c.b16 %v172, %v171
  %v226 = vpack.c.b16 %v174, %v173
  %v227 = vpack.c.b16 %v176, %v175
  %v228 = vpack.c.b16 %v178, %v177
  %v229 = vpack.c.b16 %v180, %v179
  %v230 = vpack.c.b16 %v182, %v181
  %v231 = vpack.c.b16 %v184, %v183
  %v232 = vpack.c.b16 %v186, %v185
  %v233 = vpack.c.b16 %v188, %v187
  %v234 = vpack.c.b16 %v190, %v189
  %v235 = vpack.c.b16 %v192, %v191
  %v236 = vpack.c.b16 %v194, %v193
  %v237 = vpack.c.b16 %v196, %v195
  %v238 = vpack.c.b16 %v198, %v197
  %v239 = vpack.c.b16 %v200, %v199
  %v240 = vpack.c.b16 %v202, %v201
  %v241 = vpack.c.b16 %v204, %v203
  %v242 = vpack.c.b16 %v206, %v205
  %v243 = vpack.c.b16 %v208, %v207
  %v244 = vpack.c.b16 %v210, %v209
  %v245 = vpack.c.b16 %v212, %v211
  %v246 = vpack.c.b16 %v214, %v213
  %v252 = vunpack.c.l.b16 %v82
  %v253 = vunpack.c.l.b16 %v83
  %v254 = vunpack.c.l.b16 %v84
  %v255 = vunpack.c.l.b16 %v85
  %v256 = vunpack.c.l.b16 %v86
  %v257 = vpack.c.b16 %v253, %v252
  %v258 = vpack.c.b16 %v255, %v254
  %v259 = vpack.c.b16 %v256, %v256
  %vm262 = vcmask 293888
  %v264 = vsel %vm262, %v215, 0
  %v267 = vsel %vm262, %v216, 0
  %v270 = vsel %vm262, %v217, 0
  %v273 = vsel %vm262, %v218, 0
  %v276 = vsel %vm262, %v219, 0
  %v279 = vsel %vm262, %v220, 0
  %v282 = vsel %vm262, %v221, 0
  %v285 = vsel %vm262, %v222, 0
  %v288 = vsel %vm262, %v223, 0
  %v291 = vsel %vm262, %v224, 0
  %v294 = vsel %vm262, %v225, 0
  %v297 = vsel %vm262, %v226, 0
  %v300 = vsel %vm262, %v227, 0
  %v303 = vsel %vm262, %v228, 0
  %v306 = vsel %vm262, %v229, 0
  %v309 = vsel %vm262, %v230, 0
  %v312 = vsel %vm262, %v231, 0
  %v315 = vsel %vm262, %v232, 0
  %v318 = vsel %vm262, %v233, 0
  %v321 = vsel %vm262, %v234, 0
  %v324 = vsel %vm262, %v235, 0
  %v327 = vsel %vm262, %v236, 0
  %v330 = vsel %vm262, %v237, 0
  %v333 = vsel %vm262, %v238, 0
  %v336 = vsel %vm262, %v239, 0
  %v339 = vsel %vm262, %v240, 0
  %v342 = vsel %vm262, %v241, 0
  %v345 = vsel %vm262, %v242, 0
  %v348 = vsel %vm262, %v243, 0
  %v351 = vsel %vm262, %v244, 0
  %v354 = vsel %vm262, %v245, 0
  %v357 = vsel %vm262, %v246, 0
  %vm359 = vcmask 1041408
  %v361 = vsel %vm359, %v259, 0
  %363 = vmatpush.bf16.msra.mxu0 0
  %364 = vmatpush.bf16.msra.mxu0 0
  %365 = vmatpush.bf16.msra.mxu0 0
  %366 = vmatpush.bf16.msra.mxu0 0
  %367 = vmatpush.bf16.msra.mxu0 0
  %368 = vmatpush.bf16.msra.mxu0 %v361
  %369 = vmatpush.bf16.msra.mxu0 %v258
  %370 = vmatpush.bf16.msra.mxu0 %v257
  %371 = vmatmul.bf16.gmra.mxu0 %v264
  %v372 = vpop.f32.mrf.mxu0
  %v373 = vadd.f32 0.0, %v372
  %v374 = vpop.f32.mrf.mxu0
  %v375 = vadd.f32 0.0, %v374
  %376 = vmatmul.bf16.gmra.mxu0 %v267
  %v377 = vpop.f32.mrf.mxu0
  %v378 = vadd.f32 0.0, %v377
  %v379 = vpop.f32.mrf.mxu0
  %v380 = vadd.f32 0.0, %v379
  %381 = vmatmul.bf16.gmra.mxu0 %v270
  %v382 = vpop.f32.mrf.mxu0
  %v383 = vadd.f32 0.0, %v382
  %v384 = vpop.f32.mrf.mxu0
  %v385 = vadd.f32 0.0, %v384
  %386 = vmatmul.bf16.gmra.mxu0 %v273
  %v387 = vpop.f32.mrf.mxu0
  %v388 = vadd.f32 0.0, %v387
  %v389 = vpop.f32.mrf.mxu0
  %v390 = vadd.f32 0.0, %v389
  %391 = vmatmul.bf16.gmra.mxu0 %v276
  %v392 = vpop.f32.mrf.mxu0
  %v393 = vadd.f32 0.0, %v392
  %v394 = vpop.f32.mrf.mxu0
  %v395 = vadd.f32 0.0, %v394
  %396 = vmatmul.bf16.gmra.mxu0 %v279
  %v397 = vpop.f32.mrf.mxu0
  %v398 = vadd.f32 0.0, %v397
  %v399 = vpop.f32.mrf.mxu0
  %v400 = vadd.f32 0.0, %v399
  %401 = vmatmul.bf16.gmra.mxu0 %v282
  %v402 = vpop.f32.mrf.mxu0
  %v403 = vadd.f32 0.0, %v402
  %v404 = vpop.f32.mrf.mxu0
  %v405 = vadd.f32 0.0, %v404
  %406 = vmatmul.bf16.gmra.mxu0 %v285
  %v407 = vpop.f32.mrf.mxu0
  %v408 = vadd.f32 0.0, %v407
  %v409 = vpop.f32.mrf.mxu0
  %v410 = vadd.f32 0.0, %v409
  %411 = vmatmul.bf16.gmra.mxu0 %v288
  %v412 = vpop.f32.mrf.mxu0
  %v413 = vadd.f32 0.0, %v412
  %v414 = vpop.f32.mrf.mxu0
  %v415 = vadd.f32 0.0, %v414
  %416 = vmatmul.bf16.gmra.mxu0 %v291
  %v417 = vpop.f32.mrf.mxu0
  %v418 = vadd.f32 0.0, %v417
  %v419 = vpop.f32.mrf.mxu0
  %v420 = vadd.f32 0.0, %v419
  %421 = vmatmul.bf16.gmra.mxu0 %v294
  %v422 = vpop.f32.mrf.mxu0
  %v423 = vadd.f32 0.0, %v422
  %v424 = vpop.f32.mrf.mxu0
  %v425 = vadd.f32 0.0, %v424
  %426 = vmatmul.bf16.gmra.mxu0 %v297
  %v427 = vpop.f32.mrf.mxu0
  %v428 = vadd.f32 0.0, %v427
  %v429 = vpop.f32.mrf.mxu0
  %v430 = vadd.f32 0.0, %v429
  %431 = vmatmul.bf16.gmra.mxu0 %v300
  %v432 = vpop.f32.mrf.mxu0
  %v433 = vadd.f32 0.0, %v432
  %v434 = vpop.f32.mrf.mxu0
  %v435 = vadd.f32 0.0, %v434
  %436 = vmatmul.bf16.gmra.mxu0 %v303
  %v437 = vpop.f32.mrf.mxu0
  %v438 = vadd.f32 0.0, %v437
  %v439 = vpop.f32.mrf.mxu0
  %v440 = vadd.f32 0.0, %v439
  %441 = vmatmul.bf16.gmra.mxu0 %v306
  %v442 = vpop.f32.mrf.mxu0
  %v443 = vadd.f32 0.0, %v442
  %v444 = vpop.f32.mrf.mxu0
  %v445 = vadd.f32 0.0, %v444
  %446 = vmatmul.bf16.gmra.mxu0 %v309
  %v447 = vpop.f32.mrf.mxu0
  %v448 = vadd.f32 0.0, %v447
  %v449 = vpop.f32.mrf.mxu0
  %v450 = vadd.f32 0.0, %v449
  %451 = vmatmul.bf16.gmra.mxu0 %v312
  %v452 = vpop.f32.mrf.mxu0
  %v453 = vadd.f32 0.0, %v452
  %v454 = vpop.f32.mrf.mxu0
  %v455 = vadd.f32 0.0, %v454
  %456 = vmatmul.bf16.gmra.mxu0 %v315
  %v457 = vpop.f32.mrf.mxu0
  %v458 = vadd.f32 0.0, %v457
  %v459 = vpop.f32.mrf.mxu0
  %v460 = vadd.f32 0.0, %v459
  %461 = vmatmul.bf16.gmra.mxu0 %v318
  %v462 = vpop.f32.mrf.mxu0
  %v463 = vadd.f32 0.0, %v462
  %v464 = vpop.f32.mrf.mxu0
  %v465 = vadd.f32 0.0, %v464
  %466 = vmatmul.bf16.gmra.mxu0 %v321
  %v467 = vpop.f32.mrf.mxu0
  %v468 = vadd.f32 0.0, %v467
  %v469 = vpop.f32.mrf.mxu0
  %v470 = vadd.f32 0.0, %v469
  %471 = vmatmul.bf16.gmra.mxu0 %v324
  %v472 = vpop.f32.mrf.mxu0
  %v473 = vadd.f32 0.0, %v472
  %v474 = vpop.f32.mrf.mxu0
  %v475 = vadd.f32 0.0, %v474
  %476 = vmatmul.bf16.gmra.mxu0 %v327
  %v477 = vpop.f32.mrf.mxu0
  %v478 = vadd.f32 0.0, %v477
  %v479 = vpop.f32.mrf.mxu0
  %v480 = vadd.f32 0.0, %v479
  %481 = vmatmul.bf16.gmra.mxu0 %v330
  %v482 = vpop.f32.mrf.mxu0
  %v483 = vadd.f32 0.0, %v482
  %v484 = vpop.f32.mrf.mxu0
  %v485 = vadd.f32 0.0, %v484
  %486 = vmatmul.bf16.gmra.mxu0 %v333
  %v487 = vpop.f32.mrf.mxu0
  %v488 = vadd.f32 0.0, %v487
  %v489 = vpop.f32.mrf.mxu0
  %v490 = vadd.f32 0.0, %v489
  %491 = vmatmul.bf16.gmra.mxu0 %v336
  %v492 = vpop.f32.mrf.mxu0
  %v493 = vadd.f32 0.0, %v492
  %v494 = vpop.f32.mrf.mxu0
  %v495 = vadd.f32 0.0, %v494
  %496 = vmatmul.bf16.gmra.mxu0 %v339
  %v497 = vpop.f32.mrf.mxu0
  %v498 = vadd.f32 0.0, %v497
  %v499 = vpop.f32.mrf.mxu0
  %v500 = vadd.f32 0.0, %v499
  %501 = vmatmul.bf16.gmra.mxu0 %v342
  %v502 = vpop.f32.mrf.mxu0
  %v503 = vadd.f32 0.0, %v502
  %v504 = vpop.f32.mrf.mxu0
  %v505 = vadd.f32 0.0, %v504
  %506 = vmatmul.bf16.gmra.mxu0 %v345
  %v507 = vpop.f32.mrf.mxu0
  %v508 = vadd.f32 0.0, %v507
  %v509 = vpop.f32.mrf.mxu0
  %v510 = vadd.f32 0.0, %v509
  %511 = vmatmul.bf16.gmra.mxu0 %v348
  %v512 = vpop.f32.mrf.mxu0
  %v513 = vadd.f32 0.0, %v512
  %v514 = vpop.f32.mrf.mxu0
  %v515 = vadd.f32 0.0, %v514
  %516 = vmatmul.bf16.gmra.mxu0 %v351
  %v517 = vpop.f32.mrf.mxu0
  %v518 = vadd.f32 0.0, %v517
  %v519 = vpop.f32.mrf.mxu0
  %v520 = vadd.f32 0.0, %v519
  %521 = vmatmul.bf16.gmra.mxu0 %v354
  %v522 = vpop.f32.mrf.mxu0
  %v523 = vadd.f32 0.0, %v522
  %v524 = vpop.f32.mrf.mxu0
  %v525 = vadd.f32 0.0, %v524
  %526 = vmatmul.bf16.gmra.mxu0 %v357
  %v527 = vpop.f32.mrf.mxu0
  %v528 = vadd.f32 0.0, %v527
  %v529 = vpop.f32.mrf.mxu0
  %v530 = vadd.f32 0.0, %v529
  %531 = vdwg.mxu0
  %v532 = vld [vmem:[%s2] sm:$0x1]
  %v534 = vperm.slane %v532, 0
  %v536 = vmul.f32 %v373, %v534
  %v537 = vmul.f32 %v375, %v534
  %v538 = vmul.f32 %v378, %v534
  %v539 = vmul.f32 %v380, %v534
  %v540 = vmul.f32 %v383, %v534
  %v541 = vmul.f32 %v385, %v534
  %v542 = vmul.f32 %v388, %v534
  %v543 = vmul.f32 %v390, %v534
  %v544 = vmul.f32 %v393, %v534
  %v545 = vmul.f32 %v395, %v534
  %v546 = vmul.f32 %v398, %v534
  %v547 = vmul.f32 %v400, %v534
  %v548 = vmul.f32 %v403, %v534
  %v549 = vmul.f32 %v405, %v534
  %v550 = vmul.f32 %v408, %v534
  %v551 = vmul.f32 %v410, %v534
  %v552 = vmul.f32 %v413, %v534
  %v553 = vmul.f32 %v415, %v534
  %v554 = vmul.f32 %v418, %v534
  %v555 = vmul.f32 %v420, %v534
  %v556 = vmul.f32 %v423, %v534
  %v557 = vmul.f32 %v425, %v534
  %v558 = vmul.f32 %v428, %v534
  %v559 = vmul.f32 %v430, %v534
  %v560 = vmul.f32 %v433, %v534
  %v561 = vmul.f32 %v435, %v534
  %v562 = vmul.f32 %v438, %v534
  %v563 = vmul.f32 %v440, %v534
  %v564 = vmul.f32 %v443, %v534
  %v565 = vmul.f32 %v445, %v534
  %v566 = vmul.f32 %v448, %v534
  %v567 = vmul.f32 %v450, %v534
  %v568 = vmul.f32 %v453, %v534
  %v569 = vmul.f32 %v455, %v534
  %v570 = vmul.f32 %v458, %v534
  %v571 = vmul.f32 %v460, %v534
  %v572 = vmul.f32 %v463, %v534
  %v573 = vmul.f32 %v465, %v534
  %v574 = vmul.f32 %v468, %v534
  %v575 = vmul.f32 %v470, %v534
  %v576 = vmul.f32 %v473, %v534
  %v577 = vmul.f32 %v475, %v534
  %v578 = vmul.f32 %v478, %v534
  %v579 = vmul.f32 %v480, %v534
  %v580 = vmul.f32 %v483, %v534
  %v581 = vmul.f32 %v485, %v534
  %v582 = vmul.f32 %v488, %v534
  %v583 = vmul.f32 %v490, %v534
  %v584 = vmul.f32 %v493, %v534
  %v585 = vmul.f32 %v495, %v534
  %v586 = vmul.f32 %v498, %v534
  %v587 = vmul.f32 %v500, %v534
  %v588 = vmul.f32 %v503, %v534
  %v589 = vmul.f32 %v505, %v534
  %v590 = vmul.f32 %v508, %v534
  %v591 = vmul.f32 %v510, %v534
  %v592 = vmul.f32 %v513, %v534
  %v593 = vmul.f32 %v515, %v534
  %v594 = vmul.f32 %v518, %v534
  %v595 = vmul.f32 %v520, %v534
  %v596 = vmul.f32 %v523, %v534
  %v597 = vmul.f32 %v525, %v534
  %v598 = vmul.f32 %v528, %v534
  %v599 = vmul.f32 %v530, %v534
  %v600 = vld [vmem:[%s3] sm:$0x1]
  %v602 = vperm.slane %v600, 0
  %v604 = vadd.f32 %v536, %v602
  %v605 = vadd.f32 %v537, %v602
  %v606 = vadd.f32 %v538, %v602
  %v607 = vadd.f32 %v539, %v602
  %v608 = vadd.f32 %v540, %v602
  %v609 = vadd.f32 %v541, %v602
  %v610 = vadd.f32 %v542, %v602
  %v611 = vadd.f32 %v543, %v602
  %v612 = vadd.f32 %v544, %v602
  %v613 = vadd.f32 %v545, %v602
  %v614 = vadd.f32 %v546, %v602
  %v615 = vadd.f32 %v547, %v602
  %v616 = vadd.f32 %v548, %v602
  %v617 = vadd.f32 %v549, %v602
  %v618 = vadd.f32 %v550, %v602
  %v619 = vadd.f32 %v551, %v602
  %v620 = vadd.f32 %v552, %v602
  %v621 = vadd.f32 %v553, %v602
  %v622 = vadd.f32 %v554, %v602
  %v623 = vadd.f32 %v555, %v602
  %v624 = vadd.f32 %v556, %v602
  %v625 = vadd.f32 %v557, %v602
  %v626 = vadd.f32 %v558, %v602
  %v627 = vadd.f32 %v559, %v602
  %v628 = vadd.f32 %v560, %v602
  %v629 = vadd.f32 %v561, %v602
  %v630 = vadd.f32 %v562, %v602
  %v631 = vadd.f32 %v563, %v602
  %v632 = vadd.f32 %v564, %v602
  %v633 = vadd.f32 %v565, %v602
  %v634 = vadd.f32 %v566, %v602
  %v635 = vadd.f32 %v567, %v602
  %v636 = vadd.f32 %v568, %v602
  %v637 = vadd.f32 %v569, %v602
  %v638 = vadd.f32 %v570, %v602
  %v639 = vadd.f32 %v571, %v602
  %v640 = vadd.f32 %v572, %v602
  %v641 = vadd.f32 %v573, %v602
  %v642 = vadd.f32 %v574, %v602
  %v643 = vadd.f32 %v575, %v602
  %v644 = vadd.f32 %v576, %v602
  %v645 = vadd.f32 %v577, %v602
  %v646 = vadd.f32 %v578, %v602
  %v647 = vadd.f32 %v579, %v602
  %v648 = vadd.f32 %v580, %v602
  %v649 = vadd.f32 %v581, %v602
  %v650 = vadd.f32 %v582, %v602
  %v651 = vadd.f32 %v583, %v602
  %v652 = vadd.f32 %v584, %v602
  %v653 = vadd.f32 %v585, %v602
  %v654 = vadd.f32 %v586, %v602
  %v655 = vadd.f32 %v587, %v602
  %v656 = vadd.f32 %v588, %v602
  %v657 = vadd.f32 %v589, %v602
  %v658 = vadd.f32 %v590, %v602
  %v659 = vadd.f32 %v591, %v602
  %v660 = vadd.f32 %v592, %v602
  %v661 = vadd.f32 %v593, %v602
  %v662 = vadd.f32 %v594, %v602
  %v663 = vadd.f32 %v595, %v602
  %v664 = vadd.f32 %v596, %v602
  %v665 = vadd.f32 %v597, %v602
  %v666 = vadd.f32 %v598, %v602
  %v667 = vadd.f32 %v599, %v602
  %v668 = vmul.f32 %v604, 0.5
  %v669 = vmul.f32 %v605, 0.5
  %v670 = vmul.f32 %v606, 0.5
  %v671 = vmul.f32 %v607, 0.5
  %v672 = vmul.f32 %v608, 0.5
  %v673 = vmul.f32 %v609, 0.5
  %v674 = vmul.f32 %v610, 0.5
  %v675 = vmul.f32 %v611, 0.5
  %v676 = vmul.f32 %v612, 0.5
  %v677 = vmul.f32 %v613, 0.5
  %v678 = vmul.f32 %v614, 0.5
  %v679 = vmul.f32 %v615, 0.5
  %v680 = vmul.f32 %v616, 0.5
  %v681 = vmul.f32 %v617, 0.5
  %v682 = vmul.f32 %v618, 0.5
  %v683 = vmul.f32 %v619, 0.5
  %v684 = vmul.f32 %v620, 0.5
  %v685 = vmul.f32 %v621, 0.5
  %v686 = vmul.f32 %v622, 0.5
  %v687 = vmul.f32 %v623, 0.5
  %v688 = vmul.f32 %v624, 0.5
  %v689 = vmul.f32 %v625, 0.5
  %v690 = vmul.f32 %v626, 0.5
  %v691 = vmul.f32 %v627, 0.5
  %v692 = vmul.f32 %v628, 0.5
  %v693 = vmul.f32 %v629, 0.5
  %v694 = vmul.f32 %v630, 0.5
  %v695 = vmul.f32 %v631, 0.5
  %v696 = vmul.f32 %v632, 0.5
  %v697 = vmul.f32 %v633, 0.5
  %v698 = vmul.f32 %v634, 0.5
  %v699 = vmul.f32 %v635, 0.5
  %v700 = vmul.f32 %v636, 0.5
  %v701 = vmul.f32 %v637, 0.5
  %v702 = vmul.f32 %v638, 0.5
  %v703 = vmul.f32 %v639, 0.5
  %v704 = vmul.f32 %v640, 0.5
  %v705 = vmul.f32 %v641, 0.5
  %v706 = vmul.f32 %v642, 0.5
  %v707 = vmul.f32 %v643, 0.5
  %v708 = vmul.f32 %v644, 0.5
  %v709 = vmul.f32 %v645, 0.5
  %v710 = vmul.f32 %v646, 0.5
  %v711 = vmul.f32 %v647, 0.5
  %v712 = vmul.f32 %v648, 0.5
  %v713 = vmul.f32 %v649, 0.5
  %v714 = vmul.f32 %v650, 0.5
  %v715 = vmul.f32 %v651, 0.5
  %v716 = vmul.f32 %v652, 0.5
  %v717 = vmul.f32 %v653, 0.5
  %v718 = vmul.f32 %v654, 0.5
  %v719 = vmul.f32 %v655, 0.5
  %v720 = vmul.f32 %v656, 0.5
  %v721 = vmul.f32 %v657, 0.5
  %v722 = vmul.f32 %v658, 0.5
  %v723 = vmul.f32 %v659, 0.5
  %v724 = vmul.f32 %v660, 0.5
  %v725 = vmul.f32 %v661, 0.5
  %v726 = vmul.f32 %v662, 0.5
  %v727 = vmul.f32 %v663, 0.5
  %v728 = vmul.f32 %v664, 0.5
  %v729 = vmul.f32 %v665, 0.5
  %v730 = vmul.f32 %v666, 0.5
  %v731 = vmul.f32 %v667, 0.5
  %v732 = vmul.f32 %v604, 0.70710677
  %v733 = vmul.f32 %v605, 0.70710677
  %v734 = vmul.f32 %v606, 0.70710677
  %v735 = vmul.f32 %v607, 0.70710677
  %v736 = vmul.f32 %v608, 0.70710677
  %v737 = vmul.f32 %v609, 0.70710677
  %v738 = vmul.f32 %v610, 0.70710677
  %v739 = vmul.f32 %v611, 0.70710677
  %v740 = vmul.f32 %v612, 0.70710677
  %v741 = vmul.f32 %v613, 0.70710677
  %v742 = vmul.f32 %v614, 0.70710677
  %v743 = vmul.f32 %v615, 0.70710677
  %v744 = vmul.f32 %v616, 0.70710677
  %v745 = vmul.f32 %v617, 0.70710677
  %v746 = vmul.f32 %v618, 0.70710677
  %v747 = vmul.f32 %v619, 0.70710677
  %v748 = vmul.f32 %v620, 0.70710677
  %v749 = vmul.f32 %v621, 0.70710677
  %v750 = vmul.f32 %v622, 0.70710677
  %v751 = vmul.f32 %v623, 0.70710677
  %v752 = vmul.f32 %v624, 0.70710677
  %v753 = vmul.f32 %v625, 0.70710677
  %v754 = vmul.f32 %v626, 0.70710677
  %v755 = vmul.f32 %v627, 0.70710677
  %v756 = vmul.f32 %v628, 0.70710677
  %v757 = vmul.f32 %v629, 0.70710677
  %v758 = vmul.f32 %v630, 0.70710677
  %v759 = vmul.f32 %v631, 0.70710677
  %v760 = vmul.f32 %v632, 0.70710677
  %v761 = vmul.f32 %v633, 0.70710677
  %v762 = vmul.f32 %v634, 0.70710677
  %v763 = vmul.f32 %v635, 0.70710677
  %v764 = vmul.f32 %v636, 0.70710677
  %v765 = vmul.f32 %v637, 0.70710677
  %v766 = vmul.f32 %v638, 0.70710677
  %v767 = vmul.f32 %v639, 0.70710677
  %v768 = vmul.f32 %v640, 0.70710677
  %v769 = vmul.f32 %v641, 0.70710677
  %v770 = vmul.f32 %v642, 0.70710677
  %v771 = vmul.f32 %v643, 0.70710677
  %v772 = vmul.f32 %v644, 0.70710677
  %v773 = vmul.f32 %v645, 0.70710677
  %v774 = vmul.f32 %v646, 0.70710677
  %v775 = vmul.f32 %v647, 0.70710677
  %v776 = vmul.f32 %v648, 0.70710677
  %v777 = vmul.f32 %v649, 0.70710677
  %v778 = vmul.f32 %v650, 0.70710677
  %v779 = vmul.f32 %v651, 0.70710677
  %v780 = vmul.f32 %v652, 0.70710677
  %v781 = vmul.f32 %v653, 0.70710677
  %v782 = vmul.f32 %v654, 0.70710677
  %v783 = vmul.f32 %v655, 0.70710677
  %v784 = vmul.f32 %v656, 0.70710677
  %v785 = vmul.f32 %v657, 0.70710677
  %v786 = vmul.f32 %v658, 0.70710677
  %v787 = vmul.f32 %v659, 0.70710677
  %v788 = vmul.f32 %v660, 0.70710677
  %v789 = vmul.f32 %v661, 0.70710677
  %v790 = vmul.f32 %v662, 0.70710677
  %v791 = vmul.f32 %v663, 0.70710677
  %v792 = vmul.f32 %v664, 0.70710677
  %v793 = vmul.f32 %v665, 0.70710677
  %v794 = vmul.f32 %v666, 0.70710677
  %v795 = vmul.f32 %v667, 0.70710677
  %v796 = vand.u32 2147483647, %v732
  %v797 = vand.u32 2147483647, %v733
  %v798 = vand.u32 2147483647, %v734
  %v799 = vand.u32 2147483647, %v735
  %v800 = vand.u32 2147483647, %v736
  %v801 = vand.u32 2147483647, %v737
  %v802 = vand.u32 2147483647, %v738
  %v803 = vand.u32 2147483647, %v739
  %v804 = vand.u32 2147483647, %v740
  %v805 = vand.u32 2147483647, %v741
  %v806 = vand.u32 2147483647, %v742
  %v807 = vand.u32 2147483647, %v743
  %v808 = vand.u32 2147483647, %v744
  %v809 = vand.u32 2147483647, %v745
  %v810 = vand.u32 2147483647, %v746
  %v811 = vand.u32 2147483647, %v747
  %v812 = vand.u32 2147483647, %v748
  %v813 = vand.u32 2147483647, %v749
  %v814 = vand.u32 2147483647, %v750
  %v815 = vand.u32 2147483647, %v751
  %v816 = vand.u32 2147483647, %v752
  %v817 = vand.u32 2147483647, %v753
  %v818 = vand.u32 2147483647, %v754
  %v819 = vand.u32 2147483647, %v755
  %v820 = vand.u32 2147483647, %v756
  %v821 = vand.u32 2147483647, %v757
  %v822 = vand.u32 2147483647, %v758
  %v823 = vand.u32 2147483647, %v759
  %v824 = vand.u32 2147483647, %v760
  %v825 = vand.u32 2147483647, %v761
  %v826 = vand.u32 2147483647, %v762
  %v827 = vand.u32 2147483647, %v763
  %v828 = vand.u32 2147483647, %v764
  %v829 = vand.u32 2147483647, %v765
  %v830 = vand.u32 2147483647, %v766
  %v831 = vand.u32 2147483647, %v767
  %v832 = vand.u32 2147483647, %v768
  %v833 = vand.u32 2147483647, %v769
  %v834 = vand.u32 2147483647, %v770
  %v835 = vand.u32 2147483647, %v771
  %v836 = vand.u32 2147483647, %v772
  %v837 = vand.u32 2147483647, %v773
  %v838 = vand.u32 2147483647, %v774
  %v839 = vand.u32 2147483647, %v775
  %v840 = vand.u32 2147483647, %v776
  %v841 = vand.u32 2147483647, %v777
  %v842 = vand.u32 2147483647, %v778
  %v843 = vand.u32 2147483647, %v779
  %v844 = vand.u32 2147483647, %v780
  %v845 = vand.u32 2147483647, %v781
  %v846 = vand.u32 2147483647, %v782
  %v847 = vand.u32 2147483647, %v783
  %v848 = vand.u32 2147483647, %v784
  %v849 = vand.u32 2147483647, %v785
  %v850 = vand.u32 2147483647, %v786
  %v851 = vand.u32 2147483647, %v787
  %v852 = vand.u32 2147483647, %v788
  %v853 = vand.u32 2147483647, %v789
  %v854 = vand.u32 2147483647, %v790
  %v855 = vand.u32 2147483647, %v791
  %v856 = vand.u32 2147483647, %v792
  %v857 = vand.u32 2147483647, %v793
  %v858 = vand.u32 2147483647, %v794
  %v859 = vand.u32 2147483647, %v795
  %v860 = vmul.f32 %v796, 0.3275911
  %v861 = vmul.f32 %v797, 0.3275911
  %v862 = vmul.f32 %v798, 0.3275911
  %v863 = vmul.f32 %v799, 0.3275911
  %v864 = vmul.f32 %v800, 0.3275911
  %v865 = vmul.f32 %v801, 0.3275911
  %v866 = vmul.f32 %v802, 0.3275911
  %v867 = vmul.f32 %v803, 0.3275911
  %v868 = vmul.f32 %v804, 0.3275911
  %v869 = vmul.f32 %v805, 0.3275911
  %v870 = vmul.f32 %v806, 0.3275911
  %v871 = vmul.f32 %v807, 0.3275911
  %v872 = vmul.f32 %v808, 0.3275911
  %v873 = vmul.f32 %v809, 0.3275911
  %v874 = vmul.f32 %v810, 0.3275911
  %v875 = vmul.f32 %v811, 0.3275911
  %v876 = vmul.f32 %v812, 0.3275911
  %v877 = vmul.f32 %v813, 0.3275911
  %v878 = vmul.f32 %v814, 0.3275911
  %v879 = vmul.f32 %v815, 0.3275911
  %v880 = vmul.f32 %v816, 0.3275911
  %v881 = vmul.f32 %v817, 0.3275911
  %v882 = vmul.f32 %v818, 0.3275911
  %v883 = vmul.f32 %v819, 0.3275911
  %v884 = vmul.f32 %v820, 0.3275911
  %v885 = vmul.f32 %v821, 0.3275911
  %v886 = vmul.f32 %v822, 0.3275911
  %v887 = vmul.f32 %v823, 0.3275911
  %v888 = vmul.f32 %v824, 0.3275911
  %v889 = vmul.f32 %v825, 0.3275911
  %v890 = vmul.f32 %v826, 0.3275911
  %v891 = vmul.f32 %v827, 0.3275911
  %v892 = vmul.f32 %v828, 0.3275911
  %v893 = vmul.f32 %v829, 0.3275911
  %v894 = vmul.f32 %v830, 0.3275911
  %v895 = vmul.f32 %v831, 0.3275911
  %v896 = vmul.f32 %v832, 0.3275911
  %v897 = vmul.f32 %v833, 0.3275911
  %v898 = vmul.f32 %v834, 0.3275911
  %v899 = vmul.f32 %v835, 0.3275911
  %v900 = vmul.f32 %v836, 0.3275911
  %v901 = vmul.f32 %v837, 0.3275911
  %v902 = vmul.f32 %v838, 0.3275911
  %v903 = vmul.f32 %v839, 0.3275911
  %v904 = vmul.f32 %v840, 0.3275911
  %v905 = vmul.f32 %v841, 0.3275911
  %v906 = vmul.f32 %v842, 0.3275911
  %v907 = vmul.f32 %v843, 0.3275911
  %v908 = vmul.f32 %v844, 0.3275911
  %v909 = vmul.f32 %v845, 0.3275911
  %v910 = vmul.f32 %v846, 0.3275911
  %v911 = vmul.f32 %v847, 0.3275911
  %v912 = vmul.f32 %v848, 0.3275911
  %v913 = vmul.f32 %v849, 0.3275911
  %v914 = vmul.f32 %v850, 0.3275911
  %v915 = vmul.f32 %v851, 0.3275911
  %v916 = vmul.f32 %v852, 0.3275911
  %v917 = vmul.f32 %v853, 0.3275911
  %v918 = vmul.f32 %v854, 0.3275911
  %v919 = vmul.f32 %v855, 0.3275911
  %v920 = vmul.f32 %v856, 0.3275911
  %v921 = vmul.f32 %v857, 0.3275911
  %v922 = vmul.f32 %v858, 0.3275911
  %v923 = vmul.f32 %v859, 0.3275911
  %v924 = vadd.f32 %v860, 1.0
  %v925 = vadd.f32 %v861, 1.0
  %v926 = vadd.f32 %v862, 1.0
  %v927 = vadd.f32 %v863, 1.0
  %v928 = vadd.f32 %v864, 1.0
  %v929 = vadd.f32 %v865, 1.0
  %v930 = vadd.f32 %v866, 1.0
  %v931 = vadd.f32 %v867, 1.0
  %v932 = vadd.f32 %v868, 1.0
  %v933 = vadd.f32 %v869, 1.0
  %v934 = vadd.f32 %v870, 1.0
  %v935 = vadd.f32 %v871, 1.0
  %v936 = vadd.f32 %v872, 1.0
  %v937 = vadd.f32 %v873, 1.0
  %v938 = vadd.f32 %v874, 1.0
  %v939 = vadd.f32 %v875, 1.0
  %v940 = vadd.f32 %v876, 1.0
  %v941 = vadd.f32 %v877, 1.0
  %v942 = vadd.f32 %v878, 1.0
  %v943 = vadd.f32 %v879, 1.0
  %v944 = vadd.f32 %v880, 1.0
  %v945 = vadd.f32 %v881, 1.0
  %v946 = vadd.f32 %v882, 1.0
  %v947 = vadd.f32 %v883, 1.0
  %v948 = vadd.f32 %v884, 1.0
  %v949 = vadd.f32 %v885, 1.0
  %v950 = vadd.f32 %v886, 1.0
  %v951 = vadd.f32 %v887, 1.0
  %v952 = vadd.f32 %v888, 1.0
  %v953 = vadd.f32 %v889, 1.0
  %v954 = vadd.f32 %v890, 1.0
  %v955 = vadd.f32 %v891, 1.0
  %v956 = vadd.f32 %v892, 1.0
  %v957 = vadd.f32 %v893, 1.0
  %v958 = vadd.f32 %v894, 1.0
  %v959 = vadd.f32 %v895, 1.0
  %v960 = vadd.f32 %v896, 1.0
  %v961 = vadd.f32 %v897, 1.0
  %v962 = vadd.f32 %v898, 1.0
  %v963 = vadd.f32 %v899, 1.0
  %v964 = vadd.f32 %v900, 1.0
  %v965 = vadd.f32 %v901, 1.0
  %v966 = vadd.f32 %v902, 1.0
  %v967 = vadd.f32 %v903, 1.0
  %v968 = vadd.f32 %v904, 1.0
  %v969 = vadd.f32 %v905, 1.0
  %v970 = vadd.f32 %v906, 1.0
  %v971 = vadd.f32 %v907, 1.0
  %v972 = vadd.f32 %v908, 1.0
  %v973 = vadd.f32 %v909, 1.0
  %v974 = vadd.f32 %v910, 1.0
  %v975 = vadd.f32 %v911, 1.0
  %v976 = vadd.f32 %v912, 1.0
  %v977 = vadd.f32 %v913, 1.0
  %v978 = vadd.f32 %v914, 1.0
  %v979 = vadd.f32 %v915, 1.0
  %v980 = vadd.f32 %v916, 1.0
  %v981 = vadd.f32 %v917, 1.0
  %v982 = vadd.f32 %v918, 1.0
  %v983 = vadd.f32 %v919, 1.0
  %v984 = vadd.f32 %v920, 1.0
  %v985 = vadd.f32 %v921, 1.0
  %v986 = vadd.f32 %v922, 1.0
  %v987 = vadd.f32 %v923, 1.0
  %v988 = vrcp.pop %v924
  %v989 = vmul.f32 %v924, %v988
  %v990 = vsub.f32 1.0, %v989
  %v991 = vmul.f32 %v988, %v990
  %v992 = vadd.f32 %v988, %v991
  %vm993 = vweird.f32 %v924
  %vm994 = vweird.f32 %v988
  %vm995 = vmor %vm993, %vm994
  %v996 = vsel %vm995, %v988, %v992
  %v997 = vand.u32 2147483647, %v924
  %vm998 = vcmp.eq.f32.partialorder %v997, 8.507059e+37
  %v999 = vand.u32 %v924, 2147483648
  %v1000 = vor.u32 1.1754944e-38, %v999
  %v1001 = vsel %vm998, %v1000, %v996
  %v1002 = vmul.f32 1.0, %v1001
  %v1003 = vrcp.pop %v925
  %v1004 = vmul.f32 %v925, %v1003
  %v1005 = vsub.f32 1.0, %v1004
  %v1006 = vmul.f32 %v1003, %v1005
  %v1007 = vadd.f32 %v1003, %v1006
  %vm1008 = vweird.f32 %v925
  %vm1009 = vweird.f32 %v1003
  %vm1010 = vmor %vm1008, %vm1009
  %v1011 = vsel %vm1010, %v1003, %v1007
  %v1012 = vand.u32 2147483647, %v925
  %vm1013 = vcmp.eq.f32.partialorder %v1012, 8.507059e+37
  %v1014 = vand.u32 %v925, 2147483648
  %v1015 = vor.u32 1.1754944e-38, %v1014
  %v1016 = vsel %vm1013, %v1015, %v1011
  %v1017 = vmul.f32 1.0, %v1016
  %v1018 = vrcp.pop %v926
  %v1019 = vmul.f32 %v926, %v1018
  %v1020 = vsub.f32 1.0, %v1019
  %v1021 = vmul.f32 %v1018, %v1020
  %v1022 = vadd.f32 %v1018, %v1021
  %vm1023 = vweird.f32 %v926
  %vm1024 = vweird.f32 %v1018
  %vm1025 = vmor %vm1023, %vm1024
  %v1026 = vsel %vm1025, %v1018, %v1022
  %v1027 = vand.u32 2147483647, %v926
  %vm1028 = vcmp.eq.f32.partialorder %v1027, 8.507059e+37
  %v1029 = vand.u32 %v926, 2147483648
  %v1030 = vor.u32 1.1754944e-38, %v1029
  %v1031 = vsel %vm1028, %v1030, %v1026
  %v1032 = vmul.f32 1.0, %v1031
  %v1033 = vrcp.pop %v927
  %v1034 = vmul.f32 %v927, %v1033
  %v1035 = vsub.f32 1.0, %v1034
  %v1036 = vmul.f32 %v1033, %v1035
  %v1037 = vadd.f32 %v1033, %v1036
  %vm1038 = vweird.f32 %v927
  %vm1039 = vweird.f32 %v1033
  %vm1040 = vmor %vm1038, %vm1039
  %v1041 = vsel %vm1040, %v1033, %v1037
  %v1042 = vand.u32 2147483647, %v927
  %vm1043 = vcmp.eq.f32.partialorder %v1042, 8.507059e+37
  %v1044 = vand.u32 %v927, 2147483648
  %v1045 = vor.u32 1.1754944e-38, %v1044
  %v1046 = vsel %vm1043, %v1045, %v1041
  %v1047 = vmul.f32 1.0, %v1046
  %v1048 = vrcp.pop %v928
  %v1049 = vmul.f32 %v928, %v1048
  %v1050 = vsub.f32 1.0, %v1049
  %v1051 = vmul.f32 %v1048, %v1050
  %v1052 = vadd.f32 %v1048, %v1051
  %vm1053 = vweird.f32 %v928
  %vm1054 = vweird.f32 %v1048
  %vm1055 = vmor %vm1053, %vm1054
  %v1056 = vsel %vm1055, %v1048, %v1052
  %v1057 = vand.u32 2147483647, %v928
  %vm1058 = vcmp.eq.f32.partialorder %v1057, 8.507059e+37
  %v1059 = vand.u32 %v928, 2147483648
  %v1060 = vor.u32 1.1754944e-38, %v1059
  %v1061 = vsel %vm1058, %v1060, %v1056
  %v1062 = vmul.f32 1.0, %v1061
  %v1063 = vrcp.pop %v929
  %v1064 = vmul.f32 %v929, %v1063
  %v1065 = vsub.f32 1.0, %v1064
  %v1066 = vmul.f32 %v1063, %v1065
  %v1067 = vadd.f32 %v1063, %v1066
  %vm1068 = vweird.f32 %v929
  %vm1069 = vweird.f32 %v1063
  %vm1070 = vmor %vm1068, %vm1069
  %v1071 = vsel %vm1070, %v1063, %v1067
  %v1072 = vand.u32 2147483647, %v929
  %vm1073 = vcmp.eq.f32.partialorder %v1072, 8.507059e+37
  %v1074 = vand.u32 %v929, 2147483648
  %v1075 = vor.u32 1.1754944e-38, %v1074
  %v1076 = vsel %vm1073, %v1075, %v1071
  %v1077 = vmul.f32 1.0, %v1076
  %v1078 = vrcp.pop %v930
  %v1079 = vmul.f32 %v930, %v1078
  %v1080 = vsub.f32 1.0, %v1079
  %v1081 = vmul.f32 %v1078, %v1080
  %v1082 = vadd.f32 %v1078, %v1081
  %vm1083 = vweird.f32 %v930
  %vm1084 = vweird.f32 %v1078
  %vm1085 = vmor %vm1083, %vm1084
  %v1086 = vsel %vm1085, %v1078, %v1082
  %v1087 = vand.u32 2147483647, %v930
  %vm1088 = vcmp.eq.f32.partialorder %v1087, 8.507059e+37
  %v1089 = vand.u32 %v930, 2147483648
  %v1090 = vor.u32 1.1754944e-38, %v1089
  %v1091 = vsel %vm1088, %v1090, %v1086
  %v1092 = vmul.f32 1.0, %v1091
  %v1093 = vrcp.pop %v931
  %v1094 = vmul.f32 %v931, %v1093
  %v1095 = vsub.f32 1.0, %v1094
  %v1096 = vmul.f32 %v1093, %v1095
  %v1097 = vadd.f32 %v1093, %v1096
  %vm1098 = vweird.f32 %v931
  %vm1099 = vweird.f32 %v1093
  %vm1100 = vmor %vm1098, %vm1099
  %v1101 = vsel %vm1100, %v1093, %v1097
  %v1102 = vand.u32 2147483647, %v931
  %vm1103 = vcmp.eq.f32.partialorder %v1102, 8.507059e+37
  %v1104 = vand.u32 %v931, 2147483648
  %v1105 = vor.u32 1.1754944e-38, %v1104
  %v1106 = vsel %vm1103, %v1105, %v1101
  %v1107 = vmul.f32 1.0, %v1106
  %v1108 = vrcp.pop %v932
  %v1109 = vmul.f32 %v932, %v1108
  %v1110 = vsub.f32 1.0, %v1109
  %v1111 = vmul.f32 %v1108, %v1110
  %v1112 = vadd.f32 %v1108, %v1111
  %vm1113 = vweird.f32 %v932
  %vm1114 = vweird.f32 %v1108
  %vm1115 = vmor %vm1113, %vm1114
  %v1116 = vsel %vm1115, %v1108, %v1112
  %v1117 = vand.u32 2147483647, %v932
  %vm1118 = vcmp.eq.f32.partialorder %v1117, 8.507059e+37
  %v1119 = vand.u32 %v932, 2147483648
  %v1120 = vor.u32 1.1754944e-38, %v1119
  %v1121 = vsel %vm1118, %v1120, %v1116
  %v1122 = vmul.f32 1.0, %v1121
  %v1123 = vrcp.pop %v933
  %v1124 = vmul.f32 %v933, %v1123
  %v1125 = vsub.f32 1.0, %v1124
  %v1126 = vmul.f32 %v1123, %v1125
  %v1127 = vadd.f32 %v1123, %v1126
  %vm1128 = vweird.f32 %v933
  %vm1129 = vweird.f32 %v1123
  %vm1130 = vmor %vm1128, %vm1129
  %v1131 = vsel %vm1130, %v1123, %v1127
  %v1132 = vand.u32 2147483647, %v933
  %vm1133 = vcmp.eq.f32.partialorder %v1132, 8.507059e+37
  %v1134 = vand.u32 %v933, 2147483648
  %v1135 = vor.u32 1.1754944e-38, %v1134
  %v1136 = vsel %vm1133, %v1135, %v1131
  %v1137 = vmul.f32 1.0, %v1136
  %v1138 = vrcp.pop %v934
  %v1139 = vmul.f32 %v934, %v1138
  %v1140 = vsub.f32 1.0, %v1139
  %v1141 = vmul.f32 %v1138, %v1140
  %v1142 = vadd.f32 %v1138, %v1141
  %vm1143 = vweird.f32 %v934
  %vm1144 = vweird.f32 %v1138
  %vm1145 = vmor %vm1143, %vm1144
  %v1146 = vsel %vm1145, %v1138, %v1142
  %v1147 = vand.u32 2147483647, %v934
  %vm1148 = vcmp.eq.f32.partialorder %v1147, 8.507059e+37
  %v1149 = vand.u32 %v934, 2147483648
  %v1150 = vor.u32 1.1754944e-38, %v1149
  %v1151 = vsel %vm1148, %v1150, %v1146
  %v1152 = vmul.f32 1.0, %v1151
  %v1153 = vrcp.pop %v935
  %v1154 = vmul.f32 %v935, %v1153
  %v1155 = vsub.f32 1.0, %v1154
  %v1156 = vmul.f32 %v1153, %v1155
  %v1157 = vadd.f32 %v1153, %v1156
  %vm1158 = vweird.f32 %v935
  %vm1159 = vweird.f32 %v1153
  %vm1160 = vmor %vm1158, %vm1159
  %v1161 = vsel %vm1160, %v1153, %v1157
  %v1162 = vand.u32 2147483647, %v935
  %vm1163 = vcmp.eq.f32.partialorder %v1162, 8.507059e+37
  %v1164 = vand.u32 %v935, 2147483648
  %v1165 = vor.u32 1.1754944e-38, %v1164
  %v1166 = vsel %vm1163, %v1165, %v1161
  %v1167 = vmul.f32 1.0, %v1166
  %v1168 = vrcp.pop %v936
  %v1169 = vmul.f32 %v936, %v1168
  %v1170 = vsub.f32 1.0, %v1169
  %v1171 = vmul.f32 %v1168, %v1170
  %v1172 = vadd.f32 %v1168, %v1171
  %vm1173 = vweird.f32 %v936
  %vm1174 = vweird.f32 %v1168
  %vm1175 = vmor %vm1173, %vm1174
  %v1176 = vsel %vm1175, %v1168, %v1172
  %v1177 = vand.u32 2147483647, %v936
  %vm1178 = vcmp.eq.f32.partialorder %v1177, 8.507059e+37
  %v1179 = vand.u32 %v936, 2147483648
  %v1180 = vor.u32 1.1754944e-38, %v1179
  %v1181 = vsel %vm1178, %v1180, %v1176
  %v1182 = vmul.f32 1.0, %v1181
  %v1183 = vrcp.pop %v937
  %v1184 = vmul.f32 %v937, %v1183
  %v1185 = vsub.f32 1.0, %v1184
  %v1186 = vmul.f32 %v1183, %v1185
  %v1187 = vadd.f32 %v1183, %v1186
  %vm1188 = vweird.f32 %v937
  %vm1189 = vweird.f32 %v1183
  %vm1190 = vmor %vm1188, %vm1189
  %v1191 = vsel %vm1190, %v1183, %v1187
  %v1192 = vand.u32 2147483647, %v937
  %vm1193 = vcmp.eq.f32.partialorder %v1192, 8.507059e+37
  %v1194 = vand.u32 %v937, 2147483648
  %v1195 = vor.u32 1.1754944e-38, %v1194
  %v1196 = vsel %vm1193, %v1195, %v1191
  %v1197 = vmul.f32 1.0, %v1196
  %v1198 = vrcp.pop %v938
  %v1199 = vmul.f32 %v938, %v1198
  %v1200 = vsub.f32 1.0, %v1199
  %v1201 = vmul.f32 %v1198, %v1200
  %v1202 = vadd.f32 %v1198, %v1201
  %vm1203 = vweird.f32 %v938
  %vm1204 = vweird.f32 %v1198
  %vm1205 = vmor %vm1203, %vm1204
  %v1206 = vsel %vm1205, %v1198, %v1202
  %v1207 = vand.u32 2147483647, %v938
  %vm1208 = vcmp.eq.f32.partialorder %v1207, 8.507059e+37
  %v1209 = vand.u32 %v938, 2147483648
  %v1210 = vor.u32 1.1754944e-38, %v1209
  %v1211 = vsel %vm1208, %v1210, %v1206
  %v1212 = vmul.f32 1.0, %v1211
  %v1213 = vrcp.pop %v939
  %v1214 = vmul.f32 %v939, %v1213
  %v1215 = vsub.f32 1.0, %v1214
  %v1216 = vmul.f32 %v1213, %v1215
  %v1217 = vadd.f32 %v1213, %v1216
  %vm1218 = vweird.f32 %v939
  %vm1219 = vweird.f32 %v1213
  %vm1220 = vmor %vm1218, %vm1219
  %v1221 = vsel %vm1220, %v1213, %v1217
  %v1222 = vand.u32 2147483647, %v939
  %vm1223 = vcmp.eq.f32.partialorder %v1222, 8.507059e+37
  %v1224 = vand.u32 %v939, 2147483648
  %v1225 = vor.u32 1.1754944e-38, %v1224
  %v1226 = vsel %vm1223, %v1225, %v1221
  %v1227 = vmul.f32 1.0, %v1226
  %v1228 = vrcp.pop %v940
  %v1229 = vmul.f32 %v940, %v1228
  %v1230 = vsub.f32 1.0, %v1229
  %v1231 = vmul.f32 %v1228, %v1230
  %v1232 = vadd.f32 %v1228, %v1231
  %vm1233 = vweird.f32 %v940
  %vm1234 = vweird.f32 %v1228
  %vm1235 = vmor %vm1233, %vm1234
  %v1236 = vsel %vm1235, %v1228, %v1232
  %v1237 = vand.u32 2147483647, %v940
  %vm1238 = vcmp.eq.f32.partialorder %v1237, 8.507059e+37
  %v1239 = vand.u32 %v940, 2147483648
  %v1240 = vor.u32 1.1754944e-38, %v1239
  %v1241 = vsel %vm1238, %v1240, %v1236
  %v1242 = vmul.f32 1.0, %v1241
  %v1243 = vrcp.pop %v941
  %v1244 = vmul.f32 %v941, %v1243
  %v1245 = vsub.f32 1.0, %v1244
  %v1246 = vmul.f32 %v1243, %v1245
  %v1247 = vadd.f32 %v1243, %v1246
  %vm1248 = vweird.f32 %v941
  %vm1249 = vweird.f32 %v1243
  %vm1250 = vmor %vm1248, %vm1249
  %v1251 = vsel %vm1250, %v1243, %v1247
  %v1252 = vand.u32 2147483647, %v941
  %vm1253 = vcmp.eq.f32.partialorder %v1252, 8.507059e+37
  %v1254 = vand.u32 %v941, 2147483648
  %v1255 = vor.u32 1.1754944e-38, %v1254
  %v1256 = vsel %vm1253, %v1255, %v1251
  %v1257 = vmul.f32 1.0, %v1256
  %v1258 = vrcp.pop %v942
  %v1259 = vmul.f32 %v942, %v1258
  %v1260 = vsub.f32 1.0, %v1259
  %v1261 = vmul.f32 %v1258, %v1260
  %v1262 = vadd.f32 %v1258, %v1261
  %vm1263 = vweird.f32 %v942
  %vm1264 = vweird.f32 %v1258
  %vm1265 = vmor %vm1263, %vm1264
  %v1266 = vsel %vm1265, %v1258, %v1262
  %v1267 = vand.u32 2147483647, %v942
  %vm1268 = vcmp.eq.f32.partialorder %v1267, 8.507059e+37
  %v1269 = vand.u32 %v942, 2147483648
  %v1270 = vor.u32 1.1754944e-38, %v1269
  %v1271 = vsel %vm1268, %v1270, %v1266
  %v1272 = vmul.f32 1.0, %v1271
  %v1273 = vrcp.pop %v943
  %v1274 = vmul.f32 %v943, %v1273
  %v1275 = vsub.f32 1.0, %v1274
  %v1276 = vmul.f32 %v1273, %v1275
  %v1277 = vadd.f32 %v1273, %v1276
  %vm1278 = vweird.f32 %v943
  %vm1279 = vweird.f32 %v1273
  %vm1280 = vmor %vm1278, %vm1279
  %v1281 = vsel %vm1280, %v1273, %v1277
  %v1282 = vand.u32 2147483647, %v943
  %vm1283 = vcmp.eq.f32.partialorder %v1282, 8.507059e+37
  %v1284 = vand.u32 %v943, 2147483648
  %v1285 = vor.u32 1.1754944e-38, %v1284
  %v1286 = vsel %vm1283, %v1285, %v1281
  %v1287 = vmul.f32 1.0, %v1286
  %v1288 = vrcp.pop %v944
  %v1289 = vmul.f32 %v944, %v1288
  %v1290 = vsub.f32 1.0, %v1289
  %v1291 = vmul.f32 %v1288, %v1290
  %v1292 = vadd.f32 %v1288, %v1291
  %vm1293 = vweird.f32 %v944
  %vm1294 = vweird.f32 %v1288
  %vm1295 = vmor %vm1293, %vm1294
  %v1296 = vsel %vm1295, %v1288, %v1292
  %v1297 = vand.u32 2147483647, %v944
  %vm1298 = vcmp.eq.f32.partialorder %v1297, 8.507059e+37
  %v1299 = vand.u32 %v944, 2147483648
  %v1300 = vor.u32 1.1754944e-38, %v1299
  %v1301 = vsel %vm1298, %v1300, %v1296
  %v1302 = vmul.f32 1.0, %v1301
  %v1303 = vrcp.pop %v945
  %v1304 = vmul.f32 %v945, %v1303
  %v1305 = vsub.f32 1.0, %v1304
  %v1306 = vmul.f32 %v1303, %v1305
  %v1307 = vadd.f32 %v1303, %v1306
  %vm1308 = vweird.f32 %v945
  %vm1309 = vweird.f32 %v1303
  %vm1310 = vmor %vm1308, %vm1309
  %v1311 = vsel %vm1310, %v1303, %v1307
  %v1312 = vand.u32 2147483647, %v945
  %vm1313 = vcmp.eq.f32.partialorder %v1312, 8.507059e+37
  %v1314 = vand.u32 %v945, 2147483648
  %v1315 = vor.u32 1.1754944e-38, %v1314
  %v1316 = vsel %vm1313, %v1315, %v1311
  %v1317 = vmul.f32 1.0, %v1316
  %v1318 = vrcp.pop %v946
  %v1319 = vmul.f32 %v946, %v1318
  %v1320 = vsub.f32 1.0, %v1319
  %v1321 = vmul.f32 %v1318, %v1320
  %v1322 = vadd.f32 %v1318, %v1321
  %vm1323 = vweird.f32 %v946
  %vm1324 = vweird.f32 %v1318
  %vm1325 = vmor %vm1323, %vm1324
  %v1326 = vsel %vm1325, %v1318, %v1322
  %v1327 = vand.u32 2147483647, %v946
  %vm1328 = vcmp.eq.f32.partialorder %v1327, 8.507059e+37
  %v1329 = vand.u32 %v946, 2147483648
  %v1330 = vor.u32 1.1754944e-38, %v1329
  %v1331 = vsel %vm1328, %v1330, %v1326
  %v1332 = vmul.f32 1.0, %v1331
  %v1333 = vrcp.pop %v947
  %v1334 = vmul.f32 %v947, %v1333
  %v1335 = vsub.f32 1.0, %v1334
  %v1336 = vmul.f32 %v1333, %v1335
  %v1337 = vadd.f32 %v1333, %v1336
  %vm1338 = vweird.f32 %v947
  %vm1339 = vweird.f32 %v1333
  %vm1340 = vmor %vm1338, %vm1339
  %v1341 = vsel %vm1340, %v1333, %v1337
  %v1342 = vand.u32 2147483647, %v947
  %vm1343 = vcmp.eq.f32.partialorder %v1342, 8.507059e+37
  %v1344 = vand.u32 %v947, 2147483648
  %v1345 = vor.u32 1.1754944e-38, %v1344
  %v1346 = vsel %vm1343, %v1345, %v1341
  %v1347 = vmul.f32 1.0, %v1346
  %v1348 = vrcp.pop %v948
  %v1349 = vmul.f32 %v948, %v1348
  %v1350 = vsub.f32 1.0, %v1349
  %v1351 = vmul.f32 %v1348, %v1350
  %v1352 = vadd.f32 %v1348, %v1351
  %vm1353 = vweird.f32 %v948
  %vm1354 = vweird.f32 %v1348
  %vm1355 = vmor %vm1353, %vm1354
  %v1356 = vsel %vm1355, %v1348, %v1352
  %v1357 = vand.u32 2147483647, %v948
  %vm1358 = vcmp.eq.f32.partialorder %v1357, 8.507059e+37
  %v1359 = vand.u32 %v948, 2147483648
  %v1360 = vor.u32 1.1754944e-38, %v1359
  %v1361 = vsel %vm1358, %v1360, %v1356
  %v1362 = vmul.f32 1.0, %v1361
  %v1363 = vrcp.pop %v949
  %v1364 = vmul.f32 %v949, %v1363
  %v1365 = vsub.f32 1.0, %v1364
  %v1366 = vmul.f32 %v1363, %v1365
  %v1367 = vadd.f32 %v1363, %v1366
  %vm1368 = vweird.f32 %v949
  %vm1369 = vweird.f32 %v1363
  %vm1370 = vmor %vm1368, %vm1369
  %v1371 = vsel %vm1370, %v1363, %v1367
  %v1372 = vand.u32 2147483647, %v949
  %vm1373 = vcmp.eq.f32.partialorder %v1372, 8.507059e+37
  %v1374 = vand.u32 %v949, 2147483648
  %v1375 = vor.u32 1.1754944e-38, %v1374
  %v1376 = vsel %vm1373, %v1375, %v1371
  %v1377 = vmul.f32 1.0, %v1376
  %v1378 = vrcp.pop %v950
  %v1379 = vmul.f32 %v950, %v1378
  %v1380 = vsub.f32 1.0, %v1379
  %v1381 = vmul.f32 %v1378, %v1380
  %v1382 = vadd.f32 %v1378, %v1381
  %vm1383 = vweird.f32 %v950
  %vm1384 = vweird.f32 %v1378
  %vm1385 = vmor %vm1383, %vm1384
  %v1386 = vsel %vm1385, %v1378, %v1382
  %v1387 = vand.u32 2147483647, %v950
  %vm1388 = vcmp.eq.f32.partialorder %v1387, 8.507059e+37
  %v1389 = vand.u32 %v950, 2147483648
  %v1390 = vor.u32 1.1754944e-38, %v1389
  %v1391 = vsel %vm1388, %v1390, %v1386
  %v1392 = vmul.f32 1.0, %v1391
  %v1393 = vrcp.pop %v951
  %v1394 = vmul.f32 %v951, %v1393
  %v1395 = vsub.f32 1.0, %v1394
  %v1396 = vmul.f32 %v1393, %v1395
  %v1397 = vadd.f32 %v1393, %v1396
  %vm1398 = vweird.f32 %v951
  %vm1399 = vweird.f32 %v1393
  %vm1400 = vmor %vm1398, %vm1399
  %v1401 = vsel %vm1400, %v1393, %v1397
  %v1402 = vand.u32 2147483647, %v951
  %vm1403 = vcmp.eq.f32.partialorder %v1402, 8.507059e+37
  %v1404 = vand.u32 %v951, 2147483648
  %v1405 = vor.u32 1.1754944e-38, %v1404
  %v1406 = vsel %vm1403, %v1405, %v1401
  %v1407 = vmul.f32 1.0, %v1406
  %v1408 = vrcp.pop %v952
  %v1409 = vmul.f32 %v952, %v1408
  %v1410 = vsub.f32 1.0, %v1409
  %v1411 = vmul.f32 %v1408, %v1410
  %v1412 = vadd.f32 %v1408, %v1411
  %vm1413 = vweird.f32 %v952
  %vm1414 = vweird.f32 %v1408
  %vm1415 = vmor %vm1413, %vm1414
  %v1416 = vsel %vm1415, %v1408, %v1412
  %v1417 = vand.u32 2147483647, %v952
  %vm1418 = vcmp.eq.f32.partialorder %v1417, 8.507059e+37
  %v1419 = vand.u32 %v952, 2147483648
  %v1420 = vor.u32 1.1754944e-38, %v1419
  %v1421 = vsel %vm1418, %v1420, %v1416
  %v1422 = vmul.f32 1.0, %v1421
  %v1423 = vrcp.pop %v953
  %v1424 = vmul.f32 %v953, %v1423
  %v1425 = vsub.f32 1.0, %v1424
  %v1426 = vmul.f32 %v1423, %v1425
  %v1427 = vadd.f32 %v1423, %v1426
  %vm1428 = vweird.f32 %v953
  %vm1429 = vweird.f32 %v1423
  %vm1430 = vmor %vm1428, %vm1429
  %v1431 = vsel %vm1430, %v1423, %v1427
  %v1432 = vand.u32 2147483647, %v953
  %vm1433 = vcmp.eq.f32.partialorder %v1432, 8.507059e+37
  %v1434 = vand.u32 %v953, 2147483648
  %v1435 = vor.u32 1.1754944e-38, %v1434
  %v1436 = vsel %vm1433, %v1435, %v1431
  %v1437 = vmul.f32 1.0, %v1436
  %v1438 = vrcp.pop %v954
  %v1439 = vmul.f32 %v954, %v1438
  %v1440 = vsub.f32 1.0, %v1439
  %v1441 = vmul.f32 %v1438, %v1440
  %v1442 = vadd.f32 %v1438, %v1441
  %vm1443 = vweird.f32 %v954
  %vm1444 = vweird.f32 %v1438
  %vm1445 = vmor %vm1443, %vm1444
  %v1446 = vsel %vm1445, %v1438, %v1442
  %v1447 = vand.u32 2147483647, %v954
  %vm1448 = vcmp.eq.f32.partialorder %v1447, 8.507059e+37
  %v1449 = vand.u32 %v954, 2147483648
  %v1450 = vor.u32 1.1754944e-38, %v1449
  %v1451 = vsel %vm1448, %v1450, %v1446
  %v1452 = vmul.f32 1.0, %v1451
  %v1453 = vrcp.pop %v955
  %v1454 = vmul.f32 %v955, %v1453
  %v1455 = vsub.f32 1.0, %v1454
  %v1456 = vmul.f32 %v1453, %v1455
  %v1457 = vadd.f32 %v1453, %v1456
  %vm1458 = vweird.f32 %v955
  %vm1459 = vweird.f32 %v1453
  %vm1460 = vmor %vm1458, %vm1459
  %v1461 = vsel %vm1460, %v1453, %v1457
  %v1462 = vand.u32 2147483647, %v955
  %vm1463 = vcmp.eq.f32.partialorder %v1462, 8.507059e+37
  %v1464 = vand.u32 %v955, 2147483648
  %v1465 = vor.u32 1.1754944e-38, %v1464
  %v1466 = vsel %vm1463, %v1465, %v1461
  %v1467 = vmul.f32 1.0, %v1466
  %v1468 = vrcp.pop %v956
  %v1469 = vmul.f32 %v956, %v1468
  %v1470 = vsub.f32 1.0, %v1469
  %v1471 = vmul.f32 %v1468, %v1470
  %v1472 = vadd.f32 %v1468, %v1471
  %vm1473 = vweird.f32 %v956
  %vm1474 = vweird.f32 %v1468
  %vm1475 = vmor %vm1473, %vm1474
  %v1476 = vsel %vm1475, %v1468, %v1472
  %v1477 = vand.u32 2147483647, %v956
  %vm1478 = vcmp.eq.f32.partialorder %v1477, 8.507059e+37
  %v1479 = vand.u32 %v956, 2147483648
  %v1480 = vor.u32 1.1754944e-38, %v1479
  %v1481 = vsel %vm1478, %v1480, %v1476
  %v1482 = vmul.f32 1.0, %v1481
  %v1483 = vrcp.pop %v957
  %v1484 = vmul.f32 %v957, %v1483
  %v1485 = vsub.f32 1.0, %v1484
  %v1486 = vmul.f32 %v1483, %v1485
  %v1487 = vadd.f32 %v1483, %v1486
  %vm1488 = vweird.f32 %v957
  %vm1489 = vweird.f32 %v1483
  %vm1490 = vmor %vm1488, %vm1489
  %v1491 = vsel %vm1490, %v1483, %v1487
  %v1492 = vand.u32 2147483647, %v957
  %vm1493 = vcmp.eq.f32.partialorder %v1492, 8.507059e+37
  %v1494 = vand.u32 %v957, 2147483648
  %v1495 = vor.u32 1.1754944e-38, %v1494
  %v1496 = vsel %vm1493, %v1495, %v1491
  %v1497 = vmul.f32 1.0, %v1496
  %v1498 = vrcp.pop %v958
  %v1499 = vmul.f32 %v958, %v1498
  %v1500 = vsub.f32 1.0, %v1499
  %v1501 = vmul.f32 %v1498, %v1500
  %v1502 = vadd.f32 %v1498, %v1501
  %vm1503 = vweird.f32 %v958
  %vm1504 = vweird.f32 %v1498
  %vm1505 = vmor %vm1503, %vm1504
  %v1506 = vsel %vm1505, %v1498, %v1502
  %v1507 = vand.u32 2147483647, %v958
  %vm1508 = vcmp.eq.f32.partialorder %v1507, 8.507059e+37
  %v1509 = vand.u32 %v958, 2147483648
  %v1510 = vor.u32 1.1754944e-38, %v1509
  %v1511 = vsel %vm1508, %v1510, %v1506
  %v1512 = vmul.f32 1.0, %v1511
  %v1513 = vrcp.pop %v959
  %v1514 = vmul.f32 %v959, %v1513
  %v1515 = vsub.f32 1.0, %v1514
  %v1516 = vmul.f32 %v1513, %v1515
  %v1517 = vadd.f32 %v1513, %v1516
  %vm1518 = vweird.f32 %v959
  %vm1519 = vweird.f32 %v1513
  %vm1520 = vmor %vm1518, %vm1519
  %v1521 = vsel %vm1520, %v1513, %v1517
  %v1522 = vand.u32 2147483647, %v959
  %vm1523 = vcmp.eq.f32.partialorder %v1522, 8.507059e+37
  %v1524 = vand.u32 %v959, 2147483648
  %v1525 = vor.u32 1.1754944e-38, %v1524
  %v1526 = vsel %vm1523, %v1525, %v1521
  %v1527 = vmul.f32 1.0, %v1526
  %v1528 = vrcp.pop %v960
  %v1529 = vmul.f32 %v960, %v1528
  %v1530 = vsub.f32 1.0, %v1529
  %v1531 = vmul.f32 %v1528, %v1530
  %v1532 = vadd.f32 %v1528, %v1531
  %vm1533 = vweird.f32 %v960
  %vm1534 = vweird.f32 %v1528
  %vm1535 = vmor %vm1533, %vm1534
  %v1536 = vsel %vm1535, %v1528, %v1532
  %v1537 = vand.u32 2147483647, %v960
  %vm1538 = vcmp.eq.f32.partialorder %v1537, 8.507059e+37
  %v1539 = vand.u32 %v960, 2147483648
  %v1540 = vor.u32 1.1754944e-38, %v1539
  %v1541 = vsel %vm1538, %v1540, %v1536
  %v1542 = vmul.f32 1.0, %v1541
  %v1543 = vrcp.pop %v961
  %v1544 = vmul.f32 %v961, %v1543
  %v1545 = vsub.f32 1.0, %v1544
  %v1546 = vmul.f32 %v1543, %v1545
  %v1547 = vadd.f32 %v1543, %v1546
  %vm1548 = vweird.f32 %v961
  %vm1549 = vweird.f32 %v1543
  %vm1550 = vmor %vm1548, %vm1549
  %v1551 = vsel %vm1550, %v1543, %v1547
  %v1552 = vand.u32 2147483647, %v961
  %vm1553 = vcmp.eq.f32.partialorder %v1552, 8.507059e+37
  %v1554 = vand.u32 %v961, 2147483648
  %v1555 = vor.u32 1.1754944e-38, %v1554
  %v1556 = vsel %vm1553, %v1555, %v1551
  %v1557 = vmul.f32 1.0, %v1556
  %v1558 = vrcp.pop %v962
  %v1559 = vmul.f32 %v962, %v1558
  %v1560 = vsub.f32 1.0, %v1559
  %v1561 = vmul.f32 %v1558, %v1560
  %v1562 = vadd.f32 %v1558, %v1561
  %vm1563 = vweird.f32 %v962
  %vm1564 = vweird.f32 %v1558
  %vm1565 = vmor %vm1563, %vm1564
  %v1566 = vsel %vm1565, %v1558, %v1562
  %v1567 = vand.u32 2147483647, %v962
  %vm1568 = vcmp.eq.f32.partialorder %v1567, 8.507059e+37
  %v1569 = vand.u32 %v962, 2147483648
  %v1570 = vor.u32 1.1754944e-38, %v1569
  %v1571 = vsel %vm1568, %v1570, %v1566
  %v1572 = vmul.f32 1.0, %v1571
  %v1573 = vrcp.pop %v963
  %v1574 = vmul.f32 %v963, %v1573
  %v1575 = vsub.f32 1.0, %v1574
  %v1576 = vmul.f32 %v1573, %v1575
  %v1577 = vadd.f32 %v1573, %v1576
  %vm1578 = vweird.f32 %v963
  %vm1579 = vweird.f32 %v1573
  %vm1580 = vmor %vm1578, %vm1579
  %v1581 = vsel %vm1580, %v1573, %v1577
  %v1582 = vand.u32 2147483647, %v963
  %vm1583 = vcmp.eq.f32.partialorder %v1582, 8.507059e+37
  %v1584 = vand.u32 %v963, 2147483648
  %v1585 = vor.u32 1.1754944e-38, %v1584
  %v1586 = vsel %vm1583, %v1585, %v1581
  %v1587 = vmul.f32 1.0, %v1586
  %v1588 = vrcp.pop %v964
  %v1589 = vmul.f32 %v964, %v1588
  %v1590 = vsub.f32 1.0, %v1589
  %v1591 = vmul.f32 %v1588, %v1590
  %v1592 = vadd.f32 %v1588, %v1591
  %vm1593 = vweird.f32 %v964
  %vm1594 = vweird.f32 %v1588
  %vm1595 = vmor %vm1593, %vm1594
  %v1596 = vsel %vm1595, %v1588, %v1592
  %v1597 = vand.u32 2147483647, %v964
  %vm1598 = vcmp.eq.f32.partialorder %v1597, 8.507059e+37
  %v1599 = vand.u32 %v964, 2147483648
  %v1600 = vor.u32 1.1754944e-38, %v1599
  %v1601 = vsel %vm1598, %v1600, %v1596
  %v1602 = vmul.f32 1.0, %v1601
  %v1603 = vrcp.pop %v965
  %v1604 = vmul.f32 %v965, %v1603
  %v1605 = vsub.f32 1.0, %v1604
  %v1606 = vmul.f32 %v1603, %v1605
  %v1607 = vadd.f32 %v1603, %v1606
  %vm1608 = vweird.f32 %v965
  %vm1609 = vweird.f32 %v1603
  %vm1610 = vmor %vm1608, %vm1609
  %v1611 = vsel %vm1610, %v1603, %v1607
  %v1612 = vand.u32 2147483647, %v965
  %vm1613 = vcmp.eq.f32.partialorder %v1612, 8.507059e+37
  %v1614 = vand.u32 %v965, 2147483648
  %v1615 = vor.u32 1.1754944e-38, %v1614
  %v1616 = vsel %vm1613, %v1615, %v1611
  %v1617 = vmul.f32 1.0, %v1616
  %v1618 = vrcp.pop %v966
  %v1619 = vmul.f32 %v966, %v1618
  %v1620 = vsub.f32 1.0, %v1619
  %v1621 = vmul.f32 %v1618, %v1620
  %v1622 = vadd.f32 %v1618, %v1621
  %vm1623 = vweird.f32 %v966
  %vm1624 = vweird.f32 %v1618
  %vm1625 = vmor %vm1623, %vm1624
  %v1626 = vsel %vm1625, %v1618, %v1622
  %v1627 = vand.u32 2147483647, %v966
  %vm1628 = vcmp.eq.f32.partialorder %v1627, 8.507059e+37
  %v1629 = vand.u32 %v966, 2147483648
  %v1630 = vor.u32 1.1754944e-38, %v1629
  %v1631 = vsel %vm1628, %v1630, %v1626
  %v1632 = vmul.f32 1.0, %v1631
  %v1633 = vrcp.pop %v967
  %v1634 = vmul.f32 %v967, %v1633
  %v1635 = vsub.f32 1.0, %v1634
  %v1636 = vmul.f32 %v1633, %v1635
  %v1637 = vadd.f32 %v1633, %v1636
  %vm1638 = vweird.f32 %v967
  %vm1639 = vweird.f32 %v1633
  %vm1640 = vmor %vm1638, %vm1639
  %v1641 = vsel %vm1640, %v1633, %v1637
  %v1642 = vand.u32 2147483647, %v967
  %vm1643 = vcmp.eq.f32.partialorder %v1642, 8.507059e+37
  %v1644 = vand.u32 %v967, 2147483648
  %v1645 = vor.u32 1.1754944e-38, %v1644
  %v1646 = vsel %vm1643, %v1645, %v1641
  %v1647 = vmul.f32 1.0, %v1646
  %v1648 = vrcp.pop %v968
  %v1649 = vmul.f32 %v968, %v1648
  %v1650 = vsub.f32 1.0, %v1649
  %v1651 = vmul.f32 %v1648, %v1650
  %v1652 = vadd.f32 %v1648, %v1651
  %vm1653 = vweird.f32 %v968
  %vm1654 = vweird.f32 %v1648
  %vm1655 = vmor %vm1653, %vm1654
  %v1656 = vsel %vm1655, %v1648, %v1652
  %v1657 = vand.u32 2147483647, %v968
  %vm1658 = vcmp.eq.f32.partialorder %v1657, 8.507059e+37
  %v1659 = vand.u32 %v968, 2147483648
  %v1660 = vor.u32 1.1754944e-38, %v1659
  %v1661 = vsel %vm1658, %v1660, %v1656
  %v1662 = vmul.f32 1.0, %v1661
  %v1663 = vrcp.pop %v969
  %v1664 = vmul.f32 %v969, %v1663
  %v1665 = vsub.f32 1.0, %v1664
  %v1666 = vmul.f32 %v1663, %v1665
  %v1667 = vadd.f32 %v1663, %v1666
  %vm1668 = vweird.f32 %v969
  %vm1669 = vweird.f32 %v1663
  %vm1670 = vmor %vm1668, %vm1669
  %v1671 = vsel %vm1670, %v1663, %v1667
  %v1672 = vand.u32 2147483647, %v969
  %vm1673 = vcmp.eq.f32.partialorder %v1672, 8.507059e+37
  %v1674 = vand.u32 %v969, 2147483648
  %v1675 = vor.u32 1.1754944e-38, %v1674
  %v1676 = vsel %vm1673, %v1675, %v1671
  %v1677 = vmul.f32 1.0, %v1676
  %v1678 = vrcp.pop %v970
  %v1679 = vmul.f32 %v970, %v1678
  %v1680 = vsub.f32 1.0, %v1679
  %v1681 = vmul.f32 %v1678, %v1680
  %v1682 = vadd.f32 %v1678, %v1681
  %vm1683 = vweird.f32 %v970
  %vm1684 = vweird.f32 %v1678
  %vm1685 = vmor %vm1683, %vm1684
  %v1686 = vsel %vm1685, %v1678, %v1682
  %v1687 = vand.u32 2147483647, %v970
  %vm1688 = vcmp.eq.f32.partialorder %v1687, 8.507059e+37
  %v1689 = vand.u32 %v970, 2147483648
  %v1690 = vor.u32 1.1754944e-38, %v1689
  %v1691 = vsel %vm1688, %v1690, %v1686
  %v1692 = vmul.f32 1.0, %v1691
  %v1693 = vrcp.pop %v971
  %v1694 = vmul.f32 %v971, %v1693
  %v1695 = vsub.f32 1.0, %v1694
  %v1696 = vmul.f32 %v1693, %v1695
  %v1697 = vadd.f32 %v1693, %v1696
  %vm1698 = vweird.f32 %v971
  %vm1699 = vweird.f32 %v1693
  %vm1700 = vmor %vm1698, %vm1699
  %v1701 = vsel %vm1700, %v1693, %v1697
  %v1702 = vand.u32 2147483647, %v971
  %vm1703 = vcmp.eq.f32.partialorder %v1702, 8.507059e+37
  %v1704 = vand.u32 %v971, 2147483648
  %v1705 = vor.u32 1.1754944e-38, %v1704
  %v1706 = vsel %vm1703, %v1705, %v1701
  %v1707 = vmul.f32 1.0, %v1706
  %v1708 = vrcp.pop %v972
  %v1709 = vmul.f32 %v972, %v1708
  %v1710 = vsub.f32 1.0, %v1709
  %v1711 = vmul.f32 %v1708, %v1710
  %v1712 = vadd.f32 %v1708, %v1711
  %vm1713 = vweird.f32 %v972
  %vm1714 = vweird.f32 %v1708
  %vm1715 = vmor %vm1713, %vm1714
  %v1716 = vsel %vm1715, %v1708, %v1712
  %v1717 = vand.u32 2147483647, %v972
  %vm1718 = vcmp.eq.f32.partialorder %v1717, 8.507059e+37
  %v1719 = vand.u32 %v972, 2147483648
  %v1720 = vor.u32 1.1754944e-38, %v1719
  %v1721 = vsel %vm1718, %v1720, %v1716
  %v1722 = vmul.f32 1.0, %v1721
  %v1723 = vrcp.pop %v973
  %v1724 = vmul.f32 %v973, %v1723
  %v1725 = vsub.f32 1.0, %v1724
  %v1726 = vmul.f32 %v1723, %v1725
  %v1727 = vadd.f32 %v1723, %v1726
  %vm1728 = vweird.f32 %v973
  %vm1729 = vweird.f32 %v1723
  %vm1730 = vmor %vm1728, %vm1729
  %v1731 = vsel %vm1730, %v1723, %v1727
  %v1732 = vand.u32 2147483647, %v973
  %vm1733 = vcmp.eq.f32.partialorder %v1732, 8.507059e+37
  %v1734 = vand.u32 %v973, 2147483648
  %v1735 = vor.u32 1.1754944e-38, %v1734
  %v1736 = vsel %vm1733, %v1735, %v1731
  %v1737 = vmul.f32 1.0, %v1736
  %v1738 = vrcp.pop %v974
  %v1739 = vmul.f32 %v974, %v1738
  %v1740 = vsub.f32 1.0, %v1739
  %v1741 = vmul.f32 %v1738, %v1740
  %v1742 = vadd.f32 %v1738, %v1741
  %vm1743 = vweird.f32 %v974
  %vm1744 = vweird.f32 %v1738
  %vm1745 = vmor %vm1743, %vm1744
  %v1746 = vsel %vm1745, %v1738, %v1742
  %v1747 = vand.u32 2147483647, %v974
  %vm1748 = vcmp.eq.f32.partialorder %v1747, 8.507059e+37
  %v1749 = vand.u32 %v974, 2147483648
  %v1750 = vor.u32 1.1754944e-38, %v1749
  %v1751 = vsel %vm1748, %v1750, %v1746
  %v1752 = vmul.f32 1.0, %v1751
  %v1753 = vrcp.pop %v975
  %v1754 = vmul.f32 %v975, %v1753
  %v1755 = vsub.f32 1.0, %v1754
  %v1756 = vmul.f32 %v1753, %v1755
  %v1757 = vadd.f32 %v1753, %v1756
  %vm1758 = vweird.f32 %v975
  %vm1759 = vweird.f32 %v1753
  %vm1760 = vmor %vm1758, %vm1759
  %v1761 = vsel %vm1760, %v1753, %v1757
  %v1762 = vand.u32 2147483647, %v975
  %vm1763 = vcmp.eq.f32.partialorder %v1762, 8.507059e+37
  %v1764 = vand.u32 %v975, 2147483648
  %v1765 = vor.u32 1.1754944e-38, %v1764
  %v1766 = vsel %vm1763, %v1765, %v1761
  %v1767 = vmul.f32 1.0, %v1766
  %v1768 = vrcp.pop %v976
  %v1769 = vmul.f32 %v976, %v1768
  %v1770 = vsub.f32 1.0, %v1769
  %v1771 = vmul.f32 %v1768, %v1770
  %v1772 = vadd.f32 %v1768, %v1771
  %vm1773 = vweird.f32 %v976
  %vm1774 = vweird.f32 %v1768
  %vm1775 = vmor %vm1773, %vm1774
  %v1776 = vsel %vm1775, %v1768, %v1772
  %v1777 = vand.u32 2147483647, %v976
  %vm1778 = vcmp.eq.f32.partialorder %v1777, 8.507059e+37
  %v1779 = vand.u32 %v976, 2147483648
  %v1780 = vor.u32 1.1754944e-38, %v1779
  %v1781 = vsel %vm1778, %v1780, %v1776
  %v1782 = vmul.f32 1.0, %v1781
  %v1783 = vrcp.pop %v977
  %v1784 = vmul.f32 %v977, %v1783
  %v1785 = vsub.f32 1.0, %v1784
  %v1786 = vmul.f32 %v1783, %v1785
  %v1787 = vadd.f32 %v1783, %v1786
  %vm1788 = vweird.f32 %v977
  %vm1789 = vweird.f32 %v1783
  %vm1790 = vmor %vm1788, %vm1789
  %v1791 = vsel %vm1790, %v1783, %v1787
  %v1792 = vand.u32 2147483647, %v977
  %vm1793 = vcmp.eq.f32.partialorder %v1792, 8.507059e+37
  %v1794 = vand.u32 %v977, 2147483648
  %v1795 = vor.u32 1.1754944e-38, %v1794
  %v1796 = vsel %vm1793, %v1795, %v1791
  %v1797 = vmul.f32 1.0, %v1796
  %v1798 = vrcp.pop %v978
  %v1799 = vmul.f32 %v978, %v1798
  %v1800 = vsub.f32 1.0, %v1799
  %v1801 = vmul.f32 %v1798, %v1800
  %v1802 = vadd.f32 %v1798, %v1801
  %vm1803 = vweird.f32 %v978
  %vm1804 = vweird.f32 %v1798
  %vm1805 = vmor %vm1803, %vm1804
  %v1806 = vsel %vm1805, %v1798, %v1802
  %v1807 = vand.u32 2147483647, %v978
  %vm1808 = vcmp.eq.f32.partialorder %v1807, 8.507059e+37
  %v1809 = vand.u32 %v978, 2147483648
  %v1810 = vor.u32 1.1754944e-38, %v1809
  %v1811 = vsel %vm1808, %v1810, %v1806
  %v1812 = vmul.f32 1.0, %v1811
  %v1813 = vrcp.pop %v979
  %v1814 = vmul.f32 %v979, %v1813
  %v1815 = vsub.f32 1.0, %v1814
  %v1816 = vmul.f32 %v1813, %v1815
  %v1817 = vadd.f32 %v1813, %v1816
  %vm1818 = vweird.f32 %v979
  %vm1819 = vweird.f32 %v1813
  %vm1820 = vmor %vm1818, %vm1819
  %v1821 = vsel %vm1820, %v1813, %v1817
  %v1822 = vand.u32 2147483647, %v979
  %vm1823 = vcmp.eq.f32.partialorder %v1822, 8.507059e+37
  %v1824 = vand.u32 %v979, 2147483648
  %v1825 = vor.u32 1.1754944e-38, %v1824
  %v1826 = vsel %vm1823, %v1825, %v1821
  %v1827 = vmul.f32 1.0, %v1826
  %v1828 = vrcp.pop %v980
  %v1829 = vmul.f32 %v980, %v1828
  %v1830 = vsub.f32 1.0, %v1829
  %v1831 = vmul.f32 %v1828, %v1830
  %v1832 = vadd.f32 %v1828, %v1831
  %vm1833 = vweird.f32 %v980
  %vm1834 = vweird.f32 %v1828
  %vm1835 = vmor %vm1833, %vm1834
  %v1836 = vsel %vm1835, %v1828, %v1832
  %v1837 = vand.u32 2147483647, %v980
  %vm1838 = vcmp.eq.f32.partialorder %v1837, 8.507059e+37
  %v1839 = vand.u32 %v980, 2147483648
  %v1840 = vor.u32 1.1754944e-38, %v1839
  %v1841 = vsel %vm1838, %v1840, %v1836
  %v1842 = vmul.f32 1.0, %v1841
  %v1843 = vrcp.pop %v981
  %v1844 = vmul.f32 %v981, %v1843
  %v1845 = vsub.f32 1.0, %v1844
  %v1846 = vmul.f32 %v1843, %v1845
  %v1847 = vadd.f32 %v1843, %v1846
  %vm1848 = vweird.f32 %v981
  %vm1849 = vweird.f32 %v1843
  %vm1850 = vmor %vm1848, %vm1849
  %v1851 = vsel %vm1850, %v1843, %v1847
  %v1852 = vand.u32 2147483647, %v981
  %vm1853 = vcmp.eq.f32.partialorder %v1852, 8.507059e+37
  %v1854 = vand.u32 %v981, 2147483648
  %v1855 = vor.u32 1.1754944e-38, %v1854
  %v1856 = vsel %vm1853, %v1855, %v1851
  %v1857 = vmul.f32 1.0, %v1856
  %v1858 = vrcp.pop %v982
  %v1859 = vmul.f32 %v982, %v1858
  %v1860 = vsub.f32 1.0, %v1859
  %v1861 = vmul.f32 %v1858, %v1860
  %v1862 = vadd.f32 %v1858, %v1861
  %vm1863 = vweird.f32 %v982
  %vm1864 = vweird.f32 %v1858
  %vm1865 = vmor %vm1863, %vm1864
  %v1866 = vsel %vm1865, %v1858, %v1862
  %v1867 = vand.u32 2147483647, %v982
  %vm1868 = vcmp.eq.f32.partialorder %v1867, 8.507059e+37
  %v1869 = vand.u32 %v982, 2147483648
  %v1870 = vor.u32 1.1754944e-38, %v1869
  %v1871 = vsel %vm1868, %v1870, %v1866
  %v1872 = vmul.f32 1.0, %v1871
  %v1873 = vrcp.pop %v983
  %v1874 = vmul.f32 %v983, %v1873
  %v1875 = vsub.f32 1.0, %v1874
  %v1876 = vmul.f32 %v1873, %v1875
  %v1877 = vadd.f32 %v1873, %v1876
  %vm1878 = vweird.f32 %v983
  %vm1879 = vweird.f32 %v1873
  %vm1880 = vmor %vm1878, %vm1879
  %v1881 = vsel %vm1880, %v1873, %v1877
  %v1882 = vand.u32 2147483647, %v983
  %vm1883 = vcmp.eq.f32.partialorder %v1882, 8.507059e+37
  %v1884 = vand.u32 %v983, 2147483648
  %v1885 = vor.u32 1.1754944e-38, %v1884
  %v1886 = vsel %vm1883, %v1885, %v1881
  %v1887 = vmul.f32 1.0, %v1886
  %v1888 = vrcp.pop %v984
  %v1889 = vmul.f32 %v984, %v1888
  %v1890 = vsub.f32 1.0, %v1889
  %v1891 = vmul.f32 %v1888, %v1890
  %v1892 = vadd.f32 %v1888, %v1891
  %vm1893 = vweird.f32 %v984
  %vm1894 = vweird.f32 %v1888
  %vm1895 = vmor %vm1893, %vm1894
  %v1896 = vsel %vm1895, %v1888, %v1892
  %v1897 = vand.u32 2147483647, %v984
  %vm1898 = vcmp.eq.f32.partialorder %v1897, 8.507059e+37
  %v1899 = vand.u32 %v984, 2147483648
  %v1900 = vor.u32 1.1754944e-38, %v1899
  %v1901 = vsel %vm1898, %v1900, %v1896
  %v1902 = vmul.f32 1.0, %v1901
  %v1903 = vrcp.pop %v985
  %v1904 = vmul.f32 %v985, %v1903
  %v1905 = vsub.f32 1.0, %v1904
  %v1906 = vmul.f32 %v1903, %v1905
  %v1907 = vadd.f32 %v1903, %v1906
  %vm1908 = vweird.f32 %v985
  %vm1909 = vweird.f32 %v1903
  %vm1910 = vmor %vm1908, %vm1909
  %v1911 = vsel %vm1910, %v1903, %v1907
  %v1912 = vand.u32 2147483647, %v985
  %vm1913 = vcmp.eq.f32.partialorder %v1912, 8.507059e+37
  %v1914 = vand.u32 %v985, 2147483648
  %v1915 = vor.u32 1.1754944e-38, %v1914
  %v1916 = vsel %vm1913, %v1915, %v1911
  %v1917 = vmul.f32 1.0, %v1916
  %v1918 = vrcp.pop %v986
  %v1919 = vmul.f32 %v986, %v1918
  %v1920 = vsub.f32 1.0, %v1919
  %v1921 = vmul.f32 %v1918, %v1920
  %v1922 = vadd.f32 %v1918, %v1921
  %vm1923 = vweird.f32 %v986
  %vm1924 = vweird.f32 %v1918
  %vm1925 = vmor %vm1923, %vm1924
  %v1926 = vsel %vm1925, %v1918, %v1922
  %v1927 = vand.u32 2147483647, %v986
  %vm1928 = vcmp.eq.f32.partialorder %v1927, 8.507059e+37
  %v1929 = vand.u32 %v986, 2147483648
  %v1930 = vor.u32 1.1754944e-38, %v1929
  %v1931 = vsel %vm1928, %v1930, %v1926
  %v1932 = vmul.f32 1.0, %v1931
  %v1933 = vrcp.pop %v987
  %v1934 = vmul.f32 %v987, %v1933
  %v1935 = vsub.f32 1.0, %v1934
  %v1936 = vmul.f32 %v1933, %v1935
  %v1937 = vadd.f32 %v1933, %v1936
  %vm1938 = vweird.f32 %v987
  %vm1939 = vweird.f32 %v1933
  %vm1940 = vmor %vm1938, %vm1939
  %v1941 = vsel %vm1940, %v1933, %v1937
  %v1942 = vand.u32 2147483647, %v987
  %vm1943 = vcmp.eq.f32.partialorder %v1942, 8.507059e+37
  %v1944 = vand.u32 %v987, 2147483648
  %v1945 = vor.u32 1.1754944e-38, %v1944
  %v1946 = vsel %vm1943, %v1945, %v1941
  %v1947 = vmul.f32 1.0, %v1946
  %v1948 = vmul.f32 %v1002, 1.0614054
  %v1949 = vmul.f32 %v1017, 1.0614054
  %v1950 = vmul.f32 %v1032, 1.0614054
  %v1951 = vmul.f32 %v1047, 1.0614054
  %v1952 = vmul.f32 %v1062, 1.0614054
  %v1953 = vmul.f32 %v1077, 1.0614054
  %v1954 = vmul.f32 %v1092, 1.0614054
  %v1955 = vmul.f32 %v1107, 1.0614054
  %v1956 = vmul.f32 %v1122, 1.0614054
  %v1957 = vmul.f32 %v1137, 1.0614054
  %v1958 = vmul.f32 %v1152, 1.0614054
  %v1959 = vmul.f32 %v1167, 1.0614054
  %v1960 = vmul.f32 %v1182, 1.0614054
  %v1961 = vmul.f32 %v1197, 1.0614054
  %v1962 = vmul.f32 %v1212, 1.0614054
  %v1963 = vmul.f32 %v1227, 1.0614054
  %v1964 = vmul.f32 %v1242, 1.0614054
  %v1965 = vmul.f32 %v1257, 1.0614054
  %v1966 = vmul.f32 %v1272, 1.0614054
  %v1967 = vmul.f32 %v1287, 1.0614054
  %v1968 = vmul.f32 %v1302, 1.0614054
  %v1969 = vmul.f32 %v1317, 1.0614054
  %v1970 = vmul.f32 %v1332, 1.0614054
  %v1971 = vmul.f32 %v1347, 1.0614054
  %v1972 = vmul.f32 %v1362, 1.0614054
  %v1973 = vmul.f32 %v1377, 1.0614054
  %v1974 = vmul.f32 %v1392, 1.0614054
  %v1975 = vmul.f32 %v1407, 1.0614054
  %v1976 = vmul.f32 %v1422, 1.0614054
  %v1977 = vmul.f32 %v1437, 1.0614054
  %v1978 = vmul.f32 %v1452, 1.0614054
  %v1979 = vmul.f32 %v1467, 1.0614054
  %v1980 = vmul.f32 %v1482, 1.0614054
  %v1981 = vmul.f32 %v1497, 1.0614054
  %v1982 = vmul.f32 %v1512, 1.0614054
  %v1983 = vmul.f32 %v1527, 1.0614054
  %v1984 = vmul.f32 %v1542, 1.0614054
  %v1985 = vmul.f32 %v1557, 1.0614054
  %v1986 = vmul.f32 %v1572, 1.0614054
  %v1987 = vmul.f32 %v1587, 1.0614054
  %v1988 = vmul.f32 %v1602, 1.0614054
  %v1989 = vmul.f32 %v1617, 1.0614054
  %v1990 = vmul.f32 %v1632, 1.0614054
  %v1991 = vmul.f32 %v1647, 1.0614054
  %v1992 = vmul.f32 %v1662, 1.0614054
  %v1993 = vmul.f32 %v1677, 1.0614054
  %v1994 = vmul.f32 %v1692, 1.0614054
  %v1995 = vmul.f32 %v1707, 1.0614054
  %v1996 = vmul.f32 %v1722, 1.0614054
  %v1997 = vmul.f32 %v1737, 1.0614054
  %v1998 = vmul.f32 %v1752, 1.0614054
  %v1999 = vmul.f32 %v1767, 1.0614054
  %v2000 = vmul.f32 %v1782, 1.0614054
  %v2001 = vmul.f32 %v1797, 1.0614054
  %v2002 = vmul.f32 %v1812, 1.0614054
  %v2003 = vmul.f32 %v1827, 1.0614054
  %v2004 = vmul.f32 %v1842, 1.0614054
  %v2005 = vmul.f32 %v1857, 1.0614054
  %v2006 = vmul.f32 %v1872, 1.0614054
  %v2007 = vmul.f32 %v1887, 1.0614054
  %v2008 = vmul.f32 %v1902, 1.0614054
  %v2009 = vmul.f32 %v1917, 1.0614054
  %v2010 = vmul.f32 %v1932, 1.0614054
  %v2011 = vmul.f32 %v1947, 1.0614054
  %v2012 = vadd.f32 %v1948, -1.4531521
  %v2013 = vadd.f32 %v1949, -1.4531521
  %v2014 = vadd.f32 %v1950, -1.4531521
  %v2015 = vadd.f32 %v1951, -1.4531521
  %v2016 = vadd.f32 %v1952, -1.4531521
  %v2017 = vadd.f32 %v1953, -1.4531521
  %v2018 = vadd.f32 %v1954, -1.4531521
  %v2019 = vadd.f32 %v1955, -1.4531521
  %v2020 = vadd.f32 %v1956, -1.4531521
  %v2021 = vadd.f32 %v1957, -1.4531521
  %v2022 = vadd.f32 %v1958, -1.4531521
  %v2023 = vadd.f32 %v1959, -1.4531521
  %v2024 = vadd.f32 %v1960, -1.4531521
  %v2025 = vadd.f32 %v1961, -1.4531521
  %v2026 = vadd.f32 %v1962, -1.4531521
  %v2027 = vadd.f32 %v1963, -1.4531521
  %v2028 = vadd.f32 %v1964, -1.4531521
  %v2029 = vadd.f32 %v1965, -1.4531521
  %v2030 = vadd.f32 %v1966, -1.4531521
  %v2031 = vadd.f32 %v1967, -1.4531521
  %v2032 = vadd.f32 %v1968, -1.4531521
  %v2033 = vadd.f32 %v1969, -1.4531521
  %v2034 = vadd.f32 %v1970, -1.4531521
  %v2035 = vadd.f32 %v1971, -1.4531521
  %v2036 = vadd.f32 %v1972, -1.4531521
  %v2037 = vadd.f32 %v1973, -1.4531521
  %v2038 = vadd.f32 %v1974, -1.4531521
  %v2039 = vadd.f32 %v1975, -1.4531521
  %v2040 = vadd.f32 %v1976, -1.4531521
  %v2041 = vadd.f32 %v1977, -1.4531521
  %v2042 = vadd.f32 %v1978, -1.4531521
  %v2043 = vadd.f32 %v1979, -1.4531521
  %v2044 = vadd.f32 %v1980, -1.4531521
  %v2045 = vadd.f32 %v1981, -1.4531521
  %v2046 = vadd.f32 %v1982, -1.4531521
  %v2047 = vadd.f32 %v1983, -1.4531521
  %v2048 = vadd.f32 %v1984, -1.4531521
  %v2049 = vadd.f32 %v1985, -1.4531521
  %v2050 = vadd.f32 %v1986, -1.4531521
  %v2051 = vadd.f32 %v1987, -1.4531521
  %v2052 = vadd.f32 %v1988, -1.4531521
  %v2053 = vadd.f32 %v1989, -1.4531521
  %v2054 = vadd.f32 %v1990, -1.4531521
  %v2055 = vadd.f32 %v1991, -1.4531521
  %v2056 = vadd.f32 %v1992, -1.4531521
  %v2057 = vadd.f32 %v1993, -1.4531521
  %v2058 = vadd.f32 %v1994, -1.4531521
  %v2059 = vadd.f32 %v1995, -1.4531521
  %v2060 = vadd.f32 %v1996, -1.4531521
  %v2061 = vadd.f32 %v1997, -1.4531521
  %v2062 = vadd.f32 %v1998, -1.4531521
  %v2063 = vadd.f32 %v1999, -1.4531521
  %v2064 = vadd.f32 %v2000, -1.4531521
  %v2065 = vadd.f32 %v2001, -1.4531521
  %v2066 = vadd.f32 %v2002, -1.4531521
  %v2067 = vadd.f32 %v2003, -1.4531521
  %v2068 = vadd.f32 %v2004, -1.4531521
  %v2069 = vadd.f32 %v2005, -1.4531521
  %v2070 = vadd.f32 %v2006, -1.4531521
  %v2071 = vadd.f32 %v2007, -1.4531521
  %v2072 = vadd.f32 %v2008, -1.4531521
  %v2073 = vadd.f32 %v2009, -1.4531521
  %v2074 = vadd.f32 %v2010, -1.4531521
  %v2075 = vadd.f32 %v2011, -1.4531521
  %v2076 = vmul.f32 %v2012, %v1002
  %v2077 = vmul.f32 %v2013, %v1017
  %v2078 = vmul.f32 %v2014, %v1032
  %v2079 = vmul.f32 %v2015, %v1047
  %v2080 = vmul.f32 %v2016, %v1062
  %v2081 = vmul.f32 %v2017, %v1077
  %v2082 = vmul.f32 %v2018, %v1092
  %v2083 = vmul.f32 %v2019, %v1107
  %v2084 = vmul.f32 %v2020, %v1122
  %v2085 = vmul.f32 %v2021, %v1137
  %v2086 = vmul.f32 %v2022, %v1152
  %v2087 = vmul.f32 %v2023, %v1167
  %v2088 = vmul.f32 %v2024, %v1182
  %v2089 = vmul.f32 %v2025, %v1197
  %v2090 = vmul.f32 %v2026, %v1212
  %v2091 = vmul.f32 %v2027, %v1227
  %v2092 = vmul.f32 %v2028, %v1242
  %v2093 = vmul.f32 %v2029, %v1257
  %v2094 = vmul.f32 %v2030, %v1272
  %v2095 = vmul.f32 %v2031, %v1287
  %v2096 = vmul.f32 %v2032, %v1302
  %v2097 = vmul.f32 %v2033, %v1317
  %v2098 = vmul.f32 %v2034, %v1332
  %v2099 = vmul.f32 %v2035, %v1347
  %v2100 = vmul.f32 %v2036, %v1362
  %v2101 = vmul.f32 %v2037, %v1377
  %v2102 = vmul.f32 %v2038, %v1392
  %v2103 = vmul.f32 %v2039, %v1407
  %v2104 = vmul.f32 %v2040, %v1422
  %v2105 = vmul.f32 %v2041, %v1437
  %v2106 = vmul.f32 %v2042, %v1452
  %v2107 = vmul.f32 %v2043, %v1467
  %v2108 = vmul.f32 %v2044, %v1482
  %v2109 = vmul.f32 %v2045, %v1497
  %v2110 = vmul.f32 %v2046, %v1512
  %v2111 = vmul.f32 %v2047, %v1527
  %v2112 = vmul.f32 %v2048, %v1542
  %v2113 = vmul.f32 %v2049, %v1557
  %v2114 = vmul.f32 %v2050, %v1572
  %v2115 = vmul.f32 %v2051, %v1587
  %v2116 = vmul.f32 %v2052, %v1602
  %v2117 = vmul.f32 %v2053, %v1617
  %v2118 = vmul.f32 %v2054, %v1632
  %v2119 = vmul.f32 %v2055, %v1647
  %v2120 = vmul.f32 %v2056, %v1662
  %v2121 = vmul.f32 %v2057, %v1677
  %v2122 = vmul.f32 %v2058, %v1692
  %v2123 = vmul.f32 %v2059, %v1707
  %v2124 = vmul.f32 %v2060, %v1722
  %v2125 = vmul.f32 %v2061, %v1737
  %v2126 = vmul.f32 %v2062, %v1752
  %v2127 = vmul.f32 %v2063, %v1767
  %v2128 = vmul.f32 %v2064, %v1782
  %v2129 = vmul.f32 %v2065, %v1797
  %v2130 = vmul.f32 %v2066, %v1812
  %v2131 = vmul.f32 %v2067, %v1827
  %v2132 = vmul.f32 %v2068, %v1842
  %v2133 = vmul.f32 %v2069, %v1857
  %v2134 = vmul.f32 %v2070, %v1872
  %v2135 = vmul.f32 %v2071, %v1887
  %v2136 = vmul.f32 %v2072, %v1902
  %v2137 = vmul.f32 %v2073, %v1917
  %v2138 = vmul.f32 %v2074, %v1932
  %v2139 = vmul.f32 %v2075, %v1947
  %v2140 = vadd.f32 %v2076, 1.4214138
  %v2141 = vadd.f32 %v2077, 1.4214138
  %v2142 = vadd.f32 %v2078, 1.4214138
  %v2143 = vadd.f32 %v2079, 1.4214138
  %v2144 = vadd.f32 %v2080, 1.4214138
  %v2145 = vadd.f32 %v2081, 1.4214138
  %v2146 = vadd.f32 %v2082, 1.4214138
  %v2147 = vadd.f32 %v2083, 1.4214138
  %v2148 = vadd.f32 %v2084, 1.4214138
  %v2149 = vadd.f32 %v2085, 1.4214138
  %v2150 = vadd.f32 %v2086, 1.4214138
  %v2151 = vadd.f32 %v2087, 1.4214138
  %v2152 = vadd.f32 %v2088, 1.4214138
  %v2153 = vadd.f32 %v2089, 1.4214138
  %v2154 = vadd.f32 %v2090, 1.4214138
  %v2155 = vadd.f32 %v2091, 1.4214138
  %v2156 = vadd.f32 %v2092, 1.4214138
  %v2157 = vadd.f32 %v2093, 1.4214138
  %v2158 = vadd.f32 %v2094, 1.4214138
  %v2159 = vadd.f32 %v2095, 1.4214138
  %v2160 = vadd.f32 %v2096, 1.4214138
  %v2161 = vadd.f32 %v2097, 1.4214138
  %v2162 = vadd.f32 %v2098, 1.4214138
  %v2163 = vadd.f32 %v2099, 1.4214138
  %v2164 = vadd.f32 %v2100, 1.4214138
  %v2165 = vadd.f32 %v2101, 1.4214138
  %v2166 = vadd.f32 %v2102, 1.4214138
  %v2167 = vadd.f32 %v2103, 1.4214138
  %v2168 = vadd.f32 %v2104, 1.4214138
  %v2169 = vadd.f32 %v2105, 1.4214138
  %v2170 = vadd.f32 %v2106, 1.4214138
  %v2171 = vadd.f32 %v2107, 1.4214138
  %v2172 = vadd.f32 %v2108, 1.4214138
  %v2173 = vadd.f32 %v2109, 1.4214138
  %v2174 = vadd.f32 %v2110, 1.4214138
  %v2175 = vadd.f32 %v2111, 1.4214138
  %v2176 = vadd.f32 %v2112, 1.4214138
  %v2177 = vadd.f32 %v2113, 1.4214138
  %v2178 = vadd.f32 %v2114, 1.4214138
  %v2179 = vadd.f32 %v2115, 1.4214138
  %v2180 = vadd.f32 %v2116, 1.4214138
  %v2181 = vadd.f32 %v2117, 1.4214138
  %v2182 = vadd.f32 %v2118, 1.4214138
  %v2183 = vadd.f32 %v2119, 1.4214138
  %v2184 = vadd.f32 %v2120, 1.4214138
  %v2185 = vadd.f32 %v2121, 1.4214138
  %v2186 = vadd.f32 %v2122, 1.4214138
  %v2187 = vadd.f32 %v2123, 1.4214138
  %v2188 = vadd.f32 %v2124, 1.4214138
  %v2189 = vadd.f32 %v2125, 1.4214138
  %v2190 = vadd.f32 %v2126, 1.4214138
  %v2191 = vadd.f32 %v2127, 1.4214138
  %v2192 = vadd.f32 %v2128, 1.4214138
  %v2193 = vadd.f32 %v2129, 1.4214138
  %v2194 = vadd.f32 %v2130, 1.4214138
  %v2195 = vadd.f32 %v2131, 1.4214138
  %v2196 = vadd.f32 %v2132, 1.4214138
  %v2197 = vadd.f32 %v2133, 1.4214138
  %v2198 = vadd.f32 %v2134, 1.4214138
  %v2199 = vadd.f32 %v2135, 1.4214138
  %v2200 = vadd.f32 %v2136, 1.4214138
  %v2201 = vadd.f32 %v2137, 1.4214138
  %v2202 = vadd.f32 %v2138, 1.4214138
  %v2203 = vadd.f32 %v2139, 1.4214138
  %v2204 = vmul.f32 %v2140, %v1002
  %v2205 = vmul.f32 %v2141, %v1017
  %v2206 = vmul.f32 %v2142, %v1032
  %v2207 = vmul.f32 %v2143, %v1047
  %v2208 = vmul.f32 %v2144, %v1062
  %v2209 = vmul.f32 %v2145, %v1077
  %v2210 = vmul.f32 %v2146, %v1092
  %v2211 = vmul.f32 %v2147, %v1107
  %v2212 = vmul.f32 %v2148, %v1122
  %v2213 = vmul.f32 %v2149, %v1137
  %v2214 = vmul.f32 %v2150, %v1152
  %v2215 = vmul.f32 %v2151, %v1167
  %v2216 = vmul.f32 %v2152, %v1182
  %v2217 = vmul.f32 %v2153, %v1197
  %v2218 = vmul.f32 %v2154, %v1212
  %v2219 = vmul.f32 %v2155, %v1227
  %v2220 = vmul.f32 %v2156, %v1242
  %v2221 = vmul.f32 %v2157, %v1257
  %v2222 = vmul.f32 %v2158, %v1272
  %v2223 = vmul.f32 %v2159, %v1287
  %v2224 = vmul.f32 %v2160, %v1302
  %v2225 = vmul.f32 %v2161, %v1317
  %v2226 = vmul.f32 %v2162, %v1332
  %v2227 = vmul.f32 %v2163, %v1347
  %v2228 = vmul.f32 %v2164, %v1362
  %v2229 = vmul.f32 %v2165, %v1377
  %v2230 = vmul.f32 %v2166, %v1392
  %v2231 = vmul.f32 %v2167, %v1407
  %v2232 = vmul.f32 %v2168, %v1422
  %v2233 = vmul.f32 %v2169, %v1437
  %v2234 = vmul.f32 %v2170, %v1452
  %v2235 = vmul.f32 %v2171, %v1467
  %v2236 = vmul.f32 %v2172, %v1482
  %v2237 = vmul.f32 %v2173, %v1497
  %v2238 = vmul.f32 %v2174, %v1512
  %v2239 = vmul.f32 %v2175, %v1527
  %v2240 = vmul.f32 %v2176, %v1542
  %v2241 = vmul.f32 %v2177, %v1557
  %v2242 = vmul.f32 %v2178, %v1572
  %v2243 = vmul.f32 %v2179, %v1587
  %v2244 = vmul.f32 %v2180, %v1602
  %v2245 = vmul.f32 %v2181, %v1617
  %v2246 = vmul.f32 %v2182, %v1632
  %v2247 = vmul.f32 %v2183, %v1647
  %v2248 = vmul.f32 %v2184, %v1662
  %v2249 = vmul.f32 %v2185, %v1677
  %v2250 = vmul.f32 %v2186, %v1692
  %v2251 = vmul.f32 %v2187, %v1707
  %v2252 = vmul.f32 %v2188, %v1722
  %v2253 = vmul.f32 %v2189, %v1737
  %v2254 = vmul.f32 %v2190, %v1752
  %v2255 = vmul.f32 %v2191, %v1767
  %v2256 = vmul.f32 %v2192, %v1782
  %v2257 = vmul.f32 %v2193, %v1797
  %v2258 = vmul.f32 %v2194, %v1812
  %v2259 = vmul.f32 %v2195, %v1827
  %v2260 = vmul.f32 %v2196, %v1842
  %v2261 = vmul.f32 %v2197, %v1857
  %v2262 = vmul.f32 %v2198, %v1872
  %v2263 = vmul.f32 %v2199, %v1887
  %v2264 = vmul.f32 %v2200, %v1902
  %v2265 = vmul.f32 %v2201, %v1917
  %v2266 = vmul.f32 %v2202, %v1932
  %v2267 = vmul.f32 %v2203, %v1947
  %v2268 = vadd.f32 %v2204, -0.28449672
  %v2269 = vadd.f32 %v2205, -0.28449672
  %v2270 = vadd.f32 %v2206, -0.28449672
  %v2271 = vadd.f32 %v2207, -0.28449672
  %v2272 = vadd.f32 %v2208, -0.28449672
  %v2273 = vadd.f32 %v2209, -0.28449672
  %v2274 = vadd.f32 %v2210, -0.28449672
  %v2275 = vadd.f32 %v2211, -0.28449672
  %v2276 = vadd.f32 %v2212, -0.28449672
  %v2277 = vadd.f32 %v2213, -0.28449672
  %v2278 = vadd.f32 %v2214, -0.28449672
  %v2279 = vadd.f32 %v2215, -0.28449672
  %v2280 = vadd.f32 %v2216, -0.28449672
  %v2281 = vadd.f32 %v2217, -0.28449672
  %v2282 = vadd.f32 %v2218, -0.28449672
  %v2283 = vadd.f32 %v2219, -0.28449672
  %v2284 = vadd.f32 %v2220, -0.28449672
  %v2285 = vadd.f32 %v2221, -0.28449672
  %v2286 = vadd.f32 %v2222, -0.28449672
  %v2287 = vadd.f32 %v2223, -0.28449672
  %v2288 = vadd.f32 %v2224, -0.28449672
  %v2289 = vadd.f32 %v2225, -0.28449672
  %v2290 = vadd.f32 %v2226, -0.28449672
  %v2291 = vadd.f32 %v2227, -0.28449672
  %v2292 = vadd.f32 %v2228, -0.28449672
  %v2293 = vadd.f32 %v2229, -0.28449672
  %v2294 = vadd.f32 %v2230, -0.28449672
  %v2295 = vadd.f32 %v2231, -0.28449672
  %v2296 = vadd.f32 %v2232, -0.28449672
  %v2297 = vadd.f32 %v2233, -0.28449672
  %v2298 = vadd.f32 %v2234, -0.28449672
  %v2299 = vadd.f32 %v2235, -0.28449672
  %v2300 = vadd.f32 %v2236, -0.28449672
  %v2301 = vadd.f32 %v2237, -0.28449672
  %v2302 = vadd.f32 %v2238, -0.28449672
  %v2303 = vadd.f32 %v2239, -0.28449672
  %v2304 = vadd.f32 %v2240, -0.28449672
  %v2305 = vadd.f32 %v2241, -0.28449672
  %v2306 = vadd.f32 %v2242, -0.28449672
  %v2307 = vadd.f32 %v2243, -0.28449672
  %v2308 = vadd.f32 %v2244, -0.28449672
  %v2309 = vadd.f32 %v2245, -0.28449672
  %v2310 = vadd.f32 %v2246, -0.28449672
  %v2311 = vadd.f32 %v2247, -0.28449672
  %v2312 = vadd.f32 %v2248, -0.28449672
  %v2313 = vadd.f32 %v2249, -0.28449672
  %v2314 = vadd.f32 %v2250, -0.28449672
  %v2315 = vadd.f32 %v2251, -0.28449672
  %v2316 = vadd.f32 %v2252, -0.28449672
  %v2317 = vadd.f32 %v2253, -0.28449672
  %v2318 = vadd.f32 %v2254, -0.28449672
  %v2319 = vadd.f32 %v2255, -0.28449672
  %v2320 = vadd.f32 %v2256, -0.28449672
  %v2321 = vadd.f32 %v2257, -0.28449672
  %v2322 = vadd.f32 %v2258, -0.28449672
  %v2323 = vadd.f32 %v2259, -0.28449672
  %v2324 = vadd.f32 %v2260, -0.28449672
  %v2325 = vadd.f32 %v2261, -0.28449672
  %v2326 = vadd.f32 %v2262, -0.28449672
  %v2327 = vadd.f32 %v2263, -0.28449672
  %v2328 = vadd.f32 %v2264, -0.28449672
  %v2329 = vadd.f32 %v2265, -0.28449672
  %v2330 = vadd.f32 %v2266, -0.28449672
  %v2331 = vadd.f32 %v2267, -0.28449672
  %v2332 = vmul.f32 %v2268, %v1002
  %v2333 = vmul.f32 %v2269, %v1017
  %v2334 = vmul.f32 %v2270, %v1032
  %v2335 = vmul.f32 %v2271, %v1047
  %v2336 = vmul.f32 %v2272, %v1062
  %v2337 = vmul.f32 %v2273, %v1077
  %v2338 = vmul.f32 %v2274, %v1092
  %v2339 = vmul.f32 %v2275, %v1107
  %v2340 = vmul.f32 %v2276, %v1122
  %v2341 = vmul.f32 %v2277, %v1137
  %v2342 = vmul.f32 %v2278, %v1152
  %v2343 = vmul.f32 %v2279, %v1167
  %v2344 = vmul.f32 %v2280, %v1182
  %v2345 = vmul.f32 %v2281, %v1197
  %v2346 = vmul.f32 %v2282, %v1212
  %v2347 = vmul.f32 %v2283, %v1227
  %v2348 = vmul.f32 %v2284, %v1242
  %v2349 = vmul.f32 %v2285, %v1257
  %v2350 = vmul.f32 %v2286, %v1272
  %v2351 = vmul.f32 %v2287, %v1287
  %v2352 = vmul.f32 %v2288, %v1302
  %v2353 = vmul.f32 %v2289, %v1317
  %v2354 = vmul.f32 %v2290, %v1332
  %v2355 = vmul.f32 %v2291, %v1347
  %v2356 = vmul.f32 %v2292, %v1362
  %v2357 = vmul.f32 %v2293, %v1377
  %v2358 = vmul.f32 %v2294, %v1392
  %v2359 = vmul.f32 %v2295, %v1407
  %v2360 = vmul.f32 %v2296, %v1422
  %v2361 = vmul.f32 %v2297, %v1437
  %v2362 = vmul.f32 %v2298, %v1452
  %v2363 = vmul.f32 %v2299, %v1467
  %v2364 = vmul.f32 %v2300, %v1482
  %v2365 = vmul.f32 %v2301, %v1497
  %v2366 = vmul.f32 %v2302, %v1512
  %v2367 = vmul.f32 %v2303, %v1527
  %v2368 = vmul.f32 %v2304, %v1542
  %v2369 = vmul.f32 %v2305, %v1557
  %v2370 = vmul.f32 %v2306, %v1572
  %v2371 = vmul.f32 %v2307, %v1587
  %v2372 = vmul.f32 %v2308, %v1602
  %v2373 = vmul.f32 %v2309, %v1617
  %v2374 = vmul.f32 %v2310, %v1632
  %v2375 = vmul.f32 %v2311, %v1647
  %v2376 = vmul.f32 %v2312, %v1662
  %v2377 = vmul.f32 %v2313, %v1677
  %v2378 = vmul.f32 %v2314, %v1692
  %v2379 = vmul.f32 %v2315, %v1707
  %v2380 = vmul.f32 %v2316, %v1722
  %v2381 = vmul.f32 %v2317, %v1737
  %v2382 = vmul.f32 %v2318, %v1752
  %v2383 = vmul.f32 %v2319, %v1767
  %v2384 = vmul.f32 %v2320, %v1782
  %v2385 = vmul.f32 %v2321, %v1797
  %v2386 = vmul.f32 %v2322, %v1812
  %v2387 = vmul.f32 %v2323, %v1827
  %v2388 = vmul.f32 %v2324, %v1842
  %v2389 = vmul.f32 %v2325, %v1857
  %v2390 = vmul.f32 %v2326, %v1872
  %v2391 = vmul.f32 %v2327, %v1887
  %v2392 = vmul.f32 %v2328, %v1902
  %v2393 = vmul.f32 %v2329, %v1917
  %v2394 = vmul.f32 %v2330, %v1932
  %v2395 = vmul.f32 %v2331, %v1947
  %v2396 = vadd.f32 %v2332, 0.2548296
  %v2397 = vadd.f32 %v2333, 0.2548296
  %v2398 = vadd.f32 %v2334, 0.2548296
  %v2399 = vadd.f32 %v2335, 0.2548296
  %v2400 = vadd.f32 %v2336, 0.2548296
  %v2401 = vadd.f32 %v2337, 0.2548296
  %v2402 = vadd.f32 %v2338, 0.2548296
  %v2403 = vadd.f32 %v2339, 0.2548296
  %v2404 = vadd.f32 %v2340, 0.2548296
  %v2405 = vadd.f32 %v2341, 0.2548296
  %v2406 = vadd.f32 %v2342, 0.2548296
  %v2407 = vadd.f32 %v2343, 0.2548296
  %v2408 = vadd.f32 %v2344, 0.2548296
  %v2409 = vadd.f32 %v2345, 0.2548296
  %v2410 = vadd.f32 %v2346, 0.2548296
  %v2411 = vadd.f32 %v2347, 0.2548296
  %v2412 = vadd.f32 %v2348, 0.2548296
  %v2413 = vadd.f32 %v2349, 0.2548296
  %v2414 = vadd.f32 %v2350, 0.2548296
  %v2415 = vadd.f32 %v2351, 0.2548296
  %v2416 = vadd.f32 %v2352, 0.2548296
  %v2417 = vadd.f32 %v2353, 0.2548296
  %v2418 = vadd.f32 %v2354, 0.2548296
  %v2419 = vadd.f32 %v2355, 0.2548296
  %v2420 = vadd.f32 %v2356, 0.2548296
  %v2421 = vadd.f32 %v2357, 0.2548296
  %v2422 = vadd.f32 %v2358, 0.2548296
  %v2423 = vadd.f32 %v2359, 0.2548296
  %v2424 = vadd.f32 %v2360, 0.2548296
  %v2425 = vadd.f32 %v2361, 0.2548296
  %v2426 = vadd.f32 %v2362, 0.2548296
  %v2427 = vadd.f32 %v2363, 0.2548296
  %v2428 = vadd.f32 %v2364, 0.2548296
  %v2429 = vadd.f32 %v2365, 0.2548296
  %v2430 = vadd.f32 %v2366, 0.2548296
  %v2431 = vadd.f32 %v2367, 0.2548296
  %v2432 = vadd.f32 %v2368, 0.2548296
  %v2433 = vadd.f32 %v2369, 0.2548296
  %v2434 = vadd.f32 %v2370, 0.2548296
  %v2435 = vadd.f32 %v2371, 0.2548296
  %v2436 = vadd.f32 %v2372, 0.2548296
  %v2437 = vadd.f32 %v2373, 0.2548296
  %v2438 = vadd.f32 %v2374, 0.2548296
  %v2439 = vadd.f32 %v2375, 0.2548296
  %v2440 = vadd.f32 %v2376, 0.2548296
  %v2441 = vadd.f32 %v2377, 0.2548296
  %v2442 = vadd.f32 %v2378, 0.2548296
  %v2443 = vadd.f32 %v2379, 0.2548296
  %v2444 = vadd.f32 %v2380, 0.2548296
  %v2445 = vadd.f32 %v2381, 0.2548296
  %v2446 = vadd.f32 %v2382, 0.2548296
  %v2447 = vadd.f32 %v2383, 0.2548296
  %v2448 = vadd.f32 %v2384, 0.2548296
  %v2449 = vadd.f32 %v2385, 0.2548296
  %v2450 = vadd.f32 %v2386, 0.2548296
  %v2451 = vadd.f32 %v2387, 0.2548296
  %v2452 = vadd.f32 %v2388, 0.2548296
  %v2453 = vadd.f32 %v2389, 0.2548296
  %v2454 = vadd.f32 %v2390, 0.2548296
  %v2455 = vadd.f32 %v2391, 0.2548296
  %v2456 = vadd.f32 %v2392, 0.2548296
  %v2457 = vadd.f32 %v2393, 0.2548296
  %v2458 = vadd.f32 %v2394, 0.2548296
  %v2459 = vadd.f32 %v2395, 0.2548296
  %v2460 = vmul.f32 %v2396, %v1002
  %v2461 = vmul.f32 %v2397, %v1017
  %v2462 = vmul.f32 %v2398, %v1032
  %v2463 = vmul.f32 %v2399, %v1047
  %v2464 = vmul.f32 %v2400, %v1062
  %v2465 = vmul.f32 %v2401, %v1077
  %v2466 = vmul.f32 %v2402, %v1092
  %v2467 = vmul.f32 %v2403, %v1107
  %v2468 = vmul.f32 %v2404, %v1122
  %v2469 = vmul.f32 %v2405, %v1137
  %v2470 = vmul.f32 %v2406, %v1152
  %v2471 = vmul.f32 %v2407, %v1167
  %v2472 = vmul.f32 %v2408, %v1182
  %v2473 = vmul.f32 %v2409, %v1197
  %v2474 = vmul.f32 %v2410, %v1212
  %v2475 = vmul.f32 %v2411, %v1227
  %v2476 = vmul.f32 %v2412, %v1242
  %v2477 = vmul.f32 %v2413, %v1257
  %v2478 = vmul.f32 %v2414, %v1272
  %v2479 = vmul.f32 %v2415, %v1287
  %v2480 = vmul.f32 %v2416, %v1302
  %v2481 = vmul.f32 %v2417, %v1317
  %v2482 = vmul.f32 %v2418, %v1332
  %v2483 = vmul.f32 %v2419, %v1347
  %v2484 = vmul.f32 %v2420, %v1362
  %v2485 = vmul.f32 %v2421, %v1377
  %v2486 = vmul.f32 %v2422, %v1392
  %v2487 = vmul.f32 %v2423, %v1407
  %v2488 = vmul.f32 %v2424, %v1422
  %v2489 = vmul.f32 %v2425, %v1437
  %v2490 = vmul.f32 %v2426, %v1452
  %v2491 = vmul.f32 %v2427, %v1467
  %v2492 = vmul.f32 %v2428, %v1482
  %v2493 = vmul.f32 %v2429, %v1497
  %v2494 = vmul.f32 %v2430, %v1512
  %v2495 = vmul.f32 %v2431, %v1527
  %v2496 = vmul.f32 %v2432, %v1542
  %v2497 = vmul.f32 %v2433, %v1557
  %v2498 = vmul.f32 %v2434, %v1572
  %v2499 = vmul.f32 %v2435, %v1587
  %v2500 = vmul.f32 %v2436, %v1602
  %v2501 = vmul.f32 %v2437, %v1617
  %v2502 = vmul.f32 %v2438, %v1632
  %v2503 = vmul.f32 %v2439, %v1647
  %v2504 = vmul.f32 %v2440, %v1662
  %v2505 = vmul.f32 %v2441, %v1677
  %v2506 = vmul.f32 %v2442, %v1692
  %v2507 = vmul.f32 %v2443, %v1707
  %v2508 = vmul.f32 %v2444, %v1722
  %v2509 = vmul.f32 %v2445, %v1737
  %v2510 = vmul.f32 %v2446, %v1752
  %v2511 = vmul.f32 %v2447, %v1767
  %v2512 = vmul.f32 %v2448, %v1782
  %v2513 = vmul.f32 %v2449, %v1797
  %v2514 = vmul.f32 %v2450, %v1812
  %v2515 = vmul.f32 %v2451, %v1827
  %v2516 = vmul.f32 %v2452, %v1842
  %v2517 = vmul.f32 %v2453, %v1857
  %v2518 = vmul.f32 %v2454, %v1872
  %v2519 = vmul.f32 %v2455, %v1887
  %v2520 = vmul.f32 %v2456, %v1902
  %v2521 = vmul.f32 %v2457, %v1917
  %v2522 = vmul.f32 %v2458, %v1932
  %v2523 = vmul.f32 %v2459, %v1947
  %v2524 = vsub.f32 0.0, %v796
  %v2525 = vsub.f32 0.0, %v797
  %v2526 = vsub.f32 0.0, %v798
  %v2527 = vsub.f32 0.0, %v799
  %v2528 = vsub.f32 0.0, %v800
  %v2529 = vsub.f32 0.0, %v801
  %v2530 = vsub.f32 0.0, %v802
  %v2531 = vsub.f32 0.0, %v803
  %v2532 = vsub.f32 0.0, %v804
  %v2533 = vsub.f32 0.0, %v805
  %v2534 = vsub.f32 0.0, %v806
  %v2535 = vsub.f32 0.0, %v807
  %v2536 = vsub.f32 0.0, %v808
  %v2537 = vsub.f32 0.0, %v809
  %v2538 = vsub.f32 0.0, %v810
  %v2539 = vsub.f32 0.0, %v811
  %v2540 = vsub.f32 0.0, %v812
  %v2541 = vsub.f32 0.0, %v813
  %v2542 = vsub.f32 0.0, %v814
  %v2543 = vsub.f32 0.0, %v815
  %v2544 = vsub.f32 0.0, %v816
  %v2545 = vsub.f32 0.0, %v817
  %v2546 = vsub.f32 0.0, %v818
  %v2547 = vsub.f32 0.0, %v819
  %v2548 = vsub.f32 0.0, %v820
  %v2549 = vsub.f32 0.0, %v821
  %v2550 = vsub.f32 0.0, %v822
  %v2551 = vsub.f32 0.0, %v823
  %v2552 = vsub.f32 0.0, %v824
  %v2553 = vsub.f32 0.0, %v825
  %v2554 = vsub.f32 0.0, %v826
  %v2555 = vsub.f32 0.0, %v827
  %v2556 = vsub.f32 0.0, %v828
  %v2557 = vsub.f32 0.0, %v829
  %v2558 = vsub.f32 0.0, %v830
  %v2559 = vsub.f32 0.0, %v831
  %v2560 = vsub.f32 0.0, %v832
  %v2561 = vsub.f32 0.0, %v833
  %v2562 = vsub.f32 0.0, %v834
  %v2563 = vsub.f32 0.0, %v835
  %v2564 = vsub.f32 0.0, %v836
  %v2565 = vsub.f32 0.0, %v837
  %v2566 = vsub.f32 0.0, %v838
  %v2567 = vsub.f32 0.0, %v839
  %v2568 = vsub.f32 0.0, %v840
  %v2569 = vsub.f32 0.0, %v841
  %v2570 = vsub.f32 0.0, %v842
  %v2571 = vsub.f32 0.0, %v843
  %v2572 = vsub.f32 0.0, %v844
  %v2573 = vsub.f32 0.0, %v845
  %v2574 = vsub.f32 0.0, %v846
  %v2575 = vsub.f32 0.0, %v847
  %v2576 = vsub.f32 0.0, %v848
  %v2577 = vsub.f32 0.0, %v849
  %v2578 = vsub.f32 0.0, %v850
  %v2579 = vsub.f32 0.0, %v851
  %v2580 = vsub.f32 0.0, %v852
  %v2581 = vsub.f32 0.0, %v853
  %v2582 = vsub.f32 0.0, %v854
  %v2583 = vsub.f32 0.0, %v855
  %v2584 = vsub.f32 0.0, %v856
  %v2585 = vsub.f32 0.0, %v857
  %v2586 = vsub.f32 0.0, %v858
  %v2587 = vsub.f32 0.0, %v859
  %v2588 = vmul.f32 %v2524, %v796
  %v2589 = vmul.f32 %v2525, %v797
  %v2590 = vmul.f32 %v2526, %v798
  %v2591 = vmul.f32 %v2527, %v799
  %v2592 = vmul.f32 %v2528, %v800
  %v2593 = vmul.f32 %v2529, %v801
  %v2594 = vmul.f32 %v2530, %v802
  %v2595 = vmul.f32 %v2531, %v803
  %v2596 = vmul.f32 %v2532, %v804
  %v2597 = vmul.f32 %v2533, %v805
  %v2598 = vmul.f32 %v2534, %v806
  %v2599 = vmul.f32 %v2535, %v807
  %v2600 = vmul.f32 %v2536, %v808
  %v2601 = vmul.f32 %v2537, %v809
  %v2602 = vmul.f32 %v2538, %v810
  %v2603 = vmul.f32 %v2539, %v811
  %v2604 = vmul.f32 %v2540, %v812
  %v2605 = vmul.f32 %v2541, %v813
  %v2606 = vmul.f32 %v2542, %v814
  %v2607 = vmul.f32 %v2543, %v815
  %v2608 = vmul.f32 %v2544, %v816
  %v2609 = vmul.f32 %v2545, %v817
  %v2610 = vmul.f32 %v2546, %v818
  %v2611 = vmul.f32 %v2547, %v819
  %v2612 = vmul.f32 %v2548, %v820
  %v2613 = vmul.f32 %v2549, %v821
  %v2614 = vmul.f32 %v2550, %v822
  %v2615 = vmul.f32 %v2551, %v823
  %v2616 = vmul.f32 %v2552, %v824
  %v2617 = vmul.f32 %v2553, %v825
  %v2618 = vmul.f32 %v2554, %v826
  %v2619 = vmul.f32 %v2555, %v827
  %v2620 = vmul.f32 %v2556, %v828
  %v2621 = vmul.f32 %v2557, %v829
  %v2622 = vmul.f32 %v2558, %v830
  %v2623 = vmul.f32 %v2559, %v831
  %v2624 = vmul.f32 %v2560, %v832
  %v2625 = vmul.f32 %v2561, %v833
  %v2626 = vmul.f32 %v2562, %v834
  %v2627 = vmul.f32 %v2563, %v835
  %v2628 = vmul.f32 %v2564, %v836
  %v2629 = vmul.f32 %v2565, %v837
  %v2630 = vmul.f32 %v2566, %v838
  %v2631 = vmul.f32 %v2567, %v839
  %v2632 = vmul.f32 %v2568, %v840
  %v2633 = vmul.f32 %v2569, %v841
  %v2634 = vmul.f32 %v2570, %v842
  %v2635 = vmul.f32 %v2571, %v843
  %v2636 = vmul.f32 %v2572, %v844
  %v2637 = vmul.f32 %v2573, %v845
  %v2638 = vmul.f32 %v2574, %v846
  %v2639 = vmul.f32 %v2575, %v847
  %v2640 = vmul.f32 %v2576, %v848
  %v2641 = vmul.f32 %v2577, %v849
  %v2642 = vmul.f32 %v2578, %v850
  %v2643 = vmul.f32 %v2579, %v851
  %v2644 = vmul.f32 %v2580, %v852
  %v2645 = vmul.f32 %v2581, %v853
  %v2646 = vmul.f32 %v2582, %v854
  %v2647 = vmul.f32 %v2583, %v855
  %v2648 = vmul.f32 %v2584, %v856
  %v2649 = vmul.f32 %v2585, %v857
  %v2650 = vmul.f32 %v2586, %v858
  %v2651 = vmul.f32 %v2587, %v859
  %v2652 = vmul.f32 %v2588, 1.442695
  %v2653 = vpow.pop %v2652
  %v2654 = vmul.f32 %v2589, 1.442695
  %v2655 = vpow.pop %v2654
  %v2656 = vmul.f32 %v2590, 1.442695
  %v2657 = vpow.pop %v2656
  %v2658 = vmul.f32 %v2591, 1.442695
  %v2659 = vpow.pop %v2658
  %v2660 = vmul.f32 %v2592, 1.442695
  %v2661 = vpow.pop %v2660
  %v2662 = vmul.f32 %v2593, 1.442695
  %v2663 = vpow.pop %v2662
  %v2664 = vmul.f32 %v2594, 1.442695
  %v2665 = vpow.pop %v2664
  %v2666 = vmul.f32 %v2595, 1.442695
  %v2667 = vpow.pop %v2666
  %v2668 = vmul.f32 %v2596, 1.442695
  %v2669 = vpow.pop %v2668
  %v2670 = vmul.f32 %v2597, 1.442695
  %v2671 = vpow.pop %v2670
  %v2672 = vmul.f32 %v2598, 1.442695
  %v2673 = vpow.pop %v2672
  %v2674 = vmul.f32 %v2599, 1.442695
  %v2675 = vpow.pop %v2674
  %v2676 = vmul.f32 %v2600, 1.442695
  %v2677 = vpow.pop %v2676
  %v2678 = vmul.f32 %v2601, 1.442695
  %v2679 = vpow.pop %v2678
  %v2680 = vmul.f32 %v2602, 1.442695
  %v2681 = vpow.pop %v2680
  %v2682 = vmul.f32 %v2603, 1.442695
  %v2683 = vpow.pop %v2682
  %v2684 = vmul.f32 %v2604, 1.442695
  %v2685 = vpow.pop %v2684
  %v2686 = vmul.f32 %v2605, 1.442695
  %v2687 = vpow.pop %v2686
  %v2688 = vmul.f32 %v2606, 1.442695
  %v2689 = vpow.pop %v2688
  %v2690 = vmul.f32 %v2607, 1.442695
  %v2691 = vpow.pop %v2690
  %v2692 = vmul.f32 %v2608, 1.442695
  %v2693 = vpow.pop %v2692
  %v2694 = vmul.f32 %v2609, 1.442695
  %v2695 = vpow.pop %v2694
  %v2696 = vmul.f32 %v2610, 1.442695
  %v2697 = vpow.pop %v2696
  %v2698 = vmul.f32 %v2611, 1.442695
  %v2699 = vpow.pop %v2698
  %v2700 = vmul.f32 %v2612, 1.442695
  %v2701 = vpow.pop %v2700
  %v2702 = vmul.f32 %v2613, 1.442695
  %v2703 = vpow.pop %v2702
  %v2704 = vmul.f32 %v2614, 1.442695
  %v2705 = vpow.pop %v2704
  %v2706 = vmul.f32 %v2615, 1.442695
  %v2707 = vpow.pop %v2706
  %v2708 = vmul.f32 %v2616, 1.442695
  %v2709 = vpow.pop %v2708
  %v2710 = vmul.f32 %v2617, 1.442695
  %v2711 = vpow.pop %v2710
  %v2712 = vmul.f32 %v2618, 1.442695
  %v2713 = vpow.pop %v2712
  %v2714 = vmul.f32 %v2619, 1.442695
  %v2715 = vpow.pop %v2714
  %v2716 = vmul.f32 %v2620, 1.442695
  %v2717 = vpow.pop %v2716
  %v2718 = vmul.f32 %v2621, 1.442695
  %v2719 = vpow.pop %v2718
  %v2720 = vmul.f32 %v2622, 1.442695
  %v2721 = vpow.pop %v2720
  %v2722 = vmul.f32 %v2623, 1.442695
  %v2723 = vpow.pop %v2722
  %v2724 = vmul.f32 %v2624, 1.442695
  %v2725 = vpow.pop %v2724
  %v2726 = vmul.f32 %v2625, 1.442695
  %v2727 = vpow.pop %v2726
  %v2728 = vmul.f32 %v2626, 1.442695
  %v2729 = vpow.pop %v2728
  %v2730 = vmul.f32 %v2627, 1.442695
  %v2731 = vpow.pop %v2730
  %v2732 = vmul.f32 %v2628, 1.442695
  %v2733 = vpow.pop %v2732
  %v2734 = vmul.f32 %v2629, 1.442695
  %v2735 = vpow.pop %v2734
  %v2736 = vmul.f32 %v2630, 1.442695
  %v2737 = vpow.pop %v2736
  %v2738 = vmul.f32 %v2631, 1.442695
  %v2739 = vpow.pop %v2738
  %v2740 = vmul.f32 %v2632, 1.442695
  %v2741 = vpow.pop %v2740
  %v2742 = vmul.f32 %v2633, 1.442695
  %v2743 = vpow.pop %v2742
  %v2744 = vmul.f32 %v2634, 1.442695
  %v2745 = vpow.pop %v2744
  %v2746 = vmul.f32 %v2635, 1.442695
  %v2747 = vpow.pop %v2746
  %v2748 = vmul.f32 %v2636, 1.442695
  %v2749 = vpow.pop %v2748
  %v2750 = vmul.f32 %v2637, 1.442695
  %v2751 = vpow.pop %v2750
  %v2752 = vmul.f32 %v2638, 1.442695
  %v2753 = vpow.pop %v2752
  %v2754 = vmul.f32 %v2639, 1.442695
  %v2755 = vpow.pop %v2754
  %v2756 = vmul.f32 %v2640, 1.442695
  %v2757 = vpow.pop %v2756
  %v2758 = vmul.f32 %v2641, 1.442695
  %v2759 = vpow.pop %v2758
  %v2760 = vmul.f32 %v2642, 1.442695
  %v2761 = vpow.pop %v2760
  %v2762 = vmul.f32 %v2643, 1.442695
  %v2763 = vpow.pop %v2762
  %v2764 = vmul.f32 %v2644, 1.442695
  %v2765 = vpow.pop %v2764
  %v2766 = vmul.f32 %v2645, 1.442695
  %v2767 = vpow.pop %v2766
  %v2768 = vmul.f32 %v2646, 1.442695
  %v2769 = vpow.pop %v2768
  %v2770 = vmul.f32 %v2647, 1.442695
  %v2771 = vpow.pop %v2770
  %v2772 = vmul.f32 %v2648, 1.442695
  %v2773 = vpow.pop %v2772
  %v2774 = vmul.f32 %v2649, 1.442695
  %v2775 = vpow.pop %v2774
  %v2776 = vmul.f32 %v2650, 1.442695
  %v2777 = vpow.pop %v2776
  %v2778 = vmul.f32 %v2651, 1.442695
  %v2779 = vpow.pop %v2778
  %v2780 = vmul.f32 %v2460, %v2653
  %v2781 = vmul.f32 %v2461, %v2655
  %v2782 = vmul.f32 %v2462, %v2657
  %v2783 = vmul.f32 %v2463, %v2659
  %v2784 = vmul.f32 %v2464, %v2661
  %v2785 = vmul.f32 %v2465, %v2663
  %v2786 = vmul.f32 %v2466, %v2665
  %v2787 = vmul.f32 %v2467, %v2667
  %v2788 = vmul.f32 %v2468, %v2669
  %v2789 = vmul.f32 %v2469, %v2671
  %v2790 = vmul.f32 %v2470, %v2673
  %v2791 = vmul.f32 %v2471, %v2675
  %v2792 = vmul.f32 %v2472, %v2677
  %v2793 = vmul.f32 %v2473, %v2679
  %v2794 = vmul.f32 %v2474, %v2681
  %v2795 = vmul.f32 %v2475, %v2683
  %v2796 = vmul.f32 %v2476, %v2685
  %v2797 = vmul.f32 %v2477, %v2687
  %v2798 = vmul.f32 %v2478, %v2689
  %v2799 = vmul.f32 %v2479, %v2691
  %v2800 = vmul.f32 %v2480, %v2693
  %v2801 = vmul.f32 %v2481, %v2695
  %v2802 = vmul.f32 %v2482, %v2697
  %v2803 = vmul.f32 %v2483, %v2699
  %v2804 = vmul.f32 %v2484, %v2701
  %v2805 = vmul.f32 %v2485, %v2703
  %v2806 = vmul.f32 %v2486, %v2705
  %v2807 = vmul.f32 %v2487, %v2707
  %v2808 = vmul.f32 %v2488, %v2709
  %v2809 = vmul.f32 %v2489, %v2711
  %v2810 = vmul.f32 %v2490, %v2713
  %v2811 = vmul.f32 %v2491, %v2715
  %v2812 = vmul.f32 %v2492, %v2717
  %v2813 = vmul.f32 %v2493, %v2719
  %v2814 = vmul.f32 %v2494, %v2721
  %v2815 = vmul.f32 %v2495, %v2723
  %v2816 = vmul.f32 %v2496, %v2725
  %v2817 = vmul.f32 %v2497, %v2727
  %v2818 = vmul.f32 %v2498, %v2729
  %v2819 = vmul.f32 %v2499, %v2731
  %v2820 = vmul.f32 %v2500, %v2733
  %v2821 = vmul.f32 %v2501, %v2735
  %v2822 = vmul.f32 %v2502, %v2737
  %v2823 = vmul.f32 %v2503, %v2739
  %v2824 = vmul.f32 %v2504, %v2741
  %v2825 = vmul.f32 %v2505, %v2743
  %v2826 = vmul.f32 %v2506, %v2745
  %v2827 = vmul.f32 %v2507, %v2747
  %v2828 = vmul.f32 %v2508, %v2749
  %v2829 = vmul.f32 %v2509, %v2751
  %v2830 = vmul.f32 %v2510, %v2753
  %v2831 = vmul.f32 %v2511, %v2755
  %v2832 = vmul.f32 %v2512, %v2757
  %v2833 = vmul.f32 %v2513, %v2759
  %v2834 = vmul.f32 %v2514, %v2761
  %v2835 = vmul.f32 %v2515, %v2763
  %v2836 = vmul.f32 %v2516, %v2765
  %v2837 = vmul.f32 %v2517, %v2767
  %v2838 = vmul.f32 %v2518, %v2769
  %v2839 = vmul.f32 %v2519, %v2771
  %v2840 = vmul.f32 %v2520, %v2773
  %v2841 = vmul.f32 %v2521, %v2775
  %v2842 = vmul.f32 %v2522, %v2777
  %v2843 = vmul.f32 %v2523, %v2779
  %v2844 = vsub.f32 1.0, %v2780
  %v2845 = vsub.f32 1.0, %v2781
  %v2846 = vsub.f32 1.0, %v2782
  %v2847 = vsub.f32 1.0, %v2783
  %v2848 = vsub.f32 1.0, %v2784
  %v2849 = vsub.f32 1.0, %v2785
  %v2850 = vsub.f32 1.0, %v2786
  %v2851 = vsub.f32 1.0, %v2787
  %v2852 = vsub.f32 1.0, %v2788
  %v2853 = vsub.f32 1.0, %v2789
  %v2854 = vsub.f32 1.0, %v2790
  %v2855 = vsub.f32 1.0, %v2791
  %v2856 = vsub.f32 1.0, %v2792
  %v2857 = vsub.f32 1.0, %v2793
  %v2858 = vsub.f32 1.0, %v2794
  %v2859 = vsub.f32 1.0, %v2795
  %v2860 = vsub.f32 1.0, %v2796
  %v2861 = vsub.f32 1.0, %v2797
  %v2862 = vsub.f32 1.0, %v2798
  %v2863 = vsub.f32 1.0, %v2799
  %v2864 = vsub.f32 1.0, %v2800
  %v2865 = vsub.f32 1.0, %v2801
  %v2866 = vsub.f32 1.0, %v2802
  %v2867 = vsub.f32 1.0, %v2803
  %v2868 = vsub.f32 1.0, %v2804
  %v2869 = vsub.f32 1.0, %v2805
  %v2870 = vsub.f32 1.0, %v2806
  %v2871 = vsub.f32 1.0, %v2807
  %v2872 = vsub.f32 1.0, %v2808
  %v2873 = vsub.f32 1.0, %v2809
  %v2874 = vsub.f32 1.0, %v2810
  %v2875 = vsub.f32 1.0, %v2811
  %v2876 = vsub.f32 1.0, %v2812
  %v2877 = vsub.f32 1.0, %v2813
  %v2878 = vsub.f32 1.0, %v2814
  %v2879 = vsub.f32 1.0, %v2815
  %v2880 = vsub.f32 1.0, %v2816
  %v2881 = vsub.f32 1.0, %v2817
  %v2882 = vsub.f32 1.0, %v2818
  %v2883 = vsub.f32 1.0, %v2819
  %v2884 = vsub.f32 1.0, %v2820
  %v2885 = vsub.f32 1.0, %v2821
  %v2886 = vsub.f32 1.0, %v2822
  %v2887 = vsub.f32 1.0, %v2823
  %v2888 = vsub.f32 1.0, %v2824
  %v2889 = vsub.f32 1.0, %v2825
  %v2890 = vsub.f32 1.0, %v2826
  %v2891 = vsub.f32 1.0, %v2827
  %v2892 = vsub.f32 1.0, %v2828
  %v2893 = vsub.f32 1.0, %v2829
  %v2894 = vsub.f32 1.0, %v2830
  %v2895 = vsub.f32 1.0, %v2831
  %v2896 = vsub.f32 1.0, %v2832
  %v2897 = vsub.f32 1.0, %v2833
  %v2898 = vsub.f32 1.0, %v2834
  %v2899 = vsub.f32 1.0, %v2835
  %v2900 = vsub.f32 1.0, %v2836
  %v2901 = vsub.f32 1.0, %v2837
  %v2902 = vsub.f32 1.0, %v2838
  %v2903 = vsub.f32 1.0, %v2839
  %v2904 = vsub.f32 1.0, %v2840
  %v2905 = vsub.f32 1.0, %v2841
  %v2906 = vsub.f32 1.0, %v2842
  %v2907 = vsub.f32 1.0, %v2843
  %vm2908 = vcmp.lt.f32.partialorder %v732, 0.0
  %vm2909 = vcmp.lt.f32.partialorder %v733, 0.0
  %vm2910 = vcmp.lt.f32.partialorder %v734, 0.0
  %vm2911 = vcmp.lt.f32.partialorder %v735, 0.0
  %vm2912 = vcmp.lt.f32.partialorder %v736, 0.0
  %vm2913 = vcmp.lt.f32.partialorder %v737, 0.0
  %vm2914 = vcmp.lt.f32.partialorder %v738, 0.0
  %vm2915 = vcmp.lt.f32.partialorder %v739, 0.0
  %vm2916 = vcmp.lt.f32.partialorder %v740, 0.0
  %vm2917 = vcmp.lt.f32.partialorder %v741, 0.0
  %vm2918 = vcmp.lt.f32.partialorder %v742, 0.0
  %vm2919 = vcmp.lt.f32.partialorder %v743, 0.0
  %vm2920 = vcmp.lt.f32.partialorder %v744, 0.0
  %vm2921 = vcmp.lt.f32.partialorder %v745, 0.0
  %vm2922 = vcmp.lt.f32.partialorder %v746, 0.0
  %vm2923 = vcmp.lt.f32.partialorder %v747, 0.0
  %vm2924 = vcmp.lt.f32.partialorder %v748, 0.0
  %vm2925 = vcmp.lt.f32.partialorder %v749, 0.0
  %vm2926 = vcmp.lt.f32.partialorder %v750, 0.0
  %vm2927 = vcmp.lt.f32.partialorder %v751, 0.0
  %vm2928 = vcmp.lt.f32.partialorder %v752, 0.0
  %vm2929 = vcmp.lt.f32.partialorder %v753, 0.0
  %vm2930 = vcmp.lt.f32.partialorder %v754, 0.0
  %vm2931 = vcmp.lt.f32.partialorder %v755, 0.0
  %vm2932 = vcmp.lt.f32.partialorder %v756, 0.0
  %vm2933 = vcmp.lt.f32.partialorder %v757, 0.0
  %vm2934 = vcmp.lt.f32.partialorder %v758, 0.0
  %vm2935 = vcmp.lt.f32.partialorder %v759, 0.0
  %vm2936 = vcmp.lt.f32.partialorder %v760, 0.0
  %vm2937 = vcmp.lt.f32.partialorder %v761, 0.0
  %vm2938 = vcmp.lt.f32.partialorder %v762, 0.0
  %vm2939 = vcmp.lt.f32.partialorder %v763, 0.0
  %vm2940 = vcmp.lt.f32.partialorder %v764, 0.0
  %vm2941 = vcmp.lt.f32.partialorder %v765, 0.0
  %vm2942 = vcmp.lt.f32.partialorder %v766, 0.0
  %vm2943 = vcmp.lt.f32.partialorder %v767, 0.0
  %vm2944 = vcmp.lt.f32.partialorder %v768, 0.0
  %vm2945 = vcmp.lt.f32.partialorder %v769, 0.0
  %vm2946 = vcmp.lt.f32.partialorder %v770, 0.0
  %vm2947 = vcmp.lt.f32.partialorder %v771, 0.0
  %vm2948 = vcmp.lt.f32.partialorder %v772, 0.0
  %vm2949 = vcmp.lt.f32.partialorder %v773, 0.0
  %vm2950 = vcmp.lt.f32.partialorder %v774, 0.0
  %vm2951 = vcmp.lt.f32.partialorder %v775, 0.0
  %vm2952 = vcmp.lt.f32.partialorder %v776, 0.0
  %vm2953 = vcmp.lt.f32.partialorder %v777, 0.0
  %vm2954 = vcmp.lt.f32.partialorder %v778, 0.0
  %vm2955 = vcmp.lt.f32.partialorder %v779, 0.0
  %vm2956 = vcmp.lt.f32.partialorder %v780, 0.0
  %vm2957 = vcmp.lt.f32.partialorder %v781, 0.0
  %vm2958 = vcmp.lt.f32.partialorder %v782, 0.0
  %vm2959 = vcmp.lt.f32.partialorder %v783, 0.0
  %vm2960 = vcmp.lt.f32.partialorder %v784, 0.0
  %vm2961 = vcmp.lt.f32.partialorder %v785, 0.0
  %vm2962 = vcmp.lt.f32.partialorder %v786, 0.0
  %vm2963 = vcmp.lt.f32.partialorder %v787, 0.0
  %vm2964 = vcmp.lt.f32.partialorder %v788, 0.0
  %vm2965 = vcmp.lt.f32.partialorder %v789, 0.0
  %vm2966 = vcmp.lt.f32.partialorder %v790, 0.0
  %vm2967 = vcmp.lt.f32.partialorder %v791, 0.0
  %vm2968 = vcmp.lt.f32.partialorder %v792, 0.0
  %vm2969 = vcmp.lt.f32.partialorder %v793, 0.0
  %vm2970 = vcmp.lt.f32.partialorder %v794, 0.0
  %vm2971 = vcmp.lt.f32.partialorder %v795, 0.0
  %v2972 = vsub.f32 0.0, %v2844
  %v2973 = vsub.f32 0.0, %v2845
  %v2974 = vsub.f32 0.0, %v2846
  %v2975 = vsub.f32 0.0, %v2847
  %v2976 = vsub.f32 0.0, %v2848
  %v2977 = vsub.f32 0.0, %v2849
  %v2978 = vsub.f32 0.0, %v2850
  %v2979 = vsub.f32 0.0, %v2851
  %v2980 = vsub.f32 0.0, %v2852
  %v2981 = vsub.f32 0.0, %v2853
  %v2982 = vsub.f32 0.0, %v2854
  %v2983 = vsub.f32 0.0, %v2855
  %v2984 = vsub.f32 0.0, %v2856
  %v2985 = vsub.f32 0.0, %v2857
  %v2986 = vsub.f32 0.0, %v2858
  %v2987 = vsub.f32 0.0, %v2859
  %v2988 = vsub.f32 0.0, %v2860
  %v2989 = vsub.f32 0.0, %v2861
  %v2990 = vsub.f32 0.0, %v2862
  %v2991 = vsub.f32 0.0, %v2863
  %v2992 = vsub.f32 0.0, %v2864
  %v2993 = vsub.f32 0.0, %v2865
  %v2994 = vsub.f32 0.0, %v2866
  %v2995 = vsub.f32 0.0, %v2867
  %v2996 = vsub.f32 0.0, %v2868
  %v2997 = vsub.f32 0.0, %v2869
  %v2998 = vsub.f32 0.0, %v2870
  %v2999 = vsub.f32 0.0, %v2871
  %v3000 = vsub.f32 0.0, %v2872
  %v3001 = vsub.f32 0.0, %v2873
  %v3002 = vsub.f32 0.0, %v2874
  %v3003 = vsub.f32 0.0, %v2875
  %v3004 = vsub.f32 0.0, %v2876
  %v3005 = vsub.f32 0.0, %v2877
  %v3006 = vsub.f32 0.0, %v2878
  %v3007 = vsub.f32 0.0, %v2879
  %v3008 = vsub.f32 0.0, %v2880
  %v3009 = vsub.f32 0.0, %v2881
  %v3010 = vsub.f32 0.0, %v2882
  %v3011 = vsub.f32 0.0, %v2883
  %v3012 = vsub.f32 0.0, %v2884
  %v3013 = vsub.f32 0.0, %v2885
  %v3014 = vsub.f32 0.0, %v2886
  %v3015 = vsub.f32 0.0, %v2887
  %v3016 = vsub.f32 0.0, %v2888
  %v3017 = vsub.f32 0.0, %v2889
  %v3018 = vsub.f32 0.0, %v2890
  %v3019 = vsub.f32 0.0, %v2891
  %v3020 = vsub.f32 0.0, %v2892
  %v3021 = vsub.f32 0.0, %v2893
  %v3022 = vsub.f32 0.0, %v2894
  %v3023 = vsub.f32 0.0, %v2895
  %v3024 = vsub.f32 0.0, %v2896
  %v3025 = vsub.f32 0.0, %v2897
  %v3026 = vsub.f32 0.0, %v2898
  %v3027 = vsub.f32 0.0, %v2899
  %v3028 = vsub.f32 0.0, %v2900
  %v3029 = vsub.f32 0.0, %v2901
  %v3030 = vsub.f32 0.0, %v2902
  %v3031 = vsub.f32 0.0, %v2903
  %v3032 = vsub.f32 0.0, %v2904
  %v3033 = vsub.f32 0.0, %v2905
  %v3034 = vsub.f32 0.0, %v2906
  %v3035 = vsub.f32 0.0, %v2907
  %v3036 = vsel %vm2908, %v2972, %v2844
  %v3037 = vsel %vm2909, %v2973, %v2845
  %v3038 = vsel %vm2910, %v2974, %v2846
  %v3039 = vsel %vm2911, %v2975, %v2847
  %v3040 = vsel %vm2912, %v2976, %v2848
  %v3041 = vsel %vm2913, %v2977, %v2849
  %v3042 = vsel %vm2914, %v2978, %v2850
  %v3043 = vsel %vm2915, %v2979, %v2851
  %v3044 = vsel %vm2916, %v2980, %v2852
  %v3045 = vsel %vm2917, %v2981, %v2853
  %v3046 = vsel %vm2918, %v2982, %v2854
  %v3047 = vsel %vm2919, %v2983, %v2855
  %v3048 = vsel %vm2920, %v2984, %v2856
  %v3049 = vsel %vm2921, %v2985, %v2857
  %v3050 = vsel %vm2922, %v2986, %v2858
  %v3051 = vsel %vm2923, %v2987, %v2859
  %v3052 = vsel %vm2924, %v2988, %v2860
  %v3053 = vsel %vm2925, %v2989, %v2861
  %v3054 = vsel %vm2926, %v2990, %v2862
  %v3055 = vsel %vm2927, %v2991, %v2863
  %v3056 = vsel %vm2928, %v2992, %v2864
  %v3057 = vsel %vm2929, %v2993, %v2865
  %v3058 = vsel %vm2930, %v2994, %v2866
  %v3059 = vsel %vm2931, %v2995, %v2867
  %v3060 = vsel %vm2932, %v2996, %v2868
  %v3061 = vsel %vm2933, %v2997, %v2869
  %v3062 = vsel %vm2934, %v2998, %v2870
  %v3063 = vsel %vm2935, %v2999, %v2871
  %v3064 = vsel %vm2936, %v3000, %v2872
  %v3065 = vsel %vm2937, %v3001, %v2873
  %v3066 = vsel %vm2938, %v3002, %v2874
  %v3067 = vsel %vm2939, %v3003, %v2875
  %v3068 = vsel %vm2940, %v3004, %v2876
  %v3069 = vsel %vm2941, %v3005, %v2877
  %v3070 = vsel %vm2942, %v3006, %v2878
  %v3071 = vsel %vm2943, %v3007, %v2879
  %v3072 = vsel %vm2944, %v3008, %v2880
  %v3073 = vsel %vm2945, %v3009, %v2881
  %v3074 = vsel %vm2946, %v3010, %v2882
  %v3075 = vsel %vm2947, %v3011, %v2883
  %v3076 = vsel %vm2948, %v3012, %v2884
  %v3077 = vsel %vm2949, %v3013, %v2885
  %v3078 = vsel %vm2950, %v3014, %v2886
  %v3079 = vsel %vm2951, %v3015, %v2887
  %v3080 = vsel %vm2952, %v3016, %v2888
  %v3081 = vsel %vm2953, %v3017, %v2889
  %v3082 = vsel %vm2954, %v3018, %v2890
  %v3083 = vsel %vm2955, %v3019, %v2891
  %v3084 = vsel %vm2956, %v3020, %v2892
  %v3085 = vsel %vm2957, %v3021, %v2893
  %v3086 = vsel %vm2958, %v3022, %v2894
  %v3087 = vsel %vm2959, %v3023, %v2895
  %v3088 = vsel %vm2960, %v3024, %v2896
  %v3089 = vsel %vm2961, %v3025, %v2897
  %v3090 = vsel %vm2962, %v3026, %v2898
  %v3091 = vsel %vm2963, %v3027, %v2899
  %v3092 = vsel %vm2964, %v3028, %v2900
  %v3093 = vsel %vm2965, %v3029, %v2901
  %v3094 = vsel %vm2966, %v3030, %v2902
  %v3095 = vsel %vm2967, %v3031, %v2903
  %v3096 = vsel %vm2968, %v3032, %v2904
  %v3097 = vsel %vm2969, %v3033, %v2905
  %v3098 = vsel %vm2970, %v3034, %v2906
  %v3099 = vsel %vm2971, %v3035, %v2907
  %v3100 = vadd.f32 %v3036, 1.0
  %v3101 = vadd.f32 %v3037, 1.0
  %v3102 = vadd.f32 %v3038, 1.0
  %v3103 = vadd.f32 %v3039, 1.0
  %v3104 = vadd.f32 %v3040, 1.0
  %v3105 = vadd.f32 %v3041, 1.0
  %v3106 = vadd.f32 %v3042, 1.0
  %v3107 = vadd.f32 %v3043, 1.0
  %v3108 = vadd.f32 %v3044, 1.0
  %v3109 = vadd.f32 %v3045, 1.0
  %v3110 = vadd.f32 %v3046, 1.0
  %v3111 = vadd.f32 %v3047, 1.0
  %v3112 = vadd.f32 %v3048, 1.0
  %v3113 = vadd.f32 %v3049, 1.0
  %v3114 = vadd.f32 %v3050, 1.0
  %v3115 = vadd.f32 %v3051, 1.0
  %v3116 = vadd.f32 %v3052, 1.0
  %v3117 = vadd.f32 %v3053, 1.0
  %v3118 = vadd.f32 %v3054, 1.0
  %v3119 = vadd.f32 %v3055, 1.0
  %v3120 = vadd.f32 %v3056, 1.0
  %v3121 = vadd.f32 %v3057, 1.0
  %v3122 = vadd.f32 %v3058, 1.0
  %v3123 = vadd.f32 %v3059, 1.0
  %v3124 = vadd.f32 %v3060, 1.0
  %v3125 = vadd.f32 %v3061, 1.0
  %v3126 = vadd.f32 %v3062, 1.0
  %v3127 = vadd.f32 %v3063, 1.0
  %v3128 = vadd.f32 %v3064, 1.0
  %v3129 = vadd.f32 %v3065, 1.0
  %v3130 = vadd.f32 %v3066, 1.0
  %v3131 = vadd.f32 %v3067, 1.0
  %v3132 = vadd.f32 %v3068, 1.0
  %v3133 = vadd.f32 %v3069, 1.0
  %v3134 = vadd.f32 %v3070, 1.0
  %v3135 = vadd.f32 %v3071, 1.0
  %v3136 = vadd.f32 %v3072, 1.0
  %v3137 = vadd.f32 %v3073, 1.0
  %v3138 = vadd.f32 %v3074, 1.0
  %v3139 = vadd.f32 %v3075, 1.0
  %v3140 = vadd.f32 %v3076, 1.0
  %v3141 = vadd.f32 %v3077, 1.0
  %v3142 = vadd.f32 %v3078, 1.0
  %v3143 = vadd.f32 %v3079, 1.0
  %v3144 = vadd.f32 %v3080, 1.0
  %v3145 = vadd.f32 %v3081, 1.0
  %v3146 = vadd.f32 %v3082, 1.0
  %v3147 = vadd.f32 %v3083, 1.0
  %v3148 = vadd.f32 %v3084, 1.0
  %v3149 = vadd.f32 %v3085, 1.0
  %v3150 = vadd.f32 %v3086, 1.0
  %v3151 = vadd.f32 %v3087, 1.0
  %v3152 = vadd.f32 %v3088, 1.0
  %v3153 = vadd.f32 %v3089, 1.0
  %v3154 = vadd.f32 %v3090, 1.0
  %v3155 = vadd.f32 %v3091, 1.0
  %v3156 = vadd.f32 %v3092, 1.0
  %v3157 = vadd.f32 %v3093, 1.0
  %v3158 = vadd.f32 %v3094, 1.0
  %v3159 = vadd.f32 %v3095, 1.0
  %v3160 = vadd.f32 %v3096, 1.0
  %v3161 = vadd.f32 %v3097, 1.0
  %v3162 = vadd.f32 %v3098, 1.0
  %v3163 = vadd.f32 %v3099, 1.0
  %v3164 = vmul.f32 %v668, %v3100
  %v3165 = vmul.f32 %v669, %v3101
  %v3166 = vmul.f32 %v670, %v3102
  %v3167 = vmul.f32 %v671, %v3103
  %v3168 = vmul.f32 %v672, %v3104
  %v3169 = vmul.f32 %v673, %v3105
  %v3170 = vmul.f32 %v674, %v3106
  %v3171 = vmul.f32 %v675, %v3107
  %v3172 = vmul.f32 %v676, %v3108
  %v3173 = vmul.f32 %v677, %v3109
  %v3174 = vmul.f32 %v678, %v3110
  %v3175 = vmul.f32 %v679, %v3111
  %v3176 = vmul.f32 %v680, %v3112
  %v3177 = vmul.f32 %v681, %v3113
  %v3178 = vmul.f32 %v682, %v3114
  %v3179 = vmul.f32 %v683, %v3115
  %v3180 = vmul.f32 %v684, %v3116
  %v3181 = vmul.f32 %v685, %v3117
  %v3182 = vmul.f32 %v686, %v3118
  %v3183 = vmul.f32 %v687, %v3119
  %v3184 = vmul.f32 %v688, %v3120
  %v3185 = vmul.f32 %v689, %v3121
  %v3186 = vmul.f32 %v690, %v3122
  %v3187 = vmul.f32 %v691, %v3123
  %v3188 = vmul.f32 %v692, %v3124
  %v3189 = vmul.f32 %v693, %v3125
  %v3190 = vmul.f32 %v694, %v3126
  %v3191 = vmul.f32 %v695, %v3127
  %v3192 = vmul.f32 %v696, %v3128
  %v3193 = vmul.f32 %v697, %v3129
  %v3194 = vmul.f32 %v698, %v3130
  %v3195 = vmul.f32 %v699, %v3131
  %v3196 = vmul.f32 %v700, %v3132
  %v3197 = vmul.f32 %v701, %v3133
  %v3198 = vmul.f32 %v702, %v3134
  %v3199 = vmul.f32 %v703, %v3135
  %v3200 = vmul.f32 %v704, %v3136
  %v3201 = vmul.f32 %v705, %v3137
  %v3202 = vmul.f32 %v706, %v3138
  %v3203 = vmul.f32 %v707, %v3139
  %v3204 = vmul.f32 %v708, %v3140
  %v3205 = vmul.f32 %v709, %v3141
  %v3206 = vmul.f32 %v710, %v3142
  %v3207 = vmul.f32 %v711, %v3143
  %v3208 = vmul.f32 %v712, %v3144
  %v3209 = vmul.f32 %v713, %v3145
  %v3210 = vmul.f32 %v714, %v3146
  %v3211 = vmul.f32 %v715, %v3147
  %v3212 = vmul.f32 %v716, %v3148
  %v3213 = vmul.f32 %v717, %v3149
  %v3214 = vmul.f32 %v718, %v3150
  %v3215 = vmul.f32 %v719, %v3151
  %v3216 = vmul.f32 %v720, %v3152
  %v3217 = vmul.f32 %v721, %v3153
  %v3218 = vmul.f32 %v722, %v3154
  %v3219 = vmul.f32 %v723, %v3155
  %v3220 = vmul.f32 %v724, %v3156
  %v3221 = vmul.f32 %v725, %v3157
  %v3222 = vmul.f32 %v726, %v3158
  %v3223 = vmul.f32 %v727, %v3159
  %v3224 = vmul.f32 %v728, %v3160
  %v3225 = vmul.f32 %v729, %v3161
  %v3226 = vmul.f32 %v730, %v3162
  %v3227 = vmul.f32 %v731, %v3163
  %v3228 = vpack.c.bf16 %v3164, %v3164
  %v3229 = vpack.c.bf16 %v3165, %v3165
  %v3230 = vpack.c.bf16 %v3166, %v3166
  %v3231 = vpack.c.bf16 %v3167, %v3167
  %v3232 = vpack.c.bf16 %v3168, %v3168
  %v3233 = vpack.c.bf16 %v3169, %v3169
  %v3234 = vpack.c.bf16 %v3170, %v3170
  %v3235 = vpack.c.bf16 %v3171, %v3171
  %v3236 = vpack.c.bf16 %v3172, %v3172
  %v3237 = vpack.c.bf16 %v3173, %v3173
  %v3238 = vpack.c.bf16 %v3174, %v3174
  %v3239 = vpack.c.bf16 %v3175, %v3175
  %v3240 = vpack.c.bf16 %v3176, %v3176
  %v3241 = vpack.c.bf16 %v3177, %v3177
  %v3242 = vpack.c.bf16 %v3178, %v3178
  %v3243 = vpack.c.bf16 %v3179, %v3179
  %v3244 = vpack.c.bf16 %v3180, %v3180
  %v3245 = vpack.c.bf16 %v3181, %v3181
  %v3246 = vpack.c.bf16 %v3182, %v3182
  %v3247 = vpack.c.bf16 %v3183, %v3183
  %v3248 = vpack.c.bf16 %v3184, %v3184
  %v3249 = vpack.c.bf16 %v3185, %v3185
  %v3250 = vpack.c.bf16 %v3186, %v3186
  %v3251 = vpack.c.bf16 %v3187, %v3187
  %v3252 = vpack.c.bf16 %v3188, %v3188
  %v3253 = vpack.c.bf16 %v3189, %v3189
  %v3254 = vpack.c.bf16 %v3190, %v3190
  %v3255 = vpack.c.bf16 %v3191, %v3191
  %v3256 = vpack.c.bf16 %v3192, %v3192
  %v3257 = vpack.c.bf16 %v3193, %v3193
  %v3258 = vpack.c.bf16 %v3194, %v3194
  %v3259 = vpack.c.bf16 %v3195, %v3195
  %v3260 = vpack.c.bf16 %v3196, %v3196
  %v3261 = vpack.c.bf16 %v3197, %v3197
  %v3262 = vpack.c.bf16 %v3198, %v3198
  %v3263 = vpack.c.bf16 %v3199, %v3199
  %v3264 = vpack.c.bf16 %v3200, %v3200
  %v3265 = vpack.c.bf16 %v3201, %v3201
  %v3266 = vpack.c.bf16 %v3202, %v3202
  %v3267 = vpack.c.bf16 %v3203, %v3203
  %v3268 = vpack.c.bf16 %v3204, %v3204
  %v3269 = vpack.c.bf16 %v3205, %v3205
  %v3270 = vpack.c.bf16 %v3206, %v3206
  %v3271 = vpack.c.bf16 %v3207, %v3207
  %v3272 = vpack.c.bf16 %v3208, %v3208
  %v3273 = vpack.c.bf16 %v3209, %v3209
  %v3274 = vpack.c.bf16 %v3210, %v3210
  %v3275 = vpack.c.bf16 %v3211, %v3211
  %v3276 = vpack.c.bf16 %v3212, %v3212
  %v3277 = vpack.c.bf16 %v3213, %v3213
  %v3278 = vpack.c.bf16 %v3214, %v3214
  %v3279 = vpack.c.bf16 %v3215, %v3215
  %v3280 = vpack.c.bf16 %v3216, %v3216
  %v3281 = vpack.c.bf16 %v3217, %v3217
  %v3282 = vpack.c.bf16 %v3218, %v3218
  %v3283 = vpack.c.bf16 %v3219, %v3219
  %v3284 = vpack.c.bf16 %v3220, %v3220
  %v3285 = vpack.c.bf16 %v3221, %v3221
  %v3286 = vpack.c.bf16 %v3222, %v3222
  %v3287 = vpack.c.bf16 %v3223, %v3223
  %v3288 = vpack.c.bf16 %v3224, %v3224
  %v3289 = vpack.c.bf16 %v3225, %v3225
  %v3290 = vpack.c.bf16 %v3226, %v3226
  %v3291 = vpack.c.bf16 %v3227, %v3227
  %3292 = vst [vmem:[%s4] sm:$0xf] %v3228
  %3293 = vst [vmem:[%s4 + $0x4] sm:$0xf] %v3229
  %3294 = vst [vmem:[%s4 + $0x8] sm:$0xf] %v3230
  %3295 = vst [vmem:[%s4 + $0xc] sm:$0xf] %v3231
  %3296 = vst [vmem:[%s4 + $0x10] sm:$0xf] %v3232
  %3297 = vst [vmem:[%s4 + $0x14] sm:$0xf] %v3233
  %3298 = vst [vmem:[%s4 + $0x18] sm:$0xf] %v3234
  %3299 = vst [vmem:[%s4 + $0x1c] sm:$0xf] %v3235
  %3300 = vst [vmem:[%s4 + $0x20] sm:$0xf] %v3236
  %3301 = vst [vmem:[%s4 + $0x24] sm:$0xf] %v3237
  %3302 = vst [vmem:[%s4 + $0x28] sm:$0xf] %v3238
  %3303 = vst [vmem:[%s4 + $0x2c] sm:$0xf] %v3239
  %3304 = vst [vmem:[%s4 + $0x30] sm:$0xf] %v3240
  %3305 = vst [vmem:[%s4 + $0x34] sm:$0xf] %v3241
  %3306 = vst [vmem:[%s4 + $0x38] sm:$0xf] %v3242
  %3307 = vst [vmem:[%s4 + $0x3c] sm:$0xf] %v3243
  %3308 = vst [vmem:[%s4 + $0x40] sm:$0xf] %v3244
  %3309 = vst [vmem:[%s4 + $0x44] sm:$0xf] %v3245
  %3310 = vst [vmem:[%s4 + $0x48] sm:$0xf] %v3246
  %3311 = vst [vmem:[%s4 + $0x4c] sm:$0xf] %v3247
  %3312 = vst [vmem:[%s4 + $0x50] sm:$0xf] %v3248
  %3313 = vst [vmem:[%s4 + $0x54] sm:$0xf] %v3249
  %3314 = vst [vmem:[%s4 + $0x58] sm:$0xf] %v3250
  %3315 = vst [vmem:[%s4 + $0x5c] sm:$0xf] %v3251
  %3316 = vst [vmem:[%s4 + $0x60] sm:$0xf] %v3252
  %3317 = vst [vmem:[%s4 + $0x64] sm:$0xf] %v3253
  %3318 = vst [vmem:[%s4 + $0x68] sm:$0xf] %v3254
  %3319 = vst [vmem:[%s4 + $0x6c] sm:$0xf] %v3255
  %3320 = vst [vmem:[%s4 + $0x70] sm:$0xf] %v3256
  %3321 = vst [vmem:[%s4 + $0x74] sm:$0xf] %v3257
  %3322 = vst [vmem:[%s4 + $0x78] sm:$0xf] %v3258
  %3323 = vst [vmem:[%s4 + $0x7c] sm:$0xf] %v3259
  %3324 = vst [vmem:[%s4 + $0x80] sm:$0xf] %v3260
  %3325 = vst [vmem:[%s4 + $0x84] sm:$0xf] %v3261
  %3326 = vst [vmem:[%s4 + $0x88] sm:$0xf] %v3262
  %3327 = vst [vmem:[%s4 + $0x8c] sm:$0xf] %v3263
  %3328 = vst [vmem:[%s4 + $0x90] sm:$0xf] %v3264
  %3329 = vst [vmem:[%s4 + $0x94] sm:$0xf] %v3265
  %3330 = vst [vmem:[%s4 + $0x98] sm:$0xf] %v3266
  %3331 = vst [vmem:[%s4 + $0x9c] sm:$0xf] %v3267
  %3332 = vst [vmem:[%s4 + $0xa0] sm:$0xf] %v3268
  %3333 = vst [vmem:[%s4 + $0xa4] sm:$0xf] %v3269
  %3334 = vst [vmem:[%s4 + $0xa8] sm:$0xf] %v3270
  %3335 = vst [vmem:[%s4 + $0xac] sm:$0xf] %v3271
  %3336 = vst [vmem:[%s4 + $0xb0] sm:$0xf] %v3272
  %3337 = vst [vmem:[%s4 + $0xb4] sm:$0xf] %v3273
  %3338 = vst [vmem:[%s4 + $0xb8] sm:$0xf] %v3274
  %3339 = vst [vmem:[%s4 + $0xbc] sm:$0xf] %v3275
  %3340 = vst [vmem:[%s4 + $0xc0] sm:$0xf] %v3276
  %3341 = vst [vmem:[%s4 + $0xc4] sm:$0xf] %v3277
  %3342 = vst [vmem:[%s4 + $0xc8] sm:$0xf] %v3278
  %3343 = vst [vmem:[%s4 + $0xcc] sm:$0xf] %v3279
  %3344 = vst [vmem:[%s4 + $0xd0] sm:$0xf] %v3280
  %3345 = vst [vmem:[%s4 + $0xd4] sm:$0xf] %v3281
  %3346 = vst [vmem:[%s4 + $0xd8] sm:$0xf] %v3282
  %3347 = vst [vmem:[%s4 + $0xdc] sm:$0xf] %v3283
  %3348 = vst [vmem:[%s4 + $0xe0] sm:$0xf] %v3284
  %3349 = vst [vmem:[%s4 + $0xe4] sm:$0xf] %v3285
  %3350 = vst [vmem:[%s4 + $0xe8] sm:$0xf] %v3286
  %3351 = vst [vmem:[%s4 + $0xec] sm:$0xf] %v3287
  %3352 = vst [vmem:[%s4 + $0xf0] sm:$0xf] %v3288
  %3353 = vst [vmem:[%s4 + $0xf4] sm:$0xf] %v3289
  %3354 = vst [vmem:[%s4 + $0xf8] sm:$0xf] %v3290
  %3355 = vst [vmem:[%s4 + $0xfc] sm:$0xf] %v3291
  // Predicated region
  $region18: #{res_block_forward.5} parent=0 // pred_check
    _
  $region19: #{res_block_forward.5} parent=0 // pred_check_branch
    %3357 = sbr.rel (0) target = $region21
  $region20: #{res_block_forward.5} parent=0 // pred_region
    _
  $region21: #{res_block_forward.5} parent=0 // pred_fallthru
    _
  // Predicated region
  $region22: #{res_block_forward.5} parent=0 // pred_check
    _
  $region23: #{res_block_forward.5} parent=0 // pred_check_branch
    %3359 = sbr.rel (0) target = $region25
  $region24: #{res_block_forward.5} parent=0 // pred_region
    _
  $region25: #{res_block_forward.5} parent=0 // pred_fallthru
    _

// kernel: res_block_forward.6
$region0: #{res_block_forward.6}
  #allocation0 [shape = 'u32[]', space=smem, size = 0x4, offset = 0x4, fixed_abs, tag = 'smem constant byte address 0x4 - core index']
  #allocation1 [shape = 'u32[72,128]{1,0:T(1,128)}', space=vmem, size = 0x9000, scoped, tag = 'internal scratch']
  %s0 = inlined_call_operand.vmem [shape: bf16[512,72], index: 0, kind: input, shape index: {}]
  %s1 = inlined_call_operand.vmem [shape: bf16[72,128], index: 1, kind: input, shape index: {}]
  %s2 = inlined_call_operand.vmem [shape: f32[8,128], index: 2, kind: output, shape index: {0}]
  %s3 = inlined_call_operand.vmem [shape: f32[8,128], index: 3, kind: output, shape index: {1}]
  %4 = xla_tuple %s2, %s3
  %s5 = sld [smem:[#allocation0]]
  $region30: #{res_block_forward.6} parent=0
    _
  %s7 = ssub.s32 1, %s5
  %s8 = scalar_select 0, %s7, %s5
  // Predicated region
  $region2: #{res_block_forward.6} parent=0 // pred_check
    _
  $region3: #{res_block_forward.6} parent=0 // pred_check_branch
    %10 = sbr.rel (0) target = $region5
  $region4: #{res_block_forward.6} parent=0 // pred_region
    %s11 = sadd.s32 0, 0
    %s12 = smul.u32 64, %s11
    %p13 = scmp.lt.s32.totalorder %s12, 63
    %s14 = scalar_select %p13, %s12, 63
    %s15 = smul.addr %s14, 4
    %s16 = scalar_lea.vmem %s0, %s15
    %s17 = sadd.s32 0, 0
    %s18 = smul.u32 64, %s17
  $region5: #{res_block_forward.6} parent=0 // pred_fallthru
    _
  // Predicated region
  $region6: #{res_block_forward.6} parent=0 // pred_check
    _
  $region7: #{res_block_forward.6} parent=0 // pred_check_branch
    %20 = sbr.rel (0) target = $region9
  $region8: #{res_block_forward.6} parent=0 // pred_region
    _
  $region9: #{res_block_forward.6} parent=0 // pred_fallthru
    _
  %s21 = sadd.s32 0, 0
  %s22 = smul.u32 64, %s21
  %p23 = scmp.lt.s32.totalorder %s22, 63
  %s24 = scalar_select %p23, %s22, 63
  %s25 = smul.addr %s24, 4
  %s26 = scalar_lea.vmem %s0, %s25
  %s27 = sadd.s32 0, 0
  %s28 = smul.u32 64, %s27
  %p29 = scmp.lt.s32.totalorder %s28, 63
  %s30 = scalar_select %p29, %s28, 63
  %s31 = smul.addr %s30, 4
  %s32 = scalar_lea.vmem %s0, %s31
  %s33 = sadd.s32 0, 0
  %s34 = smul.u32 64, %s33
  %p36 = scmp.eq.s32.totalorder 0, 0
  // Predicated region
  $region10: #{res_block_forward.6} parent=0 // pred_check
    %p37 = pneg %p36
  $region11: #{res_block_forward.6} parent=0 // pred_check_branch
    %39 = sbr.rel (%p37) target = $region13
  $region12: #{res_block_forward.6} parent=0 // pred_region
    %40 = vst [vmem:[%s2] sm:$0xff] 0.0
    %41 = vst [vmem:[%s3] sm:$0xff] 0.0
  $region13: #{res_block_forward.6} parent=0 // pred_fallthru
    _
  %v42 = vld [vmem:[%s32] sm:$0xf]
  %v43 = vld [vmem:[%s32 + $0x4] sm:$0xf]
  %v44 = vld [vmem:[%s32 + $0x8] sm:$0xf]
  %v45 = vld [vmem:[%s32 + $0xc] sm:$0xf]
  %v46 = vld [vmem:[%s32 + $0x10] sm:$0xf]
  %v47 = vld [vmem:[%s32 + $0x14] sm:$0xf]
  %v48 = vld [vmem:[%s32 + $0x18] sm:$0xf]
  %v49 = vld [vmem:[%s32 + $0x1c] sm:$0xf]
  %v50 = vld [vmem:[%s32 + $0x20] sm:$0xf]
  %v51 = vld [vmem:[%s32 + $0x24] sm:$0xf]
  %v52 = vld [vmem:[%s32 + $0x28] sm:$0xf]
  %v53 = vld [vmem:[%s32 + $0x2c] sm:$0xf]
  %v54 = vld [vmem:[%s32 + $0x30] sm:$0xf]
  %v55 = vld [vmem:[%s32 + $0x34] sm:$0xf]
  %v56 = vld [vmem:[%s32 + $0x38] sm:$0xf]
  %v57 = vld [vmem:[%s32 + $0x3c] sm:$0xf]
  %v58 = vld [vmem:[%s32 + $0x40] sm:$0xf]
  %v59 = vld [vmem:[%s32 + $0x44] sm:$0xf]
  %v60 = vld [vmem:[%s32 + $0x48] sm:$0xf]
  %v61 = vld [vmem:[%s32 + $0x4c] sm:$0xf]
  %v62 = vld [vmem:[%s32 + $0x50] sm:$0xf]
  %v63 = vld [vmem:[%s32 + $0x54] sm:$0xf]
  %v64 = vld [vmem:[%s32 + $0x58] sm:$0xf]
  %v65 = vld [vmem:[%s32 + $0x5c] sm:$0xf]
  %v66 = vld [vmem:[%s32 + $0x60] sm:$0xf]
  %v67 = vld [vmem:[%s32 + $0x64] sm:$0xf]
  %v68 = vld [vmem:[%s32 + $0x68] sm:$0xf]
  %v69 = vld [vmem:[%s32 + $0x6c] sm:$0xf]
  %v70 = vld [vmem:[%s32 + $0x70] sm:$0xf]
  %v71 = vld [vmem:[%s32 + $0x74] sm:$0xf]
  %v72 = vld [vmem:[%s32 + $0x78] sm:$0xf]
  %v73 = vld [vmem:[%s32 + $0x7c] sm:$0xf]
  %v74 = vld [vmem:[%s32 + $0x80] sm:$0xf]
  %v75 = vld [vmem:[%s32 + $0x84] sm:$0xf]
  %v76 = vld [vmem:[%s32 + $0x88] sm:$0xf]
  %v77 = vld [vmem:[%s32 + $0x8c] sm:$0xf]
  %v78 = vld [vmem:[%s32 + $0x90] sm:$0xf]
  %v79 = vld [vmem:[%s32 + $0x94] sm:$0xf]
  %v80 = vld [vmem:[%s32 + $0x98] sm:$0xf]
  %v81 = vld [vmem:[%s32 + $0x9c] sm:$0xf]
  %v82 = vld [vmem:[%s32 + $0xa0] sm:$0xf]
  %v83 = vld [vmem:[%s32 + $0xa4] sm:$0xf]
  %v84 = vld [vmem:[%s32 + $0xa8] sm:$0xf]
  %v85 = vld [vmem:[%s32 + $0xac] sm:$0xf]
  %v86 = vld [vmem:[%s32 + $0xb0] sm:$0xf]
  %v87 = vld [vmem:[%s32 + $0xb4] sm:$0xf]
  %v88 = vld [vmem:[%s32 + $0xb8] sm:$0xf]
  %v89 = vld [vmem:[%s32 + $0xbc] sm:$0xf]
  %v90 = vld [vmem:[%s32 + $0xc0] sm:$0xf]
  %v91 = vld [vmem:[%s32 + $0xc4] sm:$0xf]
  %v92 = vld [vmem:[%s32 + $0xc8] sm:$0xf]
  %v93 = vld [vmem:[%s32 + $0xcc] sm:$0xf]
  %v94 = vld [vmem:[%s32 + $0xd0] sm:$0xf]
  %v95 = vld [vmem:[%s32 + $0xd4] sm:$0xf]
  %v96 = vld [vmem:[%s32 + $0xd8] sm:$0xf]
  %v97 = vld [vmem:[%s32 + $0xdc] sm:$0xf]
  %v98 = vld [vmem:[%s32 + $0xe0] sm:$0xf]
  %v99 = vld [vmem:[%s32 + $0xe4] sm:$0xf]
  %v100 = vld [vmem:[%s32 + $0xe8] sm:$0xf]
  %v101 = vld [vmem:[%s32 + $0xec] sm:$0xf]
  %v102 = vld [vmem:[%s32 + $0xf0] sm:$0xf]
  %v103 = vld [vmem:[%s32 + $0xf4] sm:$0xf]
  %v104 = vld [vmem:[%s32 + $0xf8] sm:$0xf]
  %v105 = vld [vmem:[%s32 + $0xfc] sm:$0xf]
  %v106 = vld [vmem:[%s1] sm:$0xf]
  %v107 = vld [vmem:[%s1 + $0x4] sm:$0xf]
  %v108 = vld [vmem:[%s1 + $0x8] sm:$0xf]
  %v109 = vld [vmem:[%s1 + $0xc] sm:$0xf]
  %v110 = vld [vmem:[%s1 + $0x10] sm:$0xf]
  %v111 = vld [vmem:[%s1 + $0x14] sm:$0xf]
  %v112 = vld [vmem:[%s1 + $0x18] sm:$0xf]
  %v113 = vld [vmem:[%s1 + $0x1c] sm:$0xf]
  %v114 = vld [vmem:[%s1 + $0x20] sm:$0xf]
  %v179 = vunpack.c.l.b16 %v42
  %v180 = vunpack.c.l.b16 %v43
  %v181 = vunpack.c.l.b16 %v44
  %v182 = vunpack.c.l.b16 %v45
  %v183 = vunpack.c.l.b16 %v46
  %v184 = vunpack.c.l.b16 %v47
  %v185 = vunpack.c.l.b16 %v48
  %v186 = vunpack.c.l.b16 %v49
  %v187 = vunpack.c.l.b16 %v50
  %v188 = vunpack.c.l.b16 %v51
  %v189 = vunpack.c.l.b16 %v52
  %v190 = vunpack.c.l.b16 %v53
  %v191 = vunpack.c.l.b16 %v54
  %v192 = vunpack.c.l.b16 %v55
  %v193 = vunpack.c.l.b16 %v56
  %v194 = vunpack.c.l.b16 %v57
  %v195 = vunpack.c.l.b16 %v58
  %v196 = vunpack.c.l.b16 %v59
  %v197 = vunpack.c.l.b16 %v60
  %v198 = vunpack.c.l.b16 %v61
  %v199 = vunpack.c.l.b16 %v62
  %v200 = vunpack.c.l.b16 %v63
  %v201 = vunpack.c.l.b16 %v64
  %v202 = vunpack.c.l.b16 %v65
  %v203 = vunpack.c.l.b16 %v66
  %v204 = vunpack.c.l.b16 %v67
  %v205 = vunpack.c.l.b16 %v68
  %v206 = vunpack.c.l.b16 %v69
  %v207 = vunpack.c.l.b16 %v70
  %v208 = vunpack.c.l.b16 %v71
  %v209 = vunpack.c.l.b16 %v72
  %v210 = vunpack.c.l.b16 %v73
  %v211 = vunpack.c.l.b16 %v74
  %v212 = vunpack.c.l.b16 %v75
  %v213 = vunpack.c.l.b16 %v76
  %v214 = vunpack.c.l.b16 %v77
  %v215 = vunpack.c.l.b16 %v78
  %v216 = vunpack.c.l.b16 %v79
  %v217 = vunpack.c.l.b16 %v80
  %v218 = vunpack.c.l.b16 %v81
  %v219 = vunpack.c.l.b16 %v82
  %v220 = vunpack.c.l.b16 %v83
  %v221 = vunpack.c.l.b16 %v84
  %v222 = vunpack.c.l.b16 %v85
  %v223 = vunpack.c.l.b16 %v86
  %v224 = vunpack.c.l.b16 %v87
  %v225 = vunpack.c.l.b16 %v88
  %v226 = vunpack.c.l.b16 %v89
  %v227 = vunpack.c.l.b16 %v90
  %v228 = vunpack.c.l.b16 %v91
  %v229 = vunpack.c.l.b16 %v92
  %v230 = vunpack.c.l.b16 %v93
  %v231 = vunpack.c.l.b16 %v94
  %v232 = vunpack.c.l.b16 %v95
  %v233 = vunpack.c.l.b16 %v96
  %v234 = vunpack.c.l.b16 %v97
  %v235 = vunpack.c.l.b16 %v98
  %v236 = vunpack.c.l.b16 %v99
  %v237 = vunpack.c.l.b16 %v100
  %v238 = vunpack.c.l.b16 %v101
  %v239 = vunpack.c.l.b16 %v102
  %v240 = vunpack.c.l.b16 %v103
  %v241 = vunpack.c.l.b16 %v104
  %v242 = vunpack.c.l.b16 %v105
  %v243 = vpack.c.b16 %v180, %v179
  %v244 = vpack.c.b16 %v182, %v181
  %v245 = vpack.c.b16 %v184, %v183
  %v246 = vpack.c.b16 %v186, %v185
  %v247 = vpack.c.b16 %v188, %v187
  %v248 = vpack.c.b16 %v190, %v189
  %v249 = vpack.c.b16 %v192, %v191
  %v250 = vpack.c.b16 %v194, %v193
  %v251 = vpack.c.b16 %v196, %v195
  %v252 = vpack.c.b16 %v198, %v197
  %v253 = vpack.c.b16 %v200, %v199
  %v254 = vpack.c.b16 %v202, %v201
  %v255 = vpack.c.b16 %v204, %v203
  %v256 = vpack.c.b16 %v206, %v205
  %v257 = vpack.c.b16 %v208, %v207
  %v258 = vpack.c.b16 %v210, %v209
  %v259 = vpack.c.b16 %v212, %v211
  %v260 = vpack.c.b16 %v214, %v213
  %v261 = vpack.c.b16 %v216, %v215
  %v262 = vpack.c.b16 %v218, %v217
  %v263 = vpack.c.b16 %v220, %v219
  %v264 = vpack.c.b16 %v222, %v221
  %v265 = vpack.c.b16 %v224, %v223
  %v266 = vpack.c.b16 %v226, %v225
  %v267 = vpack.c.b16 %v228, %v227
  %v268 = vpack.c.b16 %v230, %v229
  %v269 = vpack.c.b16 %v232, %v231
  %v270 = vpack.c.b16 %v234, %v233
  %v271 = vpack.c.b16 %v236, %v235
  %v272 = vpack.c.b16 %v238, %v237
  %v273 = vpack.c.b16 %v240, %v239
  %v274 = vpack.c.b16 %v242, %v241
  %v284 = vunpack.c.l.b16 %v106
  %v285 = vunpack.c.l.b16 %v107
  %v286 = vunpack.c.l.b16 %v108
  %v287 = vunpack.c.l.b16 %v109
  %v288 = vunpack.c.l.b16 %v110
  %v289 = vunpack.c.l.b16 %v111
  %v290 = vunpack.c.l.b16 %v112
  %v291 = vunpack.c.l.b16 %v113
  %v292 = vunpack.c.l.b16 %v114
  %v293 = vpack.c.b16 %v285, %v284
  %v294 = vpack.c.b16 %v287, %v286
  %v295 = vpack.c.b16 %v289, %v288
  %v296 = vpack.c.b16 %v291, %v290
  %v297 = vpack.c.b16 %v292, %v292
  %vm302 = vcmask 588800
  %v304 = vsel %vm302, %v243, 0
  %v307 = vsel %vm302, %v244, 0
  %v310 = vsel %vm302, %v245, 0
  %v313 = vsel %vm302, %v246, 0
  %v316 = vsel %vm302, %v247, 0
  %v319 = vsel %vm302, %v248, 0
  %v322 = vsel %vm302, %v249, 0
  %v325 = vsel %vm302, %v250, 0
  %v328 = vsel %vm302, %v251, 0
  %v331 = vsel %vm302, %v252, 0
  %v334 = vsel %vm302, %v253, 0
  %v337 = vsel %vm302, %v254, 0
  %v340 = vsel %vm302, %v255, 0
  %v343 = vsel %vm302, %v256, 0
  %v346 = vsel %vm302, %v257, 0
  %v349 = vsel %vm302, %v258, 0
  %v352 = vsel %vm302, %v259, 0
  %v355 = vsel %vm302, %v260, 0
  %v358 = vsel %vm302, %v261, 0
  %v361 = vsel %vm302, %v262, 0
  %v364 = vsel %vm302, %v263, 0
  %v367 = vsel %vm302, %v264, 0
  %v370 = vsel %vm302, %v265, 0
  %v373 = vsel %vm302, %v266, 0
  %v376 = vsel %vm302, %v267, 0
  %v379 = vsel %vm302, %v268, 0
  %v382 = vsel %vm302, %v269, 0
  %v385 = vsel %vm302, %v270, 0
  %v388 = vsel %vm302, %v271, 0
  %v391 = vsel %vm302, %v272, 0
  %v394 = vsel %vm302, %v273, 0
  %v397 = vsel %vm302, %v274, 0
  %vm399 = vcmask 1043456
  %v401 = vsel %vm399, %v297, 0
  %403 = vmatpush.bf16.msra.mxu0 0
  %404 = vmatpush.bf16.msra.mxu0 0
  %405 = vmatpush.bf16.msra.mxu0 0
  %406 = vmatpush.bf16.msra.mxu0 %v401
  %407 = vmatpush.bf16.msra.mxu0 %v296
  %408 = vmatpush.bf16.msra.mxu0 %v295
  %409 = vmatpush.bf16.msra.mxu0 %v294
  %410 = vmatpush.bf16.msra.mxu0 %v293
  %411 = vmatmul.bf16.gmra.mxu0 %v304
  %v412 = vpop.f32.mrf.mxu0
  %v413 = vadd.f32 0.0, %v412
  %v414 = vpop.f32.mrf.mxu0
  %v415 = vadd.f32 0.0, %v414
  %416 = vmatmul.bf16.gmra.mxu0 %v307
  %v417 = vpop.f32.mrf.mxu0
  %v418 = vadd.f32 0.0, %v417
  %v419 = vpop.f32.mrf.mxu0
  %v420 = vadd.f32 0.0, %v419
  %421 = vmatmul.bf16.gmra.mxu0 %v310
  %v422 = vpop.f32.mrf.mxu0
  %v423 = vadd.f32 0.0, %v422
  %v424 = vpop.f32.mrf.mxu0
  %v425 = vadd.f32 0.0, %v424
  %426 = vmatmul.bf16.gmra.mxu0 %v313
  %v427 = vpop.f32.mrf.mxu0
  %v428 = vadd.f32 0.0, %v427
  %v429 = vpop.f32.mrf.mxu0
  %v430 = vadd.f32 0.0, %v429
  %431 = vmatmul.bf16.gmra.mxu0 %v316
  %v432 = vpop.f32.mrf.mxu0
  %v433 = vadd.f32 0.0, %v432
  %v434 = vpop.f32.mrf.mxu0
  %v435 = vadd.f32 0.0, %v434
  %436 = vmatmul.bf16.gmra.mxu0 %v319
  %v437 = vpop.f32.mrf.mxu0
  %v438 = vadd.f32 0.0, %v437
  %v439 = vpop.f32.mrf.mxu0
  %v440 = vadd.f32 0.0, %v439
  %441 = vmatmul.bf16.gmra.mxu0 %v322
  %v442 = vpop.f32.mrf.mxu0
  %v443 = vadd.f32 0.0, %v442
  %v444 = vpop.f32.mrf.mxu0
  %v445 = vadd.f32 0.0, %v444
  %446 = vmatmul.bf16.gmra.mxu0 %v325
  %v447 = vpop.f32.mrf.mxu0
  %v448 = vadd.f32 0.0, %v447
  %v449 = vpop.f32.mrf.mxu0
  %v450 = vadd.f32 0.0, %v449
  %451 = vmatmul.bf16.gmra.mxu0 %v328
  %v452 = vpop.f32.mrf.mxu0
  %v453 = vadd.f32 0.0, %v452
  %v454 = vpop.f32.mrf.mxu0
  %v455 = vadd.f32 0.0, %v454
  %456 = vmatmul.bf16.gmra.mxu0 %v331
  %v457 = vpop.f32.mrf.mxu0
  %v458 = vadd.f32 0.0, %v457
  %v459 = vpop.f32.mrf.mxu0
  %v460 = vadd.f32 0.0, %v459
  %461 = vmatmul.bf16.gmra.mxu0 %v334
  %v462 = vpop.f32.mrf.mxu0
  %v463 = vadd.f32 0.0, %v462
  %v464 = vpop.f32.mrf.mxu0
  %v465 = vadd.f32 0.0, %v464
  %466 = vmatmul.bf16.gmra.mxu0 %v337
  %v467 = vpop.f32.mrf.mxu0
  %v468 = vadd.f32 0.0, %v467
  %v469 = vpop.f32.mrf.mxu0
  %v470 = vadd.f32 0.0, %v469
  %471 = vmatmul.bf16.gmra.mxu0 %v340
  %v472 = vpop.f32.mrf.mxu0
  %v473 = vadd.f32 0.0, %v472
  %v474 = vpop.f32.mrf.mxu0
  %v475 = vadd.f32 0.0, %v474
  %476 = vmatmul.bf16.gmra.mxu0 %v343
  %v477 = vpop.f32.mrf.mxu0
  %v478 = vadd.f32 0.0, %v477
  %v479 = vpop.f32.mrf.mxu0
  %v480 = vadd.f32 0.0, %v479
  %481 = vmatmul.bf16.gmra.mxu0 %v346
  %v482 = vpop.f32.mrf.mxu0
  %v483 = vadd.f32 0.0, %v482
  %v484 = vpop.f32.mrf.mxu0
  %v485 = vadd.f32 0.0, %v484
  %486 = vmatmul.bf16.gmra.mxu0 %v349
  %v487 = vpop.f32.mrf.mxu0
  %v488 = vadd.f32 0.0, %v487
  %v489 = vpop.f32.mrf.mxu0
  %v490 = vadd.f32 0.0, %v489
  %491 = vmatmul.bf16.gmra.mxu0 %v352
  %v492 = vpop.f32.mrf.mxu0
  %v493 = vadd.f32 0.0, %v492
  %v494 = vpop.f32.mrf.mxu0
  %v495 = vadd.f32 0.0, %v494
  %496 = vmatmul.bf16.gmra.mxu0 %v355
  %v497 = vpop.f32.mrf.mxu0
  %v498 = vadd.f32 0.0, %v497
  %v499 = vpop.f32.mrf.mxu0
  %v500 = vadd.f32 0.0, %v499
  %501 = vmatmul.bf16.gmra.mxu0 %v358
  %v502 = vpop.f32.mrf.mxu0
  %v503 = vadd.f32 0.0, %v502
  %v504 = vpop.f32.mrf.mxu0
  %v505 = vadd.f32 0.0, %v504
  %506 = vmatmul.bf16.gmra.mxu0 %v361
  %v507 = vpop.f32.mrf.mxu0
  %v508 = vadd.f32 0.0, %v507
  %v509 = vpop.f32.mrf.mxu0
  %v510 = vadd.f32 0.0, %v509
  %511 = vmatmul.bf16.gmra.mxu0 %v364
  %v512 = vpop.f32.mrf.mxu0
  %v513 = vadd.f32 0.0, %v512
  %v514 = vpop.f32.mrf.mxu0
  %v515 = vadd.f32 0.0, %v514
  %516 = vmatmul.bf16.gmra.mxu0 %v367
  %v517 = vpop.f32.mrf.mxu0
  %v518 = vadd.f32 0.0, %v517
  %v519 = vpop.f32.mrf.mxu0
  %v520 = vadd.f32 0.0, %v519
  %521 = vmatmul.bf16.gmra.mxu0 %v370
  %v522 = vpop.f32.mrf.mxu0
  %v523 = vadd.f32 0.0, %v522
  %v524 = vpop.f32.mrf.mxu0
  %v525 = vadd.f32 0.0, %v524
  %526 = vmatmul.bf16.gmra.mxu0 %v373
  %v527 = vpop.f32.mrf.mxu0
  %v528 = vadd.f32 0.0, %v527
  %v529 = vpop.f32.mrf.mxu0
  %v530 = vadd.f32 0.0, %v529
  %531 = vmatmul.bf16.gmra.mxu0 %v376
  %v532 = vpop.f32.mrf.mxu0
  %v533 = vadd.f32 0.0, %v532
  %v534 = vpop.f32.mrf.mxu0
  %v535 = vadd.f32 0.0, %v534
  %536 = vmatmul.bf16.gmra.mxu0 %v379
  %v537 = vpop.f32.mrf.mxu0
  %v538 = vadd.f32 0.0, %v537
  %v539 = vpop.f32.mrf.mxu0
  %v540 = vadd.f32 0.0, %v539
  %541 = vmatmul.bf16.gmra.mxu0 %v382
  %v542 = vpop.f32.mrf.mxu0
  %v543 = vadd.f32 0.0, %v542
  %v544 = vpop.f32.mrf.mxu0
  %v545 = vadd.f32 0.0, %v544
  %546 = vmatmul.bf16.gmra.mxu0 %v385
  %v547 = vpop.f32.mrf.mxu0
  %v548 = vadd.f32 0.0, %v547
  %v549 = vpop.f32.mrf.mxu0
  %v550 = vadd.f32 0.0, %v549
  %551 = vmatmul.bf16.gmra.mxu0 %v388
  %v552 = vpop.f32.mrf.mxu0
  %v553 = vadd.f32 0.0, %v552
  %v554 = vpop.f32.mrf.mxu0
  %v555 = vadd.f32 0.0, %v554
  %556 = vmatmul.bf16.gmra.mxu0 %v391
  %v557 = vpop.f32.mrf.mxu0
  %v558 = vadd.f32 0.0, %v557
  %v559 = vpop.f32.mrf.mxu0
  %v560 = vadd.f32 0.0, %v559
  %561 = vmatmul.bf16.gmra.mxu0 %v394
  %v562 = vpop.f32.mrf.mxu0
  %v563 = vadd.f32 0.0, %v562
  %v564 = vpop.f32.mrf.mxu0
  %v565 = vadd.f32 0.0, %v564
  %566 = vmatmul.bf16.gmra.mxu0 %v397
  %v567 = vpop.f32.mrf.mxu0
  %v568 = vadd.f32 0.0, %v567
  %v569 = vpop.f32.mrf.mxu0
  %v570 = vadd.f32 0.0, %v569
  %571 = vdwg.mxu0
  %v572 = vld [vmem:[%s2] sm:$0x1]
  %v573 = vadd.f32 %v413, %v415
  %v574 = vadd.f32 %v573, %v418
  %v575 = vadd.f32 %v574, %v420
  %v576 = vadd.f32 %v575, %v423
  %v577 = vadd.f32 %v576, %v425
  %v578 = vadd.f32 %v577, %v428
  %v579 = vadd.f32 %v578, %v430
  %v580 = vadd.f32 %v579, %v433
  %v581 = vadd.f32 %v580, %v435
  %v582 = vadd.f32 %v581, %v438
  %v583 = vadd.f32 %v582, %v440
  %v584 = vadd.f32 %v583, %v443
  %v585 = vadd.f32 %v584, %v445
  %v586 = vadd.f32 %v585, %v448
  %v587 = vadd.f32 %v586, %v450
  %v588 = vadd.f32 %v587, %v453
  %v589 = vadd.f32 %v588, %v455
  %v590 = vadd.f32 %v589, %v458
  %v591 = vadd.f32 %v590, %v460
  %v592 = vadd.f32 %v591, %v463
  %v593 = vadd.f32 %v592, %v465
  %v594 = vadd.f32 %v593, %v468
  %v595 = vadd.f32 %v594, %v470
  %v596 = vadd.f32 %v595, %v473
  %v597 = vadd.f32 %v596, %v475
  %v598 = vadd.f32 %v597, %v478
  %v599 = vadd.f32 %v598, %v480
  %v600 = vadd.f32 %v599, %v483
  %v601 = vadd.f32 %v600, %v485
  %v602 = vadd.f32 %v601, %v488
  %v603 = vadd.f32 %v602, %v490
  %v604 = vadd.f32 %v603, %v493
  %v605 = vadd.f32 %v604, %v495
  %v606 = vadd.f32 %v605, %v498
  %v607 = vadd.f32 %v606, %v500
  %v608 = vadd.f32 %v607, %v503
  %v609 = vadd.f32 %v608, %v505
  %v610 = vadd.f32 %v609, %v508
  %v611 = vadd.f32 %v610, %v510
  %v612 = vadd.f32 %v611, %v513
  %v613 = vadd.f32 %v612, %v515
  %v614 = vadd.f32 %v613, %v518
  %v615 = vadd.f32 %v614, %v520
  %v616 = vadd.f32 %v615, %v523
  %v617 = vadd.f32 %v616, %v525
  %v618 = vadd.f32 %v617, %v528
  %v619 = vadd.f32 %v618, %v530
  %v620 = vadd.f32 %v619, %v533
  %v621 = vadd.f32 %v620, %v535
  %v622 = vadd.f32 %v621, %v538
  %v623 = vadd.f32 %v622, %v540
  %v624 = vadd.f32 %v623, %v543
  %v625 = vadd.f32 %v624, %v545
  %v626 = vadd.f32 %v625, %v548
  %v627 = vadd.f32 %v626, %v550
  %v628 = vadd.f32 %v627, %v553
  %v629 = vadd.f32 %v628, %v555
  %v630 = vadd.f32 %v629, %v558
  %v631 = vadd.f32 %v630, %v560
  %v632 = vadd.f32 %v631, %v563
  %v633 = vadd.f32 %v632, %v565
  %v634 = vadd.f32 %v633, %v568
  %v635 = vadd.f32 %v634, %v570
  %v636 = vrot.slane %v635, 4
  %v637 = vadd.f32 %v635, %v636
  %v638 = vrot.slane %v637, 2
  %v639 = vadd.f32 %v637, %v638
  %v640 = vrot.slane %v639, 1
  %v641 = vadd.f32 %v639, %v640
  %v642 = vadd.f32 %v572, %v641
  %643 = vst [vmem:[%s2] sm:$0x1] %v642
  %v644 = vld [vmem:[%s3] sm:$0x1]
  %v645 = vmul.f32 %v413, %v413
  %v646 = vmul.f32 %v415, %v415
  %v647 = vmul.f32 %v418, %v418
  %v648 = vmul.f32 %v420, %v420
  %v649 = vmul.f32 %v423, %v423
  %v650 = vmul.f32 %v425, %v425
  %v651 = vmul.f32 %v428, %v428
  %v652 = vmul.f32 %v430, %v430
  %v653 = vmul.f32 %v433, %v433
  %v654 = vmul.f32 %v435, %v435
  %v655 = vmul.f32 %v438, %v438
  %v656 = vmul.f32 %v440, %v440
  %v657 = vmul.f32 %v443, %v443
  %v658 = vmul.f32 %v445, %v445
  %v659 = vmul.f32 %v448, %v448
  %v660 = vmul.f32 %v450, %v450
  %v661 = vmul.f32 %v453, %v453
  %v662 = vmul.f32 %v455, %v455
  %v663 = vmul.f32 %v458, %v458
  %v664 = vmul.f32 %v460, %v460
  %v665 = vmul.f32 %v463, %v463
  %v666 = vmul.f32 %v465, %v465
  %v667 = vmul.f32 %v468, %v468
  %v668 = vmul.f32 %v470, %v470
  %v669 = vmul.f32 %v473, %v473
  %v670 = vmul.f32 %v475, %v475
  %v671 = vmul.f32 %v478, %v478
  %v672 = vmul.f32 %v480, %v480
  %v673 = vmul.f32 %v483, %v483
  %v674 = vmul.f32 %v485, %v485
  %v675 = vmul.f32 %v488, %v488
  %v676 = vmul.f32 %v490, %v490
  %v677 = vmul.f32 %v493, %v493
  %v678 = vmul.f32 %v495, %v495
  %v679 = vmul.f32 %v498, %v498
  %v680 = vmul.f32 %v500, %v500
  %v681 = vmul.f32 %v503, %v503
  %v682 = vmul.f32 %v505, %v505
  %v683 = vmul.f32 %v508, %v508
  %v684 = vmul.f32 %v510, %v510
  %v685 = vmul.f32 %v513, %v513
  %v686 = vmul.f32 %v515, %v515
  %v687 = vmul.f32 %v518, %v518
  %v688 = vmul.f32 %v520, %v520
  %v689 = vmul.f32 %v523, %v523
  %v690 = vmul.f32 %v525, %v525
  %v691 = vmul.f32 %v528, %v528
  %v692 = vmul.f32 %v530, %v530
  %v693 = vmul.f32 %v533, %v533
  %v694 = vmul.f32 %v535, %v535
  %v695 = vmul.f32 %v538, %v538
  %v696 = vmul.f32 %v540, %v540
  %v697 = vmul.f32 %v543, %v543
  %v698 = vmul.f32 %v545, %v545
  %v699 = vmul.f32 %v548, %v548
  %v700 = vmul.f32 %v550, %v550
  %v701 = vmul.f32 %v553, %v553
  %v702 = vmul.f32 %v555, %v555
  %v703 = vmul.f32 %v558, %v558
  %v704 = vmul.f32 %v560, %v560
  %v705 = vmul.f32 %v563, %v563
  %v706 = vmul.f32 %v565, %v565
  %v707 = vmul.f32 %v568, %v568
  %v708 = vmul.f32 %v570, %v570
  %v709 = vadd.f32 %v645, %v646
  %v710 = vadd.f32 %v709, %v647
  %v711 = vadd.f32 %v710, %v648
  %v712 = vadd.f32 %v711, %v649
  %v713 = vadd.f32 %v712, %v650
  %v714 = vadd.f32 %v713, %v651
  %v715 = vadd.f32 %v714, %v652
  %v716 = vadd.f32 %v715, %v653
  %v717 = vadd.f32 %v716, %v654
  %v718 = vadd.f32 %v717, %v655
  %v719 = vadd.f32 %v718, %v656
  %v720 = vadd.f32 %v719, %v657
  %v721 = vadd.f32 %v720, %v658
  %v722 = vadd.f32 %v721, %v659
  %v723 = vadd.f32 %v722, %v660
  %v724 = vadd.f32 %v723, %v661
  %v725 = vadd.f32 %v724, %v662
  %v726 = vadd.f32 %v725, %v663
  %v727 = vadd.f32 %v726, %v664
  %v728 = vadd.f32 %v727, %v665
  %v729 = vadd.f32 %v728, %v666
  %v730 = vadd.f32 %v729, %v667
  %v731 = vadd.f32 %v730, %v668
  %v732 = vadd.f32 %v731, %v669
  %v733 = vadd.f32 %v732, %v670
  %v734 = vadd.f32 %v733, %v671
  %v735 = vadd.f32 %v734, %v672
  %v736 = vadd.f32 %v735, %v673
  %v737 = vadd.f32 %v736, %v674
  %v738 = vadd.f32 %v737, %v675
  %v739 = vadd.f32 %v738, %v676
  %v740 = vadd.f32 %v739, %v677
  %v741 = vadd.f32 %v740, %v678
  %v742 = vadd.f32 %v741, %v679
  %v743 = vadd.f32 %v742, %v680
  %v744 = vadd.f32 %v743, %v681
  %v745 = vadd.f32 %v744, %v682
  %v746 = vadd.f32 %v745, %v683
  %v747 = vadd.f32 %v746, %v684
  %v748 = vadd.f32 %v747, %v685
  %v749 = vadd.f32 %v748, %v686
  %v750 = vadd.f32 %v749, %v687
  %v751 = vadd.f32 %v750, %v688
  %v752 = vadd.f32 %v751, %v689
  %v753 = vadd.f32 %v752, %v690
  %v754 = vadd.f32 %v753, %v691
  %v755 = vadd.f32 %v754, %v692
  %v756 = vadd.f32 %v755, %v693
  %v757 = vadd.f32 %v756, %v694
  %v758 = vadd.f32 %v757, %v695
  %v759 = vadd.f32 %v758, %v696
  %v760 = vadd.f32 %v759, %v697
  %v761 = vadd.f32 %v760, %v698
  %v762 = vadd.f32 %v761, %v699
  %v763 = vadd.f32 %v762, %v700
  %v764 = vadd.f32 %v763, %v701
  %v765 = vadd.f32 %v764, %v702
  %v766 = vadd.f32 %v765, %v703
  %v767 = vadd.f32 %v766, %v704
  %v768 = vadd.f32 %v767, %v705
  %v769 = vadd.f32 %v768, %v706
  %v770 = vadd.f32 %v769, %v707
  %v771 = vadd.f32 %v770, %v708
  %v772 = vrot.slane %v771, 4
  %v773 = vadd.f32 %v771, %v772
  %v774 = vrot.slane %v773, 2
  %v775 = vadd.f32 %v773, %v774
  %v776 = vrot.slane %v775, 1
  %v777 = vadd.f32 %v775, %v776
  %v778 = vadd.f32 %v644, %v777
  %779 = vst [vmem:[%s3] sm:$0x1] %v778
  // Predicated region
  $region14: #{res_block_forward.6} parent=0 // pred_check
    _
  $region15: #{res_block_forward.6} parent=0 // pred_check_branch
    %781 = sbr.rel (0) target = $region17
  $region16: #{res_block_forward.6} parent=0 // pred_region
    _
  $region17: #{res_block_forward.6} parent=0 // pred_fallthru
    _
  // Predicated region
  $region18: #{res_block_forward.6} parent=0 // pred_check
    _
  $region19: #{res_block_forward.6} parent=0 // pred_check_branch
    %783 = sbr.rel (0) target = $region21
  $region20: #{res_block_forward.6} parent=0 // pred_region
    _
  $region21: #{res_block_forward.6} parent=0 // pred_fallthru
    _
  // Predicated region
  $region22: #{res_block_forward.6} parent=0 // pred_check
    _
  $region23: #{res_block_forward.6} parent=0 // pred_check_branch
    %785 = sbr.rel (0) target = $region25
  $region24: #{res_block_forward.6} parent=0 // pred_region
    _
  $region25: #{res_block_forward.6} parent=0 // pred_fallthru
    _
  // Predicated region
  $region26: #{res_block_forward.6} parent=0 // pred_check
    _
  $region27: #{res_block_forward.6} parent=0 // pred_check_branch
    %787 = sbr.rel (0) target = $region29
  $region28: #{res_block_forward.6} parent=0 // pred_region
    _
  $region29: #{res_block_forward.6} parent=0 // pred_fallthru
    _

// kernel: res_block_forward.7
$region0: #{res_block_forward.7}
  #allocation0 [shape = 'u32[]', space=smem, size = 0x4, offset = 0x4, fixed_abs, tag = 'smem constant byte address 0x4 - core index']
  #allocation1 [shape = 'u32[72,128]{1,0:T(1,128)}', space=vmem, size = 0x9000, scoped, tag = 'internal scratch']
  %s0 = inlined_call_operand.vmem [shape: bf16[512,72], index: 0, kind: input, shape index: {}]
  %s1 = inlined_call_operand.vmem [shape: bf16[72,128], index: 1, kind: input, shape index: {}]
  %s2 = inlined_call_operand.vmem [shape: f32[1,128], index: 2, kind: input, shape index: {}]
  %s3 = inlined_call_operand.vmem [shape: f32[1,128], index: 3, kind: input, shape index: {}]
  %s4 = inlined_call_operand.vmem [shape: bf16[512,4], index: 4, kind: input, shape index: {}]
  %s5 = inlined_call_operand.vmem [shape: bf16[4,128], index: 5, kind: input, shape index: {}]
  %s6 = inlined_call_operand.vmem [shape: f32[1,128], index: 6, kind: input, shape index: {}]
  %s7 = inlined_call_operand.vmem [shape: f32[1,128], index: 7, kind: input, shape index: {}]
  %s8 = inlined_call_operand.vmem [shape: f32[512,128], index: 8, kind: output, shape index: {}]
  %s9 = sld [smem:[#allocation0]]
  $region42: #{res_block_forward.7} parent=0
    _
  %s11 = ssub.s32 1, %s9
  %s12 = scalar_select 0, %s11, %s9
  // Predicated region
  $region2: #{res_block_forward.7} parent=0 // pred_check
    _
  $region3: #{res_block_forward.7} parent=0 // pred_check_branch
    %14 = sbr.rel (0) target = $region5
  $region4: #{res_block_forward.7} parent=0 // pred_region
    _
  $region5: #{res_block_forward.7} parent=0 // pred_fallthru
    _
  // Predicated region
  $region6: #{res_block_forward.7} parent=0 // pred_check
    _
  $region7: #{res_block_forward.7} parent=0 // pred_check_branch
    %16 = sbr.rel (0) target = $region9
  $region8: #{res_block_forward.7} parent=0 // pred_region
    _
  $region9: #{res_block_forward.7} parent=0 // pred_fallthru
    _
  // Predicated region
  $region10: #{res_block_forward.7} parent=0 // pred_check
    _
  $region11: #{res_block_forward.7} parent=0 // pred_check_branch
    %18 = sbr.rel (0) target = $region13
  $region12: #{res_block_forward.7} parent=0 // pred_region
    _
  $region13: #{res_block_forward.7} parent=0 // pred_fallthru
    _
  // Predicated region
  $region14: #{res_block_forward.7} parent=0 // pred_check
    _
  $region15: #{res_block_forward.7} parent=0 // pred_check_branch
    %20 = sbr.rel (0) target = $region17
  $region16: #{res_block_forward.7} parent=0 // pred_region
    _
  $region17: #{res_block_forward.7} parent=0 // pred_fallthru
    _
  // Predicated region
  $region18: #{res_block_forward.7} parent=0 // pred_check
    _
  $region19: #{res_block_forward.7} parent=0 // pred_check_branch
    %22 = sbr.rel (0) target = $region21
  $region20: #{res_block_forward.7} parent=0 // pred_region
    _
  $region21: #{res_block_forward.7} parent=0 // pred_fallthru
    _
  // Predicated region
  $region22: #{res_block_forward.7} parent=0 // pred_check
    _
  $region23: #{res_block_forward.7} parent=0 // pred_check_branch
    %24 = sbr.rel (0) target = $region25
  $region24: #{res_block_forward.7} parent=0 // pred_region
    _
  $region25: #{res_block_forward.7} parent=0 // pred_fallthru
    _
  // Predicated region
  $region26: #{res_block_forward.7} parent=0 // pred_check
    _
  $region27: #{res_block_forward.7} parent=0 // pred_check_branch
    %26 = sbr.rel (0) target = $region29
  $region28: #{res_block_forward.7} parent=0 // pred_region
    _
  $region29: #{res_block_forward.7} parent=0 // pred_fallthru
    _
  // Predicated region
  $region30: #{res_block_forward.7} parent=0 // pred_check
    _
  $region31: #{res_block_forward.7} parent=0 // pred_check_branch
    %28 = sbr.rel (0) target = $region33
  $region32: #{res_block_forward.7} parent=0 // pred_region
    _
  $region33: #{res_block_forward.7} parent=0 // pred_fallthru
    _
  %v30 = vld [vmem:[%s0] sm:$0xf]
  %v31 = vld [vmem:[%s0 + $0x4] sm:$0xf]
  %v32 = vld [vmem:[%s0 + $0x8] sm:$0xf]
  %v33 = vld [vmem:[%s0 + $0xc] sm:$0xf]
  %v34 = vld [vmem:[%s0 + $0x10] sm:$0xf]
  %v35 = vld [vmem:[%s0 + $0x14] sm:$0xf]
  %v36 = vld [vmem:[%s0 + $0x18] sm:$0xf]
  %v37 = vld [vmem:[%s0 + $0x1c] sm:$0xf]
  %v38 = vld [vmem:[%s0 + $0x20] sm:$0xf]
  %v39 = vld [vmem:[%s0 + $0x24] sm:$0xf]
  %v40 = vld [vmem:[%s0 + $0x28] sm:$0xf]
  %v41 = vld [vmem:[%s0 + $0x2c] sm:$0xf]
  %v42 = vld [vmem:[%s0 + $0x30] sm:$0xf]
  %v43 = vld [vmem:[%s0 + $0x34] sm:$0xf]
  %v44 = vld [vmem:[%s0 + $0x38] sm:$0xf]
  %v45 = vld [vmem:[%s0 + $0x3c] sm:$0xf]
  %v46 = vld [vmem:[%s0 + $0x40] sm:$0xf]
  %v47 = vld [vmem:[%s0 + $0x44] sm:$0xf]
  %v48 = vld [vmem:[%s0 + $0x48] sm:$0xf]
  %v49 = vld [vmem:[%s0 + $0x4c] sm:$0xf]
  %v50 = vld [vmem:[%s0 + $0x50] sm:$0xf]
  %v51 = vld [vmem:[%s0 + $0x54] sm:$0xf]
  %v52 = vld [vmem:[%s0 + $0x58] sm:$0xf]
  %v53 = vld [vmem:[%s0 + $0x5c] sm:$0xf]
  %v54 = vld [vmem:[%s0 + $0x60] sm:$0xf]
  %v55 = vld [vmem:[%s0 + $0x64] sm:$0xf]
  %v56 = vld [vmem:[%s0 + $0x68] sm:$0xf]
  %v57 = vld [vmem:[%s0 + $0x6c] sm:$0xf]
  %v58 = vld [vmem:[%s0 + $0x70] sm:$0xf]
  %v59 = vld [vmem:[%s0 + $0x74] sm:$0xf]
  %v60 = vld [vmem:[%s0 + $0x78] sm:$0xf]
  %v61 = vld [vmem:[%s0 + $0x7c] sm:$0xf]
  %v62 = vld [vmem:[%s0 + $0x80] sm:$0xf]
  %v63 = vld [vmem:[%s0 + $0x84] sm:$0xf]
  %v64 = vld [vmem:[%s0 + $0x88] sm:$0xf]
  %v65 = vld [vmem:[%s0 + $0x8c] sm:$0xf]
  %v66 = vld [vmem:[%s0 + $0x90] sm:$0xf]
  %v67 = vld [vmem:[%s0 + $0x94] sm:$0xf]
  %v68 = vld [vmem:[%s0 + $0x98] sm:$0xf]
  %v69 = vld [vmem:[%s0 + $0x9c] sm:$0xf]
  %v70 = vld [vmem:[%s0 + $0xa0] sm:$0xf]
  %v71 = vld [vmem:[%s0 + $0xa4] sm:$0xf]
  %v72 = vld [vmem:[%s0 + $0xa8] sm:$0xf]
  %v73 = vld [vmem:[%s0 + $0xac] sm:$0xf]
  %v74 = vld [vmem:[%s0 + $0xb0] sm:$0xf]
  %v75 = vld [vmem:[%s0 + $0xb4] sm:$0xf]
  %v76 = vld [vmem:[%s0 + $0xb8] sm:$0xf]
  %v77 = vld [vmem:[%s0 + $0xbc] sm:$0xf]
  %v78 = vld [vmem:[%s0 + $0xc0] sm:$0xf]
  %v79 = vld [vmem:[%s0 + $0xc4] sm:$0xf]
  %v80 = vld [vmem:[%s0 + $0xc8] sm:$0xf]
  %v81 = vld [vmem:[%s0 + $0xcc] sm:$0xf]
  %v82 = vld [vmem:[%s0 + $0xd0] sm:$0xf]
  %v83 = vld [vmem:[%s0 + $0xd4] sm:$0xf]
  %v84 = vld [vmem:[%s0 + $0xd8] sm:$0xf]
  %v85 = vld [vmem:[%s0 + $0xdc] sm:$0xf]
  %v86 = vld [vmem:[%s0 + $0xe0] sm:$0xf]
  %v87 = vld [vmem:[%s0 + $0xe4] sm:$0xf]
  %v88 = vld [vmem:[%s0 + $0xe8] sm:$0xf]
  %v89 = vld [vmem:[%s0 + $0xec] sm:$0xf]
  %v90 = vld [vmem:[%s0 + $0xf0] sm:$0xf]
  %v91 = vld [vmem:[%s0 + $0xf4] sm:$0xf]
  %v92 = vld [vmem:[%s0 + $0xf8] sm:$0xf]
  %v93 = vld [vmem:[%s0 + $0xfc] sm:$0xf]
  %v94 = vld [vmem:[%s1] sm:$0xf]
  %v95 = vld [vmem:[%s1 + $0x4] sm:$0xf]
  %v96 = vld [vmem:[%s1 + $0x8] sm:$0xf]
  %v97 = vld [vmem:[%s1 + $0xc] sm:$0xf]
  %v98 = vld [vmem:[%s1 + $0x10] sm:$0xf]
  %v99 = vld [vmem:[%s1 + $0x14] sm:$0xf]
  %v100 = vld [vmem:[%s1 + $0x18] sm:$0xf]
  %v101 = vld [vmem:[%s1 + $0x1c] sm:$0xf]
  %v102 = vld [vmem:[%s1 + $0x20] sm:$0xf]
  %v167 = vunpack.c.l.b16 %v30
  %v168 = vunpack.c.l.b16 %v31
  %v169 = vunpack.c.l.b16 %v32
  %v170 = vunpack.c.l.b16 %v33
  %v171 = vunpack.c.l.b16 %v34
  %v172 = vunpack.c.l.b16 %v35
  %v173 = vunpack.c.l.b16 %v36
  %v174 = vunpack.c.l.b16 %v37
  %v175 = vunpack.c.l.b16 %v38
  %v176 = vunpack.c.l.b16 %v39
  %v177 = vunpack.c.l.b16 %v40
  %v178 = vunpack.c.l.b16 %v41
  %v179 = vunpack.c.l.b16 %v42
  %v180 = vunpack.c.l.b16 %v43
  %v181 = vunpack.c.l.b16 %v44
  %v182 = vunpack.c.l.b16 %v45
  %v183 = vunpack.c.l.b16 %v46
  %v184 = vunpack.c.l.b16 %v47
  %v185 = vunpack.c.l.b16 %v48
  %v186 = vunpack.c.l.b16 %v49
  %v187 = vunpack.c.l.b16 %v50
  %v188 = vunpack.c.l.b16 %v51
  %v189 = vunpack.c.l.b16 %v52
  %v190 = vunpack.c.l.b16 %v53
  %v191 = vunpack.c.l.b16 %v54
  %v192 = vunpack.c.l.b16 %v55
  %v193 = vunpack.c.l.b16 %v56
  %v194 = vunpack.c.l.b16 %v57
  %v195 = vunpack.c.l.b16 %v58
  %v196 = vunpack.c.l.b16 %v59
  %v197 = vunpack.c.l.b16 %v60
  %v198 = vunpack.c.l.b16 %v61
  %v199 = vunpack.c.l.b16 %v62
  %v200 = vunpack.c.l.b16 %v63
  %v201 = vunpack.c.l.b16 %v64
  %v202 = vunpack.c.l.b16 %v65
  %v203 = vunpack.c.l.b16 %v66
  %v204 = vunpack.c.l.b16 %v67
  %v205 = vunpack.c.l.b16 %v68
  %v206 = vunpack.c.l.b16 %v69
  %v207 = vunpack.c.l.b16 %v70
  %v208 = vunpack.c.l.b16 %v71
  %v209 = vunpack.c.l.b16 %v72
  %v210 = vunpack.c.l.b16 %v73
  %v211 = vunpack.c.l.b16 %v74
  %v212 = vunpack.c.l.b16 %v75
  %v213 = vunpack.c.l.b16 %v76
  %v214 = vunpack.c.l.b16 %v77
  %v215 = vunpack.c.l.b16 %v78
  %v216 = vunpack.c.l.b16 %v79
  %v217 = vunpack.c.l.b16 %v80
  %v218 = vunpack.c.l.b16 %v81
  %v219 = vunpack.c.l.b16 %v82
  %v220 = vunpack.c.l.b16 %v83
  %v221 = vunpack.c.l.b16 %v84
  %v222 = vunpack.c.l.b16 %v85
  %v223 = vunpack.c.l.b16 %v86
  %v224 = vunpack.c.l.b16 %v87
  %v225 = vunpack.c.l.b16 %v88
  %v226 = vunpack.c.l.b16 %v89
  %v227 = vunpack.c.l.b16 %v90
  %v228 = vunpack.c.l.b16 %v91
  %v229 = vunpack.c.l.b16 %v92
  %v230 = vunpack.c.l.b16 %v93
  %v231 = vpack.c.b16 %v168, %v167
  %v232 = vpack.c.b16 %v170, %v169
  %v233 = vpack.c.b16 %v172, %v171
  %v234 = vpack.c.b16 %v174, %v173
  %v235 = vpack.c.b16 %v176, %v175
  %v236 = vpack.c.b16 %v178, %v177
  %v237 = vpack.c.b16 %v180, %v179
  %v238 = vpack.c.b16 %v182, %v181
  %v239 = vpack.c.b16 %v184, %v183
  %v240 = vpack.c.b16 %v186, %v185
  %v241 = vpack.c.b16 %v188, %v187
  %v242 = vpack.c.b16 %v190, %v189
  %v243 = vpack.c.b16 %v192, %v191
  %v244 = vpack.c.b16 %v194, %v193
  %v245 = vpack.c.b16 %v196, %v195
  %v246 = vpack.c.b16 %v198, %v197
  %v247 = vpack.c.b16 %v200, %v199
  %v248 = vpack.c.b16 %v202, %v201
  %v249 = vpack.c.b16 %v204, %v203
  %v250 = vpack.c.b16 %v206, %v205
  %v251 = vpack.c.b16 %v208, %v207
  %v252 = vpack.c.b16 %v210, %v209
  %v253 = vpack.c.b16 %v212, %v211
  %v254 = vpack.c.b16 %v214, %v213
  %v255 = vpack.c.b16 %v216, %v215
  %v256 = vpack.c.b16 %v218, %v217
  %v257 = vpack.c.b16 %v220, %v219
  %v258 = vpack.c.b16 %v222, %v221
  %v259 = vpack.c.b16 %v224, %v223
  %v260 = vpack.c.b16 %v226, %v225
  %v261 = vpack.c.b16 %v228, %v227
  %v262 = vpack.c.b16 %v230, %v229
  %v272 = vunpack.c.l.b16 %v94
  %v273 = vunpack.c.l.b16 %v95
  %v274 = vunpack.c.l.b16 %v96
  %v275 = vunpack.c.l.b16 %v97
  %v276 = vunpack.c.l.b16 %v98
  %v277 = vunpack.c.l.b16 %v99
  %v278 = vunpack.c.l.b16 %v100
  %v279 = vunpack.c.l.b16 %v101
  %v280 = vunpack.c.l.b16 %v102
  %v281 = vpack.c.b16 %v273, %v272
  %v282 = vpack.c.b16 %v275, %v274
  %v283 = vpack.c.b16 %v277, %v276
  %v284 = vpack.c.b16 %v279, %v278
  %v285 = vpack.c.b16 %v280, %v280
  %vm290 = vcmask 588800
  %v292 = vsel %vm290, %v231, 0
  %v295 = vsel %vm290, %v232, 0
  %v298 = vsel %vm290, %v233, 0
  %v301 = vsel %vm290, %v234, 0
  %v304 = vsel %vm290, %v235, 0
  %v307 = vsel %vm290, %v236, 0
  %v310 = vsel %vm290, %v237, 0
  %v313 = vsel %vm290, %v238, 0
  %v316 = vsel %vm290, %v239, 0
  %v319 = vsel %vm290, %v240, 0
  %v322 = vsel %vm290, %v241, 0
  %v325 = vsel %vm290, %v242, 0
  %v328 = vsel %vm290, %v243, 0
  %v331 = vsel %vm290, %v244, 0
  %v334 = vsel %vm290, %v245, 0
  %v337 = vsel %vm290, %v246, 0
  %v340 = vsel %vm290, %v247, 0
  %v343 = vsel %vm290, %v248, 0
  %v346 = vsel %vm290, %v249, 0
  %v349 = vsel %vm290, %v250, 0
  %v352 = vsel %vm290, %v251, 0
  %v355 = vsel %vm290, %v252, 0
  %v358 = vsel %vm290, %v253, 0
  %v361 = vsel %vm290, %v254, 0
  %v364 = vsel %vm290, %v255, 0
  %v367 = vsel %vm290, %v256, 0
  %v370 = vsel %vm290, %v257, 0
  %v373 = vsel %vm290, %v258, 0
  %v376 = vsel %vm290, %v259, 0
  %v379 = vsel %vm290, %v260, 0
  %v382 = vsel %vm290, %v261, 0
  %v385 = vsel %vm290, %v262, 0
  %vm387 = vcmask 1043456
  %v389 = vsel %vm387, %v285, 0
  %391 = vmatpush.bf16.msra.mxu0 0
  %392 = vmatpush.bf16.msra.mxu0 0
  %393 = vmatpush.bf16.msra.mxu0 0
  %394 = vmatpush.bf16.msra.mxu0 %v389
  %395 = vmatpush.bf16.msra.mxu0 %v284
  %396 = vmatpush.bf16.msra.mxu0 %v283
  %397 = vmatpush.bf16.msra.mxu0 %v282
  %398 = vmatpush.bf16.msra.mxu0 %v281
  %399 = vmatmul.bf16.gmra.mxu0 %v292
  %v400 = vpop.f32.mrf.mxu0
  %v401 = vadd.f32 0.0, %v400
  %v402 = vpop.f32.mrf.mxu0
  %v403 = vadd.f32 0.0, %v402
  %404 = vmatmul.bf16.gmra.mxu0 %v295
  %v405 = vpop.f32.mrf.mxu0
  %v406 = vadd.f32 0.0, %v405
  %v407 = vpop.f32.mrf.mxu0
  %v408 = vadd.f32 0.0, %v407
  %409 = vmatmul.bf16.gmra.mxu0 %v298
  %v410 = vpop.f32.mrf.mxu0
  %v411 = vadd.f32 0.0, %v410
  %v412 = vpop.f32.mrf.mxu0
  %v413 = vadd.f32 0.0, %v412
  %414 = vmatmul.bf16.gmra.mxu0 %v301
  %v415 = vpop.f32.mrf.mxu0
  %v416 = vadd.f32 0.0, %v415
  %v417 = vpop.f32.mrf.mxu0
  %v418 = vadd.f32 0.0, %v417
  %419 = vmatmul.bf16.gmra.mxu0 %v304
  %v420 = vpop.f32.mrf.mxu0
  %v421 = vadd.f32 0.0, %v420
  %v422 = vpop.f32.mrf.mxu0
  %v423 = vadd.f32 0.0, %v422
  %424 = vmatmul.bf16.gmra.mxu0 %v307
  %v425 = vpop.f32.mrf.mxu0
  %v426 = vadd.f32 0.0, %v425
  %v427 = vpop.f32.mrf.mxu0
  %v428 = vadd.f32 0.0, %v427
  %429 = vmatmul.bf16.gmra.mxu0 %v310
  %v430 = vpop.f32.mrf.mxu0
  %v431 = vadd.f32 0.0, %v430
  %v432 = vpop.f32.mrf.mxu0
  %v433 = vadd.f32 0.0, %v432
  %434 = vmatmul.bf16.gmra.mxu0 %v313
  %v435 = vpop.f32.mrf.mxu0
  %v436 = vadd.f32 0.0, %v435
  %v437 = vpop.f32.mrf.mxu0
  %v438 = vadd.f32 0.0, %v437
  %439 = vmatmul.bf16.gmra.mxu0 %v316
  %v440 = vpop.f32.mrf.mxu0
  %v441 = vadd.f32 0.0, %v440
  %v442 = vpop.f32.mrf.mxu0
  %v443 = vadd.f32 0.0, %v442
  %444 = vmatmul.bf16.gmra.mxu0 %v319
  %v445 = vpop.f32.mrf.mxu0
  %v446 = vadd.f32 0.0, %v445
  %v447 = vpop.f32.mrf.mxu0
  %v448 = vadd.f32 0.0, %v447
  %449 = vmatmul.bf16.gmra.mxu0 %v322
  %v450 = vpop.f32.mrf.mxu0
  %v451 = vadd.f32 0.0, %v450
  %v452 = vpop.f32.mrf.mxu0
  %v453 = vadd.f32 0.0, %v452
  %454 = vmatmul.bf16.gmra.mxu0 %v325
  %v455 = vpop.f32.mrf.mxu0
  %v456 = vadd.f32 0.0, %v455
  %v457 = vpop.f32.mrf.mxu0
  %v458 = vadd.f32 0.0, %v457
  %459 = vmatmul.bf16.gmra.mxu0 %v328
  %v460 = vpop.f32.mrf.mxu0
  %v461 = vadd.f32 0.0, %v460
  %v462 = vpop.f32.mrf.mxu0
  %v463 = vadd.f32 0.0, %v462
  %464 = vmatmul.bf16.gmra.mxu0 %v331
  %v465 = vpop.f32.mrf.mxu0
  %v466 = vadd.f32 0.0, %v465
  %v467 = vpop.f32.mrf.mxu0
  %v468 = vadd.f32 0.0, %v467
  %469 = vmatmul.bf16.gmra.mxu0 %v334
  %v470 = vpop.f32.mrf.mxu0
  %v471 = vadd.f32 0.0, %v470
  %v472 = vpop.f32.mrf.mxu0
  %v473 = vadd.f32 0.0, %v472
  %474 = vmatmul.bf16.gmra.mxu0 %v337
  %v475 = vpop.f32.mrf.mxu0
  %v476 = vadd.f32 0.0, %v475
  %v477 = vpop.f32.mrf.mxu0
  %v478 = vadd.f32 0.0, %v477
  %479 = vmatmul.bf16.gmra.mxu0 %v340
  %v480 = vpop.f32.mrf.mxu0
  %v481 = vadd.f32 0.0, %v480
  %v482 = vpop.f32.mrf.mxu0
  %v483 = vadd.f32 0.0, %v482
  %484 = vmatmul.bf16.gmra.mxu0 %v343
  %v485 = vpop.f32.mrf.mxu0
  %v486 = vadd.f32 0.0, %v485
  %v487 = vpop.f32.mrf.mxu0
  %v488 = vadd.f32 0.0, %v487
  %489 = vmatmul.bf16.gmra.mxu0 %v346
  %v490 = vpop.f32.mrf.mxu0
  %v491 = vadd.f32 0.0, %v490
  %v492 = vpop.f32.mrf.mxu0
  %v493 = vadd.f32 0.0, %v492
  %494 = vmatmul.bf16.gmra.mxu0 %v349
  %v495 = vpop.f32.mrf.mxu0
  %v496 = vadd.f32 0.0, %v495
  %v497 = vpop.f32.mrf.mxu0
  %v498 = vadd.f32 0.0, %v497
  %499 = vmatmul.bf16.gmra.mxu0 %v352
  %v500 = vpop.f32.mrf.mxu0
  %v501 = vadd.f32 0.0, %v500
  %v502 = vpop.f32.mrf.mxu0
  %v503 = vadd.f32 0.0, %v502
  %504 = vmatmul.bf16.gmra.mxu0 %v355
  %v505 = vpop.f32.mrf.mxu0
  %v506 = vadd.f32 0.0, %v505
  %v507 = vpop.f32.mrf.mxu0
  %v508 = vadd.f32 0.0, %v507
  %509 = vmatmul.bf16.gmra.mxu0 %v358
  %v510 = vpop.f32.mrf.mxu0
  %v511 = vadd.f32 0.0, %v510
  %v512 = vpop.f32.mrf.mxu0
  %v513 = vadd.f32 0.0, %v512
  %514 = vmatmul.bf16.gmra.mxu0 %v361
  %v515 = vpop.f32.mrf.mxu0
  %v516 = vadd.f32 0.0, %v515
  %v517 = vpop.f32.mrf.mxu0
  %v518 = vadd.f32 0.0, %v517
  %519 = vmatmul.bf16.gmra.mxu0 %v364
  %v520 = vpop.f32.mrf.mxu0
  %v521 = vadd.f32 0.0, %v520
  %v522 = vpop.f32.mrf.mxu0
  %v523 = vadd.f32 0.0, %v522
  %524 = vmatmul.bf16.gmra.mxu0 %v367
  %v525 = vpop.f32.mrf.mxu0
  %v526 = vadd.f32 0.0, %v525
  %v527 = vpop.f32.mrf.mxu0
  %v528 = vadd.f32 0.0, %v527
  %529 = vmatmul.bf16.gmra.mxu0 %v370
  %v530 = vpop.f32.mrf.mxu0
  %v531 = vadd.f32 0.0, %v530
  %v532 = vpop.f32.mrf.mxu0
  %v533 = vadd.f32 0.0, %v532
  %534 = vmatmul.bf16.gmra.mxu0 %v373
  %v535 = vpop.f32.mrf.mxu0
  %v536 = vadd.f32 0.0, %v535
  %v537 = vpop.f32.mrf.mxu0
  %v538 = vadd.f32 0.0, %v537
  %539 = vmatmul.bf16.gmra.mxu0 %v376
  %v540 = vpop.f32.mrf.mxu0
  %v541 = vadd.f32 0.0, %v540
  %v542 = vpop.f32.mrf.mxu0
  %v543 = vadd.f32 0.0, %v542
  %544 = vmatmul.bf16.gmra.mxu0 %v379
  %v545 = vpop.f32.mrf.mxu0
  %v546 = vadd.f32 0.0, %v545
  %v547 = vpop.f32.mrf.mxu0
  %v548 = vadd.f32 0.0, %v547
  %549 = vmatmul.bf16.gmra.mxu0 %v382
  %v550 = vpop.f32.mrf.mxu0
  %v551 = vadd.f32 0.0, %v550
  %v552 = vpop.f32.mrf.mxu0
  %v553 = vadd.f32 0.0, %v552
  %554 = vmatmul.bf16.gmra.mxu0 %v385
  %v555 = vpop.f32.mrf.mxu0
  %v556 = vadd.f32 0.0, %v555
  %v557 = vpop.f32.mrf.mxu0
  %v558 = vadd.f32 0.0, %v557
  %559 = vdwg.mxu0
  %v560 = vld [vmem:[%s2] sm:$0x1]
  %v562 = vperm.slane %v560, 0
  %v564 = vmul.f32 %v401, %v562
  %v565 = vmul.f32 %v403, %v562
  %v566 = vmul.f32 %v406, %v562
  %v567 = vmul.f32 %v408, %v562
  %v568 = vmul.f32 %v411, %v562
  %v569 = vmul.f32 %v413, %v562
  %v570 = vmul.f32 %v416, %v562
  %v571 = vmul.f32 %v418, %v562
  %v572 = vmul.f32 %v421, %v562
  %v573 = vmul.f32 %v423, %v562
  %v574 = vmul.f32 %v426, %v562
  %v575 = vmul.f32 %v428, %v562
  %v576 = vmul.f32 %v431, %v562
  %v577 = vmul.f32 %v433, %v562
  %v578 = vmul.f32 %v436, %v562
  %v579 = vmul.f32 %v438, %v562
  %v580 = vmul.f32 %v441, %v562
  %v581 = vmul.f32 %v443, %v562
  %v582 = vmul.f32 %v446, %v562
  %v583 = vmul.f32 %v448, %v562
  %v584 = vmul.f32 %v451, %v562
  %v585 = vmul.f32 %v453, %v562
  %v586 = vmul.f32 %v456, %v562
  %v587 = vmul.f32 %v458, %v562
  %v588 = vmul.f32 %v461, %v562
  %v589 = vmul.f32 %v463, %v562
  %v590 = vmul.f32 %v466, %v562
  %v591 = vmul.f32 %v468, %v562
  %v592 = vmul.f32 %v471, %v562
  %v593 = vmul.f32 %v473, %v562
  %v594 = vmul.f32 %v476, %v562
  %v595 = vmul.f32 %v478, %v562
  %v596 = vmul.f32 %v481, %v562
  %v597 = vmul.f32 %v483, %v562
  %v598 = vmul.f32 %v486, %v562
  %v599 = vmul.f32 %v488, %v562
  %v600 = vmul.f32 %v491, %v562
  %v601 = vmul.f32 %v493, %v562
  %v602 = vmul.f32 %v496, %v562
  %v603 = vmul.f32 %v498, %v562
  %v604 = vmul.f32 %v501, %v562
  %v605 = vmul.f32 %v503, %v562
  %v606 = vmul.f32 %v506, %v562
  %v607 = vmul.f32 %v508, %v562
  %v608 = vmul.f32 %v511, %v562
  %v609 = vmul.f32 %v513, %v562
  %v610 = vmul.f32 %v516, %v562
  %v611 = vmul.f32 %v518, %v562
  %v612 = vmul.f32 %v521, %v562
  %v613 = vmul.f32 %v523, %v562
  %v614 = vmul.f32 %v526, %v562
  %v615 = vmul.f32 %v528, %v562
  %v616 = vmul.f32 %v531, %v562
  %v617 = vmul.f32 %v533, %v562
  %v618 = vmul.f32 %v536, %v562
  %v619 = vmul.f32 %v538, %v562
  %v620 = vmul.f32 %v541, %v562
  %v621 = vmul.f32 %v543, %v562
  %v622 = vmul.f32 %v546, %v562
  %v623 = vmul.f32 %v548, %v562
  %v624 = vmul.f32 %v551, %v562
  %v625 = vmul.f32 %v553, %v562
  %v626 = vmul.f32 %v556, %v562
  %v627 = vmul.f32 %v558, %v562
  %v628 = vld [vmem:[%s3] sm:$0x1]
  %v630 = vperm.slane %v628, 0
  %v632 = vadd.f32 %v564, %v630
  %v633 = vadd.f32 %v565, %v630
  %v634 = vadd.f32 %v566, %v630
  %v635 = vadd.f32 %v567, %v630
  %v636 = vadd.f32 %v568, %v630
  %v637 = vadd.f32 %v569, %v630
  %v638 = vadd.f32 %v570, %v630
  %v639 = vadd.f32 %v571, %v630
  %v640 = vadd.f32 %v572, %v630
  %v641 = vadd.f32 %v573, %v630
  %v642 = vadd.f32 %v574, %v630
  %v643 = vadd.f32 %v575, %v630
  %v644 = vadd.f32 %v576, %v630
  %v645 = vadd.f32 %v577, %v630
  %v646 = vadd.f32 %v578, %v630
  %v647 = vadd.f32 %v579, %v630
  %v648 = vadd.f32 %v580, %v630
  %v649 = vadd.f32 %v581, %v630
  %v650 = vadd.f32 %v582, %v630
  %v651 = vadd.f32 %v583, %v630
  %v652 = vadd.f32 %v584, %v630
  %v653 = vadd.f32 %v585, %v630
  %v654 = vadd.f32 %v586, %v630
  %v655 = vadd.f32 %v587, %v630
  %v656 = vadd.f32 %v588, %v630
  %v657 = vadd.f32 %v589, %v630
  %v658 = vadd.f32 %v590, %v630
  %v659 = vadd.f32 %v591, %v630
  %v660 = vadd.f32 %v592, %v630
  %v661 = vadd.f32 %v593, %v630
  %v662 = vadd.f32 %v594, %v630
  %v663 = vadd.f32 %v595, %v630
  %v664 = vadd.f32 %v596, %v630
  %v665 = vadd.f32 %v597, %v630
  %v666 = vadd.f32 %v598, %v630
  %v667 = vadd.f32 %v599, %v630
  %v668 = vadd.f32 %v600, %v630
  %v669 = vadd.f32 %v601, %v630
  %v670 = vadd.f32 %v602, %v630
  %v671 = vadd.f32 %v603, %v630
  %v672 = vadd.f32 %v604, %v630
  %v673 = vadd.f32 %v605, %v630
  %v674 = vadd.f32 %v606, %v630
  %v675 = vadd.f32 %v607, %v630
  %v676 = vadd.f32 %v608, %v630
  %v677 = vadd.f32 %v609, %v630
  %v678 = vadd.f32 %v610, %v630
  %v679 = vadd.f32 %v611, %v630
  %v680 = vadd.f32 %v612, %v630
  %v681 = vadd.f32 %v613, %v630
  %v682 = vadd.f32 %v614, %v630
  %v683 = vadd.f32 %v615, %v630
  %v684 = vadd.f32 %v616, %v630
  %v685 = vadd.f32 %v617, %v630
  %v686 = vadd.f32 %v618, %v630
  %v687 = vadd.f32 %v619, %v630
  %v688 = vadd.f32 %v620, %v630
  %v689 = vadd.f32 %v621, %v630
  %v690 = vadd.f32 %v622, %v630
  %v691 = vadd.f32 %v623, %v630
  %v692 = vadd.f32 %v624, %v630
  %v693 = vadd.f32 %v625, %v630
  %v694 = vadd.f32 %v626, %v630
  %v695 = vadd.f32 %v627, %v630
  %v696 = vld [vmem:[%s4] sm:$0xf]
  %v697 = vld [vmem:[%s4 + $0x4] sm:$0xf]
  %v698 = vld [vmem:[%s4 + $0x8] sm:$0xf]
  %v699 = vld [vmem:[%s4 + $0xc] sm:$0xf]
  %v700 = vld [vmem:[%s4 + $0x10] sm:$0xf]
  %v701 = vld [vmem:[%s4 + $0x14] sm:$0xf]
  %v702 = vld [vmem:[%s4 + $0x18] sm:$0xf]
  %v703 = vld [vmem:[%s4 + $0x1c] sm:$0xf]
  %v704 = vld [vmem:[%s4 + $0x20] sm:$0xf]
  %v705 = vld [vmem:[%s4 + $0x24] sm:$0xf]
  %v706 = vld [vmem:[%s4 + $0x28] sm:$0xf]
  %v707 = vld [vmem:[%s4 + $0x2c] sm:$0xf]
  %v708 = vld [vmem:[%s4 + $0x30] sm:$0xf]
  %v709 = vld [vmem:[%s4 + $0x34] sm:$0xf]
  %v710 = vld [vmem:[%s4 + $0x38] sm:$0xf]
  %v711 = vld [vmem:[%s4 + $0x3c] sm:$0xf]
  %v712 = vld [vmem:[%s4 + $0x40] sm:$0xf]
  %v713 = vld [vmem:[%s4 + $0x44] sm:$0xf]
  %v714 = vld [vmem:[%s4 + $0x48] sm:$0xf]
  %v715 = vld [vmem:[%s4 + $0x4c] sm:$0xf]
  %v716 = vld [vmem:[%s4 + $0x50] sm:$0xf]
  %v717 = vld [vmem:[%s4 + $0x54] sm:$0xf]
  %v718 = vld [vmem:[%s4 + $0x58] sm:$0xf]
  %v719 = vld [vmem:[%s4 + $0x5c] sm:$0xf]
  %v720 = vld [vmem:[%s4 + $0x60] sm:$0xf]
  %v721 = vld [vmem:[%s4 + $0x64] sm:$0xf]
  %v722 = vld [vmem:[%s4 + $0x68] sm:$0xf]
  %v723 = vld [vmem:[%s4 + $0x6c] sm:$0xf]
  %v724 = vld [vmem:[%s4 + $0x70] sm:$0xf]
  %v725 = vld [vmem:[%s4 + $0x74] sm:$0xf]
  %v726 = vld [vmem:[%s4 + $0x78] sm:$0xf]
  %v727 = vld [vmem:[%s4 + $0x7c] sm:$0xf]
  %v728 = vld [vmem:[%s4 + $0x80] sm:$0xf]
  %v729 = vld [vmem:[%s4 + $0x84] sm:$0xf]
  %v730 = vld [vmem:[%s4 + $0x88] sm:$0xf]
  %v731 = vld [vmem:[%s4 + $0x8c] sm:$0xf]
  %v732 = vld [vmem:[%s4 + $0x90] sm:$0xf]
  %v733 = vld [vmem:[%s4 + $0x94] sm:$0xf]
  %v734 = vld [vmem:[%s4 + $0x98] sm:$0xf]
  %v735 = vld [vmem:[%s4 + $0x9c] sm:$0xf]
  %v736 = vld [vmem:[%s4 + $0xa0] sm:$0xf]
  %v737 = vld [vmem:[%s4 + $0xa4] sm:$0xf]
  %v738 = vld [vmem:[%s4 + $0xa8] sm:$0xf]
  %v739 = vld [vmem:[%s4 + $0xac] sm:$0xf]
  %v740 = vld [vmem:[%s4 + $0xb0] sm:$0xf]
  %v741 = vld [vmem:[%s4 + $0xb4] sm:$0xf]
  %v742 = vld [vmem:[%s4 + $0xb8] sm:$0xf]
  %v743 = vld [vmem:[%s4 + $0xbc] sm:$0xf]
  %v744 = vld [vmem:[%s4 + $0xc0] sm:$0xf]
  %v745 = vld [vmem:[%s4 + $0xc4] sm:$0xf]
  %v746 = vld [vmem:[%s4 + $0xc8] sm:$0xf]
  %v747 = vld [vmem:[%s4 + $0xcc] sm:$0xf]
  %v748 = vld [vmem:[%s4 + $0xd0] sm:$0xf]
  %v749 = vld [vmem:[%s4 + $0xd4] sm:$0xf]
  %v750 = vld [vmem:[%s4 + $0xd8] sm:$0xf]
  %v751 = vld [vmem:[%s4 + $0xdc] sm:$0xf]
  %v752 = vld [vmem:[%s4 + $0xe0] sm:$0xf]
  %v753 = vld [vmem:[%s4 + $0xe4] sm:$0xf]
  %v754 = vld [vmem:[%s4 + $0xe8] sm:$0xf]
  %v755 = vld [vmem:[%s4 + $0xec] sm:$0xf]
  %v756 = vld [vmem:[%s4 + $0xf0] sm:$0xf]
  %v757 = vld [vmem:[%s4 + $0xf4] sm:$0xf]
  %v758 = vld [vmem:[%s4 + $0xf8] sm:$0xf]
  %v759 = vld [vmem:[%s4 + $0xfc] sm:$0xf]
  %v760 = vld [vmem:[%s5] sm:$0x3]
  %v825 = vunpack.c.l.b16 %v696
  %v826 = vunpack.c.l.b16 %v697
  %v827 = vunpack.c.l.b16 %v698
  %v828 = vunpack.c.l.b16 %v699
  %v829 = vunpack.c.l.b16 %v700
  %v830 = vunpack.c.l.b16 %v701
  %v831 = vunpack.c.l.b16 %v702
  %v832 = vunpack.c.l.b16 %v703
  %v833 = vunpack.c.l.b16 %v704
  %v834 = vunpack.c.l.b16 %v705
  %v835 = vunpack.c.l.b16 %v706
  %v836 = vunpack.c.l.b16 %v707
  %v837 = vunpack.c.l.b16 %v708
  %v838 = vunpack.c.l.b16 %v709
  %v839 = vunpack.c.l.b16 %v710
  %v840 = vunpack.c.l.b16 %v711
  %v841 = vunpack.c.l.b16 %v712
  %v842 = vunpack.c.l.b16 %v713
  %v843 = vunpack.c.l.b16 %v714
  %v844 = vunpack.c.l.b16 %v715
  %v845 = vunpack.c.l.b16 %v716
  %v846 = vunpack.c.l.b16 %v717
  %v847 = vunpack.c.l.b16 %v718
  %v848 = vunpack.c.l.b16 %v719
  %v849 = vunpack.c.l.b16 %v720
  %v850 = vunpack.c.l.b16 %v721
  %v851 = vunpack.c.l.b16 %v722
  %v852 = vunpack.c.l.b16 %v723
  %v853 = vunpack.c.l.b16 %v724
  %v854 = vunpack.c.l.b16 %v725
  %v855 = vunpack.c.l.b16 %v726
  %v856 = vunpack.c.l.b16 %v727
  %v857 = vunpack.c.l.b16 %v728
  %v858 = vunpack.c.l.b16 %v729
  %v859 = vunpack.c.l.b16 %v730
  %v860 = vunpack.c.l.b16 %v731
  %v861 = vunpack.c.l.b16 %v732
  %v862 = vunpack.c.l.b16 %v733
  %v863 = vunpack.c.l.b16 %v734
  %v864 = vunpack.c.l.b16 %v735
  %v865 = vunpack.c.l.b16 %v736
  %v866 = vunpack.c.l.b16 %v737
  %v867 = vunpack.c.l.b16 %v738
  %v868 = vunpack.c.l.b16 %v739
  %v869 = vunpack.c.l.b16 %v740
  %v870 = vunpack.c.l.b16 %v741
  %v871 = vunpack.c.l.b16 %v742
  %v872 = vunpack.c.l.b16 %v743
  %v873 = vunpack.c.l.b16 %v744
  %v874 = vunpack.c.l.b16 %v745
  %v875 = vunpack.c.l.b16 %v746
  %v876 = vunpack.c.l.b16 %v747
  %v877 = vunpack.c.l.b16 %v748
  %v878 = vunpack.c.l.b16 %v749
  %v879 = vunpack.c.l.b16 %v750
  %v880 = vunpack.c.l.b16 %v751
  %v881 = vunpack.c.l.b16 %v752
  %v882 = vunpack.c.l.b16 %v753
  %v883 = vunpack.c.l.b16 %v754
  %v884 = vunpack.c.l.b16 %v755
  %v885 = vunpack.c.l.b16 %v756
  %v886 = vunpack.c.l.b16 %v757
  %v887 = vunpack.c.l.b16 %v758
  %v888 = vunpack.c.l.b16 %v759
  %v889 = vpack.c.b16 %v826, %v825
  %v890 = vpack.c.b16 %v828, %v827
  %v891 = vpack.c.b16 %v830, %v829
  %v892 = vpack.c.b16 %v832, %v831
  %v893 = vpack.c.b16 %v834, %v833
  %v894 = vpack.c.b16 %v836, %v835
  %v895 = vpack.c.b16 %v838, %v837
  %v896 = vpack.c.b16 %v840, %v839
  %v897 = vpack.c.b16 %v842, %v841
  %v898 = vpack.c.b16 %v844, %v843
  %v899 = vpack.c.b16 %v846, %v845
  %v900 = vpack.c.b16 %v848, %v847
  %v901 = vpack.c.b16 %v850, %v849
  %v902 = vpack.c.b16 %v852, %v851
  %v903 = vpack.c.b16 %v854, %v853
  %v904 = vpack.c.b16 %v856, %v855
  %v905 = vpack.c.b16 %v858, %v857
  %v906 = vpack.c.b16 %v860, %v859
  %v907 = vpack.c.b16 %v862, %v861
  %v908 = vpack.c.b16 %v864, %v863
  %v909 = vpack.c.b16 %v866, %v865
  %v910 = vpack.c.b16 %v868, %v867
  %v911 = vpack.c.b16 %v870, %v869
  %v912 = vpack.c.b16 %v872, %v871
  %v913 = vpack.c.b16 %v874, %v873
  %v914 = vpack.c.b16 %v876, %v875
  %v915 = vpack.c.b16 %v878, %v877
  %v916 = vpack.c.b16 %v880, %v879
  %v917 = vpack.c.b16 %v882, %v881
  %v918 = vpack.c.b16 %v884, %v883
  %v919 = vpack.c.b16 %v886, %v885
  %v920 = vpack.c.b16 %v888, %v887
  %vm921 = vcmask 31744
  %v923 = vsel %vm921, %v889, 0
  %v926 = vsel %vm921, %v890, 0
  %v929 = vsel %vm921, %v891, 0
  %v932 = vsel %vm921, %v892, 0
  %v935 = vsel %vm921, %v893, 0
  %v938 = vsel %vm921, %v894, 0
  %v941 = vsel %vm921, %v895, 0
  %v944 = vsel %vm921, %v896, 0
  %v947 = vsel %vm921, %v897, 0
  %v950 = vsel %vm921, %v898, 0
  %v953 = vsel %vm921, %v899, 0
  %v956 = vsel %vm921, %v900, 0
  %v959 = vsel %vm921, %v901, 0
  %v962 = vsel %vm921, %v902, 0
  %v965 = vsel %vm921, %v903, 0
  %v968 = vsel %vm921, %v904, 0
  %v971 = vsel %vm921, %v905, 0
  %v974 = vsel %vm921, %v906, 0
  %v977 = vsel %vm921, %v907, 0
  %v980 = vsel %vm921, %v908, 0
  %v983 = vsel %vm921, %v909, 0
  %v986 = vsel %vm921, %v910, 0
  %v989 = vsel %vm921, %v911, 0
  %v992 = vsel %vm921, %v912, 0
  %v995 = vsel %vm921, %v913, 0
  %v998 = vsel %vm921, %v914, 0
  %v1001 = vsel %vm921, %v915, 0
  %v1004 = vsel %vm921, %v916, 0
  %v1007 = vsel %vm921, %v917, 0
  %v1010 = vsel %vm921, %v918, 0
  %v1013 = vsel %vm921, %v919, 0
  %v1016 = vsel %vm921, %v920, 0
  %vm1018 = vcmask 1041408
  %v1020 = vsel %vm1018, %v760, 0
  %1022 = vmatpush.bf16.msra.mxu0 0
  %1023 = vmatpush.bf16.msra.mxu0 0
  %1024 = vmatpush.bf16.msra.mxu0 0
  %1025 = vmatpush.bf16.msra.mxu0 0
  %1026 = vmatpush.bf16.msra.mxu0 0
  %1027 = vmatpush.bf16.msra.mxu0 0
  %1028 = vmatpush.bf16.msra.mxu0 0
  %1029 = vmatpush.bf16.msra.mxu0 %v1020
  %1030 = vmatmul.bf16.gmra.mxu0 %v923
  %v1031 = vpop.f32.mrf.mxu0
  %v1032 = vadd.f32 0.0, %v1031
  %v1033 = vpop.f32.mrf.mxu0
  %v1034 = vadd.f32 0.0, %v1033
  %1035 = vmatmul.bf16.gmra.mxu0 %v926
  %v1036 = vpop.f32.mrf.mxu0
  %v1037 = vadd.f32 0.0, %v1036
  %v1038 = vpop.f32.mrf.mxu0
  %v1039 = vadd.f32 0.0, %v1038
  %1040 = vmatmul.bf16.gmra.mxu0 %v929
  %v1041 = vpop.f32.mrf.mxu0
  %v1042 = vadd.f32 0.0, %v1041
  %v1043 = vpop.f32.mrf.mxu0
  %v1044 = vadd.f32 0.0, %v1043
  %1045 = vmatmul.bf16.gmra.mxu0 %v932
  %v1046 = vpop.f32.mrf.mxu0
  %v1047 = vadd.f32 0.0, %v1046
  %v1048 = vpop.f32.mrf.mxu0
  %v1049 = vadd.f32 0.0, %v1048
  %1050 = vmatmul.bf16.gmra.mxu0 %v935
  %v1051 = vpop.f32.mrf.mxu0
  %v1052 = vadd.f32 0.0, %v1051
  %v1053 = vpop.f32.mrf.mxu0
  %v1054 = vadd.f32 0.0, %v1053
  %1055 = vmatmul.bf16.gmra.mxu0 %v938
  %v1056 = vpop.f32.mrf.mxu0
  %v1057 = vadd.f32 0.0, %v1056
  %v1058 = vpop.f32.mrf.mxu0
  %v1059 = vadd.f32 0.0, %v1058
  %1060 = vmatmul.bf16.gmra.mxu0 %v941
  %v1061 = vpop.f32.mrf.mxu0
  %v1062 = vadd.f32 0.0, %v1061
  %v1063 = vpop.f32.mrf.mxu0
  %v1064 = vadd.f32 0.0, %v1063
  %1065 = vmatmul.bf16.gmra.mxu0 %v944
  %v1066 = vpop.f32.mrf.mxu0
  %v1067 = vadd.f32 0.0, %v1066
  %v1068 = vpop.f32.mrf.mxu0
  %v1069 = vadd.f32 0.0, %v1068
  %1070 = vmatmul.bf16.gmra.mxu0 %v947
  %v1071 = vpop.f32.mrf.mxu0
  %v1072 = vadd.f32 0.0, %v1071
  %v1073 = vpop.f32.mrf.mxu0
  %v1074 = vadd.f32 0.0, %v1073
  %1075 = vmatmul.bf16.gmra.mxu0 %v950
  %v1076 = vpop.f32.mrf.mxu0
  %v1077 = vadd.f32 0.0, %v1076
  %v1078 = vpop.f32.mrf.mxu0
  %v1079 = vadd.f32 0.0, %v1078
  %1080 = vmatmul.bf16.gmra.mxu0 %v953
  %v1081 = vpop.f32.mrf.mxu0
  %v1082 = vadd.f32 0.0, %v1081
  %v1083 = vpop.f32.mrf.mxu0
  %v1084 = vadd.f32 0.0, %v1083
  %1085 = vmatmul.bf16.gmra.mxu0 %v956
  %v1086 = vpop.f32.mrf.mxu0
  %v1087 = vadd.f32 0.0, %v1086
  %v1088 = vpop.f32.mrf.mxu0
  %v1089 = vadd.f32 0.0, %v1088
  %1090 = vmatmul.bf16.gmra.mxu0 %v959
  %v1091 = vpop.f32.mrf.mxu0
  %v1092 = vadd.f32 0.0, %v1091
  %v1093 = vpop.f32.mrf.mxu0
  %v1094 = vadd.f32 0.0, %v1093
  %1095 = vmatmul.bf16.gmra.mxu0 %v962
  %v1096 = vpop.f32.mrf.mxu0
  %v1097 = vadd.f32 0.0, %v1096
  %v1098 = vpop.f32.mrf.mxu0
  %v1099 = vadd.f32 0.0, %v1098
  %1100 = vmatmul.bf16.gmra.mxu0 %v965
  %v1101 = vpop.f32.mrf.mxu0
  %v1102 = vadd.f32 0.0, %v1101
  %v1103 = vpop.f32.mrf.mxu0
  %v1104 = vadd.f32 0.0, %v1103
  %1105 = vmatmul.bf16.gmra.mxu0 %v968
  %v1106 = vpop.f32.mrf.mxu0
  %v1107 = vadd.f32 0.0, %v1106
  %v1108 = vpop.f32.mrf.mxu0
  %v1109 = vadd.f32 0.0, %v1108
  %1110 = vmatmul.bf16.gmra.mxu0 %v971
  %v1111 = vpop.f32.mrf.mxu0
  %v1112 = vadd.f32 0.0, %v1111
  %v1113 = vpop.f32.mrf.mxu0
  %v1114 = vadd.f32 0.0, %v1113
  %1115 = vmatmul.bf16.gmra.mxu0 %v974
  %v1116 = vpop.f32.mrf.mxu0
  %v1117 = vadd.f32 0.0, %v1116
  %v1118 = vpop.f32.mrf.mxu0
  %v1119 = vadd.f32 0.0, %v1118
  %1120 = vmatmul.bf16.gmra.mxu0 %v977
  %v1121 = vpop.f32.mrf.mxu0
  %v1122 = vadd.f32 0.0, %v1121
  %v1123 = vpop.f32.mrf.mxu0
  %v1124 = vadd.f32 0.0, %v1123
  %1125 = vmatmul.bf16.gmra.mxu0 %v980
  %v1126 = vpop.f32.mrf.mxu0
  %v1127 = vadd.f32 0.0, %v1126
  %v1128 = vpop.f32.mrf.mxu0
  %v1129 = vadd.f32 0.0, %v1128
  %1130 = vmatmul.bf16.gmra.mxu0 %v983
  %v1131 = vpop.f32.mrf.mxu0
  %v1132 = vadd.f32 0.0, %v1131
  %v1133 = vpop.f32.mrf.mxu0
  %v1134 = vadd.f32 0.0, %v1133
  %1135 = vmatmul.bf16.gmra.mxu0 %v986
  %v1136 = vpop.f32.mrf.mxu0
  %v1137 = vadd.f32 0.0, %v1136
  %v1138 = vpop.f32.mrf.mxu0
  %v1139 = vadd.f32 0.0, %v1138
  %1140 = vmatmul.bf16.gmra.mxu0 %v989
  %v1141 = vpop.f32.mrf.mxu0
  %v1142 = vadd.f32 0.0, %v1141
  %v1143 = vpop.f32.mrf.mxu0
  %v1144 = vadd.f32 0.0, %v1143
  %1145 = vmatmul.bf16.gmra.mxu0 %v992
  %v1146 = vpop.f32.mrf.mxu0
  %v1147 = vadd.f32 0.0, %v1146
  %v1148 = vpop.f32.mrf.mxu0
  %v1149 = vadd.f32 0.0, %v1148
  %1150 = vmatmul.bf16.gmra.mxu0 %v995
  %v1151 = vpop.f32.mrf.mxu0
  %v1152 = vadd.f32 0.0, %v1151
  %v1153 = vpop.f32.mrf.mxu0
  %v1154 = vadd.f32 0.0, %v1153
  %1155 = vmatmul.bf16.gmra.mxu0 %v998
  %v1156 = vpop.f32.mrf.mxu0
  %v1157 = vadd.f32 0.0, %v1156
  %v1158 = vpop.f32.mrf.mxu0
  %v1159 = vadd.f32 0.0, %v1158
  %1160 = vmatmul.bf16.gmra.mxu0 %v1001
  %v1161 = vpop.f32.mrf.mxu0
  %v1162 = vadd.f32 0.0, %v1161
  %v1163 = vpop.f32.mrf.mxu0
  %v1164 = vadd.f32 0.0, %v1163
  %1165 = vmatmul.bf16.gmra.mxu0 %v1004
  %v1166 = vpop.f32.mrf.mxu0
  %v1167 = vadd.f32 0.0, %v1166
  %v1168 = vpop.f32.mrf.mxu0
  %v1169 = vadd.f32 0.0, %v1168
  %1170 = vmatmul.bf16.gmra.mxu0 %v1007
  %v1171 = vpop.f32.mrf.mxu0
  %v1172 = vadd.f32 0.0, %v1171
  %v1173 = vpop.f32.mrf.mxu0
  %v1174 = vadd.f32 0.0, %v1173
  %1175 = vmatmul.bf16.gmra.mxu0 %v1010
  %v1176 = vpop.f32.mrf.mxu0
  %v1177 = vadd.f32 0.0, %v1176
  %v1178 = vpop.f32.mrf.mxu0
  %v1179 = vadd.f32 0.0, %v1178
  %1180 = vmatmul.bf16.gmra.mxu0 %v1013
  %v1181 = vpop.f32.mrf.mxu0
  %v1182 = vadd.f32 0.0, %v1181
  %v1183 = vpop.f32.mrf.mxu0
  %v1184 = vadd.f32 0.0, %v1183
  %1185 = vmatmul.bf16.gmra.mxu0 %v1016
  %v1186 = vpop.f32.mrf.mxu0
  %v1187 = vadd.f32 0.0, %v1186
  %v1188 = vpop.f32.mrf.mxu0
  %v1189 = vadd.f32 0.0, %v1188
  %1190 = vdwg.mxu0
  %v1191 = vld [vmem:[%s6] sm:$0x1]
  %v1193 = vperm.slane %v1191, 0
  %v1195 = vmul.f32 %v1032, %v1193
  %v1196 = vmul.f32 %v1034, %v1193
  %v1197 = vmul.f32 %v1037, %v1193
  %v1198 = vmul.f32 %v1039, %v1193
  %v1199 = vmul.f32 %v1042, %v1193
  %v1200 = vmul.f32 %v1044, %v1193
  %v1201 = vmul.f32 %v1047, %v1193
  %v1202 = vmul.f32 %v1049, %v1193
  %v1203 = vmul.f32 %v1052, %v1193
  %v1204 = vmul.f32 %v1054, %v1193
  %v1205 = vmul.f32 %v1057, %v1193
  %v1206 = vmul.f32 %v1059, %v1193
  %v1207 = vmul.f32 %v1062, %v1193
  %v1208 = vmul.f32 %v1064, %v1193
  %v1209 = vmul.f32 %v1067, %v1193
  %v1210 = vmul.f32 %v1069, %v1193
  %v1211 = vmul.f32 %v1072, %v1193
  %v1212 = vmul.f32 %v1074, %v1193
  %v1213 = vmul.f32 %v1077, %v1193
  %v1214 = vmul.f32 %v1079, %v1193
  %v1215 = vmul.f32 %v1082, %v1193
  %v1216 = vmul.f32 %v1084, %v1193
  %v1217 = vmul.f32 %v1087, %v1193
  %v1218 = vmul.f32 %v1089, %v1193
  %v1219 = vmul.f32 %v1092, %v1193
  %v1220 = vmul.f32 %v1094, %v1193
  %v1221 = vmul.f32 %v1097, %v1193
  %v1222 = vmul.f32 %v1099, %v1193
  %v1223 = vmul.f32 %v1102, %v1193
  %v1224 = vmul.f32 %v1104, %v1193
  %v1225 = vmul.f32 %v1107, %v1193
  %v1226 = vmul.f32 %v1109, %v1193
  %v1227 = vmul.f32 %v1112, %v1193
  %v1228 = vmul.f32 %v1114, %v1193
  %v1229 = vmul.f32 %v1117, %v1193
  %v1230 = vmul.f32 %v1119, %v1193
  %v1231 = vmul.f32 %v1122, %v1193
  %v1232 = vmul.f32 %v1124, %v1193
  %v1233 = vmul.f32 %v1127, %v1193
  %v1234 = vmul.f32 %v1129, %v1193
  %v1235 = vmul.f32 %v1132, %v1193
  %v1236 = vmul.f32 %v1134, %v1193
  %v1237 = vmul.f32 %v1137, %v1193
  %v1238 = vmul.f32 %v1139, %v1193
  %v1239 = vmul.f32 %v1142, %v1193
  %v1240 = vmul.f32 %v1144, %v1193
  %v1241 = vmul.f32 %v1147, %v1193
  %v1242 = vmul.f32 %v1149, %v1193
  %v1243 = vmul.f32 %v1152, %v1193
  %v1244 = vmul.f32 %v1154, %v1193
  %v1245 = vmul.f32 %v1157, %v1193
  %v1246 = vmul.f32 %v1159, %v1193
  %v1247 = vmul.f32 %v1162, %v1193
  %v1248 = vmul.f32 %v1164, %v1193
  %v1249 = vmul.f32 %v1167, %v1193
  %v1250 = vmul.f32 %v1169, %v1193
  %v1251 = vmul.f32 %v1172, %v1193
  %v1252 = vmul.f32 %v1174, %v1193
  %v1253 = vmul.f32 %v1177, %v1193
  %v1254 = vmul.f32 %v1179, %v1193
  %v1255 = vmul.f32 %v1182, %v1193
  %v1256 = vmul.f32 %v1184, %v1193
  %v1257 = vmul.f32 %v1187, %v1193
  %v1258 = vmul.f32 %v1189, %v1193
  %v1259 = vld [vmem:[%s7] sm:$0x1]
  %v1261 = vperm.slane %v1259, 0
  %v1263 = vadd.f32 %v1195, %v1261
  %v1264 = vadd.f32 %v1196, %v1261
  %v1265 = vadd.f32 %v1197, %v1261
  %v1266 = vadd.f32 %v1198, %v1261
  %v1267 = vadd.f32 %v1199, %v1261
  %v1268 = vadd.f32 %v1200, %v1261
  %v1269 = vadd.f32 %v1201, %v1261
  %v1270 = vadd.f32 %v1202, %v1261
  %v1271 = vadd.f32 %v1203, %v1261
  %v1272 = vadd.f32 %v1204, %v1261
  %v1273 = vadd.f32 %v1205, %v1261
  %v1274 = vadd.f32 %v1206, %v1261
  %v1275 = vadd.f32 %v1207, %v1261
  %v1276 = vadd.f32 %v1208, %v1261
  %v1277 = vadd.f32 %v1209, %v1261
  %v1278 = vadd.f32 %v1210, %v1261
  %v1279 = vadd.f32 %v1211, %v1261
  %v1280 = vadd.f32 %v1212, %v1261
  %v1281 = vadd.f32 %v1213, %v1261
  %v1282 = vadd.f32 %v1214, %v1261
  %v1283 = vadd.f32 %v1215, %v1261
  %v1284 = vadd.f32 %v1216, %v1261
  %v1285 = vadd.f32 %v1217, %v1261
  %v1286 = vadd.f32 %v1218, %v1261
  %v1287 = vadd.f32 %v1219, %v1261
  %v1288 = vadd.f32 %v1220, %v1261
  %v1289 = vadd.f32 %v1221, %v1261
  %v1290 = vadd.f32 %v1222, %v1261
  %v1291 = vadd.f32 %v1223, %v1261
  %v1292 = vadd.f32 %v1224, %v1261
  %v1293 = vadd.f32 %v1225, %v1261
  %v1294 = vadd.f32 %v1226, %v1261
  %v1295 = vadd.f32 %v1227, %v1261
  %v1296 = vadd.f32 %v1228, %v1261
  %v1297 = vadd.f32 %v1229, %v1261
  %v1298 = vadd.f32 %v1230, %v1261
  %v1299 = vadd.f32 %v1231, %v1261
  %v1300 = vadd.f32 %v1232, %v1261
  %v1301 = vadd.f32 %v1233, %v1261
  %v1302 = vadd.f32 %v1234, %v1261
  %v1303 = vadd.f32 %v1235, %v1261
  %v1304 = vadd.f32 %v1236, %v1261
  %v1305 = vadd.f32 %v1237, %v1261
  %v1306 = vadd.f32 %v1238, %v1261
  %v1307 = vadd.f32 %v1239, %v1261
  %v1308 = vadd.f32 %v1240, %v1261
  %v1309 = vadd.f32 %v1241, %v1261
  %v1310 = vadd.f32 %v1242, %v1261
  %v1311 = vadd.f32 %v1243, %v1261
  %v1312 = vadd.f32 %v1244, %v1261
  %v1313 = vadd.f32 %v1245, %v1261
  %v1314 = vadd.f32 %v1246, %v1261
  %v1315 = vadd.f32 %v1247, %v1261
  %v1316 = vadd.f32 %v1248, %v1261
  %v1317 = vadd.f32 %v1249, %v1261
  %v1318 = vadd.f32 %v1250, %v1261
  %v1319 = vadd.f32 %v1251, %v1261
  %v1320 = vadd.f32 %v1252, %v1261
  %v1321 = vadd.f32 %v1253, %v1261
  %v1322 = vadd.f32 %v1254, %v1261
  %v1323 = vadd.f32 %v1255, %v1261
  %v1324 = vadd.f32 %v1256, %v1261
  %v1325 = vadd.f32 %v1257, %v1261
  %v1326 = vadd.f32 %v1258, %v1261
  %v1327 = vadd.f32 %v632, %v1263
  %v1328 = vadd.f32 %v633, %v1264
  %v1329 = vadd.f32 %v634, %v1265
  %v1330 = vadd.f32 %v635, %v1266
  %v1331 = vadd.f32 %v636, %v1267
  %v1332 = vadd.f32 %v637, %v1268
  %v1333 = vadd.f32 %v638, %v1269
  %v1334 = vadd.f32 %v639, %v1270
  %v1335 = vadd.f32 %v640, %v1271
  %v1336 = vadd.f32 %v641, %v1272
  %v1337 = vadd.f32 %v642, %v1273
  %v1338 = vadd.f32 %v643, %v1274
  %v1339 = vadd.f32 %v644, %v1275
  %v1340 = vadd.f32 %v645, %v1276
  %v1341 = vadd.f32 %v646, %v1277
  %v1342 = vadd.f32 %v647, %v1278
  %v1343 = vadd.f32 %v648, %v1279
  %v1344 = vadd.f32 %v649, %v1280
  %v1345 = vadd.f32 %v650, %v1281
  %v1346 = vadd.f32 %v651, %v1282
  %v1347 = vadd.f32 %v652, %v1283
  %v1348 = vadd.f32 %v653, %v1284
  %v1349 = vadd.f32 %v654, %v1285
  %v1350 = vadd.f32 %v655, %v1286
  %v1351 = vadd.f32 %v656, %v1287
  %v1352 = vadd.f32 %v657, %v1288
  %v1353 = vadd.f32 %v658, %v1289
  %v1354 = vadd.f32 %v659, %v1290
  %v1355 = vadd.f32 %v660, %v1291
  %v1356 = vadd.f32 %v661, %v1292
  %v1357 = vadd.f32 %v662, %v1293
  %v1358 = vadd.f32 %v663, %v1294
  %v1359 = vadd.f32 %v664, %v1295
  %v1360 = vadd.f32 %v665, %v1296
  %v1361 = vadd.f32 %v666, %v1297
  %v1362 = vadd.f32 %v667, %v1298
  %v1363 = vadd.f32 %v668, %v1299
  %v1364 = vadd.f32 %v669, %v1300
  %v1365 = vadd.f32 %v670, %v1301
  %v1366 = vadd.f32 %v671, %v1302
  %v1367 = vadd.f32 %v672, %v1303
  %v1368 = vadd.f32 %v673, %v1304
  %v1369 = vadd.f32 %v674, %v1305
  %v1370 = vadd.f32 %v675, %v1306
  %v1371 = vadd.f32 %v676, %v1307
  %v1372 = vadd.f32 %v677, %v1308
  %v1373 = vadd.f32 %v678, %v1309
  %v1374 = vadd.f32 %v679, %v1310
  %v1375 = vadd.f32 %v680, %v1311
  %v1376 = vadd.f32 %v681, %v1312
  %v1377 = vadd.f32 %v682, %v1313
  %v1378 = vadd.f32 %v683, %v1314
  %v1379 = vadd.f32 %v684, %v1315
  %v1380 = vadd.f32 %v685, %v1316
  %v1381 = vadd.f32 %v686, %v1317
  %v1382 = vadd.f32 %v687, %v1318
  %v1383 = vadd.f32 %v688, %v1319
  %v1384 = vadd.f32 %v689, %v1320
  %v1385 = vadd.f32 %v690, %v1321
  %v1386 = vadd.f32 %v691, %v1322
  %v1387 = vadd.f32 %v692, %v1323
  %v1388 = vadd.f32 %v693, %v1324
  %v1389 = vadd.f32 %v694, %v1325
  %v1390 = vadd.f32 %v695, %v1326
  %v1391 = vmul.f32 %v1327, 0.5
  %v1392 = vmul.f32 %v1328, 0.5
  %v1393 = vmul.f32 %v1329, 0.5
  %v1394 = vmul.f32 %v1330, 0.5
  %v1395 = vmul.f32 %v1331, 0.5
  %v1396 = vmul.f32 %v1332, 0.5
  %v1397 = vmul.f32 %v1333, 0.5
  %v1398 = vmul.f32 %v1334, 0.5
  %v1399 = vmul.f32 %v1335, 0.5
  %v1400 = vmul.f32 %v1336, 0.5
  %v1401 = vmul.f32 %v1337, 0.5
  %v1402 = vmul.f32 %v1338, 0.5
  %v1403 = vmul.f32 %v1339, 0.5
  %v1404 = vmul.f32 %v1340, 0.5
  %v1405 = vmul.f32 %v1341, 0.5
  %v1406 = vmul.f32 %v1342, 0.5
  %v1407 = vmul.f32 %v1343, 0.5
  %v1408 = vmul.f32 %v1344, 0.5
  %v1409 = vmul.f32 %v1345, 0.5
  %v1410 = vmul.f32 %v1346, 0.5
  %v1411 = vmul.f32 %v1347, 0.5
  %v1412 = vmul.f32 %v1348, 0.5
  %v1413 = vmul.f32 %v1349, 0.5
  %v1414 = vmul.f32 %v1350, 0.5
  %v1415 = vmul.f32 %v1351, 0.5
  %v1416 = vmul.f32 %v1352, 0.5
  %v1417 = vmul.f32 %v1353, 0.5
  %v1418 = vmul.f32 %v1354, 0.5
  %v1419 = vmul.f32 %v1355, 0.5
  %v1420 = vmul.f32 %v1356, 0.5
  %v1421 = vmul.f32 %v1357, 0.5
  %v1422 = vmul.f32 %v1358, 0.5
  %v1423 = vmul.f32 %v1359, 0.5
  %v1424 = vmul.f32 %v1360, 0.5
  %v1425 = vmul.f32 %v1361, 0.5
  %v1426 = vmul.f32 %v1362, 0.5
  %v1427 = vmul.f32 %v1363, 0.5
  %v1428 = vmul.f32 %v1364, 0.5
  %v1429 = vmul.f32 %v1365, 0.5
  %v1430 = vmul.f32 %v1366, 0.5
  %v1431 = vmul.f32 %v1367, 0.5
  %v1432 = vmul.f32 %v1368, 0.5
  %v1433 = vmul.f32 %v1369, 0.5
  %v1434 = vmul.f32 %v1370, 0.5
  %v1435 = vmul.f32 %v1371, 0.5
  %v1436 = vmul.f32 %v1372, 0.5
  %v1437 = vmul.f32 %v1373, 0.5
  %v1438 = vmul.f32 %v1374, 0.5
  %v1439 = vmul.f32 %v1375, 0.5
  %v1440 = vmul.f32 %v1376, 0.5
  %v1441 = vmul.f32 %v1377, 0.5
  %v1442 = vmul.f32 %v1378, 0.5
  %v1443 = vmul.f32 %v1379, 0.5
  %v1444 = vmul.f32 %v1380, 0.5
  %v1445 = vmul.f32 %v1381, 0.5
  %v1446 = vmul.f32 %v1382, 0.5
  %v1447 = vmul.f32 %v1383, 0.5
  %v1448 = vmul.f32 %v1384, 0.5
  %v1449 = vmul.f32 %v1385, 0.5
  %v1450 = vmul.f32 %v1386, 0.5
  %v1451 = vmul.f32 %v1387, 0.5
  %v1452 = vmul.f32 %v1388, 0.5
  %v1453 = vmul.f32 %v1389, 0.5
  %v1454 = vmul.f32 %v1390, 0.5
  %v1455 = vmul.f32 %v1327, 0.70710677
  %v1456 = vmul.f32 %v1328, 0.70710677
  %v1457 = vmul.f32 %v1329, 0.70710677
  %v1458 = vmul.f32 %v1330, 0.70710677
  %v1459 = vmul.f32 %v1331, 0.70710677
  %v1460 = vmul.f32 %v1332, 0.70710677
  %v1461 = vmul.f32 %v1333, 0.70710677
  %v1462 = vmul.f32 %v1334, 0.70710677
  %v1463 = vmul.f32 %v1335, 0.70710677
  %v1464 = vmul.f32 %v1336, 0.70710677
  %v1465 = vmul.f32 %v1337, 0.70710677
  %v1466 = vmul.f32 %v1338, 0.70710677
  %v1467 = vmul.f32 %v1339, 0.70710677
  %v1468 = vmul.f32 %v1340, 0.70710677
  %v1469 = vmul.f32 %v1341, 0.70710677
  %v1470 = vmul.f32 %v1342, 0.70710677
  %v1471 = vmul.f32 %v1343, 0.70710677
  %v1472 = vmul.f32 %v1344, 0.70710677
  %v1473 = vmul.f32 %v1345, 0.70710677
  %v1474 = vmul.f32 %v1346, 0.70710677
  %v1475 = vmul.f32 %v1347, 0.70710677
  %v1476 = vmul.f32 %v1348, 0.70710677
  %v1477 = vmul.f32 %v1349, 0.70710677
  %v1478 = vmul.f32 %v1350, 0.70710677
  %v1479 = vmul.f32 %v1351, 0.70710677
  %v1480 = vmul.f32 %v1352, 0.70710677
  %v1481 = vmul.f32 %v1353, 0.70710677
  %v1482 = vmul.f32 %v1354, 0.70710677
  %v1483 = vmul.f32 %v1355, 0.70710677
  %v1484 = vmul.f32 %v1356, 0.70710677
  %v1485 = vmul.f32 %v1357, 0.70710677
  %v1486 = vmul.f32 %v1358, 0.70710677
  %v1487 = vmul.f32 %v1359, 0.70710677
  %v1488 = vmul.f32 %v1360, 0.70710677
  %v1489 = vmul.f32 %v1361, 0.70710677
  %v1490 = vmul.f32 %v1362, 0.70710677
  %v1491 = vmul.f32 %v1363, 0.70710677
  %v1492 = vmul.f32 %v1364, 0.70710677
  %v1493 = vmul.f32 %v1365, 0.70710677
  %v1494 = vmul.f32 %v1366, 0.70710677
  %v1495 = vmul.f32 %v1367, 0.70710677
  %v1496 = vmul.f32 %v1368, 0.70710677
  %v1497 = vmul.f32 %v1369, 0.70710677
  %v1498 = vmul.f32 %v1370, 0.70710677
  %v1499 = vmul.f32 %v1371, 0.70710677
  %v1500 = vmul.f32 %v1372, 0.70710677
  %v1501 = vmul.f32 %v1373, 0.70710677
  %v1502 = vmul.f32 %v1374, 0.70710677
  %v1503 = vmul.f32 %v1375, 0.70710677
  %v1504 = vmul.f32 %v1376, 0.70710677
  %v1505 = vmul.f32 %v1377, 0.70710677
  %v1506 = vmul.f32 %v1378, 0.70710677
  %v1507 = vmul.f32 %v1379, 0.70710677
  %v1508 = vmul.f32 %v1380, 0.70710677
  %v1509 = vmul.f32 %v1381, 0.70710677
  %v1510 = vmul.f32 %v1382, 0.70710677
  %v1511 = vmul.f32 %v1383, 0.70710677
  %v1512 = vmul.f32 %v1384, 0.70710677
  %v1513 = vmul.f32 %v1385, 0.70710677
  %v1514 = vmul.f32 %v1386, 0.70710677
  %v1515 = vmul.f32 %v1387, 0.70710677
  %v1516 = vmul.f32 %v1388, 0.70710677
  %v1517 = vmul.f32 %v1389, 0.70710677
  %v1518 = vmul.f32 %v1390, 0.70710677
  %v1519 = vand.u32 2147483647, %v1455
  %v1520 = vand.u32 2147483647, %v1456
  %v1521 = vand.u32 2147483647, %v1457
  %v1522 = vand.u32 2147483647, %v1458
  %v1523 = vand.u32 2147483647, %v1459
  %v1524 = vand.u32 2147483647, %v1460
  %v1525 = vand.u32 2147483647, %v1461
  %v1526 = vand.u32 2147483647, %v1462
  %v1527 = vand.u32 2147483647, %v1463
  %v1528 = vand.u32 2147483647, %v1464
  %v1529 = vand.u32 2147483647, %v1465
  %v1530 = vand.u32 2147483647, %v1466
  %v1531 = vand.u32 2147483647, %v1467
  %v1532 = vand.u32 2147483647, %v1468
  %v1533 = vand.u32 2147483647, %v1469
  %v1534 = vand.u32 2147483647, %v1470
  %v1535 = vand.u32 2147483647, %v1471
  %v1536 = vand.u32 2147483647, %v1472
  %v1537 = vand.u32 2147483647, %v1473
  %v1538 = vand.u32 2147483647, %v1474
  %v1539 = vand.u32 2147483647, %v1475
  %v1540 = vand.u32 2147483647, %v1476
  %v1541 = vand.u32 2147483647, %v1477
  %v1542 = vand.u32 2147483647, %v1478
  %v1543 = vand.u32 2147483647, %v1479
  %v1544 = vand.u32 2147483647, %v1480
  %v1545 = vand.u32 2147483647, %v1481
  %v1546 = vand.u32 2147483647, %v1482
  %v1547 = vand.u32 2147483647, %v1483
  %v1548 = vand.u32 2147483647, %v1484
  %v1549 = vand.u32 2147483647, %v1485
  %v1550 = vand.u32 2147483647, %v1486
  %v1551 = vand.u32 2147483647, %v1487
  %v1552 = vand.u32 2147483647, %v1488
  %v1553 = vand.u32 2147483647, %v1489
  %v1554 = vand.u32 2147483647, %v1490
  %v1555 = vand.u32 2147483647, %v1491
  %v1556 = vand.u32 2147483647, %v1492
  %v1557 = vand.u32 2147483647, %v1493
  %v1558 = vand.u32 2147483647, %v1494
  %v1559 = vand.u32 2147483647, %v1495
  %v1560 = vand.u32 2147483647, %v1496
  %v1561 = vand.u32 2147483647, %v1497
  %v1562 = vand.u32 2147483647, %v1498
  %v1563 = vand.u32 2147483647, %v1499
  %v1564 = vand.u32 2147483647, %v1500
  %v1565 = vand.u32 2147483647, %v1501
  %v1566 = vand.u32 2147483647, %v1502
  %v1567 = vand.u32 2147483647, %v1503
  %v1568 = vand.u32 2147483647, %v1504
  %v1569 = vand.u32 2147483647, %v1505
  %v1570 = vand.u32 2147483647, %v1506
  %v1571 = vand.u32 2147483647, %v1507
  %v1572 = vand.u32 2147483647, %v1508
  %v1573 = vand.u32 2147483647, %v1509
  %v1574 = vand.u32 2147483647, %v1510
  %v1575 = vand.u32 2147483647, %v1511
  %v1576 = vand.u32 2147483647, %v1512
  %v1577 = vand.u32 2147483647, %v1513
  %v1578 = vand.u32 2147483647, %v1514
  %v1579 = vand.u32 2147483647, %v1515
  %v1580 = vand.u32 2147483647, %v1516
  %v1581 = vand.u32 2147483647, %v1517
  %v1582 = vand.u32 2147483647, %v1518
  %v1583 = vmul.f32 %v1519, 0.3275911
  %v1584 = vmul.f32 %v1520, 0.3275911
  %v1585 = vmul.f32 %v1521, 0.3275911
  %v1586 = vmul.f32 %v1522, 0.3275911
  %v1587 = vmul.f32 %v1523, 0.3275911
  %v1588 = vmul.f32 %v1524, 0.3275911
  %v1589 = vmul.f32 %v1525, 0.3275911
  %v1590 = vmul.f32 %v1526, 0.3275911
  %v1591 = vmul.f32 %v1527, 0.3275911
  %v1592 = vmul.f32 %v1528, 0.3275911
  %v1593 = vmul.f32 %v1529, 0.3275911
  %v1594 = vmul.f32 %v1530, 0.3275911
  %v1595 = vmul.f32 %v1531, 0.3275911
  %v1596 = vmul.f32 %v1532, 0.3275911
  %v1597 = vmul.f32 %v1533, 0.3275911
  %v1598 = vmul.f32 %v1534, 0.3275911
  %v1599 = vmul.f32 %v1535, 0.3275911
  %v1600 = vmul.f32 %v1536, 0.3275911
  %v1601 = vmul.f32 %v1537, 0.3275911
  %v1602 = vmul.f32 %v1538, 0.3275911
  %v1603 = vmul.f32 %v1539, 0.3275911
  %v1604 = vmul.f32 %v1540, 0.3275911
  %v1605 = vmul.f32 %v1541, 0.3275911
  %v1606 = vmul.f32 %v1542, 0.3275911
  %v1607 = vmul.f32 %v1543, 0.3275911
  %v1608 = vmul.f32 %v1544, 0.3275911
  %v1609 = vmul.f32 %v1545, 0.3275911
  %v1610 = vmul.f32 %v1546, 0.3275911
  %v1611 = vmul.f32 %v1547, 0.3275911
  %v1612 = vmul.f32 %v1548, 0.3275911
  %v1613 = vmul.f32 %v1549, 0.3275911
  %v1614 = vmul.f32 %v1550, 0.3275911
  %v1615 = vmul.f32 %v1551, 0.3275911
  %v1616 = vmul.f32 %v1552, 0.3275911
  %v1617 = vmul.f32 %v1553, 0.3275911
  %v1618 = vmul.f32 %v1554, 0.3275911
  %v1619 = vmul.f32 %v1555, 0.3275911
  %v1620 = vmul.f32 %v1556, 0.3275911
  %v1621 = vmul.f32 %v1557, 0.3275911
  %v1622 = vmul.f32 %v1558, 0.3275911
  %v1623 = vmul.f32 %v1559, 0.3275911
  %v1624 = vmul.f32 %v1560, 0.3275911
  %v1625 = vmul.f32 %v1561, 0.3275911
  %v1626 = vmul.f32 %v1562, 0.3275911
  %v1627 = vmul.f32 %v1563, 0.3275911
  %v1628 = vmul.f32 %v1564, 0.3275911
  %v1629 = vmul.f32 %v1565, 0.3275911
  %v1630 = vmul.f32 %v1566, 0.3275911
  %v1631 = vmul.f32 %v1567, 0.3275911
  %v1632 = vmul.f32 %v1568, 0.3275911
  %v1633 = vmul.f32 %v1569, 0.3275911
  %v1634 = vmul.f32 %v1570, 0.3275911
  %v1635 = vmul.f32 %v1571, 0.3275911
  %v1636 = vmul.f32 %v1572, 0.3275911
  %v1637 = vmul.f32 %v1573, 0.3275911
  %v1638 = vmul.f32 %v1574, 0.3275911
  %v1639 = vmul.f32 %v1575, 0.3275911
  %v1640 = vmul.f32 %v1576, 0.3275911
  %v1641 = vmul.f32 %v1577, 0.3275911
  %v1642 = vmul.f32 %v1578, 0.3275911
  %v1643 = vmul.f32 %v1579, 0.3275911
  %v1644 = vmul.f32 %v1580, 0.3275911
  %v1645 = vmul.f32 %v1581, 0.3275911
  %v1646 = vmul.f32 %v1582, 0.3275911
  %v1647 = vadd.f32 %v1583, 1.0
  %v1648 = vadd.f32 %v1584, 1.0
  %v1649 = vadd.f32 %v1585, 1.0
  %v1650 = vadd.f32 %v1586, 1.0
  %v1651 = vadd.f32 %v1587, 1.0
  %v1652 = vadd.f32 %v1588, 1.0
  %v1653 = vadd.f32 %v1589, 1.0
  %v1654 = vadd.f32 %v1590, 1.0
  %v1655 = vadd.f32 %v1591, 1.0
  %v1656 = vadd.f32 %v1592, 1.0
  %v1657 = vadd.f32 %v1593, 1.0
  %v1658 = vadd.f32 %v1594, 1.0
  %v1659 = vadd.f32 %v1595, 1.0
  %v1660 = vadd.f32 %v1596, 1.0
  %v1661 = vadd.f32 %v1597, 1.0
  %v1662 = vadd.f32 %v1598, 1.0
  %v1663 = vadd.f32 %v1599, 1.0
  %v1664 = vadd.f32 %v1600, 1.0
  %v1665 = vadd.f32 %v1601, 1.0
  %v1666 = vadd.f32 %v1602, 1.0
  %v1667 = vadd.f32 %v1603, 1.0
  %v1668 = vadd.f32 %v1604, 1.0
  %v1669 = vadd.f32 %v1605, 1.0
  %v1670 = vadd.f32 %v1606, 1.0
  %v1671 = vadd.f32 %v1607, 1.0
  %v1672 = vadd.f32 %v1608, 1.0
  %v1673 = vadd.f32 %v1609, 1.0
  %v1674 = vadd.f32 %v1610, 1.0
  %v1675 = vadd.f32 %v1611, 1.0
  %v1676 = vadd.f32 %v1612, 1.0
  %v1677 = vadd.f32 %v1613, 1.0
  %v1678 = vadd.f32 %v1614, 1.0
  %v1679 = vadd.f32 %v1615, 1.0
  %v1680 = vadd.f32 %v1616, 1.0
  %v1681 = vadd.f32 %v1617, 1.0
  %v1682 = vadd.f32 %v1618, 1.0
  %v1683 = vadd.f32 %v1619, 1.0
  %v1684 = vadd.f32 %v1620, 1.0
  %v1685 = vadd.f32 %v1621, 1.0
  %v1686 = vadd.f32 %v1622, 1.0
  %v1687 = vadd.f32 %v1623, 1.0
  %v1688 = vadd.f32 %v1624, 1.0
  %v1689 = vadd.f32 %v1625, 1.0
  %v1690 = vadd.f32 %v1626, 1.0
  %v1691 = vadd.f32 %v1627, 1.0
  %v1692 = vadd.f32 %v1628, 1.0
  %v1693 = vadd.f32 %v1629, 1.0
  %v1694 = vadd.f32 %v1630, 1.0
  %v1695 = vadd.f32 %v1631, 1.0
  %v1696 = vadd.f32 %v1632, 1.0
  %v1697 = vadd.f32 %v1633, 1.0
  %v1698 = vadd.f32 %v1634, 1.0
  %v1699 = vadd.f32 %v1635, 1.0
  %v1700 = vadd.f32 %v1636, 1.0
  %v1701 = vadd.f32 %v1637, 1.0
  %v1702 = vadd.f32 %v1638, 1.0
  %v1703 = vadd.f32 %v1639, 1.0
  %v1704 = vadd.f32 %v1640, 1.0
  %v1705 = vadd.f32 %v1641, 1.0
  %v1706 = vadd.f32 %v1642, 1.0
  %v1707 = vadd.f32 %v1643, 1.0
  %v1708 = vadd.f32 %v1644, 1.0
  %v1709 = vadd.f32 %v1645, 1.0
  %v1710 = vadd.f32 %v1646, 1.0
  %v1711 = vrcp.pop %v1647
  %v1712 = vmul.f32 %v1647, %v1711
  %v1713 = vsub.f32 1.0, %v1712
  %v1714 = vmul.f32 %v1711, %v1713
  %v1715 = vadd.f32 %v1711, %v1714
  %vm1716 = vweird.f32 %v1647
  %vm1717 = vweird.f32 %v1711
  %vm1718 = vmor %vm1716, %vm1717
  %v1719 = vsel %vm1718, %v1711, %v1715
  %v1720 = vand.u32 2147483647, %v1647
  %vm1721 = vcmp.eq.f32.partialorder %v1720, 8.507059e+37
  %v1722 = vand.u32 %v1647, 2147483648
  %v1723 = vor.u32 1.1754944e-38, %v1722
  %v1724 = vsel %vm1721, %v1723, %v1719
  %v1725 = vmul.f32 1.0, %v1724
  %v1726 = vrcp.pop %v1648
  %v1727 = vmul.f32 %v1648, %v1726
  %v1728 = vsub.f32 1.0, %v1727
  %v1729 = vmul.f32 %v1726, %v1728
  %v1730 = vadd.f32 %v1726, %v1729
  %vm1731 = vweird.f32 %v1648
  %vm1732 = vweird.f32 %v1726
  %vm1733 = vmor %vm1731, %vm1732
  %v1734 = vsel %vm1733, %v1726, %v1730
  %v1735 = vand.u32 2147483647, %v1648
  %vm1736 = vcmp.eq.f32.partialorder %v1735, 8.507059e+37
  %v1737 = vand.u32 %v1648, 2147483648
  %v1738 = vor.u32 1.1754944e-38, %v1737
  %v1739 = vsel %vm1736, %v1738, %v1734
  %v1740 = vmul.f32 1.0, %v1739
  %v1741 = vrcp.pop %v1649
  %v1742 = vmul.f32 %v1649, %v1741
  %v1743 = vsub.f32 1.0, %v1742
  %v1744 = vmul.f32 %v1741, %v1743
  %v1745 = vadd.f32 %v1741, %v1744
  %vm1746 = vweird.f32 %v1649
  %vm1747 = vweird.f32 %v1741
  %vm1748 = vmor %vm1746, %vm1747
  %v1749 = vsel %vm1748, %v1741, %v1745
  %v1750 = vand.u32 2147483647, %v1649
  %vm1751 = vcmp.eq.f32.partialorder %v1750, 8.507059e+37
  %v1752 = vand.u32 %v1649, 2147483648
  %v1753 = vor.u32 1.1754944e-38, %v1752
  %v1754 = vsel %vm1751, %v1753, %v1749
  %v1755 = vmul.f32 1.0, %v1754
  %v1756 = vrcp.pop %v1650
  %v1757 = vmul.f32 %v1650, %v1756
  %v1758 = vsub.f32 1.0, %v1757
  %v1759 = vmul.f32 %v1756, %v1758
  %v1760 = vadd.f32 %v1756, %v1759
  %vm1761 = vweird.f32 %v1650
  %vm1762 = vweird.f32 %v1756
  %vm1763 = vmor %vm1761, %vm1762
  %v1764 = vsel %vm1763, %v1756, %v1760
  %v1765 = vand.u32 2147483647, %v1650
  %vm1766 = vcmp.eq.f32.partialorder %v1765, 8.507059e+37
  %v1767 = vand.u32 %v1650, 2147483648
  %v1768 = vor.u32 1.1754944e-38, %v1767
  %v1769 = vsel %vm1766, %v1768, %v1764
  %v1770 = vmul.f32 1.0, %v1769
  %v1771 = vrcp.pop %v1651
  %v1772 = vmul.f32 %v1651, %v1771
  %v1773 = vsub.f32 1.0, %v1772
  %v1774 = vmul.f32 %v1771, %v1773
  %v1775 = vadd.f32 %v1771, %v1774
  %vm1776 = vweird.f32 %v1651
  %vm1777 = vweird.f32 %v1771
  %vm1778 = vmor %vm1776, %vm1777
  %v1779 = vsel %vm1778, %v1771, %v1775
  %v1780 = vand.u32 2147483647, %v1651
  %vm1781 = vcmp.eq.f32.partialorder %v1780, 8.507059e+37
  %v1782 = vand.u32 %v1651, 2147483648
  %v1783 = vor.u32 1.1754944e-38, %v1782
  %v1784 = vsel %vm1781, %v1783, %v1779
  %v1785 = vmul.f32 1.0, %v1784
  %v1786 = vrcp.pop %v1652
  %v1787 = vmul.f32 %v1652, %v1786
  %v1788 = vsub.f32 1.0, %v1787
  %v1789 = vmul.f32 %v1786, %v1788
  %v1790 = vadd.f32 %v1786, %v1789
  %vm1791 = vweird.f32 %v1652
  %vm1792 = vweird.f32 %v1786
  %vm1793 = vmor %vm1791, %vm1792
  %v1794 = vsel %vm1793, %v1786, %v1790
  %v1795 = vand.u32 2147483647, %v1652
  %vm1796 = vcmp.eq.f32.partialorder %v1795, 8.507059e+37
  %v1797 = vand.u32 %v1652, 2147483648
  %v1798 = vor.u32 1.1754944e-38, %v1797
  %v1799 = vsel %vm1796, %v1798, %v1794
  %v1800 = vmul.f32 1.0, %v1799
  %v1801 = vrcp.pop %v1653
  %v1802 = vmul.f32 %v1653, %v1801
  %v1803 = vsub.f32 1.0, %v1802
  %v1804 = vmul.f32 %v1801, %v1803
  %v1805 = vadd.f32 %v1801, %v1804
  %vm1806 = vweird.f32 %v1653
  %vm1807 = vweird.f32 %v1801
  %vm1808 = vmor %vm1806, %vm1807
  %v1809 = vsel %vm1808, %v1801, %v1805
  %v1810 = vand.u32 2147483647, %v1653
  %vm1811 = vcmp.eq.f32.partialorder %v1810, 8.507059e+37
  %v1812 = vand.u32 %v1653, 2147483648
  %v1813 = vor.u32 1.1754944e-38, %v1812
  %v1814 = vsel %vm1811, %v1813, %v1809
  %v1815 = vmul.f32 1.0, %v1814
  %v1816 = vrcp.pop %v1654
  %v1817 = vmul.f32 %v1654, %v1816
  %v1818 = vsub.f32 1.0, %v1817
  %v1819 = vmul.f32 %v1816, %v1818
  %v1820 = vadd.f32 %v1816, %v1819
  %vm1821 = vweird.f32 %v1654
  %vm1822 = vweird.f32 %v1816
  %vm1823 = vmor %vm1821, %vm1822
  %v1824 = vsel %vm1823, %v1816, %v1820
  %v1825 = vand.u32 2147483647, %v1654
  %vm1826 = vcmp.eq.f32.partialorder %v1825, 8.507059e+37
  %v1827 = vand.u32 %v1654, 2147483648
  %v1828 = vor.u32 1.1754944e-38, %v1827
  %v1829 = vsel %vm1826, %v1828, %v1824
  %v1830 = vmul.f32 1.0, %v1829
  %v1831 = vrcp.pop %v1655
  %v1832 = vmul.f32 %v1655, %v1831
  %v1833 = vsub.f32 1.0, %v1832
  %v1834 = vmul.f32 %v1831, %v1833
  %v1835 = vadd.f32 %v1831, %v1834
  %vm1836 = vweird.f32 %v1655
  %vm1837 = vweird.f32 %v1831
  %vm1838 = vmor %vm1836, %vm1837
  %v1839 = vsel %vm1838, %v1831, %v1835
  %v1840 = vand.u32 2147483647, %v1655
  %vm1841 = vcmp.eq.f32.partialorder %v1840, 8.507059e+37
  %v1842 = vand.u32 %v1655, 2147483648
  %v1843 = vor.u32 1.1754944e-38, %v1842
  %v1844 = vsel %vm1841, %v1843, %v1839
  %v1845 = vmul.f32 1.0, %v1844
  %v1846 = vrcp.pop %v1656
  %v1847 = vmul.f32 %v1656, %v1846
  %v1848 = vsub.f32 1.0, %v1847
  %v1849 = vmul.f32 %v1846, %v1848
  %v1850 = vadd.f32 %v1846, %v1849
  %vm1851 = vweird.f32 %v1656
  %vm1852 = vweird.f32 %v1846
  %vm1853 = vmor %vm1851, %vm1852
  %v1854 = vsel %vm1853, %v1846, %v1850
  %v1855 = vand.u32 2147483647, %v1656
  %vm1856 = vcmp.eq.f32.partialorder %v1855, 8.507059e+37
  %v1857 = vand.u32 %v1656, 2147483648
  %v1858 = vor.u32 1.1754944e-38, %v1857
  %v1859 = vsel %vm1856, %v1858, %v1854
  %v1860 = vmul.f32 1.0, %v1859
  %v1861 = vrcp.pop %v1657
  %v1862 = vmul.f32 %v1657, %v1861
  %v1863 = vsub.f32 1.0, %v1862
  %v1864 = vmul.f32 %v1861, %v1863
  %v1865 = vadd.f32 %v1861, %v1864
  %vm1866 = vweird.f32 %v1657
  %vm1867 = vweird.f32 %v1861
  %vm1868 = vmor %vm1866, %vm1867
  %v1869 = vsel %vm1868, %v1861, %v1865
  %v1870 = vand.u32 2147483647, %v1657
  %vm1871 = vcmp.eq.f32.partialorder %v1870, 8.507059e+37
  %v1872 = vand.u32 %v1657, 2147483648
  %v1873 = vor.u32 1.1754944e-38, %v1872
  %v1874 = vsel %vm1871, %v1873, %v1869
  %v1875 = vmul.f32 1.0, %v1874
  %v1876 = vrcp.pop %v1658
  %v1877 = vmul.f32 %v1658, %v1876
  %v1878 = vsub.f32 1.0, %v1877
  %v1879 = vmul.f32 %v1876, %v1878
  %v1880 = vadd.f32 %v1876, %v1879
  %vm1881 = vweird.f32 %v1658
  %vm1882 = vweird.f32 %v1876
  %vm1883 = vmor %vm1881, %vm1882
  %v1884 = vsel %vm1883, %v1876, %v1880
  %v1885 = vand.u32 2147483647, %v1658
  %vm1886 = vcmp.eq.f32.partialorder %v1885, 8.507059e+37
  %v1887 = vand.u32 %v1658, 2147483648
  %v1888 = vor.u32 1.1754944e-38, %v1887
  %v1889 = vsel %vm1886, %v1888, %v1884
  %v1890 = vmul.f32 1.0, %v1889
  %v1891 = vrcp.pop %v1659
  %v1892 = vmul.f32 %v1659, %v1891
  %v1893 = vsub.f32 1.0, %v1892
  %v1894 = vmul.f32 %v1891, %v1893
  %v1895 = vadd.f32 %v1891, %v1894
  %vm1896 = vweird.f32 %v1659
  %vm1897 = vweird.f32 %v1891
  %vm1898 = vmor %vm1896, %vm1897
  %v1899 = vsel %vm1898, %v1891, %v1895
  %v1900 = vand.u32 2147483647, %v1659
  %vm1901 = vcmp.eq.f32.partialorder %v1900, 8.507059e+37
  %v1902 = vand.u32 %v1659, 2147483648
  %v1903 = vor.u32 1.1754944e-38, %v1902
  %v1904 = vsel %vm1901, %v1903, %v1899
  %v1905 = vmul.f32 1.0, %v1904
  %v1906 = vrcp.pop %v1660
  %v1907 = vmul.f32 %v1660, %v1906
  %v1908 = vsub.f32 1.0, %v1907
  %v1909 = vmul.f32 %v1906, %v1908
  %v1910 = vadd.f32 %v1906, %v1909
  %vm1911 = vweird.f32 %v1660
  %vm1912 = vweird.f32 %v1906
  %vm1913 = vmor %vm1911, %vm1912
  %v1914 = vsel %vm1913, %v1906, %v1910
  %v1915 = vand.u32 2147483647, %v1660
  %vm1916 = vcmp.eq.f32.partialorder %v1915, 8.507059e+37
  %v1917 = vand.u32 %v1660, 2147483648
  %v1918 = vor.u32 1.1754944e-38, %v1917
  %v1919 = vsel %vm1916, %v1918, %v1914
  %v1920 = vmul.f32 1.0, %v1919
  %v1921 = vrcp.pop %v1661
  %v1922 = vmul.f32 %v1661, %v1921
  %v1923 = vsub.f32 1.0, %v1922
  %v1924 = vmul.f32 %v1921, %v1923
  %v1925 = vadd.f32 %v1921, %v1924
  %vm1926 = vweird.f32 %v1661
  %vm1927 = vweird.f32 %v1921
  %vm1928 = vmor %vm1926, %vm1927
  %v1929 = vsel %vm1928, %v1921, %v1925
  %v1930 = vand.u32 2147483647, %v1661
  %vm1931 = vcmp.eq.f32.partialorder %v1930, 8.507059e+37
  %v1932 = vand.u32 %v1661, 2147483648
  %v1933 = vor.u32 1.1754944e-38, %v1932
  %v1934 = vsel %vm1931, %v1933, %v1929
  %v1935 = vmul.f32 1.0, %v1934
  %v1936 = vrcp.pop %v1662
  %v1937 = vmul.f32 %v1662, %v1936
  %v1938 = vsub.f32 1.0, %v1937
  %v1939 = vmul.f32 %v1936, %v1938
  %v1940 = vadd.f32 %v1936, %v1939
  %vm1941 = vweird.f32 %v1662
  %vm1942 = vweird.f32 %v1936
  %vm1943 = vmor %vm1941, %vm1942
  %v1944 = vsel %vm1943, %v1936, %v1940
  %v1945 = vand.u32 2147483647, %v1662
  %vm1946 = vcmp.eq.f32.partialorder %v1945, 8.507059e+37
  %v1947 = vand.u32 %v1662, 2147483648
  %v1948 = vor.u32 1.1754944e-38, %v1947
  %v1949 = vsel %vm1946, %v1948, %v1944
  %v1950 = vmul.f32 1.0, %v1949
  %v1951 = vrcp.pop %v1663
  %v1952 = vmul.f32 %v1663, %v1951
  %v1953 = vsub.f32 1.0, %v1952
  %v1954 = vmul.f32 %v1951, %v1953
  %v1955 = vadd.f32 %v1951, %v1954
  %vm1956 = vweird.f32 %v1663
  %vm1957 = vweird.f32 %v1951
  %vm1958 = vmor %vm1956, %vm1957
  %v1959 = vsel %vm1958, %v1951, %v1955
  %v1960 = vand.u32 2147483647, %v1663
  %vm1961 = vcmp.eq.f32.partialorder %v1960, 8.507059e+37
  %v1962 = vand.u32 %v1663, 2147483648
  %v1963 = vor.u32 1.1754944e-38, %v1962
  %v1964 = vsel %vm1961, %v1963, %v1959
  %v1965 = vmul.f32 1.0, %v1964
  %v1966 = vrcp.pop %v1664
  %v1967 = vmul.f32 %v1664, %v1966
  %v1968 = vsub.f32 1.0, %v1967
  %v1969 = vmul.f32 %v1966, %v1968
  %v1970 = vadd.f32 %v1966, %v1969
  %vm1971 = vweird.f32 %v1664
  %vm1972 = vweird.f32 %v1966
  %vm1973 = vmor %vm1971, %vm1972
  %v1974 = vsel %vm1973, %v1966, %v1970
  %v1975 = vand.u32 2147483647, %v1664
  %vm1976 = vcmp.eq.f32.partialorder %v1975, 8.507059e+37
  %v1977 = vand.u32 %v1664, 2147483648
  %v1978 = vor.u32 1.1754944e-38, %v1977
  %v1979 = vsel %vm1976, %v1978, %v1974
  %v1980 = vmul.f32 1.0, %v1979
  %v1981 = vrcp.pop %v1665
  %v1982 = vmul.f32 %v1665, %v1981
  %v1983 = vsub.f32 1.0, %v1982
  %v1984 = vmul.f32 %v1981, %v1983
  %v1985 = vadd.f32 %v1981, %v1984
  %vm1986 = vweird.f32 %v1665
  %vm1987 = vweird.f32 %v1981
  %vm1988 = vmor %vm1986, %vm1987
  %v1989 = vsel %vm1988, %v1981, %v1985
  %v1990 = vand.u32 2147483647, %v1665
  %vm1991 = vcmp.eq.f32.partialorder %v1990, 8.507059e+37
  %v1992 = vand.u32 %v1665, 2147483648
  %v1993 = vor.u32 1.1754944e-38, %v1992
  %v1994 = vsel %vm1991, %v1993, %v1989
  %v1995 = vmul.f32 1.0, %v1994
  %v1996 = vrcp.pop %v1666
  %v1997 = vmul.f32 %v1666, %v1996
  %v1998 = vsub.f32 1.0, %v1997
  %v1999 = vmul.f32 %v1996, %v1998
  %v2000 = vadd.f32 %v1996, %v1999
  %vm2001 = vweird.f32 %v1666
  %vm2002 = vweird.f32 %v1996
  %vm2003 = vmor %vm2001, %vm2002
  %v2004 = vsel %vm2003, %v1996, %v2000
  %v2005 = vand.u32 2147483647, %v1666
  %vm2006 = vcmp.eq.f32.partialorder %v2005, 8.507059e+37
  %v2007 = vand.u32 %v1666, 2147483648
  %v2008 = vor.u32 1.1754944e-38, %v2007
  %v2009 = vsel %vm2006, %v2008, %v2004
  %v2010 = vmul.f32 1.0, %v2009
  %v2011 = vrcp.pop %v1667
  %v2012 = vmul.f32 %v1667, %v2011
  %v2013 = vsub.f32 1.0, %v2012
  %v2014 = vmul.f32 %v2011, %v2013
  %v2015 = vadd.f32 %v2011, %v2014
  %vm2016 = vweird.f32 %v1667
  %vm2017 = vweird.f32 %v2011
  %vm2018 = vmor %vm2016, %vm2017
  %v2019 = vsel %vm2018, %v2011, %v2015
  %v2020 = vand.u32 2147483647, %v1667
  %vm2021 = vcmp.eq.f32.partialorder %v2020, 8.507059e+37
  %v2022 = vand.u32 %v1667, 2147483648
  %v2023 = vor.u32 1.1754944e-38, %v2022
  %v2024 = vsel %vm2021, %v2023, %v2019
  %v2025 = vmul.f32 1.0, %v2024
  %v2026 = vrcp.pop %v1668
  %v2027 = vmul.f32 %v1668, %v2026
  %v2028 = vsub.f32 1.0, %v2027
  %v2029 = vmul.f32 %v2026, %v2028
  %v2030 = vadd.f32 %v2026, %v2029
  %vm2031 = vweird.f32 %v1668
  %vm2032 = vweird.f32 %v2026
  %vm2033 = vmor %vm2031, %vm2032
  %v2034 = vsel %vm2033, %v2026, %v2030
  %v2035 = vand.u32 2147483647, %v1668
  %vm2036 = vcmp.eq.f32.partialorder %v2035, 8.507059e+37
  %v2037 = vand.u32 %v1668, 2147483648
  %v2038 = vor.u32 1.1754944e-38, %v2037
  %v2039 = vsel %vm2036, %v2038, %v2034
  %v2040 = vmul.f32 1.0, %v2039
  %v2041 = vrcp.pop %v1669
  %v2042 = vmul.f32 %v1669, %v2041
  %v2043 = vsub.f32 1.0, %v2042
  %v2044 = vmul.f32 %v2041, %v2043
  %v2045 = vadd.f32 %v2041, %v2044
  %vm2046 = vweird.f32 %v1669
  %vm2047 = vweird.f32 %v2041
  %vm2048 = vmor %vm2046, %vm2047
  %v2049 = vsel %vm2048, %v2041, %v2045
  %v2050 = vand.u32 2147483647, %v1669
  %vm2051 = vcmp.eq.f32.partialorder %v2050, 8.507059e+37
  %v2052 = vand.u32 %v1669, 2147483648
  %v2053 = vor.u32 1.1754944e-38, %v2052
  %v2054 = vsel %vm2051, %v2053, %v2049
  %v2055 = vmul.f32 1.0, %v2054
  %v2056 = vrcp.pop %v1670
  %v2057 = vmul.f32 %v1670, %v2056
  %v2058 = vsub.f32 1.0, %v2057
  %v2059 = vmul.f32 %v2056, %v2058
  %v2060 = vadd.f32 %v2056, %v2059
  %vm2061 = vweird.f32 %v1670
  %vm2062 = vweird.f32 %v2056
  %vm2063 = vmor %vm2061, %vm2062
  %v2064 = vsel %vm2063, %v2056, %v2060
  %v2065 = vand.u32 2147483647, %v1670
  %vm2066 = vcmp.eq.f32.partialorder %v2065, 8.507059e+37
  %v2067 = vand.u32 %v1670, 2147483648
  %v2068 = vor.u32 1.1754944e-38, %v2067
  %v2069 = vsel %vm2066, %v2068, %v2064
  %v2070 = vmul.f32 1.0, %v2069
  %v2071 = vrcp.pop %v1671
  %v2072 = vmul.f32 %v1671, %v2071
  %v2073 = vsub.f32 1.0, %v2072
  %v2074 = vmul.f32 %v2071, %v2073
  %v2075 = vadd.f32 %v2071, %v2074
  %vm2076 = vweird.f32 %v1671
  %vm2077 = vweird.f32 %v2071
  %vm2078 = vmor %vm2076, %vm2077
  %v2079 = vsel %vm2078, %v2071, %v2075
  %v2080 = vand.u32 2147483647, %v1671
  %vm2081 = vcmp.eq.f32.partialorder %v2080, 8.507059e+37
  %v2082 = vand.u32 %v1671, 2147483648
  %v2083 = vor.u32 1.1754944e-38, %v2082
  %v2084 = vsel %vm2081, %v2083, %v2079
  %v2085 = vmul.f32 1.0, %v2084
  %v2086 = vrcp.pop %v1672
  %v2087 = vmul.f32 %v1672, %v2086
  %v2088 = vsub.f32 1.0, %v2087
  %v2089 = vmul.f32 %v2086, %v2088
  %v2090 = vadd.f32 %v2086, %v2089
  %vm2091 = vweird.f32 %v1672
  %vm2092 = vweird.f32 %v2086
  %vm2093 = vmor %vm2091, %vm2092
  %v2094 = vsel %vm2093, %v2086, %v2090
  %v2095 = vand.u32 2147483647, %v1672
  %vm2096 = vcmp.eq.f32.partialorder %v2095, 8.507059e+37
  %v2097 = vand.u32 %v1672, 2147483648
  %v2098 = vor.u32 1.1754944e-38, %v2097
  %v2099 = vsel %vm2096, %v2098, %v2094
  %v2100 = vmul.f32 1.0, %v2099
  %v2101 = vrcp.pop %v1673
  %v2102 = vmul.f32 %v1673, %v2101
  %v2103 = vsub.f32 1.0, %v2102
  %v2104 = vmul.f32 %v2101, %v2103
  %v2105 = vadd.f32 %v2101, %v2104
  %vm2106 = vweird.f32 %v1673
  %vm2107 = vweird.f32 %v2101
  %vm2108 = vmor %vm2106, %vm2107
  %v2109 = vsel %vm2108, %v2101, %v2105
  %v2110 = vand.u32 2147483647, %v1673
  %vm2111 = vcmp.eq.f32.partialorder %v2110, 8.507059e+37
  %v2112 = vand.u32 %v1673, 2147483648
  %v2113 = vor.u32 1.1754944e-38, %v2112
  %v2114 = vsel %vm2111, %v2113, %v2109
  %v2115 = vmul.f32 1.0, %v2114
  %v2116 = vrcp.pop %v1674
  %v2117 = vmul.f32 %v1674, %v2116
  %v2118 = vsub.f32 1.0, %v2117
  %v2119 = vmul.f32 %v2116, %v2118
  %v2120 = vadd.f32 %v2116, %v2119
  %vm2121 = vweird.f32 %v1674
  %vm2122 = vweird.f32 %v2116
  %vm2123 = vmor %vm2121, %vm2122
  %v2124 = vsel %vm2123, %v2116, %v2120
  %v2125 = vand.u32 2147483647, %v1674
  %vm2126 = vcmp.eq.f32.partialorder %v2125, 8.507059e+37
  %v2127 = vand.u32 %v1674, 2147483648
  %v2128 = vor.u32 1.1754944e-38, %v2127
  %v2129 = vsel %vm2126, %v2128, %v2124
  %v2130 = vmul.f32 1.0, %v2129
  %v2131 = vrcp.pop %v1675
  %v2132 = vmul.f32 %v1675, %v2131
  %v2133 = vsub.f32 1.0, %v2132
  %v2134 = vmul.f32 %v2131, %v2133
  %v2135 = vadd.f32 %v2131, %v2134
  %vm2136 = vweird.f32 %v1675
  %vm2137 = vweird.f32 %v2131
  %vm2138 = vmor %vm2136, %vm2137
  %v2139 = vsel %vm2138, %v2131, %v2135
  %v2140 = vand.u32 2147483647, %v1675
  %vm2141 = vcmp.eq.f32.partialorder %v2140, 8.507059e+37
  %v2142 = vand.u32 %v1675, 2147483648
  %v2143 = vor.u32 1.1754944e-38, %v2142
  %v2144 = vsel %vm2141, %v2143, %v2139
  %v2145 = vmul.f32 1.0, %v2144
  %v2146 = vrcp.pop %v1676
  %v2147 = vmul.f32 %v1676, %v2146
  %v2148 = vsub.f32 1.0, %v2147
  %v2149 = vmul.f32 %v2146, %v2148
  %v2150 = vadd.f32 %v2146, %v2149
  %vm2151 = vweird.f32 %v1676
  %vm2152 = vweird.f32 %v2146
  %vm2153 = vmor %vm2151, %vm2152
  %v2154 = vsel %vm2153, %v2146, %v2150
  %v2155 = vand.u32 2147483647, %v1676
  %vm2156 = vcmp.eq.f32.partialorder %v2155, 8.507059e+37
  %v2157 = vand.u32 %v1676, 2147483648
  %v2158 = vor.u32 1.1754944e-38, %v2157
  %v2159 = vsel %vm2156, %v2158, %v2154
  %v2160 = vmul.f32 1.0, %v2159
  %v2161 = vrcp.pop %v1677
  %v2162 = vmul.f32 %v1677, %v2161
  %v2163 = vsub.f32 1.0, %v2162
  %v2164 = vmul.f32 %v2161, %v2163
  %v2165 = vadd.f32 %v2161, %v2164
  %vm2166 = vweird.f32 %v1677
  %vm2167 = vweird.f32 %v2161
  %vm2168 = vmor %vm2166, %vm2167
  %v2169 = vsel %vm2168, %v2161, %v2165
  %v2170 = vand.u32 2147483647, %v1677
  %vm2171 = vcmp.eq.f32.partialorder %v2170, 8.507059e+37
  %v2172 = vand.u32 %v1677, 2147483648
  %v2173 = vor.u32 1.1754944e-38, %v2172
  %v2174 = vsel %vm2171, %v2173, %v2169
  %v2175 = vmul.f32 1.0, %v2174
  %v2176 = vrcp.pop %v1678
  %v2177 = vmul.f32 %v1678, %v2176
  %v2178 = vsub.f32 1.0, %v2177
  %v2179 = vmul.f32 %v2176, %v2178
  %v2180 = vadd.f32 %v2176, %v2179
  %vm2181 = vweird.f32 %v1678
  %vm2182 = vweird.f32 %v2176
  %vm2183 = vmor %vm2181, %vm2182
  %v2184 = vsel %vm2183, %v2176, %v2180
  %v2185 = vand.u32 2147483647, %v1678
  %vm2186 = vcmp.eq.f32.partialorder %v2185, 8.507059e+37
  %v2187 = vand.u32 %v1678, 2147483648
  %v2188 = vor.u32 1.1754944e-38, %v2187
  %v2189 = vsel %vm2186, %v2188, %v2184
  %v2190 = vmul.f32 1.0, %v2189
  %v2191 = vrcp.pop %v1679
  %v2192 = vmul.f32 %v1679, %v2191
  %v2193 = vsub.f32 1.0, %v2192
  %v2194 = vmul.f32 %v2191, %v2193
  %v2195 = vadd.f32 %v2191, %v2194
  %vm2196 = vweird.f32 %v1679
  %vm2197 = vweird.f32 %v2191
  %vm2198 = vmor %vm2196, %vm2197
  %v2199 = vsel %vm2198, %v2191, %v2195
  %v2200 = vand.u32 2147483647, %v1679
  %vm2201 = vcmp.eq.f32.partialorder %v2200, 8.507059e+37
  %v2202 = vand.u32 %v1679, 2147483648
  %v2203 = vor.u32 1.1754944e-38, %v2202
  %v2204 = vsel %vm2201, %v2203, %v2199
  %v2205 = vmul.f32 1.0, %v2204
  %v2206 = vrcp.pop %v1680
  %v2207 = vmul.f32 %v1680, %v2206
  %v2208 = vsub.f32 1.0, %v2207
  %v2209 = vmul.f32 %v2206, %v2208
  %v2210 = vadd.f32 %v2206, %v2209
  %vm2211 = vweird.f32 %v1680
  %vm2212 = vweird.f32 %v2206
  %vm2213 = vmor %vm2211, %vm2212
  %v2214 = vsel %vm2213, %v2206, %v2210
  %v2215 = vand.u32 2147483647, %v1680
  %vm2216 = vcmp.eq.f32.partialorder %v2215, 8.507059e+37
  %v2217 = vand.u32 %v1680, 2147483648
  %v2218 = vor.u32 1.1754944e-38, %v2217
  %v2219 = vsel %vm2216, %v2218, %v2214
  %v2220 = vmul.f32 1.0, %v2219
  %v2221 = vrcp.pop %v1681
  %v2222 = vmul.f32 %v1681, %v2221
  %v2223 = vsub.f32 1.0, %v2222
  %v2224 = vmul.f32 %v2221, %v2223
  %v2225 = vadd.f32 %v2221, %v2224
  %vm2226 = vweird.f32 %v1681
  %vm2227 = vweird.f32 %v2221
  %vm2228 = vmor %vm2226, %vm2227
  %v2229 = vsel %vm2228, %v2221, %v2225
  %v2230 = vand.u32 2147483647, %v1681
  %vm2231 = vcmp.eq.f32.partialorder %v2230, 8.507059e+37
  %v2232 = vand.u32 %v1681, 2147483648
  %v2233 = vor.u32 1.1754944e-38, %v2232
  %v2234 = vsel %vm2231, %v2233, %v2229
  %v2235 = vmul.f32 1.0, %v2234
  %v2236 = vrcp.pop %v1682
  %v2237 = vmul.f32 %v1682, %v2236
  %v2238 = vsub.f32 1.0, %v2237
  %v2239 = vmul.f32 %v2236, %v2238
  %v2240 = vadd.f32 %v2236, %v2239
  %vm2241 = vweird.f32 %v1682
  %vm2242 = vweird.f32 %v2236
  %vm2243 = vmor %vm2241, %vm2242
  %v2244 = vsel %vm2243, %v2236, %v2240
  %v2245 = vand.u32 2147483647, %v1682
  %vm2246 = vcmp.eq.f32.partialorder %v2245, 8.507059e+37
  %v2247 = vand.u32 %v1682, 2147483648
  %v2248 = vor.u32 1.1754944e-38, %v2247
  %v2249 = vsel %vm2246, %v2248, %v2244
  %v2250 = vmul.f32 1.0, %v2249
  %v2251 = vrcp.pop %v1683
  %v2252 = vmul.f32 %v1683, %v2251
  %v2253 = vsub.f32 1.0, %v2252
  %v2254 = vmul.f32 %v2251, %v2253
  %v2255 = vadd.f32 %v2251, %v2254
  %vm2256 = vweird.f32 %v1683
  %vm2257 = vweird.f32 %v2251
  %vm2258 = vmor %vm2256, %vm2257
  %v2259 = vsel %vm2258, %v2251, %v2255
  %v2260 = vand.u32 2147483647, %v1683
  %vm2261 = vcmp.eq.f32.partialorder %v2260, 8.507059e+37
  %v2262 = vand.u32 %v1683, 2147483648
  %v2263 = vor.u32 1.1754944e-38, %v2262
  %v2264 = vsel %vm2261, %v2263, %v2259
  %v2265 = vmul.f32 1.0, %v2264
  %v2266 = vrcp.pop %v1684
  %v2267 = vmul.f32 %v1684, %v2266
  %v2268 = vsub.f32 1.0, %v2267
  %v2269 = vmul.f32 %v2266, %v2268
  %v2270 = vadd.f32 %v2266, %v2269
  %vm2271 = vweird.f32 %v1684
  %vm2272 = vweird.f32 %v2266
  %vm2273 = vmor %vm2271, %vm2272
  %v2274 = vsel %vm2273, %v2266, %v2270
  %v2275 = vand.u32 2147483647, %v1684
  %vm2276 = vcmp.eq.f32.partialorder %v2275, 8.507059e+37
  %v2277 = vand.u32 %v1684, 2147483648
  %v2278 = vor.u32 1.1754944e-38, %v2277
  %v2279 = vsel %vm2276, %v2278, %v2274
  %v2280 = vmul.f32 1.0, %v2279
  %v2281 = vrcp.pop %v1685
  %v2282 = vmul.f32 %v1685, %v2281
  %v2283 = vsub.f32 1.0, %v2282
  %v2284 = vmul.f32 %v2281, %v2283
  %v2285 = vadd.f32 %v2281, %v2284
  %vm2286 = vweird.f32 %v1685
  %vm2287 = vweird.f32 %v2281
  %vm2288 = vmor %vm2286, %vm2287
  %v2289 = vsel %vm2288, %v2281, %v2285
  %v2290 = vand.u32 2147483647, %v1685
  %vm2291 = vcmp.eq.f32.partialorder %v2290, 8.507059e+37
  %v2292 = vand.u32 %v1685, 2147483648
  %v2293 = vor.u32 1.1754944e-38, %v2292
  %v2294 = vsel %vm2291, %v2293, %v2289
  %v2295 = vmul.f32 1.0, %v2294
  %v2296 = vrcp.pop %v1686
  %v2297 = vmul.f32 %v1686, %v2296
  %v2298 = vsub.f32 1.0, %v2297
  %v2299 = vmul.f32 %v2296, %v2298
  %v2300 = vadd.f32 %v2296, %v2299
  %vm2301 = vweird.f32 %v1686
  %vm2302 = vweird.f32 %v2296
  %vm2303 = vmor %vm2301, %vm2302
  %v2304 = vsel %vm2303, %v2296, %v2300
  %v2305 = vand.u32 2147483647, %v1686
  %vm2306 = vcmp.eq.f32.partialorder %v2305, 8.507059e+37
  %v2307 = vand.u32 %v1686, 2147483648
  %v2308 = vor.u32 1.1754944e-38, %v2307
  %v2309 = vsel %vm2306, %v2308, %v2304
  %v2310 = vmul.f32 1.0, %v2309
  %v2311 = vrcp.pop %v1687
  %v2312 = vmul.f32 %v1687, %v2311
  %v2313 = vsub.f32 1.0, %v2312
  %v2314 = vmul.f32 %v2311, %v2313
  %v2315 = vadd.f32 %v2311, %v2314
  %vm2316 = vweird.f32 %v1687
  %vm2317 = vweird.f32 %v2311
  %vm2318 = vmor %vm2316, %vm2317
  %v2319 = vsel %vm2318, %v2311, %v2315
  %v2320 = vand.u32 2147483647, %v1687
  %vm2321 = vcmp.eq.f32.partialorder %v2320, 8.507059e+37
  %v2322 = vand.u32 %v1687, 2147483648
  %v2323 = vor.u32 1.1754944e-38, %v2322
  %v2324 = vsel %vm2321, %v2323, %v2319
  %v2325 = vmul.f32 1.0, %v2324
  %v2326 = vrcp.pop %v1688
  %v2327 = vmul.f32 %v1688, %v2326
  %v2328 = vsub.f32 1.0, %v2327
  %v2329 = vmul.f32 %v2326, %v2328
  %v2330 = vadd.f32 %v2326, %v2329
  %vm2331 = vweird.f32 %v1688
  %vm2332 = vweird.f32 %v2326
  %vm2333 = vmor %vm2331, %vm2332
  %v2334 = vsel %vm2333, %v2326, %v2330
  %v2335 = vand.u32 2147483647, %v1688
  %vm2336 = vcmp.eq.f32.partialorder %v2335, 8.507059e+37
  %v2337 = vand.u32 %v1688, 2147483648
  %v2338 = vor.u32 1.1754944e-38, %v2337
  %v2339 = vsel %vm2336, %v2338, %v2334
  %v2340 = vmul.f32 1.0, %v2339
  %v2341 = vrcp.pop %v1689
  %v2342 = vmul.f32 %v1689, %v2341
  %v2343 = vsub.f32 1.0, %v2342
  %v2344 = vmul.f32 %v2341, %v2343
  %v2345 = vadd.f32 %v2341, %v2344
  %vm2346 = vweird.f32 %v1689
  %vm2347 = vweird.f32 %v2341
  %vm2348 = vmor %vm2346, %vm2347
  %v2349 = vsel %vm2348, %v2341, %v2345
  %v2350 = vand.u32 2147483647, %v1689
  %vm2351 = vcmp.eq.f32.partialorder %v2350, 8.507059e+37
  %v2352 = vand.u32 %v1689, 2147483648
  %v2353 = vor.u32 1.1754944e-38, %v2352
  %v2354 = vsel %vm2351, %v2353, %v2349
  %v2355 = vmul.f32 1.0, %v2354
  %v2356 = vrcp.pop %v1690
  %v2357 = vmul.f32 %v1690, %v2356
  %v2358 = vsub.f32 1.0, %v2357
  %v2359 = vmul.f32 %v2356, %v2358
  %v2360 = vadd.f32 %v2356, %v2359
  %vm2361 = vweird.f32 %v1690
  %vm2362 = vweird.f32 %v2356
  %vm2363 = vmor %vm2361, %vm2362
  %v2364 = vsel %vm2363, %v2356, %v2360
  %v2365 = vand.u32 2147483647, %v1690
  %vm2366 = vcmp.eq.f32.partialorder %v2365, 8.507059e+37
  %v2367 = vand.u32 %v1690, 2147483648
  %v2368 = vor.u32 1.1754944e-38, %v2367
  %v2369 = vsel %vm2366, %v2368, %v2364
  %v2370 = vmul.f32 1.0, %v2369
  %v2371 = vrcp.pop %v1691
  %v2372 = vmul.f32 %v1691, %v2371
  %v2373 = vsub.f32 1.0, %v2372
  %v2374 = vmul.f32 %v2371, %v2373
  %v2375 = vadd.f32 %v2371, %v2374
  %vm2376 = vweird.f32 %v1691
  %vm2377 = vweird.f32 %v2371
  %vm2378 = vmor %vm2376, %vm2377
  %v2379 = vsel %vm2378, %v2371, %v2375
  %v2380 = vand.u32 2147483647, %v1691
  %vm2381 = vcmp.eq.f32.partialorder %v2380, 8.507059e+37
  %v2382 = vand.u32 %v1691, 2147483648
  %v2383 = vor.u32 1.1754944e-38, %v2382
  %v2384 = vsel %vm2381, %v2383, %v2379
  %v2385 = vmul.f32 1.0, %v2384
  %v2386 = vrcp.pop %v1692
  %v2387 = vmul.f32 %v1692, %v2386
  %v2388 = vsub.f32 1.0, %v2387
  %v2389 = vmul.f32 %v2386, %v2388
  %v2390 = vadd.f32 %v2386, %v2389
  %vm2391 = vweird.f32 %v1692
  %vm2392 = vweird.f32 %v2386
  %vm2393 = vmor %vm2391, %vm2392
  %v2394 = vsel %vm2393, %v2386, %v2390
  %v2395 = vand.u32 2147483647, %v1692
  %vm2396 = vcmp.eq.f32.partialorder %v2395, 8.507059e+37
  %v2397 = vand.u32 %v1692, 2147483648
  %v2398 = vor.u32 1.1754944e-38, %v2397
  %v2399 = vsel %vm2396, %v2398, %v2394
  %v2400 = vmul.f32 1.0, %v2399
  %v2401 = vrcp.pop %v1693
  %v2402 = vmul.f32 %v1693, %v2401
  %v2403 = vsub.f32 1.0, %v2402
  %v2404 = vmul.f32 %v2401, %v2403
  %v2405 = vadd.f32 %v2401, %v2404
  %vm2406 = vweird.f32 %v1693
  %vm2407 = vweird.f32 %v2401
  %vm2408 = vmor %vm2406, %vm2407
  %v2409 = vsel %vm2408, %v2401, %v2405
  %v2410 = vand.u32 2147483647, %v1693
  %vm2411 = vcmp.eq.f32.partialorder %v2410, 8.507059e+37
  %v2412 = vand.u32 %v1693, 2147483648
  %v2413 = vor.u32 1.1754944e-38, %v2412
  %v2414 = vsel %vm2411, %v2413, %v2409
  %v2415 = vmul.f32 1.0, %v2414
  %v2416 = vrcp.pop %v1694
  %v2417 = vmul.f32 %v1694, %v2416
  %v2418 = vsub.f32 1.0, %v2417
  %v2419 = vmul.f32 %v2416, %v2418
  %v2420 = vadd.f32 %v2416, %v2419
  %vm2421 = vweird.f32 %v1694
  %vm2422 = vweird.f32 %v2416
  %vm2423 = vmor %vm2421, %vm2422
  %v2424 = vsel %vm2423, %v2416, %v2420
  %v2425 = vand.u32 2147483647, %v1694
  %vm2426 = vcmp.eq.f32.partialorder %v2425, 8.507059e+37
  %v2427 = vand.u32 %v1694, 2147483648
  %v2428 = vor.u32 1.1754944e-38, %v2427
  %v2429 = vsel %vm2426, %v2428, %v2424
  %v2430 = vmul.f32 1.0, %v2429
  %v2431 = vrcp.pop %v1695
  %v2432 = vmul.f32 %v1695, %v2431
  %v2433 = vsub.f32 1.0, %v2432
  %v2434 = vmul.f32 %v2431, %v2433
  %v2435 = vadd.f32 %v2431, %v2434
  %vm2436 = vweird.f32 %v1695
  %vm2437 = vweird.f32 %v2431
  %vm2438 = vmor %vm2436, %vm2437
  %v2439 = vsel %vm2438, %v2431, %v2435
  %v2440 = vand.u32 2147483647, %v1695
  %vm2441 = vcmp.eq.f32.partialorder %v2440, 8.507059e+37
  %v2442 = vand.u32 %v1695, 2147483648
  %v2443 = vor.u32 1.1754944e-38, %v2442
  %v2444 = vsel %vm2441, %v2443, %v2439
  %v2445 = vmul.f32 1.0, %v2444
  %v2446 = vrcp.pop %v1696
  %v2447 = vmul.f32 %v1696, %v2446
  %v2448 = vsub.f32 1.0, %v2447
  %v2449 = vmul.f32 %v2446, %v2448
  %v2450 = vadd.f32 %v2446, %v2449
  %vm2451 = vweird.f32 %v1696
  %vm2452 = vweird.f32 %v2446
  %vm2453 = vmor %vm2451, %vm2452
  %v2454 = vsel %vm2453, %v2446, %v2450
  %v2455 = vand.u32 2147483647, %v1696
  %vm2456 = vcmp.eq.f32.partialorder %v2455, 8.507059e+37
  %v2457 = vand.u32 %v1696, 2147483648
  %v2458 = vor.u32 1.1754944e-38, %v2457
  %v2459 = vsel %vm2456, %v2458, %v2454
  %v2460 = vmul.f32 1.0, %v2459
  %v2461 = vrcp.pop %v1697
  %v2462 = vmul.f32 %v1697, %v2461
  %v2463 = vsub.f32 1.0, %v2462
  %v2464 = vmul.f32 %v2461, %v2463
  %v2465 = vadd.f32 %v2461, %v2464
  %vm2466 = vweird.f32 %v1697
  %vm2467 = vweird.f32 %v2461
  %vm2468 = vmor %vm2466, %vm2467
  %v2469 = vsel %vm2468, %v2461, %v2465
  %v2470 = vand.u32 2147483647, %v1697
  %vm2471 = vcmp.eq.f32.partialorder %v2470, 8.507059e+37
  %v2472 = vand.u32 %v1697, 2147483648
  %v2473 = vor.u32 1.1754944e-38, %v2472
  %v2474 = vsel %vm2471, %v2473, %v2469
  %v2475 = vmul.f32 1.0, %v2474
  %v2476 = vrcp.pop %v1698
  %v2477 = vmul.f32 %v1698, %v2476
  %v2478 = vsub.f32 1.0, %v2477
  %v2479 = vmul.f32 %v2476, %v2478
  %v2480 = vadd.f32 %v2476, %v2479
  %vm2481 = vweird.f32 %v1698
  %vm2482 = vweird.f32 %v2476
  %vm2483 = vmor %vm2481, %vm2482
  %v2484 = vsel %vm2483, %v2476, %v2480
  %v2485 = vand.u32 2147483647, %v1698
  %vm2486 = vcmp.eq.f32.partialorder %v2485, 8.507059e+37
  %v2487 = vand.u32 %v1698, 2147483648
  %v2488 = vor.u32 1.1754944e-38, %v2487
  %v2489 = vsel %vm2486, %v2488, %v2484
  %v2490 = vmul.f32 1.0, %v2489
  %v2491 = vrcp.pop %v1699
  %v2492 = vmul.f32 %v1699, %v2491
  %v2493 = vsub.f32 1.0, %v2492
  %v2494 = vmul.f32 %v2491, %v2493
  %v2495 = vadd.f32 %v2491, %v2494
  %vm2496 = vweird.f32 %v1699
  %vm2497 = vweird.f32 %v2491
  %vm2498 = vmor %vm2496, %vm2497
  %v2499 = vsel %vm2498, %v2491, %v2495
  %v2500 = vand.u32 2147483647, %v1699
  %vm2501 = vcmp.eq.f32.partialorder %v2500, 8.507059e+37
  %v2502 = vand.u32 %v1699, 2147483648
  %v2503 = vor.u32 1.1754944e-38, %v2502
  %v2504 = vsel %vm2501, %v2503, %v2499
  %v2505 = vmul.f32 1.0, %v2504
  %v2506 = vrcp.pop %v1700
  %v2507 = vmul.f32 %v1700, %v2506
  %v2508 = vsub.f32 1.0, %v2507
  %v2509 = vmul.f32 %v2506, %v2508
  %v2510 = vadd.f32 %v2506, %v2509
  %vm2511 = vweird.f32 %v1700
  %vm2512 = vweird.f32 %v2506
  %vm2513 = vmor %vm2511, %vm2512
  %v2514 = vsel %vm2513, %v2506, %v2510
  %v2515 = vand.u32 2147483647, %v1700
  %vm2516 = vcmp.eq.f32.partialorder %v2515, 8.507059e+37
  %v2517 = vand.u32 %v1700, 2147483648
  %v2518 = vor.u32 1.1754944e-38, %v2517
  %v2519 = vsel %vm2516, %v2518, %v2514
  %v2520 = vmul.f32 1.0, %v2519
  %v2521 = vrcp.pop %v1701
  %v2522 = vmul.f32 %v1701, %v2521
  %v2523 = vsub.f32 1.0, %v2522
  %v2524 = vmul.f32 %v2521, %v2523
  %v2525 = vadd.f32 %v2521, %v2524
  %vm2526 = vweird.f32 %v1701
  %vm2527 = vweird.f32 %v2521
  %vm2528 = vmor %vm2526, %vm2527
  %v2529 = vsel %vm2528, %v2521, %v2525
  %v2530 = vand.u32 2147483647, %v1701
  %vm2531 = vcmp.eq.f32.partialorder %v2530, 8.507059e+37
  %v2532 = vand.u32 %v1701, 2147483648
  %v2533 = vor.u32 1.1754944e-38, %v2532
  %v2534 = vsel %vm2531, %v2533, %v2529
  %v2535 = vmul.f32 1.0, %v2534
  %v2536 = vrcp.pop %v1702
  %v2537 = vmul.f32 %v1702, %v2536
  %v2538 = vsub.f32 1.0, %v2537
  %v2539 = vmul.f32 %v2536, %v2538
  %v2540 = vadd.f32 %v2536, %v2539
  %vm2541 = vweird.f32 %v1702
  %vm2542 = vweird.f32 %v2536
  %vm2543 = vmor %vm2541, %vm2542
  %v2544 = vsel %vm2543, %v2536, %v2540
  %v2545 = vand.u32 2147483647, %v1702
  %vm2546 = vcmp.eq.f32.partialorder %v2545, 8.507059e+37
  %v2547 = vand.u32 %v1702, 2147483648
  %v2548 = vor.u32 1.1754944e-38, %v2547
  %v2549 = vsel %vm2546, %v2548, %v2544
  %v2550 = vmul.f32 1.0, %v2549
  %v2551 = vrcp.pop %v1703
  %v2552 = vmul.f32 %v1703, %v2551
  %v2553 = vsub.f32 1.0, %v2552
  %v2554 = vmul.f32 %v2551, %v2553
  %v2555 = vadd.f32 %v2551, %v2554
  %vm2556 = vweird.f32 %v1703
  %vm2557 = vweird.f32 %v2551
  %vm2558 = vmor %vm2556, %vm2557
  %v2559 = vsel %vm2558, %v2551, %v2555
  %v2560 = vand.u32 2147483647, %v1703
  %vm2561 = vcmp.eq.f32.partialorder %v2560, 8.507059e+37
  %v2562 = vand.u32 %v1703, 2147483648
  %v2563 = vor.u32 1.1754944e-38, %v2562
  %v2564 = vsel %vm2561, %v2563, %v2559
  %v2565 = vmul.f32 1.0, %v2564
  %v2566 = vrcp.pop %v1704
  %v2567 = vmul.f32 %v1704, %v2566
  %v2568 = vsub.f32 1.0, %v2567
  %v2569 = vmul.f32 %v2566, %v2568
  %v2570 = vadd.f32 %v2566, %v2569
  %vm2571 = vweird.f32 %v1704
  %vm2572 = vweird.f32 %v2566
  %vm2573 = vmor %vm2571, %vm2572
  %v2574 = vsel %vm2573, %v2566, %v2570
  %v2575 = vand.u32 2147483647, %v1704
  %vm2576 = vcmp.eq.f32.partialorder %v2575, 8.507059e+37
  %v2577 = vand.u32 %v1704, 2147483648
  %v2578 = vor.u32 1.1754944e-38, %v2577
  %v2579 = vsel %vm2576, %v2578, %v2574
  %v2580 = vmul.f32 1.0, %v2579
  %v2581 = vrcp.pop %v1705
  %v2582 = vmul.f32 %v1705, %v2581
  %v2583 = vsub.f32 1.0, %v2582
  %v2584 = vmul.f32 %v2581, %v2583
  %v2585 = vadd.f32 %v2581, %v2584
  %vm2586 = vweird.f32 %v1705
  %vm2587 = vweird.f32 %v2581
  %vm2588 = vmor %vm2586, %vm2587
  %v2589 = vsel %vm2588, %v2581, %v2585
  %v2590 = vand.u32 2147483647, %v1705
  %vm2591 = vcmp.eq.f32.partialorder %v2590, 8.507059e+37
  %v2592 = vand.u32 %v1705, 2147483648
  %v2593 = vor.u32 1.1754944e-38, %v2592
  %v2594 = vsel %vm2591, %v2593, %v2589
  %v2595 = vmul.f32 1.0, %v2594
  %v2596 = vrcp.pop %v1706
  %v2597 = vmul.f32 %v1706, %v2596
  %v2598 = vsub.f32 1.0, %v2597
  %v2599 = vmul.f32 %v2596, %v2598
  %v2600 = vadd.f32 %v2596, %v2599
  %vm2601 = vweird.f32 %v1706
  %vm2602 = vweird.f32 %v2596
  %vm2603 = vmor %vm2601, %vm2602
  %v2604 = vsel %vm2603, %v2596, %v2600
  %v2605 = vand.u32 2147483647, %v1706
  %vm2606 = vcmp.eq.f32.partialorder %v2605, 8.507059e+37
  %v2607 = vand.u32 %v1706, 2147483648
  %v2608 = vor.u32 1.1754944e-38, %v2607
  %v2609 = vsel %vm2606, %v2608, %v2604
  %v2610 = vmul.f32 1.0, %v2609
  %v2611 = vrcp.pop %v1707
  %v2612 = vmul.f32 %v1707, %v2611
  %v2613 = vsub.f32 1.0, %v2612
  %v2614 = vmul.f32 %v2611, %v2613
  %v2615 = vadd.f32 %v2611, %v2614
  %vm2616 = vweird.f32 %v1707
  %vm2617 = vweird.f32 %v2611
  %vm2618 = vmor %vm2616, %vm2617
  %v2619 = vsel %vm2618, %v2611, %v2615
  %v2620 = vand.u32 2147483647, %v1707
  %vm2621 = vcmp.eq.f32.partialorder %v2620, 8.507059e+37
  %v2622 = vand.u32 %v1707, 2147483648
  %v2623 = vor.u32 1.1754944e-38, %v2622
  %v2624 = vsel %vm2621, %v2623, %v2619
  %v2625 = vmul.f32 1.0, %v2624
  %v2626 = vrcp.pop %v1708
  %v2627 = vmul.f32 %v1708, %v2626
  %v2628 = vsub.f32 1.0, %v2627
  %v2629 = vmul.f32 %v2626, %v2628
  %v2630 = vadd.f32 %v2626, %v2629
  %vm2631 = vweird.f32 %v1708
  %vm2632 = vweird.f32 %v2626
  %vm2633 = vmor %vm2631, %vm2632
  %v2634 = vsel %vm2633, %v2626, %v2630
  %v2635 = vand.u32 2147483647, %v1708
  %vm2636 = vcmp.eq.f32.partialorder %v2635, 8.507059e+37
  %v2637 = vand.u32 %v1708, 2147483648
  %v2638 = vor.u32 1.1754944e-38, %v2637
  %v2639 = vsel %vm2636, %v2638, %v2634
  %v2640 = vmul.f32 1.0, %v2639
  %v2641 = vrcp.pop %v1709
  %v2642 = vmul.f32 %v1709, %v2641
  %v2643 = vsub.f32 1.0, %v2642
  %v2644 = vmul.f32 %v2641, %v2643
  %v2645 = vadd.f32 %v2641, %v2644
  %vm2646 = vweird.f32 %v1709
  %vm2647 = vweird.f32 %v2641
  %vm2648 = vmor %vm2646, %vm2647
  %v2649 = vsel %vm2648, %v2641, %v2645
  %v2650 = vand.u32 2147483647, %v1709
  %vm2651 = vcmp.eq.f32.partialorder %v2650, 8.507059e+37
  %v2652 = vand.u32 %v1709, 2147483648
  %v2653 = vor.u32 1.1754944e-38, %v2652
  %v2654 = vsel %vm2651, %v2653, %v2649
  %v2655 = vmul.f32 1.0, %v2654
  %v2656 = vrcp.pop %v1710
  %v2657 = vmul.f32 %v1710, %v2656
  %v2658 = vsub.f32 1.0, %v2657
  %v2659 = vmul.f32 %v2656, %v2658
  %v2660 = vadd.f32 %v2656, %v2659
  %vm2661 = vweird.f32 %v1710
  %vm2662 = vweird.f32 %v2656
  %vm2663 = vmor %vm2661, %vm2662
  %v2664 = vsel %vm2663, %v2656, %v2660
  %v2665 = vand.u32 2147483647, %v1710
  %vm2666 = vcmp.eq.f32.partialorder %v2665, 8.507059e+37
  %v2667 = vand.u32 %v1710, 2147483648
  %v2668 = vor.u32 1.1754944e-38, %v2667
  %v2669 = vsel %vm2666, %v2668, %v2664
  %v2670 = vmul.f32 1.0, %v2669
  %v2671 = vmul.f32 %v1725, 1.0614054
  %v2672 = vmul.f32 %v1740, 1.0614054
  %v2673 = vmul.f32 %v1755, 1.0614054
  %v2674 = vmul.f32 %v1770, 1.0614054
  %v2675 = vmul.f32 %v1785, 1.0614054
  %v2676 = vmul.f32 %v1800, 1.0614054
  %v2677 = vmul.f32 %v1815, 1.0614054
  %v2678 = vmul.f32 %v1830, 1.0614054
  %v2679 = vmul.f32 %v1845, 1.0614054
  %v2680 = vmul.f32 %v1860, 1.0614054
  %v2681 = vmul.f32 %v1875, 1.0614054
  %v2682 = vmul.f32 %v1890, 1.0614054
  %v2683 = vmul.f32 %v1905, 1.0614054
  %v2684 = vmul.f32 %v1920, 1.0614054
  %v2685 = vmul.f32 %v1935, 1.0614054
  %v2686 = vmul.f32 %v1950, 1.0614054
  %v2687 = vmul.f32 %v1965, 1.0614054
  %v2688 = vmul.f32 %v1980, 1.0614054
  %v2689 = vmul.f32 %v1995, 1.0614054
  %v2690 = vmul.f32 %v2010, 1.0614054
  %v2691 = vmul.f32 %v2025, 1.0614054
  %v2692 = vmul.f32 %v2040, 1.0614054
  %v2693 = vmul.f32 %v2055, 1.0614054
  %v2694 = vmul.f32 %v2070, 1.0614054
  %v2695 = vmul.f32 %v2085, 1.0614054
  %v2696 = vmul.f32 %v2100, 1.0614054
  %v2697 = vmul.f32 %v2115, 1.0614054
  %v2698 = vmul.f32 %v2130, 1.0614054
  %v2699 = vmul.f32 %v2145, 1.0614054
  %v2700 = vmul.f32 %v2160, 1.0614054
  %v2701 = vmul.f32 %v2175, 1.0614054
  %v2702 = vmul.f32 %v2190, 1.0614054
  %v2703 = vmul.f32 %v2205, 1.0614054
  %v2704 = vmul.f32 %v2220, 1.0614054
  %v2705 = vmul.f32 %v2235, 1.0614054
  %v2706 = vmul.f32 %v2250, 1.0614054
  %v2707 = vmul.f32 %v2265, 1.0614054
  %v2708 = vmul.f32 %v2280, 1.0614054
  %v2709 = vmul.f32 %v2295, 1.0614054
  %v2710 = vmul.f32 %v2310, 1.0614054
  %v2711 = vmul.f32 %v2325, 1.0614054
  %v2712 = vmul.f32 %v2340, 1.0614054
  %v2713 = vmul.f32 %v2355, 1.0614054
  %v2714 = vmul.f32 %v2370, 1.0614054
  %v2715 = vmul.f32 %v2385, 1.0614054
  %v2716 = vmul.f32 %v2400, 1.0614054
  %v2717 = vmul.f32 %v2415, 1.0614054
  %v2718 = vmul.f32 %v2430, 1.0614054
  %v2719 = vmul.f32 %v2445, 1.0614054
  %v2720 = vmul.f32 %v2460, 1.0614054
  %v2721 = vmul.f32 %v2475, 1.0614054
  %v2722 = vmul.f32 %v2490, 1.0614054
  %v2723 = vmul.f32 %v2505, 1.0614054
  %v2724 = vmul.f32 %v2520, 1.0614054
  %v2725 = vmul.f32 %v2535, 1.0614054
  %v2726 = vmul.f32 %v2550, 1.0614054
  %v2727 = vmul.f32 %v2565, 1.0614054
  %v2728 = vmul.f32 %v2580, 1.0614054
  %v2729 = vmul.f32 %v2595, 1.0614054
  %v2730 = vmul.f32 %v2610, 1.0614054
  %v2731 = vmul.f32 %v2625, 1.0614054
  %v2732 = vmul.f32 %v2640, 1.0614054
  %v2733 = vmul.f32 %v2655, 1.0614054
  %v2734 = vmul.f32 %v2670, 1.0614054
  %v2735 = vadd.f32 %v2671, -1.4531521
  %v2736 = vadd.f32 %v2672, -1.4531521
  %v2737 = vadd.f32 %v2673, -1.4531521
  %v2738 = vadd.f32 %v2674, -1.4531521
  %v2739 = vadd.f32 %v2675, -1.4531521
  %v2740 = vadd.f32 %v2676, -1.4531521
  %v2741 = vadd.f32 %v2677, -1.4531521
  %v2742 = vadd.f32 %v2678, -1.4531521
  %v2743 = vadd.f32 %v2679, -1.4531521
  %v2744 = vadd.f32 %v2680, -1.4531521
  %v2745 = vadd.f32 %v2681, -1.4531521
  %v2746 = vadd.f32 %v2682, -1.4531521
  %v2747 = vadd.f32 %v2683, -1.4531521
  %v2748 = vadd.f32 %v2684, -1.4531521
  %v2749 = vadd.f32 %v2685, -1.4531521
  %v2750 = vadd.f32 %v2686, -1.4531521
  %v2751 = vadd.f32 %v2687, -1.4531521
  %v2752 = vadd.f32 %v2688, -1.4531521
  %v2753 = vadd.f32 %v2689, -1.4531521
  %v2754 = vadd.f32 %v2690, -1.4531521
  %v2755 = vadd.f32 %v2691, -1.4531521
  %v2756 = vadd.f32 %v2692, -1.4531521
  %v2757 = vadd.f32 %v2693, -1.4531521
  %v2758 = vadd.f32 %v2694, -1.4531521
  %v2759 = vadd.f32 %v2695, -1.4531521
  %v2760 = vadd.f32 %v2696, -1.4531521
  %v2761 = vadd.f32 %v2697, -1.4531521
  %v2762 = vadd.f32 %v2698, -1.4531521
  %v2763 = vadd.f32 %v2699, -1.4531521
  %v2764 = vadd.f32 %v2700, -1.4531521
  %v2765 = vadd.f32 %v2701, -1.4531521
  %v2766 = vadd.f32 %v2702, -1.4531521
  %v2767 = vadd.f32 %v2703, -1.4531521
  %v2768 = vadd.f32 %v2704, -1.4531521
  %v2769 = vadd.f32 %v2705, -1.4531521
  %v2770 = vadd.f32 %v2706, -1.4531521
  %v2771 = vadd.f32 %v2707, -1.4531521
  %v2772 = vadd.f32 %v2708, -1.4531521
  %v2773 = vadd.f32 %v2709, -1.4531521
  %v2774 = vadd.f32 %v2710, -1.4531521
  %v2775 = vadd.f32 %v2711, -1.4531521
  %v2776 = vadd.f32 %v2712, -1.4531521
  %v2777 = vadd.f32 %v2713, -1.4531521
  %v2778 = vadd.f32 %v2714, -1.4531521
  %v2779 = vadd.f32 %v2715, -1.4531521
  %v2780 = vadd.f32 %v2716, -1.4531521
  %v2781 = vadd.f32 %v2717, -1.4531521
  %v2782 = vadd.f32 %v2718, -1.4531521
  %v2783 = vadd.f32 %v2719, -1.4531521
  %v2784 = vadd.f32 %v2720, -1.4531521
  %v2785 = vadd.f32 %v2721, -1.4531521
  %v2786 = vadd.f32 %v2722, -1.4531521
  %v2787 = vadd.f32 %v2723, -1.4531521
  %v2788 = vadd.f32 %v2724, -1.4531521
  %v2789 = vadd.f32 %v2725, -1.4531521
  %v2790 = vadd.f32 %v2726, -1.4531521
  %v2791 = vadd.f32 %v2727, -1.4531521
  %v2792 = vadd.f32 %v2728, -1.4531521
  %v2793 = vadd.f32 %v2729, -1.4531521
  %v2794 = vadd.f32 %v2730, -1.4531521
  %v2795 = vadd.f32 %v2731, -1.4531521
  %v2796 = vadd.f32 %v2732, -1.4531521
  %v2797 = vadd.f32 %v2733, -1.4531521
  %v2798 = vadd.f32 %v2734, -1.4531521
  %v2799 = vmul.f32 %v2735, %v1725
  %v2800 = vmul.f32 %v2736, %v1740
  %v2801 = vmul.f32 %v2737, %v1755
  %v2802 = vmul.f32 %v2738, %v1770
  %v2803 = vmul.f32 %v2739, %v1785
  %v2804 = vmul.f32 %v2740, %v1800
  %v2805 = vmul.f32 %v2741, %v1815
  %v2806 = vmul.f32 %v2742, %v1830
  %v2807 = vmul.f32 %v2743, %v1845
  %v2808 = vmul.f32 %v2744, %v1860
  %v2809 = vmul.f32 %v2745, %v1875
  %v2810 = vmul.f32 %v2746, %v1890
  %v2811 = vmul.f32 %v2747, %v1905
  %v2812 = vmul.f32 %v2748, %v1920
  %v2813 = vmul.f32 %v2749, %v1935
  %v2814 = vmul.f32 %v2750, %v1950
  %v2815 = vmul.f32 %v2751, %v1965
  %v2816 = vmul.f32 %v2752, %v1980
  %v2817 = vmul.f32 %v2753, %v1995
  %v2818 = vmul.f32 %v2754, %v2010
  %v2819 = vmul.f32 %v2755, %v2025
  %v2820 = vmul.f32 %v2756, %v2040
  %v2821 = vmul.f32 %v2757, %v2055
  %v2822 = vmul.f32 %v2758, %v2070
  %v2823 = vmul.f32 %v2759, %v2085
  %v2824 = vmul.f32 %v2760, %v2100
  %v2825 = vmul.f32 %v2761, %v2115
  %v2826 = vmul.f32 %v2762, %v2130
  %v2827 = vmul.f32 %v2763, %v2145
  %v2828 = vmul.f32 %v2764, %v2160
  %v2829 = vmul.f32 %v2765, %v2175
  %v2830 = vmul.f32 %v2766, %v2190
  %v2831 = vmul.f32 %v2767, %v2205
  %v2832 = vmul.f32 %v2768, %v2220
  %v2833 = vmul.f32 %v2769, %v2235
  %v2834 = vmul.f32 %v2770, %v2250
  %v2835 = vmul.f32 %v2771, %v2265
  %v2836 = vmul.f32 %v2772, %v2280
  %v2837 = vmul.f32 %v2773, %v2295
  %v2838 = vmul.f32 %v2774, %v2310
  %v2839 = vmul.f32 %v2775, %v2325
  %v2840 = vmul.f32 %v2776, %v2340
  %v2841 = vmul.f32 %v2777, %v2355
  %v2842 = vmul.f32 %v2778, %v2370
  %v2843 = vmul.f32 %v2779, %v2385
  %v2844 = vmul.f32 %v2780, %v2400
  %v2845 = vmul.f32 %v2781, %v2415
  %v2846 = vmul.f32 %v2782, %v2430
  %v2847 = vmul.f32 %v2783, %v2445
  %v2848 = vmul.f32 %v2784, %v2460
  %v2849 = vmul.f32 %v2785, %v2475
  %v2850 = vmul.f32 %v2786, %v2490
  %v2851 = vmul.f32 %v2787, %v2505
  %v2852 = vmul.f32 %v2788, %v2520
  %v2853 = vmul.f32 %v2789, %v2535
  %v2854 = vmul.f32 %v2790, %v2550
  %v2855 = vmul.f32 %v2791, %v2565
  %v2856 = vmul.f32 %v2792, %v2580
  %v2857 = vmul.f32 %v2793, %v2595
  %v2858 = vmul.f32 %v2794, %v2610
  %v2859 = vmul.f32 %v2795, %v2625
  %v2860 = vmul.f32 %v2796, %v2640
  %v2861 = vmul.f32 %v2797, %v2655
  %v2862 = vmul.f32 %v2798, %v2670
  %v2863 = vadd.f32 %v2799, 1.4214138
  %v2864 = vadd.f32 %v2800, 1.4214138
  %v2865 = vadd.f32 %v2801, 1.4214138
  %v2866 = vadd.f32 %v2802, 1.4214138
  %v2867 = vadd.f32 %v2803, 1.4214138
  %v2868 = vadd.f32 %v2804, 1.4214138
  %v2869 = vadd.f32 %v2805, 1.4214138
  %v2870 = vadd.f32 %v2806, 1.4214138
  %v2871 = vadd.f32 %v2807, 1.4214138
  %v2872 = vadd.f32 %v2808, 1.4214138
  %v2873 = vadd.f32 %v2809, 1.4214138
  %v2874 = vadd.f32 %v2810, 1.4214138
  %v2875 = vadd.f32 %v2811, 1.4214138
  %v2876 = vadd.f32 %v2812, 1.4214138
  %v2877 = vadd.f32 %v2813, 1.4214138
  %v2878 = vadd.f32 %v2814, 1.4214138
  %v2879 = vadd.f32 %v2815, 1.4214138
  %v2880 = vadd.f32 %v2816, 1.4214138
  %v2881 = vadd.f32 %v2817, 1.4214138
  %v2882 = vadd.f32 %v2818, 1.4214138
  %v2883 = vadd.f32 %v2819, 1.4214138
  %v2884 = vadd.f32 %v2820, 1.4214138
  %v2885 = vadd.f32 %v2821, 1.4214138
  %v2886 = vadd.f32 %v2822, 1.4214138
  %v2887 = vadd.f32 %v2823, 1.4214138
  %v2888 = vadd.f32 %v2824, 1.4214138
  %v2889 = vadd.f32 %v2825, 1.4214138
  %v2890 = vadd.f32 %v2826, 1.4214138
  %v2891 = vadd.f32 %v2827, 1.4214138
  %v2892 = vadd.f32 %v2828, 1.4214138
  %v2893 = vadd.f32 %v2829, 1.4214138
  %v2894 = vadd.f32 %v2830, 1.4214138
  %v2895 = vadd.f32 %v2831, 1.4214138
  %v2896 = vadd.f32 %v2832, 1.4214138
  %v2897 = vadd.f32 %v2833, 1.4214138
  %v2898 = vadd.f32 %v2834, 1.4214138
  %v2899 = vadd.f32 %v2835, 1.4214138
  %v2900 = vadd.f32 %v2836, 1.4214138
  %v2901 = vadd.f32 %v2837, 1.4214138
  %v2902 = vadd.f32 %v2838, 1.4214138
  %v2903 = vadd.f32 %v2839, 1.4214138
  %v2904 = vadd.f32 %v2840, 1.4214138
  %v2905 = vadd.f32 %v2841, 1.4214138
  %v2906 = vadd.f32 %v2842, 1.4214138
  %v2907 = vadd.f32 %v2843, 1.4214138
  %v2908 = vadd.f32 %v2844, 1.4214138
  %v2909 = vadd.f32 %v2845, 1.4214138
  %v2910 = vadd.f32 %v2846, 1.4214138
  %v2911 = vadd.f32 %v2847, 1.4214138
  %v2912 = vadd.f32 %v2848, 1.4214138
  %v2913 = vadd.f32 %v2849, 1.4214138
  %v2914 = vadd.f32 %v2850, 1.4214138
  %v2915 = vadd.f32 %v2851, 1.4214138
  %v2916 = vadd.f32 %v2852, 1.4214138
  %v2917 = vadd.f32 %v2853, 1.4214138
  %v2918 = vadd.f32 %v2854, 1.4214138
  %v2919 = vadd.f32 %v2855, 1.4214138
  %v2920 = vadd.f32 %v2856, 1.4214138
  %v2921 = vadd.f32 %v2857, 1.4214138
  %v2922 = vadd.f32 %v2858, 1.4214138
  %v2923 = vadd.f32 %v2859, 1.4214138
  %v2924 = vadd.f32 %v2860, 1.4214138
  %v2925 = vadd.f32 %v2861, 1.4214138
  %v2926 = vadd.f32 %v2862, 1.4214138
  %v2927 = vmul.f32 %v2863, %v1725
  %v2928 = vmul.f32 %v2864, %v1740
  %v2929 = vmul.f32 %v2865, %v1755
  %v2930 = vmul.f32 %v2866, %v1770
  %v2931 = vmul.f32 %v2867, %v1785
  %v2932 = vmul.f32 %v2868, %v1800
  %v2933 = vmul.f32 %v2869, %v1815
  %v2934 = vmul.f32 %v2870, %v1830
  %v2935 = vmul.f32 %v2871, %v1845
  %v2936 = vmul.f32 %v2872, %v1860
  %v2937 = vmul.f32 %v2873, %v1875
  %v2938 = vmul.f32 %v2874, %v1890
  %v2939 = vmul.f32 %v2875, %v1905
  %v2940 = vmul.f32 %v2876, %v1920
  %v2941 = vmul.f32 %v2877, %v1935
  %v2942 = vmul.f32 %v2878, %v1950
  %v2943 = vmul.f32 %v2879, %v1965
  %v2944 = vmul.f32 %v2880, %v1980
  %v2945 = vmul.f32 %v2881, %v1995
  %v2946 = vmul.f32 %v2882, %v2010
  %v2947 = vmul.f32 %v2883, %v2025
  %v2948 = vmul.f32 %v2884, %v2040
  %v2949 = vmul.f32 %v2885, %v2055
  %v2950 = vmul.f32 %v2886, %v2070
  %v2951 = vmul.f32 %v2887, %v2085
  %v2952 = vmul.f32 %v2888, %v2100
  %v2953 = vmul.f32 %v2889, %v2115
  %v2954 = vmul.f32 %v2890, %v2130
  %v2955 = vmul.f32 %v2891, %v2145
  %v2956 = vmul.f32 %v2892, %v2160
  %v2957 = vmul.f32 %v2893, %v2175
  %v2958 = vmul.f32 %v2894, %v2190
  %v2959 = vmul.f32 %v2895, %v2205
  %v2960 = vmul.f32 %v2896, %v2220
  %v2961 = vmul.f32 %v2897, %v2235
  %v2962 = vmul.f32 %v2898, %v2250
  %v2963 = vmul.f32 %v2899, %v2265
  %v2964 = vmul.f32 %v2900, %v2280
  %v2965 = vmul.f32 %v2901, %v2295
  %v2966 = vmul.f32 %v2902, %v2310
  %v2967 = vmul.f32 %v2903, %v2325
  %v2968 = vmul.f32 %v2904, %v2340
  %v2969 = vmul.f32 %v2905, %v2355
  %v2970 = vmul.f32 %v2906, %v2370
  %v2971 = vmul.f32 %v2907, %v2385
  %v2972 = vmul.f32 %v2908, %v2400
  %v2973 = vmul.f32 %v2909, %v2415
  %v2974 = vmul.f32 %v2910, %v2430
  %v2975 = vmul.f32 %v2911, %v2445
  %v2976 = vmul.f32 %v2912, %v2460
  %v2977 = vmul.f32 %v2913, %v2475
  %v2978 = vmul.f32 %v2914, %v2490
  %v2979 = vmul.f32 %v2915, %v2505
  %v2980 = vmul.f32 %v2916, %v2520
  %v2981 = vmul.f32 %v2917, %v2535
  %v2982 = vmul.f32 %v2918, %v2550
  %v2983 = vmul.f32 %v2919, %v2565
  %v2984 = vmul.f32 %v2920, %v2580
  %v2985 = vmul.f32 %v2921, %v2595
  %v2986 = vmul.f32 %v2922, %v2610
  %v2987 = vmul.f32 %v2923, %v2625
  %v2988 = vmul.f32 %v2924, %v2640
  %v2989 = vmul.f32 %v2925, %v2655
  %v2990 = vmul.f32 %v2926, %v2670
  %v2991 = vadd.f32 %v2927, -0.28449672
  %v2992 = vadd.f32 %v2928, -0.28449672
  %v2993 = vadd.f32 %v2929, -0.28449672
  %v2994 = vadd.f32 %v2930, -0.28449672
  %v2995 = vadd.f32 %v2931, -0.28449672
  %v2996 = vadd.f32 %v2932, -0.28449672
  %v2997 = vadd.f32 %v2933, -0.28449672
  %v2998 = vadd.f32 %v2934, -0.28449672
  %v2999 = vadd.f32 %v2935, -0.28449672
  %v3000 = vadd.f32 %v2936, -0.28449672
  %v3001 = vadd.f32 %v2937, -0.28449672
  %v3002 = vadd.f32 %v2938, -0.28449672
  %v3003 = vadd.f32 %v2939, -0.28449672
  %v3004 = vadd.f32 %v2940, -0.28449672
  %v3005 = vadd.f32 %v2941, -0.28449672
  %v3006 = vadd.f32 %v2942, -0.28449672
  %v3007 = vadd.f32 %v2943, -0.28449672
  %v3008 = vadd.f32 %v2944, -0.28449672
  %v3009 = vadd.f32 %v2945, -0.28449672
  %v3010 = vadd.f32 %v2946, -0.28449672
  %v3011 = vadd.f32 %v2947, -0.28449672
  %v3012 = vadd.f32 %v2948, -0.28449672
  %v3013 = vadd.f32 %v2949, -0.28449672
  %v3014 = vadd.f32 %v2950, -0.28449672
  %v3015 = vadd.f32 %v2951, -0.28449672
  %v3016 = vadd.f32 %v2952, -0.28449672
  %v3017 = vadd.f32 %v2953, -0.28449672
  %v3018 = vadd.f32 %v2954, -0.28449672
  %v3019 = vadd.f32 %v2955, -0.28449672
  %v3020 = vadd.f32 %v2956, -0.28449672
  %v3021 = vadd.f32 %v2957, -0.28449672
  %v3022 = vadd.f32 %v2958, -0.28449672
  %v3023 = vadd.f32 %v2959, -0.28449672
  %v3024 = vadd.f32 %v2960, -0.28449672
  %v3025 = vadd.f32 %v2961, -0.28449672
  %v3026 = vadd.f32 %v2962, -0.28449672
  %v3027 = vadd.f32 %v2963, -0.28449672
  %v3028 = vadd.f32 %v2964, -0.28449672
  %v3029 = vadd.f32 %v2965, -0.28449672
  %v3030 = vadd.f32 %v2966, -0.28449672
  %v3031 = vadd.f32 %v2967, -0.28449672
  %v3032 = vadd.f32 %v2968, -0.28449672
  %v3033 = vadd.f32 %v2969, -0.28449672
  %v3034 = vadd.f32 %v2970, -0.28449672
  %v3035 = vadd.f32 %v2971, -0.28449672
  %v3036 = vadd.f32 %v2972, -0.28449672
  %v3037 = vadd.f32 %v2973, -0.28449672
  %v3038 = vadd.f32 %v2974, -0.28449672
  %v3039 = vadd.f32 %v2975, -0.28449672
  %v3040 = vadd.f32 %v2976, -0.28449672
  %v3041 = vadd.f32 %v2977, -0.28449672
  %v3042 = vadd.f32 %v2978, -0.28449672
  %v3043 = vadd.f32 %v2979, -0.28449672
  %v3044 = vadd.f32 %v2980, -0.28449672
  %v3045 = vadd.f32 %v2981, -0.28449672
  %v3046 = vadd.f32 %v2982, -0.28449672
  %v3047 = vadd.f32 %v2983, -0.28449672
  %v3048 = vadd.f32 %v2984, -0.28449672
  %v3049 = vadd.f32 %v2985, -0.28449672
  %v3050 = vadd.f32 %v2986, -0.28449672
  %v3051 = vadd.f32 %v2987, -0.28449672
  %v3052 = vadd.f32 %v2988, -0.28449672
  %v3053 = vadd.f32 %v2989, -0.28449672
  %v3054 = vadd.f32 %v2990, -0.28449672
  %v3055 = vmul.f32 %v2991, %v1725
  %v3056 = vmul.f32 %v2992, %v1740
  %v3057 = vmul.f32 %v2993, %v1755
  %v3058 = vmul.f32 %v2994, %v1770
  %v3059 = vmul.f32 %v2995, %v1785
  %v3060 = vmul.f32 %v2996, %v1800
  %v3061 = vmul.f32 %v2997, %v1815
  %v3062 = vmul.f32 %v2998, %v1830
  %v3063 = vmul.f32 %v2999, %v1845
  %v3064 = vmul.f32 %v3000, %v1860
  %v3065 = vmul.f32 %v3001, %v1875
  %v3066 = vmul.f32 %v3002, %v1890
  %v3067 = vmul.f32 %v3003, %v1905
  %v3068 = vmul.f32 %v3004, %v1920
  %v3069 = vmul.f32 %v3005, %v1935
  %v3070 = vmul.f32 %v3006, %v1950
  %v3071 = vmul.f32 %v3007, %v1965
  %v3072 = vmul.f32 %v3008, %v1980
  %v3073 = vmul.f32 %v3009, %v1995
  %v3074 = vmul.f32 %v3010, %v2010
  %v3075 = vmul.f32 %v3011, %v2025
  %v3076 = vmul.f32 %v3012, %v2040
  %v3077 = vmul.f32 %v3013, %v2055
  %v3078 = vmul.f32 %v3014, %v2070
  %v3079 = vmul.f32 %v3015, %v2085
  %v3080 = vmul.f32 %v3016, %v2100
  %v3081 = vmul.f32 %v3017, %v2115
  %v3082 = vmul.f32 %v3018, %v2130
  %v3083 = vmul.f32 %v3019, %v2145
  %v3084 = vmul.f32 %v3020, %v2160
  %v3085 = vmul.f32 %v3021, %v2175
  %v3086 = vmul.f32 %v3022, %v2190
  %v3087 = vmul.f32 %v3023, %v2205
  %v3088 = vmul.f32 %v3024, %v2220
  %v3089 = vmul.f32 %v3025, %v2235
  %v3090 = vmul.f32 %v3026, %v2250
  %v3091 = vmul.f32 %v3027, %v2265
  %v3092 = vmul.f32 %v3028, %v2280
  %v3093 = vmul.f32 %v3029, %v2295
  %v3094 = vmul.f32 %v3030, %v2310
  %v3095 = vmul.f32 %v3031, %v2325
  %v3096 = vmul.f32 %v3032, %v2340
  %v3097 = vmul.f32 %v3033, %v2355
  %v3098 = vmul.f32 %v3034, %v2370
  %v3099 = vmul.f32 %v3035, %v2385
  %v3100 = vmul.f32 %v3036, %v2400
  %v3101 = vmul.f32 %v3037, %v2415
  %v3102 = vmul.f32 %v3038, %v2430
  %v3103 = vmul.f32 %v3039, %v2445
  %v3104 = vmul.f32 %v3040, %v2460
  %v3105 = vmul.f32 %v3041, %v2475
  %v3106 = vmul.f32 %v3042, %v2490
  %v3107 = vmul.f32 %v3043, %v2505
  %v3108 = vmul.f32 %v3044, %v2520
  %v3109 = vmul.f32 %v3045, %v2535
  %v3110 = vmul.f32 %v3046, %v2550
  %v3111 = vmul.f32 %v3047, %v2565
  %v3112 = vmul.f32 %v3048, %v2580
  %v3113 = vmul.f32 %v3049, %v2595
  %v3114 = vmul.f32 %v3050, %v2610
  %v3115 = vmul.f32 %v3051, %v2625
  %v3116 = vmul.f32 %v3052, %v2640
  %v3117 = vmul.f32 %v3053, %v2655
  %v3118 = vmul.f32 %v3054, %v2670
  %v3119 = vadd.f32 %v3055, 0.2548296
  %v3120 = vadd.f32 %v3056, 0.2548296
  %v3121 = vadd.f32 %v3057, 0.2548296
  %v3122 = vadd.f32 %v3058, 0.2548296
  %v3123 = vadd.f32 %v3059, 0.2548296
  %v3124 = vadd.f32 %v3060, 0.2548296
  %v3125 = vadd.f32 %v3061, 0.2548296
  %v3126 = vadd.f32 %v3062, 0.2548296
  %v3127 = vadd.f32 %v3063, 0.2548296
  %v3128 = vadd.f32 %v3064, 0.2548296
  %v3129 = vadd.f32 %v3065, 0.2548296
  %v3130 = vadd.f32 %v3066, 0.2548296
  %v3131 = vadd.f32 %v3067, 0.2548296
  %v3132 = vadd.f32 %v3068, 0.2548296
  %v3133 = vadd.f32 %v3069, 0.2548296
  %v3134 = vadd.f32 %v3070, 0.2548296
  %v3135 = vadd.f32 %v3071, 0.2548296
  %v3136 = vadd.f32 %v3072, 0.2548296
  %v3137 = vadd.f32 %v3073, 0.2548296
  %v3138 = vadd.f32 %v3074, 0.2548296
  %v3139 = vadd.f32 %v3075, 0.2548296
  %v3140 = vadd.f32 %v3076, 0.2548296
  %v3141 = vadd.f32 %v3077, 0.2548296
  %v3142 = vadd.f32 %v3078, 0.2548296
  %v3143 = vadd.f32 %v3079, 0.2548296
  %v3144 = vadd.f32 %v3080, 0.2548296
  %v3145 = vadd.f32 %v3081, 0.2548296
  %v3146 = vadd.f32 %v3082, 0.2548296
  %v3147 = vadd.f32 %v3083, 0.2548296
  %v3148 = vadd.f32 %v3084, 0.2548296
  %v3149 = vadd.f32 %v3085, 0.2548296
  %v3150 = vadd.f32 %v3086, 0.2548296
  %v3151 = vadd.f32 %v3087, 0.2548296
  %v3152 = vadd.f32 %v3088, 0.2548296
  %v3153 = vadd.f32 %v3089, 0.2548296
  %v3154 = vadd.f32 %v3090, 0.2548296
  %v3155 = vadd.f32 %v3091, 0.2548296
  %v3156 = vadd.f32 %v3092, 0.2548296
  %v3157 = vadd.f32 %v3093, 0.2548296
  %v3158 = vadd.f32 %v3094, 0.2548296
  %v3159 = vadd.f32 %v3095, 0.2548296
  %v3160 = vadd.f32 %v3096, 0.2548296
  %v3161 = vadd.f32 %v3097, 0.2548296
  %v3162 = vadd.f32 %v3098, 0.2548296
  %v3163 = vadd.f32 %v3099, 0.2548296
  %v3164 = vadd.f32 %v3100, 0.2548296
  %v3165 = vadd.f32 %v3101, 0.2548296
  %v3166 = vadd.f32 %v3102, 0.2548296
  %v3167 = vadd.f32 %v3103, 0.2548296
  %v3168 = vadd.f32 %v3104, 0.2548296
  %v3169 = vadd.f32 %v3105, 0.2548296
  %v3170 = vadd.f32 %v3106, 0.2548296
  %v3171 = vadd.f32 %v3107, 0.2548296
  %v3172 = vadd.f32 %v3108, 0.2548296
  %v3173 = vadd.f32 %v3109, 0.2548296
  %v3174 = vadd.f32 %v3110, 0.2548296
  %v3175 = vadd.f32 %v3111, 0.2548296
  %v3176 = vadd.f32 %v3112, 0.2548296
  %v3177 = vadd.f32 %v3113, 0.2548296
  %v3178 = vadd.f32 %v3114, 0.2548296
  %v3179 = vadd.f32 %v3115, 0.2548296
  %v3180 = vadd.f32 %v3116, 0.2548296
  %v3181 = vadd.f32 %v3117, 0.2548296
  %v3182 = vadd.f32 %v3118, 0.2548296
  %v3183 = vmul.f32 %v3119, %v1725
  %v3184 = vmul.f32 %v3120, %v1740
  %v3185 = vmul.f32 %v3121, %v1755
  %v3186 = vmul.f32 %v3122, %v1770
  %v3187 = vmul.f32 %v3123, %v1785
  %v3188 = vmul.f32 %v3124, %v1800
  %v3189 = vmul.f32 %v3125, %v1815
  %v3190 = vmul.f32 %v3126, %v1830
  %v3191 = vmul.f32 %v3127, %v1845
  %v3192 = vmul.f32 %v3128, %v1860
  %v3193 = vmul.f32 %v3129, %v1875
  %v3194 = vmul.f32 %v3130, %v1890
  %v3195 = vmul.f32 %v3131, %v1905
  %v3196 = vmul.f32 %v3132, %v1920
  %v3197 = vmul.f32 %v3133, %v1935
  %v3198 = vmul.f32 %v3134, %v1950
  %v3199 = vmul.f32 %v3135, %v1965
  %v3200 = vmul.f32 %v3136, %v1980
  %v3201 = vmul.f32 %v3137, %v1995
  %v3202 = vmul.f32 %v3138, %v2010
  %v3203 = vmul.f32 %v3139, %v2025
  %v3204 = vmul.f32 %v3140, %v2040
  %v3205 = vmul.f32 %v3141, %v2055
  %v3206 = vmul.f32 %v3142, %v2070
  %v3207 = vmul.f32 %v3143, %v2085
  %v3208 = vmul.f32 %v3144, %v2100
  %v3209 = vmul.f32 %v3145, %v2115
  %v3210 = vmul.f32 %v3146, %v2130
  %v3211 = vmul.f32 %v3147, %v2145
  %v3212 = vmul.f32 %v3148, %v2160
  %v3213 = vmul.f32 %v3149, %v2175
  %v3214 = vmul.f32 %v3150, %v2190
  %v3215 = vmul.f32 %v3151, %v2205
  %v3216 = vmul.f32 %v3152, %v2220
  %v3217 = vmul.f32 %v3153, %v2235
  %v3218 = vmul.f32 %v3154, %v2250
  %v3219 = vmul.f32 %v3155, %v2265
  %v3220 = vmul.f32 %v3156, %v2280
  %v3221 = vmul.f32 %v3157, %v2295
  %v3222 = vmul.f32 %v3158, %v2310
  %v3223 = vmul.f32 %v3159, %v2325
  %v3224 = vmul.f32 %v3160, %v2340
  %v3225 = vmul.f32 %v3161, %v2355
  %v3226 = vmul.f32 %v3162, %v2370
  %v3227 = vmul.f32 %v3163, %v2385
  %v3228 = vmul.f32 %v3164, %v2400
  %v3229 = vmul.f32 %v3165, %v2415
  %v3230 = vmul.f32 %v3166, %v2430
  %v3231 = vmul.f32 %v3167, %v2445
  %v3232 = vmul.f32 %v3168, %v2460
  %v3233 = vmul.f32 %v3169, %v2475
  %v3234 = vmul.f32 %v3170, %v2490
  %v3235 = vmul.f32 %v3171, %v2505
  %v3236 = vmul.f32 %v3172, %v2520
  %v3237 = vmul.f32 %v3173, %v2535
  %v3238 = vmul.f32 %v3174, %v2550
  %v3239 = vmul.f32 %v3175, %v2565
  %v3240 = vmul.f32 %v3176, %v2580
  %v3241 = vmul.f32 %v3177, %v2595
  %v3242 = vmul.f32 %v3178, %v2610
  %v3243 = vmul.f32 %v3179, %v2625
  %v3244 = vmul.f32 %v3180, %v2640
  %v3245 = vmul.f32 %v3181, %v2655
  %v3246 = vmul.f32 %v3182, %v2670
  %v3247 = vsub.f32 0.0, %v1519
  %v3248 = vsub.f32 0.0, %v1520
  %v3249 = vsub.f32 0.0, %v1521
  %v3250 = vsub.f32 0.0, %v1522
  %v3251 = vsub.f32 0.0, %v1523
  %v3252 = vsub.f32 0.0, %v1524
  %v3253 = vsub.f32 0.0, %v1525
  %v3254 = vsub.f32 0.0, %v1526
  %v3255 = vsub.f32 0.0, %v1527
  %v3256 = vsub.f32 0.0, %v1528
  %v3257 = vsub.f32 0.0, %v1529
  %v3258 = vsub.f32 0.0, %v1530
  %v3259 = vsub.f32 0.0, %v1531
  %v3260 = vsub.f32 0.0, %v1532
  %v3261 = vsub.f32 0.0, %v1533
  %v3262 = vsub.f32 0.0, %v1534
  %v3263 = vsub.f32 0.0, %v1535
  %v3264 = vsub.f32 0.0, %v1536
  %v3265 = vsub.f32 0.0, %v1537
  %v3266 = vsub.f32 0.0, %v1538
  %v3267 = vsub.f32 0.0, %v1539
  %v3268 = vsub.f32 0.0, %v1540
  %v3269 = vsub.f32 0.0, %v1541
  %v3270 = vsub.f32 0.0, %v1542
  %v3271 = vsub.f32 0.0, %v1543
  %v3272 = vsub.f32 0.0, %v1544
  %v3273 = vsub.f32 0.0, %v1545
  %v3274 = vsub.f32 0.0, %v1546
  %v3275 = vsub.f32 0.0, %v1547
  %v3276 = vsub.f32 0.0, %v1548
  %v3277 = vsub.f32 0.0, %v1549
  %v3278 = vsub.f32 0.0, %v1550
  %v3279 = vsub.f32 0.0, %v1551
  %v3280 = vsub.f32 0.0, %v1552
  %v3281 = vsub.f32 0.0, %v1553
  %v3282 = vsub.f32 0.0, %v1554
  %v3283 = vsub.f32 0.0, %v1555
  %v3284 = vsub.f32 0.0, %v1556
  %v3285 = vsub.f32 0.0, %v1557
  %v3286 = vsub.f32 0.0, %v1558
  %v3287 = vsub.f32 0.0, %v1559
  %v3288 = vsub.f32 0.0, %v1560
  %v3289 = vsub.f32 0.0, %v1561
  %v3290 = vsub.f32 0.0, %v1562
  %v3291 = vsub.f32 0.0, %v1563
  %v3292 = vsub.f32 0.0, %v1564
  %v3293 = vsub.f32 0.0, %v1565
  %v3294 = vsub.f32 0.0, %v1566
  %v3295 = vsub.f32 0.0, %v1567
  %v3296 = vsub.f32 0.0, %v1568
  %v3297 = vsub.f32 0.0, %v1569
  %v3298 = vsub.f32 0.0, %v1570
  %v3299 = vsub.f32 0.0, %v1571
  %v3300 = vsub.f32 0.0, %v1572
  %v3301 = vsub.f32 0.0, %v1573
  %v3302 = vsub.f32 0.0, %v1574
  %v3303 = vsub.f32 0.0, %v1575
  %v3304 = vsub.f32 0.0, %v1576
  %v3305 = vsub.f32 0.0, %v1577
  %v3306 = vsub.f32 0.0, %v1578
  %v3307 = vsub.f32 0.0, %v1579
  %v3308 = vsub.f32 0.0, %v1580
  %v3309 = vsub.f32 0.0, %v1581
  %v3310 = vsub.f32 0.0, %v1582
  %v3311 = vmul.f32 %v3247, %v1519
  %v3312 = vmul.f32 %v3248, %v1520
  %v3313 = vmul.f32 %v3249, %v1521
  %v3314 = vmul.f32 %v3250, %v1522
  %v3315 = vmul.f32 %v3251, %v1523
  %v3316 = vmul.f32 %v3252, %v1524
  %v3317 = vmul.f32 %v3253, %v1525
  %v3318 = vmul.f32 %v3254, %v1526
  %v3319 = vmul.f32 %v3255, %v1527
  %v3320 = vmul.f32 %v3256, %v1528
  %v3321 = vmul.f32 %v3257, %v1529
  %v3322 = vmul.f32 %v3258, %v1530
  %v3323 = vmul.f32 %v3259, %v1531
  %v3324 = vmul.f32 %v3260, %v1532
  %v3325 = vmul.f32 %v3261, %v1533
  %v3326 = vmul.f32 %v3262, %v1534
  %v3327 = vmul.f32 %v3263, %v1535
  %v3328 = vmul.f32 %v3264, %v1536
  %v3329 = vmul.f32 %v3265, %v1537
  %v3330 = vmul.f32 %v3266, %v1538
  %v3331 = vmul.f32 %v3267, %v1539
  %v3332 = vmul.f32 %v3268, %v1540
  %v3333 = vmul.f32 %v3269, %v1541
  %v3334 = vmul.f32 %v3270, %v1542
  %v3335 = vmul.f32 %v3271, %v1543
  %v3336 = vmul.f32 %v3272, %v1544
  %v3337 = vmul.f32 %v3273, %v1545
  %v3338 = vmul.f32 %v3274, %v1546
  %v3339 = vmul.f32 %v3275, %v1547
  %v3340 = vmul.f32 %v3276, %v1548
  %v3341 = vmul.f32 %v3277, %v1549
  %v3342 = vmul.f32 %v3278, %v1550
  %v3343 = vmul.f32 %v3279, %v1551
  %v3344 = vmul.f32 %v3280, %v1552
  %v3345 = vmul.f32 %v3281, %v1553
  %v3346 = vmul.f32 %v3282, %v1554
  %v3347 = vmul.f32 %v3283, %v1555
  %v3348 = vmul.f32 %v3284, %v1556
  %v3349 = vmul.f32 %v3285, %v1557
  %v3350 = vmul.f32 %v3286, %v1558
  %v3351 = vmul.f32 %v3287, %v1559
  %v3352 = vmul.f32 %v3288, %v1560
  %v3353 = vmul.f32 %v3289, %v1561
  %v3354 = vmul.f32 %v3290, %v1562
  %v3355 = vmul.f32 %v3291, %v1563
  %v3356 = vmul.f32 %v3292, %v1564
  %v3357 = vmul.f32 %v3293, %v1565
  %v3358 = vmul.f32 %v3294, %v1566
  %v3359 = vmul.f32 %v3295, %v1567
  %v3360 = vmul.f32 %v3296, %v1568
  %v3361 = vmul.f32 %v3297, %v1569
  %v3362 = vmul.f32 %v3298, %v1570
  %v3363 = vmul.f32 %v3299, %v1571
  %v3364 = vmul.f32 %v3300, %v1572
  %v3365 = vmul.f32 %v3301, %v1573
  %v3366 = vmul.f32 %v3302, %v1574
  %v3367 = vmul.f32 %v3303, %v1575
  %v3368 = vmul.f32 %v3304, %v1576
  %v3369 = vmul.f32 %v3305, %v1577
  %v3370 = vmul.f32 %v3306, %v1578
  %v3371 = vmul.f32 %v3307, %v1579
  %v3372 = vmul.f32 %v3308, %v1580
  %v3373 = vmul.f32 %v3309, %v1581
  %v3374 = vmul.f32 %v3310, %v1582
  %v3375 = vmul.f32 %v3311, 1.442695
  %v3376 = vpow.pop %v3375
  %v3377 = vmul.f32 %v3312, 1.442695
  %v3378 = vpow.pop %v3377
  %v3379 = vmul.f32 %v3313, 1.442695
  %v3380 = vpow.pop %v3379
  %v3381 = vmul.f32 %v3314, 1.442695
  %v3382 = vpow.pop %v3381
  %v3383 = vmul.f32 %v3315, 1.442695
  %v3384 = vpow.pop %v3383
  %v3385 = vmul.f32 %v3316, 1.442695
  %v3386 = vpow.pop %v3385
  %v3387 = vmul.f32 %v3317, 1.442695
  %v3388 = vpow.pop %v3387
  %v3389 = vmul.f32 %v3318, 1.442695
  %v3390 = vpow.pop %v3389
  %v3391 = vmul.f32 %v3319, 1.442695
  %v3392 = vpow.pop %v3391
  %v3393 = vmul.f32 %v3320, 1.442695
  %v3394 = vpow.pop %v3393
  %v3395 = vmul.f32 %v3321, 1.442695
  %v3396 = vpow.pop %v3395
  %v3397 = vmul.f32 %v3322, 1.442695
  %v3398 = vpow.pop %v3397
  %v3399 = vmul.f32 %v3323, 1.442695
  %v3400 = vpow.pop %v3399
  %v3401 = vmul.f32 %v3324, 1.442695
  %v3402 = vpow.pop %v3401
  %v3403 = vmul.f32 %v3325, 1.442695
  %v3404 = vpow.pop %v3403
  %v3405 = vmul.f32 %v3326, 1.442695
  %v3406 = vpow.pop %v3405
  %v3407 = vmul.f32 %v3327, 1.442695
  %v3408 = vpow.pop %v3407
  %v3409 = vmul.f32 %v3328, 1.442695
  %v3410 = vpow.pop %v3409
  %v3411 = vmul.f32 %v3329, 1.442695
  %v3412 = vpow.pop %v3411
  %v3413 = vmul.f32 %v3330, 1.442695
  %v3414 = vpow.pop %v3413
  %v3415 = vmul.f32 %v3331, 1.442695
  %v3416 = vpow.pop %v3415
  %v3417 = vmul.f32 %v3332, 1.442695
  %v3418 = vpow.pop %v3417
  %v3419 = vmul.f32 %v3333, 1.442695
  %v3420 = vpow.pop %v3419
  %v3421 = vmul.f32 %v3334, 1.442695
  %v3422 = vpow.pop %v3421
  %v3423 = vmul.f32 %v3335, 1.442695
  %v3424 = vpow.pop %v3423
  %v3425 = vmul.f32 %v3336, 1.442695
  %v3426 = vpow.pop %v3425
  %v3427 = vmul.f32 %v3337, 1.442695
  %v3428 = vpow.pop %v3427
  %v3429 = vmul.f32 %v3338, 1.442695
  %v3430 = vpow.pop %v3429
  %v3431 = vmul.f32 %v3339, 1.442695
  %v3432 = vpow.pop %v3431
  %v3433 = vmul.f32 %v3340, 1.442695
  %v3434 = vpow.pop %v3433
  %v3435 = vmul.f32 %v3341, 1.442695
  %v3436 = vpow.pop %v3435
  %v3437 = vmul.f32 %v3342, 1.442695
  %v3438 = vpow.pop %v3437
  %v3439 = vmul.f32 %v3343, 1.442695
  %v3440 = vpow.pop %v3439
  %v3441 = vmul.f32 %v3344, 1.442695
  %v3442 = vpow.pop %v3441
  %v3443 = vmul.f32 %v3345, 1.442695
  %v3444 = vpow.pop %v3443
  %v3445 = vmul.f32 %v3346, 1.442695
  %v3446 = vpow.pop %v3445
  %v3447 = vmul.f32 %v3347, 1.442695
  %v3448 = vpow.pop %v3447
  %v3449 = vmul.f32 %v3348, 1.442695
  %v3450 = vpow.pop %v3449
  %v3451 = vmul.f32 %v3349, 1.442695
  %v3452 = vpow.pop %v3451
  %v3453 = vmul.f32 %v3350, 1.442695
  %v3454 = vpow.pop %v3453
  %v3455 = vmul.f32 %v3351, 1.442695
  %v3456 = vpow.pop %v3455
  %v3457 = vmul.f32 %v3352, 1.442695
  %v3458 = vpow.pop %v3457
  %v3459 = vmul.f32 %v3353, 1.442695
  %v3460 = vpow.pop %v3459
  %v3461 = vmul.f32 %v3354, 1.442695
  %v3462 = vpow.pop %v3461
  %v3463 = vmul.f32 %v3355, 1.442695
  %v3464 = vpow.pop %v3463
  %v3465 = vmul.f32 %v3356, 1.442695
  %v3466 = vpow.pop %v3465
  %v3467 = vmul.f32 %v3357, 1.442695
  %v3468 = vpow.pop %v3467
  %v3469 = vmul.f32 %v3358, 1.442695
  %v3470 = vpow.pop %v3469
  %v3471 = vmul.f32 %v3359, 1.442695
  %v3472 = vpow.pop %v3471
  %v3473 = vmul.f32 %v3360, 1.442695
  %v3474 = vpow.pop %v3473
  %v3475 = vmul.f32 %v3361, 1.442695
  %v3476 = vpow.pop %v3475
  %v3477 = vmul.f32 %v3362, 1.442695
  %v3478 = vpow.pop %v3477
  %v3479 = vmul.f32 %v3363, 1.442695
  %v3480 = vpow.pop %v3479
  %v3481 = vmul.f32 %v3364, 1.442695
  %v3482 = vpow.pop %v3481
  %v3483 = vmul.f32 %v3365, 1.442695
  %v3484 = vpow.pop %v3483
  %v3485 = vmul.f32 %v3366, 1.442695
  %v3486 = vpow.pop %v3485
  %v3487 = vmul.f32 %v3367, 1.442695
  %v3488 = vpow.pop %v3487
  %v3489 = vmul.f32 %v3368, 1.442695
  %v3490 = vpow.pop %v3489
  %v3491 = vmul.f32 %v3369, 1.442695
  %v3492 = vpow.pop %v3491
  %v3493 = vmul.f32 %v3370, 1.442695
  %v3494 = vpow.pop %v3493
  %v3495 = vmul.f32 %v3371, 1.442695
  %v3496 = vpow.pop %v3495
  %v3497 = vmul.f32 %v3372, 1.442695
  %v3498 = vpow.pop %v3497
  %v3499 = vmul.f32 %v3373, 1.442695
  %v3500 = vpow.pop %v3499
  %v3501 = vmul.f32 %v3374, 1.442695
  %v3502 = vpow.pop %v3501
  %v3503 = vmul.f32 %v3183, %v3376
  %v3504 = vmul.f32 %v3184, %v3378
  %v3505 = vmul.f32 %v3185, %v3380
  %v3506 = vmul.f32 %v3186, %v3382
  %v3507 = vmul.f32 %v3187, %v3384
  %v3508 = vmul.f32 %v3188, %v3386
  %v3509 = vmul.f32 %v3189, %v3388
  %v3510 = vmul.f32 %v3190, %v3390
  %v3511 = vmul.f32 %v3191, %v3392
  %v3512 = vmul.f32 %v3192, %v3394
  %v3513 = vmul.f32 %v3193, %v3396
  %v3514 = vmul.f32 %v3194, %v3398
  %v3515 = vmul.f32 %v3195, %v3400
  %v3516 = vmul.f32 %v3196, %v3402
  %v3517 = vmul.f32 %v3197, %v3404
  %v3518 = vmul.f32 %v3198, %v3406
  %v3519 = vmul.f32 %v3199, %v3408
  %v3520 = vmul.f32 %v3200, %v3410
  %v3521 = vmul.f32 %v3201, %v3412
  %v3522 = vmul.f32 %v3202, %v3414
  %v3523 = vmul.f32 %v3203, %v3416
  %v3524 = vmul.f32 %v3204, %v3418
  %v3525 = vmul.f32 %v3205, %v3420
  %v3526 = vmul.f32 %v3206, %v3422
  %v3527 = vmul.f32 %v3207, %v3424
  %v3528 = vmul.f32 %v3208, %v3426
  %v3529 = vmul.f32 %v3209, %v3428
  %v3530 = vmul.f32 %v3210, %v3430
  %v3531 = vmul.f32 %v3211, %v3432
  %v3532 = vmul.f32 %v3212, %v3434
  %v3533 = vmul.f32 %v3213, %v3436
  %v3534 = vmul.f32 %v3214, %v3438
  %v3535 = vmul.f32 %v3215, %v3440
  %v3536 = vmul.f32 %v3216, %v3442
  %v3537 = vmul.f32 %v3217, %v3444
  %v3538 = vmul.f32 %v3218, %v3446
  %v3539 = vmul.f32 %v3219, %v3448
  %v3540 = vmul.f32 %v3220, %v3450
  %v3541 = vmul.f32 %v3221, %v3452
  %v3542 = vmul.f32 %v3222, %v3454
  %v3543 = vmul.f32 %v3223, %v3456
  %v3544 = vmul.f32 %v3224, %v3458
  %v3545 = vmul.f32 %v3225, %v3460
  %v3546 = vmul.f32 %v3226, %v3462
  %v3547 = vmul.f32 %v3227, %v3464
  %v3548 = vmul.f32 %v3228, %v3466
  %v3549 = vmul.f32 %v3229, %v3468
  %v3550 = vmul.f32 %v3230, %v3470
  %v3551 = vmul.f32 %v3231, %v3472
  %v3552 = vmul.f32 %v3232, %v3474
  %v3553 = vmul.f32 %v3233, %v3476
  %v3554 = vmul.f32 %v3234, %v3478
  %v3555 = vmul.f32 %v3235, %v3480
  %v3556 = vmul.f32 %v3236, %v3482
  %v3557 = vmul.f32 %v3237, %v3484
  %v3558 = vmul.f32 %v3238, %v3486
  %v3559 = vmul.f32 %v3239, %v3488
  %v3560 = vmul.f32 %v3240, %v3490
  %v3561 = vmul.f32 %v3241, %v3492
  %v3562 = vmul.f32 %v3242, %v3494
  %v3563 = vmul.f32 %v3243, %v3496
  %v3564 = vmul.f32 %v3244, %v3498
  %v3565 = vmul.f32 %v3245, %v3500
  %v3566 = vmul.f32 %v3246, %v3502
  %v3567 = vsub.f32 1.0, %v3503
  %v3568 = vsub.f32 1.0, %v3504
  %v3569 = vsub.f32 1.0, %v3505
  %v3570 = vsub.f32 1.0, %v3506
  %v3571 = vsub.f32 1.0, %v3507
  %v3572 = vsub.f32 1.0, %v3508
  %v3573 = vsub.f32 1.0, %v3509
  %v3574 = vsub.f32 1.0, %v3510
  %v3575 = vsub.f32 1.0, %v3511
  %v3576 = vsub.f32 1.0, %v3512
  %v3577 = vsub.f32 1.0, %v3513
  %v3578 = vsub.f32 1.0, %v3514
  %v3579 = vsub.f32 1.0, %v3515
  %v3580 = vsub.f32 1.0, %v3516
  %v3581 = vsub.f32 1.0, %v3517
  %v3582 = vsub.f32 1.0, %v3518
  %v3583 = vsub.f32 1.0, %v3519
  %v3584 = vsub.f32 1.0, %v3520
  %v3585 = vsub.f32 1.0, %v3521
  %v3586 = vsub.f32 1.0, %v3522
  %v3587 = vsub.f32 1.0, %v3523
  %v3588 = vsub.f32 1.0, %v3524
  %v3589 = vsub.f32 1.0, %v3525
  %v3590 = vsub.f32 1.0, %v3526
  %v3591 = vsub.f32 1.0, %v3527
  %v3592 = vsub.f32 1.0, %v3528
  %v3593 = vsub.f32 1.0, %v3529
  %v3594 = vsub.f32 1.0, %v3530
  %v3595 = vsub.f32 1.0, %v3531
  %v3596 = vsub.f32 1.0, %v3532
  %v3597 = vsub.f32 1.0, %v3533
  %v3598 = vsub.f32 1.0, %v3534
  %v3599 = vsub.f32 1.0, %v3535
  %v3600 = vsub.f32 1.0, %v3536
  %v3601 = vsub.f32 1.0, %v3537
  %v3602 = vsub.f32 1.0, %v3538
  %v3603 = vsub.f32 1.0, %v3539
  %v3604 = vsub.f32 1.0, %v3540
  %v3605 = vsub.f32 1.0, %v3541
  %v3606 = vsub.f32 1.0, %v3542
  %v3607 = vsub.f32 1.0, %v3543
  %v3608 = vsub.f32 1.0, %v3544
  %v3609 = vsub.f32 1.0, %v3545
  %v3610 = vsub.f32 1.0, %v3546
  %v3611 = vsub.f32 1.0, %v3547
  %v3612 = vsub.f32 1.0, %v3548
  %v3613 = vsub.f32 1.0, %v3549
  %v3614 = vsub.f32 1.0, %v3550
  %v3615 = vsub.f32 1.0, %v3551
  %v3616 = vsub.f32 1.0, %v3552
  %v3617 = vsub.f32 1.0, %v3553
  %v3618 = vsub.f32 1.0, %v3554
  %v3619 = vsub.f32 1.0, %v3555
  %v3620 = vsub.f32 1.0, %v3556
  %v3621 = vsub.f32 1.0, %v3557
  %v3622 = vsub.f32 1.0, %v3558
  %v3623 = vsub.f32 1.0, %v3559
  %v3624 = vsub.f32 1.0, %v3560
  %v3625 = vsub.f32 1.0, %v3561
  %v3626 = vsub.f32 1.0, %v3562
  %v3627 = vsub.f32 1.0, %v3563
  %v3628 = vsub.f32 1.0, %v3564
  %v3629 = vsub.f32 1.0, %v3565
  %v3630 = vsub.f32 1.0, %v3566
  %vm3631 = vcmp.lt.f32.partialorder %v1455, 0.0
  %vm3632 = vcmp.lt.f32.partialorder %v1456, 0.0
  %vm3633 = vcmp.lt.f32.partialorder %v1457, 0.0
  %vm3634 = vcmp.lt.f32.partialorder %v1458, 0.0
  %vm3635 = vcmp.lt.f32.partialorder %v1459, 0.0
  %vm3636 = vcmp.lt.f32.partialorder %v1460, 0.0
  %vm3637 = vcmp.lt.f32.partialorder %v1461, 0.0
  %vm3638 = vcmp.lt.f32.partialorder %v1462, 0.0
  %vm3639 = vcmp.lt.f32.partialorder %v1463, 0.0
  %vm3640 = vcmp.lt.f32.partialorder %v1464, 0.0
  %vm3641 = vcmp.lt.f32.partialorder %v1465, 0.0
  %vm3642 = vcmp.lt.f32.partialorder %v1466, 0.0
  %vm3643 = vcmp.lt.f32.partialorder %v1467, 0.0
  %vm3644 = vcmp.lt.f32.partialorder %v1468, 0.0
  %vm3645 = vcmp.lt.f32.partialorder %v1469, 0.0
  %vm3646 = vcmp.lt.f32.partialorder %v1470, 0.0
  %vm3647 = vcmp.lt.f32.partialorder %v1471, 0.0
  %vm3648 = vcmp.lt.f32.partialorder %v1472, 0.0
  %vm3649 = vcmp.lt.f32.partialorder %v1473, 0.0
  %vm3650 = vcmp.lt.f32.partialorder %v1474, 0.0
  %vm3651 = vcmp.lt.f32.partialorder %v1475, 0.0
  %vm3652 = vcmp.lt.f32.partialorder %v1476, 0.0
  %vm3653 = vcmp.lt.f32.partialorder %v1477, 0.0
  %vm3654 = vcmp.lt.f32.partialorder %v1478, 0.0
  %vm3655 = vcmp.lt.f32.partialorder %v1479, 0.0
  %vm3656 = vcmp.lt.f32.partialorder %v1480, 0.0
  %vm3657 = vcmp.lt.f32.partialorder %v1481, 0.0
  %vm3658 = vcmp.lt.f32.partialorder %v1482, 0.0
  %vm3659 = vcmp.lt.f32.partialorder %v1483, 0.0
  %vm3660 = vcmp.lt.f32.partialorder %v1484, 0.0
  %vm3661 = vcmp.lt.f32.partialorder %v1485, 0.0
  %vm3662 = vcmp.lt.f32.partialorder %v1486, 0.0
  %vm3663 = vcmp.lt.f32.partialorder %v1487, 0.0
  %vm3664 = vcmp.lt.f32.partialorder %v1488, 0.0
  %vm3665 = vcmp.lt.f32.partialorder %v1489, 0.0
  %vm3666 = vcmp.lt.f32.partialorder %v1490, 0.0
  %vm3667 = vcmp.lt.f32.partialorder %v1491, 0.0
  %vm3668 = vcmp.lt.f32.partialorder %v1492, 0.0
  %vm3669 = vcmp.lt.f32.partialorder %v1493, 0.0
  %vm3670 = vcmp.lt.f32.partialorder %v1494, 0.0
  %vm3671 = vcmp.lt.f32.partialorder %v1495, 0.0
  %vm3672 = vcmp.lt.f32.partialorder %v1496, 0.0
  %vm3673 = vcmp.lt.f32.partialorder %v1497, 0.0
  %vm3674 = vcmp.lt.f32.partialorder %v1498, 0.0
  %vm3675 = vcmp.lt.f32.partialorder %v1499, 0.0
  %vm3676 = vcmp.lt.f32.partialorder %v1500, 0.0
  %vm3677 = vcmp.lt.f32.partialorder %v1501, 0.0
  %vm3678 = vcmp.lt.f32.partialorder %v1502, 0.0
  %vm3679 = vcmp.lt.f32.partialorder %v1503, 0.0
  %vm3680 = vcmp.lt.f32.partialorder %v1504, 0.0
  %vm3681 = vcmp.lt.f32.partialorder %v1505, 0.0
  %vm3682 = vcmp.lt.f32.partialorder %v1506, 0.0
  %vm3683 = vcmp.lt.f32.partialorder %v1507, 0.0
  %vm3684 = vcmp.lt.f32.partialorder %v1508, 0.0
  %vm3685 = vcmp.lt.f32.partialorder %v1509, 0.0
  %vm3686 = vcmp.lt.f32.partialorder %v1510, 0.0
  %vm3687 = vcmp.lt.f32.partialorder %v1511, 0.0
  %vm3688 = vcmp.lt.f32.partialorder %v1512, 0.0
  %vm3689 = vcmp.lt.f32.partialorder %v1513, 0.0
  %vm3690 = vcmp.lt.f32.partialorder %v1514, 0.0
  %vm3691 = vcmp.lt.f32.partialorder %v1515, 0.0
  %vm3692 = vcmp.lt.f32.partialorder %v1516, 0.0
  %vm3693 = vcmp.lt.f32.partialorder %v1517, 0.0
  %vm3694 = vcmp.lt.f32.partialorder %v1518, 0.0
  %v3695 = vsub.f32 0.0, %v3567
  %v3696 = vsub.f32 0.0, %v3568
  %v3697 = vsub.f32 0.0, %v3569
  %v3698 = vsub.f32 0.0, %v3570
  %v3699 = vsub.f32 0.0, %v3571
  %v3700 = vsub.f32 0.0, %v3572
  %v3701 = vsub.f32 0.0, %v3573
  %v3702 = vsub.f32 0.0, %v3574
  %v3703 = vsub.f32 0.0, %v3575
  %v3704 = vsub.f32 0.0, %v3576
  %v3705 = vsub.f32 0.0, %v3577
  %v3706 = vsub.f32 0.0, %v3578
  %v3707 = vsub.f32 0.0, %v3579
  %v3708 = vsub.f32 0.0, %v3580
  %v3709 = vsub.f32 0.0, %v3581
  %v3710 = vsub.f32 0.0, %v3582
  %v3711 = vsub.f32 0.0, %v3583
  %v3712 = vsub.f32 0.0, %v3584
  %v3713 = vsub.f32 0.0, %v3585
  %v3714 = vsub.f32 0.0, %v3586
  %v3715 = vsub.f32 0.0, %v3587
  %v3716 = vsub.f32 0.0, %v3588
  %v3717 = vsub.f32 0.0, %v3589
  %v3718 = vsub.f32 0.0, %v3590
  %v3719 = vsub.f32 0.0, %v3591
  %v3720 = vsub.f32 0.0, %v3592
  %v3721 = vsub.f32 0.0, %v3593
  %v3722 = vsub.f32 0.0, %v3594
  %v3723 = vsub.f32 0.0, %v3595
  %v3724 = vsub.f32 0.0, %v3596
  %v3725 = vsub.f32 0.0, %v3597
  %v3726 = vsub.f32 0.0, %v3598
  %v3727 = vsub.f32 0.0, %v3599
  %v3728 = vsub.f32 0.0, %v3600
  %v3729 = vsub.f32 0.0, %v3601
  %v3730 = vsub.f32 0.0, %v3602
  %v3731 = vsub.f32 0.0, %v3603
  %v3732 = vsub.f32 0.0, %v3604
  %v3733 = vsub.f32 0.0, %v3605
  %v3734 = vsub.f32 0.0, %v3606
  %v3735 = vsub.f32 0.0, %v3607
  %v3736 = vsub.f32 0.0, %v3608
  %v3737 = vsub.f32 0.0, %v3609
  %v3738 = vsub.f32 0.0, %v3610
  %v3739 = vsub.f32 0.0, %v3611
  %v3740 = vsub.f32 0.0, %v3612
  %v3741 = vsub.f32 0.0, %v3613
  %v3742 = vsub.f32 0.0, %v3614
  %v3743 = vsub.f32 0.0, %v3615
  %v3744 = vsub.f32 0.0, %v3616
  %v3745 = vsub.f32 0.0, %v3617
  %v3746 = vsub.f32 0.0, %v3618
  %v3747 = vsub.f32 0.0, %v3619
  %v3748 = vsub.f32 0.0, %v3620
  %v3749 = vsub.f32 0.0, %v3621
  %v3750 = vsub.f32 0.0, %v3622
  %v3751 = vsub.f32 0.0, %v3623
  %v3752 = vsub.f32 0.0, %v3624
  %v3753 = vsub.f32 0.0, %v3625
  %v3754 = vsub.f32 0.0, %v3626
  %v3755 = vsub.f32 0.0, %v3627
  %v3756 = vsub.f32 0.0, %v3628
  %v3757 = vsub.f32 0.0, %v3629
  %v3758 = vsub.f32 0.0, %v3630
  %v3759 = vsel %vm3631, %v3695, %v3567
  %v3760 = vsel %vm3632, %v3696, %v3568
  %v3761 = vsel %vm3633, %v3697, %v3569
  %v3762 = vsel %vm3634, %v3698, %v3570
  %v3763 = vsel %vm3635, %v3699, %v3571
  %v3764 = vsel %vm3636, %v3700, %v3572
  %v3765 = vsel %vm3637, %v3701, %v3573
  %v3766 = vsel %vm3638, %v3702, %v3574
  %v3767 = vsel %vm3639, %v3703, %v3575
  %v3768 = vsel %vm3640, %v3704, %v3576
  %v3769 = vsel %vm3641, %v3705, %v3577
  %v3770 = vsel %vm3642, %v3706, %v3578
  %v3771 = vsel %vm3643, %v3707, %v3579
  %v3772 = vsel %vm3644, %v3708, %v3580
  %v3773 = vsel %vm3645, %v3709, %v3581
  %v3774 = vsel %vm3646, %v3710, %v3582
  %v3775 = vsel %vm3647, %v3711, %v3583
  %v3776 = vsel %vm3648, %v3712, %v3584
  %v3777 = vsel %vm3649, %v3713, %v3585
  %v3778 = vsel %vm3650, %v3714, %v3586
  %v3779 = vsel %vm3651, %v3715, %v3587
  %v3780 = vsel %vm3652, %v3716, %v3588
  %v3781 = vsel %vm3653, %v3717, %v3589
  %v3782 = vsel %vm3654, %v3718, %v3590
  %v3783 = vsel %vm3655, %v3719, %v3591
  %v3784 = vsel %vm3656, %v3720, %v3592
  %v3785 = vsel %vm3657, %v3721, %v3593
  %v3786 = vsel %vm3658, %v3722, %v3594
  %v3787 = vsel %vm3659, %v3723, %v3595
  %v3788 = vsel %vm3660, %v3724, %v3596
  %v3789 = vsel %vm3661, %v3725, %v3597
  %v3790 = vsel %vm3662, %v3726, %v3598
  %v3791 = vsel %vm3663, %v3727, %v3599
  %v3792 = vsel %vm3664, %v3728, %v3600
  %v3793 = vsel %vm3665, %v3729, %v3601
  %v3794 = vsel %vm3666, %v3730, %v3602
  %v3795 = vsel %vm3667, %v3731, %v3603
  %v3796 = vsel %vm3668, %v3732, %v3604
  %v3797 = vsel %vm3669, %v3733, %v3605
  %v3798 = vsel %vm3670, %v3734, %v3606
  %v3799 = vsel %vm3671, %v3735, %v3607
  %v3800 = vsel %vm3672, %v3736, %v3608
  %v3801 = vsel %vm3673, %v3737, %v3609
  %v3802 = vsel %vm3674, %v3738, %v3610
  %v3803 = vsel %vm3675, %v3739, %v3611
  %v3804 = vsel %vm3676, %v3740, %v3612
  %v3805 = vsel %vm3677, %v3741, %v3613
  %v3806 = vsel %vm3678, %v3742, %v3614
  %v3807 = vsel %vm3679, %v3743, %v3615
  %v3808 = vsel %vm3680, %v3744, %v3616
  %v3809 = vsel %vm3681, %v3745, %v3617
  %v3810 = vsel %vm3682, %v3746, %v3618
  %v3811 = vsel %vm3683, %v3747, %v3619
  %v3812 = vsel %vm3684, %v3748, %v3620
  %v3813 = vsel %vm3685, %v3749, %v3621
  %v3814 = vsel %vm3686, %v3750, %v3622
  %v3815 = vsel %vm3687, %v3751, %v3623
  %v3816 = vsel %vm3688, %v3752, %v3624
  %v3817 = vsel %vm3689, %v3753, %v3625
  %v3818 = vsel %vm3690, %v3754, %v3626
  %v3819 = vsel %vm3691, %v3755, %v3627
  %v3820 = vsel %vm3692, %v3756, %v3628
  %v3821 = vsel %vm3693, %v3757, %v3629
  %v3822 = vsel %vm3694, %v3758, %v3630
  %v3823 = vadd.f32 %v3759, 1.0
  %v3824 = vadd.f32 %v3760, 1.0
  %v3825 = vadd.f32 %v3761, 1.0
  %v3826 = vadd.f32 %v3762, 1.0
  %v3827 = vadd.f32 %v3763, 1.0
  %v3828 = vadd.f32 %v3764, 1.0
  %v3829 = vadd.f32 %v3765, 1.0
  %v3830 = vadd.f32 %v3766, 1.0
  %v3831 = vadd.f32 %v3767, 1.0
  %v3832 = vadd.f32 %v3768, 1.0
  %v3833 = vadd.f32 %v3769, 1.0
  %v3834 = vadd.f32 %v3770, 1.0
  %v3835 = vadd.f32 %v3771, 1.0
  %v3836 = vadd.f32 %v3772, 1.0
  %v3837 = vadd.f32 %v3773, 1.0
  %v3838 = vadd.f32 %v3774, 1.0
  %v3839 = vadd.f32 %v3775, 1.0
  %v3840 = vadd.f32 %v3776, 1.0
  %v3841 = vadd.f32 %v3777, 1.0
  %v3842 = vadd.f32 %v3778, 1.0
  %v3843 = vadd.f32 %v3779, 1.0
  %v3844 = vadd.f32 %v3780, 1.0
  %v3845 = vadd.f32 %v3781, 1.0
  %v3846 = vadd.f32 %v3782, 1.0
  %v3847 = vadd.f32 %v3783, 1.0
  %v3848 = vadd.f32 %v3784, 1.0
  %v3849 = vadd.f32 %v3785, 1.0
  %v3850 = vadd.f32 %v3786, 1.0
  %v3851 = vadd.f32 %v3787, 1.0
  %v3852 = vadd.f32 %v3788, 1.0
  %v3853 = vadd.f32 %v3789, 1.0
  %v3854 = vadd.f32 %v3790, 1.0
  %v3855 = vadd.f32 %v3791, 1.0
  %v3856 = vadd.f32 %v3792, 1.0
  %v3857 = vadd.f32 %v3793, 1.0
  %v3858 = vadd.f32 %v3794, 1.0
  %v3859 = vadd.f32 %v3795, 1.0
  %v3860 = vadd.f32 %v3796, 1.0
  %v3861 = vadd.f32 %v3797, 1.0
  %v3862 = vadd.f32 %v3798, 1.0
  %v3863 = vadd.f32 %v3799, 1.0
  %v3864 = vadd.f32 %v3800, 1.0
  %v3865 = vadd.f32 %v3801, 1.0
  %v3866 = vadd.f32 %v3802, 1.0
  %v3867 = vadd.f32 %v3803, 1.0
  %v3868 = vadd.f32 %v3804, 1.0
  %v3869 = vadd.f32 %v3805, 1.0
  %v3870 = vadd.f32 %v3806, 1.0
  %v3871 = vadd.f32 %v3807, 1.0
  %v3872 = vadd.f32 %v3808, 1.0
  %v3873 = vadd.f32 %v3809, 1.0
  %v3874 = vadd.f32 %v3810, 1.0
  %v3875 = vadd.f32 %v3811, 1.0
  %v3876 = vadd.f32 %v3812, 1.0
  %v3877 = vadd.f32 %v3813, 1.0
  %v3878 = vadd.f32 %v3814, 1.0
  %v3879 = vadd.f32 %v3815, 1.0
  %v3880 = vadd.f32 %v3816, 1.0
  %v3881 = vadd.f32 %v3817, 1.0
  %v3882 = vadd.f32 %v3818, 1.0
  %v3883 = vadd.f32 %v3819, 1.0
  %v3884 = vadd.f32 %v3820, 1.0
  %v3885 = vadd.f32 %v3821, 1.0
  %v3886 = vadd.f32 %v3822, 1.0
  %v3887 = vmul.f32 %v1391, %v3823
  %v3888 = vmul.f32 %v1392, %v3824
  %v3889 = vmul.f32 %v1393, %v3825
  %v3890 = vmul.f32 %v1394, %v3826
  %v3891 = vmul.f32 %v1395, %v3827
  %v3892 = vmul.f32 %v1396, %v3828
  %v3893 = vmul.f32 %v1397, %v3829
  %v3894 = vmul.f32 %v1398, %v3830
  %v3895 = vmul.f32 %v1399, %v3831
  %v3896 = vmul.f32 %v1400, %v3832
  %v3897 = vmul.f32 %v1401, %v3833
  %v3898 = vmul.f32 %v1402, %v3834
  %v3899 = vmul.f32 %v1403, %v3835
  %v3900 = vmul.f32 %v1404, %v3836
  %v3901 = vmul.f32 %v1405, %v3837
  %v3902 = vmul.f32 %v1406, %v3838
  %v3903 = vmul.f32 %v1407, %v3839
  %v3904 = vmul.f32 %v1408, %v3840
  %v3905 = vmul.f32 %v1409, %v3841
  %v3906 = vmul.f32 %v1410, %v3842
  %v3907 = vmul.f32 %v1411, %v3843
  %v3908 = vmul.f32 %v1412, %v3844
  %v3909 = vmul.f32 %v1413, %v3845
  %v3910 = vmul.f32 %v1414, %v3846
  %v3911 = vmul.f32 %v1415, %v3847
  %v3912 = vmul.f32 %v1416, %v3848
  %v3913 = vmul.f32 %v1417, %v3849
  %v3914 = vmul.f32 %v1418, %v3850
  %v3915 = vmul.f32 %v1419, %v3851
  %v3916 = vmul.f32 %v1420, %v3852
  %v3917 = vmul.f32 %v1421, %v3853
  %v3918 = vmul.f32 %v1422, %v3854
  %v3919 = vmul.f32 %v1423, %v3855
  %v3920 = vmul.f32 %v1424, %v3856
  %v3921 = vmul.f32 %v1425, %v3857
  %v3922 = vmul.f32 %v1426, %v3858
  %v3923 = vmul.f32 %v1427, %v3859
  %v3924 = vmul.f32 %v1428, %v3860
  %v3925 = vmul.f32 %v1429, %v3861
  %v3926 = vmul.f32 %v1430, %v3862
  %v3927 = vmul.f32 %v1431, %v3863
  %v3928 = vmul.f32 %v1432, %v3864
  %v3929 = vmul.f32 %v1433, %v3865
  %v3930 = vmul.f32 %v1434, %v3866
  %v3931 = vmul.f32 %v1435, %v3867
  %v3932 = vmul.f32 %v1436, %v3868
  %v3933 = vmul.f32 %v1437, %v3869
  %v3934 = vmul.f32 %v1438, %v3870
  %v3935 = vmul.f32 %v1439, %v3871
  %v3936 = vmul.f32 %v1440, %v3872
  %v3937 = vmul.f32 %v1441, %v3873
  %v3938 = vmul.f32 %v1442, %v3874
  %v3939 = vmul.f32 %v1443, %v3875
  %v3940 = vmul.f32 %v1444, %v3876
  %v3941 = vmul.f32 %v1445, %v3877
  %v3942 = vmul.f32 %v1446, %v3878
  %v3943 = vmul.f32 %v1447, %v3879
  %v3944 = vmul.f32 %v1448, %v3880
  %v3945 = vmul.f32 %v1449, %v3881
  %v3946 = vmul.f32 %v1450, %v3882
  %v3947 = vmul.f32 %v1451, %v3883
  %v3948 = vmul.f32 %v1452, %v3884
  %v3949 = vmul.f32 %v1453, %v3885
  %v3950 = vmul.f32 %v1454, %v3886
  %3951 = vst [vmem:[%s8] sm:$0xff] %v3887
  %3952 = vst [vmem:[%s8 + $0x8] sm:$0xff] %v3888
  %3953 = vst [vmem:[%s8 + $0x10] sm:$0xff] %v3889
  %3954 = vst [vmem:[%s8 + $0x18] sm:$0xff] %v3890
  %3955 = vst [vmem:[%s8 + $0x20] sm:$0xff] %v3891
  %3956 = vst [vmem:[%s8 + $0x28] sm:$0xff] %v3892
  %3957 = vst [vmem:[%s8 + $0x30] sm:$0xff] %v3893
  %3958 = vst [vmem:[%s8 + $0x38] sm:$0xff] %v3894
  %3959 = vst [vmem:[%s8 + $0x40] sm:$0xff] %v3895
  %3960 = vst [vmem:[%s8 + $0x48] sm:$0xff] %v3896
  %3961 = vst [vmem:[%s8 + $0x50] sm:$0xff] %v3897
  %3962 = vst [vmem:[%s8 + $0x58] sm:$0xff] %v3898
  %3963 = vst [vmem:[%s8 + $0x60] sm:$0xff] %v3899
  %3964 = vst [vmem:[%s8 + $0x68] sm:$0xff] %v3900
  %3965 = vst [vmem:[%s8 + $0x70] sm:$0xff] %v3901
  %3966 = vst [vmem:[%s8 + $0x78] sm:$0xff] %v3902
  %3967 = vst [vmem:[%s8 + $0x80] sm:$0xff] %v3903
  %3968 = vst [vmem:[%s8 + $0x88] sm:$0xff] %v3904
  %3969 = vst [vmem:[%s8 + $0x90] sm:$0xff] %v3905
  %3970 = vst [vmem:[%s8 + $0x98] sm:$0xff] %v3906
  %3971 = vst [vmem:[%s8 + $0xa0] sm:$0xff] %v3907
  %3972 = vst [vmem:[%s8 + $0xa8] sm:$0xff] %v3908
  %3973 = vst [vmem:[%s8 + $0xb0] sm:$0xff] %v3909
  %3974 = vst [vmem:[%s8 + $0xb8] sm:$0xff] %v3910
  %3975 = vst [vmem:[%s8 + $0xc0] sm:$0xff] %v3911
  %3976 = vst [vmem:[%s8 + $0xc8] sm:$0xff] %v3912
  %3977 = vst [vmem:[%s8 + $0xd0] sm:$0xff] %v3913
  %3978 = vst [vmem:[%s8 + $0xd8] sm:$0xff] %v3914
  %3979 = vst [vmem:[%s8 + $0xe0] sm:$0xff] %v3915
  %3980 = vst [vmem:[%s8 + $0xe8] sm:$0xff] %v3916
  %3981 = vst [vmem:[%s8 + $0xf0] sm:$0xff] %v3917
  %3982 = vst [vmem:[%s8 + $0xf8] sm:$0xff] %v3918
  %3983 = vst [vmem:[%s8 + $0x100] sm:$0xff] %v3919
  %3984 = vst [vmem:[%s8 + $0x108] sm:$0xff] %v3920
  %3985 = vst [vmem:[%s8 + $0x110] sm:$0xff] %v3921
  %3986 = vst [vmem:[%s8 + $0x118] sm:$0xff] %v3922
  %3987 = vst [vmem:[%s8 + $0x120] sm:$0xff] %v3923
  %3988 = vst [vmem:[%s8 + $0x128] sm:$0xff] %v3924
  %3989 = vst [vmem:[%s8 + $0x130] sm:$0xff] %v3925
  %3990 = vst [vmem:[%s8 + $0x138] sm:$0xff] %v3926
  %3991 = vst [vmem:[%s8 + $0x140] sm:$0xff] %v3927
  %3992 = vst [vmem:[%s8 + $0x148] sm:$0xff] %v3928
  %3993 = vst [vmem:[%s8 + $0x150] sm:$0xff] %v3929
  %3994 = vst [vmem:[%s8 + $0x158] sm:$0xff] %v3930
  %3995 = vst [vmem:[%s8 + $0x160] sm:$0xff] %v3931
  %3996 = vst [vmem:[%s8 + $0x168] sm:$0xff] %v3932
  %3997 = vst [vmem:[%s8 + $0x170] sm:$0xff] %v3933
  %3998 = vst [vmem:[%s8 + $0x178] sm:$0xff] %v3934
  %3999 = vst [vmem:[%s8 + $0x180] sm:$0xff] %v3935
  %4000 = vst [vmem:[%s8 + $0x188] sm:$0xff] %v3936
  %4001 = vst [vmem:[%s8 + $0x190] sm:$0xff] %v3937
  %4002 = vst [vmem:[%s8 + $0x198] sm:$0xff] %v3938
  %4003 = vst [vmem:[%s8 + $0x1a0] sm:$0xff] %v3939
  %4004 = vst [vmem:[%s8 + $0x1a8] sm:$0xff] %v3940
  %4005 = vst [vmem:[%s8 + $0x1b0] sm:$0xff] %v3941
  %4006 = vst [vmem:[%s8 + $0x1b8] sm:$0xff] %v3942
  %4007 = vst [vmem:[%s8 + $0x1c0] sm:$0xff] %v3943
  %4008 = vst [vmem:[%s8 + $0x1c8] sm:$0xff] %v3944
  %4009 = vst [vmem:[%s8 + $0x1d0] sm:$0xff] %v3945
  %4010 = vst [vmem:[%s8 + $0x1d8] sm:$0xff] %v3946
  %4011 = vst [vmem:[%s8 + $0x1e0] sm:$0xff] %v3947
  %4012 = vst [vmem:[%s8 + $0x1e8] sm:$0xff] %v3948
  %4013 = vst [vmem:[%s8 + $0x1f0] sm:$0xff] %v3949
  %4014 = vst [vmem:[%s8 + $0x1f8] sm:$0xff] %v3950
  // Predicated region
  $region34: #{res_block_forward.7} parent=0 // pred_check
    _
  $region35: #{res_block_forward.7} parent=0 // pred_check_branch
    %4016 = sbr.rel (0) target = $region37
  $region36: #{res_block_forward.7} parent=0 // pred_region
    _
  $region37: #{res_block_forward.7} parent=0 // pred_fallthru
    _
  // Predicated region
  $region38: #{res_block_forward.7} parent=0 // pred_check
    _
  $region39: #{res_block_forward.7} parent=0 // pred_check_branch
    %4018 = sbr.rel (0) target = $region41
  $region40: #{res_block_forward.7} parent=0 // pred_region
    _
  $region41: #{res_block_forward.7} parent=0 // pred_fallthru
    _

</llo_original>
